<compile_context>
chip_gen: v7x
topology: tpu7x:2x2x1
jax: 0.10.0
libtpu: 0.0.40
codegen_flags: <defaults>
</compile_context>

<pallas_src>
import functools
import math

import jax
import jax.numpy as jnp
from jax import lax
from jax.experimental import pallas as pl
from jax.experimental.pallas import tpu as pltpu

EMSIZE = 64
NHEAD = 2
N_LAYERS = 4
FFN = 64
HEAD_DIM = EMSIZE // NHEAD
LN_EPS = 1e-5


def _layer_norm(y, gamma, beta):
    mu = jnp.mean(y, axis=-1, keepdims=True)
    var = jnp.mean(jnp.square(y - mu), axis=-1, keepdims=True)
    return (y - mu) * lax.rsqrt(var + LN_EPS) * gamma + beta


def encoder_kernel(x_ref,
                   wq_ref, bq_ref, wk_ref, bk_ref, wv_ref, bv_ref,
                   wo_ref, bo_ref, w1_ref, b1_ref, w2_ref, b2_ref,
                   g1_ref, be1_ref, g2_ref, be2_ref,
                   out_ref, *, batch, seq):
    """Single-invocation kernel: all 4 encoder layers, all batches.

    x_ref:  (B*S, E) f32
    wq/wk/wv: (L*H, E, hd) bf16 (pre-transposed, per-head split; scale folded in wq)
    bq/bk/bv: (L*H, 1, hd) f32
    wo:       (L*H, hd, E) bf16 (pre-transposed, per-head split)
    bo/b2/g*/be*: (L, 1, E) f32 ;  w1: (L, E, F) bf16 ; b1: (L, 1, F) f32
    w2:       (L, F, E) bf16
    """
    x = x_ref[...].astype(jnp.float32)                      # (B*S, E) f32

    for l in range(N_LAYERS):                               # static unroll over layers
        xb = x.astype(jnp.bfloat16)

        # ---- Multi-head self-attention ----
        attn = jnp.zeros(x.shape, jnp.float32)
        for h in range(NHEAD):                              # static unroll over heads
            idx = l * NHEAD + h
            q = jnp.dot(xb, wq_ref[idx], preferred_element_type=jnp.float32) + bq_ref[idx]
            k = jnp.dot(xb, wk_ref[idx], preferred_element_type=jnp.float32) + bk_ref[idx]
            v = jnp.dot(xb, wv_ref[idx], preferred_element_type=jnp.float32) + bv_ref[idx]
            qb = q.astype(jnp.bfloat16)                     # scale already folded into wq/bq
            kb = k.astype(jnp.bfloat16)
            vb = v.astype(jnp.bfloat16)

            ctx_rows = []
            for b in range(batch):                          # static unroll over batch
                lo, hi = b * seq, (b + 1) * seq             # sublane-aligned row slices
                # q @ k^T with the transpose absorbed into the contraction dims
                s = lax.dot_general(qb[lo:hi], kb[lo:hi],
                                    (((1,), (1,)), ((), ())),
                                    preferred_element_type=jnp.float32)      # (S, S)
                s = s - jnp.max(s, axis=-1, keepdims=True)
                p = jnp.exp(s)
                p = p * pl.reciprocal(jnp.sum(p, axis=-1, keepdims=True), approx=True)
                ctx_rows.append(jnp.dot(p.astype(jnp.bfloat16), vb[lo:hi],
                                        preferred_element_type=jnp.float32))  # (S, hd)
            ctx = jnp.concatenate(ctx_rows, axis=0).astype(jnp.bfloat16)       # (B*S, hd)
            # per-head slice of the output projection -> accumulate, no lane concat
            attn = attn + jnp.dot(ctx, wo_ref[idx], preferred_element_type=jnp.float32)
        attn = attn + bo_ref[l]

        # ---- Add & LayerNorm 1 (f32) ----
        y = _layer_norm(x + attn, g1_ref[l], be1_ref[l])

        # ---- Feed-forward: Linear -> ReLU -> Linear ----
        yb = y.astype(jnp.bfloat16)
        h1 = jnp.maximum(
            jnp.dot(yb, w1_ref[l], preferred_element_type=jnp.float32) + b1_ref[l], 0.0)
        ff = jnp.dot(h1.astype(jnp.bfloat16), w2_ref[l],
                     preferred_element_type=jnp.float32) + b2_ref[l]

        # ---- Add & LayerNorm 2 (f32) ----
        x = _layer_norm(y + ff, g2_ref[l], be2_ref[l])

    out_ref[...] = x.astype(out_ref.dtype)


def pack_params(layers):
    """PyTorch-layout per-layer params -> stacked, pre-transposed, per-head-split,
    bf16 matmul weights (f32 biases / LayerNorm params)."""
    E, H, hd, F = EMSIZE, NHEAD, HEAD_DIM, FFN
    scale = 1.0 / math.sqrt(hd)

    wq, bq, wk, bk, wv, bv = [], [], [], [], [], []
    wo, bo, w1, b1, w2, b2 = [], [], [], [], [], []
    g1, be1, g2, be2 = [], [], [], []

    def split_heads_w(W, s=1.0):
        # nn.Linear: y = x @ W.T ; pre-transpose to (E_in, E_out) and split out-dim by head
        return (W.T * s).reshape(E, H, hd).transpose(1, 0, 2)        # (H, E, hd)

    def split_heads_b(b, s=1.0):
        return (b * s).reshape(H, 1, hd)                             # (H, 1, hd)

    for p in layers:
        W_in, b_in = p["in_proj_weight"], p["in_proj_bias"]          # (3E, E), (3E,)
        Wq, Wk, Wv = W_in[:E], W_in[E:2 * E], W_in[2 * E:]
        bqf, bkf, bvf = b_in[:E], b_in[E:2 * E], b_in[2 * E:]

        wq.append(split_heads_w(Wq, scale)); bq.append(split_heads_b(bqf, scale))
        wk.append(split_heads_w(Wk));        bk.append(split_heads_b(bkf))
        wv.append(split_heads_w(Wv));        bv.append(split_heads_b(bvf))

        wo.append(p["out_proj_weight"].T.reshape(H, hd, E))          # (H, hd, E)
        bo.append(p["out_proj_bias"].reshape(1, E))
        w1.append(p["linear1_weight"].T)                             # (E, F)
        b1.append(p["linear1_bias"].reshape(1, F))
        w2.append(p["linear2_weight"].T)                             # (F, E)
        b2.append(p["linear2_bias"].reshape(1, E))
        g1.append(p["ln1_weight"].reshape(1, E)); be1.append(p["ln1_bias"].reshape(1, E))
        g2.append(p["ln2_weight"].reshape(1, E)); be2.append(p["ln2_bias"].reshape(1, E))

    def st(xs, dt):
        return jnp.stack(xs).astype(dt)

    L = len(layers)
    return {
        # per-head arrays flattened to (L*H, ...) for single static-int ref indexing
        "wq": st(wq, jnp.bfloat16).reshape(L * H, E, hd),
        "bq": st(bq, jnp.float32).reshape(L * H, 1, hd),
        "wk": st(wk, jnp.bfloat16).reshape(L * H, E, hd),
        "bk": st(bk, jnp.float32).reshape(L * H, 1, hd),
        "wv": st(wv, jnp.bfloat16).reshape(L * H, E, hd),
        "bv": st(bv, jnp.float32).reshape(L * H, 1, hd),
        "wo": st(wo, jnp.bfloat16).reshape(L * H, hd, E),
        "bo": st(bo, jnp.float32),
        "w1": st(w1, jnp.bfloat16), "b1": st(b1, jnp.float32),
        "w2": st(w2, jnp.bfloat16), "b2": st(b2, jnp.float32),
        "g1": st(g1, jnp.float32), "be1": st(be1, jnp.float32),
        "g2": st(g2, jnp.float32), "be2": st(be2, jnp.float32),
    }


@jax.jit
def encoder_forward(x, params):
    """x: (B, S, E) f32 -> (B, S, E) f32. Single fused pallas_call, no grid."""
    B, S, E = x.shape
    x2d = x.reshape(B * S, E)
    vmem = pl.BlockSpec(memory_space=pltpu.MemorySpace.VMEM)
    out2d = pl.pallas_call(
        functools.partial(encoder_kernel, batch=B, seq=S),
        out_shape=jax.ShapeDtypeStruct((B * S, E), jnp.float32),
        in_specs=[vmem] * 17,
        out_specs=vmem,
    )(x2d,
      params["wq"], params["bq"], params["wk"], params["bk"],
      params["wv"], params["bv"], params["wo"], params["bo"],
      params["w1"], params["b1"], params["w2"], params["b2"],
      params["g1"], params["be1"], params["g2"], params["be2"])
    return out2d.reshape(B, S, E)


# ---------------- pure-JAX f32 reference (PyTorch eval semantics) ----------------
def encoder_reference(x, layers):
    B, S, E = x.shape
    H, hd = NHEAD, HEAD_DIM
    for p in layers:
        qkv = x @ p["in_proj_weight"].T + p["in_proj_bias"]
        q, k, v = qkv[..., :E], qkv[..., E:2 * E], qkv[..., 2 * E:]

        def heads(t):
            return t.reshape(B, S, H, hd).transpose(0, 2, 1, 3)

        qh, kh, vh = heads(q), heads(k), heads(v)
        s = jnp.einsum("bhqd,bhkd->bhqk", qh, kh) / math.sqrt(hd)
        pm = jax.nn.softmax(s, axis=-1)
        ctx = jnp.einsum("bhqk,bhkd->bhqd", pm, vh)
        ctx = ctx.transpose(0, 2, 1, 3).reshape(B, S, E)
        attn = ctx @ p["out_proj_weight"].T + p["out_proj_bias"]
        y = _layer_norm(x + attn, p["ln1_weight"], p["ln1_bias"])
        h1 = jax.nn.relu(y @ p["linear1_weight"].T + p["linear1_bias"])
        ff = h1 @ p["linear2_weight"].T + p["linear2_bias"]
        x = _layer_norm(y + ff, p["ln2_weight"], p["ln2_bias"])
    return x


def init_torch_style_params(key):
    """Deterministic synthetic parameters in PyTorch nn.TransformerEncoderLayer layout."""
    E, F = EMSIZE, FFN
    layers = []
    for _ in range(N_LAYERS):
        key, *ks = jax.random.split(key, 13)

        def rnd(k, shape, s):
            return jax.random.normal(k, shape, jnp.float32) * s

        layers.append({
            "in_proj_weight": rnd(ks[0], (3 * E, E), 0.1),
            "in_proj_bias": rnd(ks[1], (3 * E,), 0.05),
            "out_proj_weight": rnd(ks[2], (E, E), 0.1),
            "out_proj_bias": rnd(ks[3], (E,), 0.05),
            "linear1_weight": rnd(ks[4], (F, E), 0.1),
            "linear1_bias": rnd(ks[5], (F,), 0.05),
            "linear2_weight": rnd(ks[6], (E, F), 0.1),
            "linear2_bias": rnd(ks[7], (E,), 0.05),
            "ln1_weight": 1.0 + rnd(ks[8], (E,), 0.05),
            "ln1_bias": rnd(ks[9], (E,), 0.05),
            "ln2_weight": 1.0 + rnd(ks[10], (E,), 0.05),
            "ln2_bias": rnd(ks[11], (E,), 0.05),
        })
    return layers


if __name__ == "__main__":
    B, S = 2, 8
    key = jax.random.PRNGKey(0)
    k_x, k_p = jax.random.split(key)
    src = jax.random.normal(k_x, (B, S, EMSIZE), jnp.float32)   # (batch, seq, emsize)

    torch_layers = init_torch_style_params(k_p)
    packed = pack_params(torch_layers)

    out = encoder_forward(src, packed)
    out = jax.block_until_ready(out)
    assert out.shape == (B, S, EMSIZE)

    ref = encoder_reference(src, torch_layers)
    max_err = float(jnp.max(jnp.abs(out - ref)))
    # bf16 MXU inputs -> small deviation from the f32 reference is expected.
    assert max_err < 1e-1, f"max abs error vs f32 reference too large: {max_err}"

    print("KERNEL_OK")
</pallas_src>

<mosaic_0001>
module attributes {stable_mosaic.version = 11 : i64} {
  func.func @encoder_kernel(%arg0: memref<16x64xf32, #tpu.memory_space<vmem>>, %arg1: memref<8x64x32xbf16, #tpu.memory_space<vmem>>, %arg2: memref<8x1x32xf32, #tpu.memory_space<vmem>>, %arg3: memref<8x64x32xbf16, #tpu.memory_space<vmem>>, %arg4: memref<8x1x32xf32, #tpu.memory_space<vmem>>, %arg5: memref<8x64x32xbf16, #tpu.memory_space<vmem>>, %arg6: memref<8x1x32xf32, #tpu.memory_space<vmem>>, %arg7: memref<8x32x64xbf16, #tpu.memory_space<vmem>>, %arg8: memref<4x1x64xf32, #tpu.memory_space<vmem>>, %arg9: memref<4x64x64xbf16, #tpu.memory_space<vmem>>, %arg10: memref<4x1x64xf32, #tpu.memory_space<vmem>>, %arg11: memref<4x64x64xbf16, #tpu.memory_space<vmem>>, %arg12: memref<4x1x64xf32, #tpu.memory_space<vmem>>, %arg13: memref<4x1x64xf32, #tpu.memory_space<vmem>>, %arg14: memref<4x1x64xf32, #tpu.memory_space<vmem>>, %arg15: memref<4x1x64xf32, #tpu.memory_space<vmem>>, %arg16: memref<4x1x64xf32, #tpu.memory_space<vmem>>, %arg17: memref<16x64xf32, #tpu.memory_space<vmem>>) attributes {dimension_semantics = [], scalar_prefetch = 0 : i64, scratch_operands = 0 : i64, tpu.core_type = #tpu.core_type<tc>} {
    %c0 = arith.constant 0 : index
    %c0_0 = arith.constant 0 : index
    %0 = vector.load %arg0[%c0, %c0_0] : memref<16x64xf32, #tpu.memory_space<vmem>>, vector<16x64xf32>
    %1 = arith.truncf %0 : vector<16x64xf32> to vector<16x64xbf16>
    %cst = arith.constant 0.000000e+00 : f32
    %2 = vector.broadcast %cst : f32 to vector<16x64xf32>
    %c0_1 = arith.constant 0 : index
    %c0_2 = arith.constant 0 : index
    %c0_3 = arith.constant 0 : index
    %3 = vector.load %arg1[%c0_1, %c0_2, %c0_3] : memref<8x64x32xbf16, #tpu.memory_space<vmem>>, vector<1x64x32xbf16>
    %4 = vector.shape_cast %3 : vector<1x64x32xbf16> to vector<64x32xbf16>
    %cst_4 = arith.constant dense<0.000000e+00> : vector<16x32xf32>
    %5 = tpu.matmul %1, %4, %cst_4 {dimension_numbers = #tpu.dot_dimension_numbers<[1], [0], [0], [1], [0, 0, 1, 1], [], []>} : vector<16x64xbf16>, vector<64x32xbf16>, vector<16x32xf32> -> vector<16x32xf32>
    %c0_5 = arith.constant 0 : index
    %c0_6 = arith.constant 0 : index
    %c0_7 = arith.constant 0 : index
    %6 = vector.load %arg2[%c0_5, %c0_6, %c0_7] : memref<8x1x32xf32, #tpu.memory_space<vmem>>, vector<1x1x32xf32>
    %7 = vector.shape_cast %6 : vector<1x1x32xf32> to vector<1x32xf32>
    %8 = vector.broadcast %7 : vector<1x32xf32> to vector<16x32xf32>
    %9 = arith.addf %5, %8 : vector<16x32xf32>
    %c0_8 = arith.constant 0 : index
    %c0_9 = arith.constant 0 : index
    %c0_10 = arith.constant 0 : index
    %10 = vector.load %arg3[%c0_8, %c0_9, %c0_10] : memref<8x64x32xbf16, #tpu.memory_space<vmem>>, vector<1x64x32xbf16>
    %11 = vector.shape_cast %10 : vector<1x64x32xbf16> to vector<64x32xbf16>
    %cst_11 = arith.constant dense<0.000000e+00> : vector<16x32xf32>
    %12 = tpu.matmul %1, %11, %cst_11 {dimension_numbers = #tpu.dot_dimension_numbers<[1], [0], [0], [1], [0, 0, 1, 1], [], []>} : vector<16x64xbf16>, vector<64x32xbf16>, vector<16x32xf32> -> vector<16x32xf32>
    %c0_12 = arith.constant 0 : index
    %c0_13 = arith.constant 0 : index
    %c0_14 = arith.constant 0 : index
    %13 = vector.load %arg4[%c0_12, %c0_13, %c0_14] : memref<8x1x32xf32, #tpu.memory_space<vmem>>, vector<1x1x32xf32>
    %14 = vector.shape_cast %13 : vector<1x1x32xf32> to vector<1x32xf32>
    %15 = vector.broadcast %14 : vector<1x32xf32> to vector<16x32xf32>
    %16 = arith.addf %12, %15 : vector<16x32xf32>
    %c0_15 = arith.constant 0 : index
    %c0_16 = arith.constant 0 : index
    %c0_17 = arith.constant 0 : index
    %17 = vector.load %arg5[%c0_15, %c0_16, %c0_17] : memref<8x64x32xbf16, #tpu.memory_space<vmem>>, vector<1x64x32xbf16>
    %18 = vector.shape_cast %17 : vector<1x64x32xbf16> to vector<64x32xbf16>
    %cst_18 = arith.constant dense<0.000000e+00> : vector<16x32xf32>
    %19 = tpu.matmul %1, %18, %cst_18 {dimension_numbers = #tpu.dot_dimension_numbers<[1], [0], [0], [1], [0, 0, 1, 1], [], []>} : vector<16x64xbf16>, vector<64x32xbf16>, vector<16x32xf32> -> vector<16x32xf32>
    %c0_19 = arith.constant 0 : index
    %c0_20 = arith.constant 0 : index
    %c0_21 = arith.constant 0 : index
    %20 = vector.load %arg6[%c0_19, %c0_20, %c0_21] : memref<8x1x32xf32, #tpu.memory_space<vmem>>, vector<1x1x32xf32>
    %21 = vector.shape_cast %20 : vector<1x1x32xf32> to vector<1x32xf32>
    %22 = vector.broadcast %21 : vector<1x32xf32> to vector<16x32xf32>
    %23 = arith.addf %19, %22 : vector<16x32xf32>
    %24 = arith.truncf %9 : vector<16x32xf32> to vector<16x32xbf16>
    %25 = arith.truncf %16 : vector<16x32xf32> to vector<16x32xbf16>
    %26 = arith.truncf %23 : vector<16x32xf32> to vector<16x32xbf16>
    %27 = vector.extract_strided_slice %24 {offsets = [0, 0], sizes = [8, 32], strides = [1, 1]} : vector<16x32xbf16> to vector<8x32xbf16>
    %28 = vector.extract_strided_slice %25 {offsets = [0, 0], sizes = [8, 32], strides = [1, 1]} : vector<16x32xbf16> to vector<8x32xbf16>
    %cst_22 = arith.constant dense<0.000000e+00> : vector<8x8xf32>
    %29 = tpu.matmul %27, %28, %cst_22 {dimension_numbers = #tpu.dot_dimension_numbers<[1], [1], [0], [0], [0, 0, 1, 0], [], []>} : vector<8x32xbf16>, vector<8x32xbf16>, vector<8x8xf32> -> vector<8x8xf32>
    %cst_23 = arith.constant dense<0xFF800000> : vector<8xf32>
    %30 = vector.multi_reduction <maximumf>, %29, %cst_23 [1] : vector<8x8xf32> to vector<8xf32>
    %31 = vector.shape_cast %30 : vector<8xf32> to vector<8x1xf32>
    %32 = vector.broadcast %31 : vector<8x1xf32> to vector<8x8xf32>
    %33 = arith.subf %29, %32 : vector<8x8xf32>
    %34 = math.exp %33 : vector<8x8xf32>
    %cst_24 = arith.constant dense<0.000000e+00> : vector<8xf32>
    %35 = vector.multi_reduction <add>, %34, %cst_24 [1] : vector<8x8xf32> to vector<8xf32>
    %36 = vector.shape_cast %35 : vector<8xf32> to vector<8x1xf32>
    %37 = tpu.reciprocal %36 {approx = true} : vector<8x1xf32> -> vector<8x1xf32>
    %38 = vector.broadcast %37 : vector<8x1xf32> to vector<8x8xf32>
    %39 = arith.mulf %34, %38 : vector<8x8xf32>
    %40 = arith.truncf %39 : vector<8x8xf32> to vector<8x8xbf16>
    %41 = vector.extract_strided_slice %26 {offsets = [0, 0], sizes = [8, 32], strides = [1, 1]} : vector<16x32xbf16> to vector<8x32xbf16>
    %cst_25 = arith.constant dense<0.000000e+00> : vector<8x32xf32>
    %42 = tpu.matmul %40, %41, %cst_25 {dimension_numbers = #tpu.dot_dimension_numbers<[1], [0], [0], [1], [0, 0, 1, 1], [], []>} : vector<8x8xbf16>, vector<8x32xbf16>, vector<8x32xf32> -> vector<8x32xf32>
    %43 = vector.extract_strided_slice %24 {offsets = [8, 0], sizes = [8, 32], strides = [1, 1]} : vector<16x32xbf16> to vector<8x32xbf16>
    %44 = vector.extract_strided_slice %25 {offsets = [8, 0], sizes = [8, 32], strides = [1, 1]} : vector<16x32xbf16> to vector<8x32xbf16>
    %cst_26 = arith.constant dense<0.000000e+00> : vector<8x8xf32>
    %45 = tpu.matmul %43, %44, %cst_26 {dimension_numbers = #tpu.dot_dimension_numbers<[1], [1], [0], [0], [0, 0, 1, 0], [], []>} : vector<8x32xbf16>, vector<8x32xbf16>, vector<8x8xf32> -> vector<8x8xf32>
    %cst_27 = arith.constant dense<0xFF800000> : vector<8xf32>
    %46 = vector.multi_reduction <maximumf>, %45, %cst_27 [1] : vector<8x8xf32> to vector<8xf32>
    %47 = vector.shape_cast %46 : vector<8xf32> to vector<8x1xf32>
    %48 = vector.broadcast %47 : vector<8x1xf32> to vector<8x8xf32>
    %49 = arith.subf %45, %48 : vector<8x8xf32>
    %50 = math.exp %49 : vector<8x8xf32>
    %cst_28 = arith.constant dense<0.000000e+00> : vector<8xf32>
    %51 = vector.multi_reduction <add>, %50, %cst_28 [1] : vector<8x8xf32> to vector<8xf32>
    %52 = vector.shape_cast %51 : vector<8xf32> to vector<8x1xf32>
    %53 = tpu.reciprocal %52 {approx = true} : vector<8x1xf32> -> vector<8x1xf32>
    %54 = vector.broadcast %53 : vector<8x1xf32> to vector<8x8xf32>
    %55 = arith.mulf %50, %54 : vector<8x8xf32>
    %56 = arith.truncf %55 : vector<8x8xf32> to vector<8x8xbf16>
    %57 = vector.extract_strided_slice %26 {offsets = [8, 0], sizes = [8, 32], strides = [1, 1]} : vector<16x32xbf16> to vector<8x32xbf16>
    %cst_29 = arith.constant dense<0.000000e+00> : vector<8x32xf32>
    %58 = tpu.matmul %56, %57, %cst_29 {dimension_numbers = #tpu.dot_dimension_numbers<[1], [0], [0], [1], [0, 0, 1, 1], [], []>} : vector<8x8xbf16>, vector<8x32xbf16>, vector<8x32xf32> -> vector<8x32xf32>
    %59 = tpu.concatenate %42, %58 in 0 : vector<8x32xf32>, vector<8x32xf32> -> vector<16x32xf32>
    %60 = arith.truncf %59 : vector<16x32xf32> to vector<16x32xbf16>
    %c0_30 = arith.constant 0 : index
    %c0_31 = arith.constant 0 : index
    %c0_32 = arith.constant 0 : index
    %61 = vector.load %arg7[%c0_30, %c0_31, %c0_32] : memref<8x32x64xbf16, #tpu.memory_space<vmem>>, vector<1x32x64xbf16>
    %62 = vector.shape_cast %61 : vector<1x32x64xbf16> to vector<32x64xbf16>
    %cst_33 = arith.constant dense<0.000000e+00> : vector<16x64xf32>
    %63 = tpu.matmul %60, %62, %cst_33 {dimension_numbers = #tpu.dot_dimension_numbers<[1], [0], [0], [1], [0, 0, 1, 1], [], []>} : vector<16x32xbf16>, vector<32x64xbf16>, vector<16x64xf32> -> vector<16x64xf32>
    %64 = arith.addf %2, %63 : vector<16x64xf32>
    %c1 = arith.constant 1 : index
    %c0_34 = arith.constant 0 : index
    %c0_35 = arith.constant 0 : index
    %65 = vector.load %arg1[%c1, %c0_34, %c0_35] : memref<8x64x32xbf16, #tpu.memory_space<vmem>>, vector<1x64x32xbf16>
    %66 = vector.shape_cast %65 : vector<1x64x32xbf16> to vector<64x32xbf16>
    %cst_36 = arith.constant dense<0.000000e+00> : vector<16x32xf32>
    %67 = tpu.matmul %1, %66, %cst_36 {dimension_numbers = #tpu.dot_dimension_numbers<[1], [0], [0], [1], [0, 0, 1, 1], [], []>} : vector<16x64xbf16>, vector<64x32xbf16>, vector<16x32xf32> -> vector<16x32xf32>
    %c1_37 = arith.constant 1 : index
    %c0_38 = arith.constant 0 : index
    %c0_39 = arith.constant 0 : index
    %68 = vector.load %arg2[%c1_37, %c0_38, %c0_39] : memref<8x1x32xf32, #tpu.memory_space<vmem>>, vector<1x1x32xf32>
    %69 = vector.shape_cast %68 : vector<1x1x32xf32> to vector<1x32xf32>
    %70 = vector.broadcast %69 : vector<1x32xf32> to vector<16x32xf32>
    %71 = arith.addf %67, %70 : vector<16x32xf32>
    %c1_40 = arith.constant 1 : index
    %c0_41 = arith.constant 0 : index
    %c0_42 = arith.constant 0 : index
    %72 = vector.load %arg3[%c1_40, %c0_41, %c0_42] : memref<8x64x32xbf16, #tpu.memory_space<vmem>>, vector<1x64x32xbf16>
    %73 = vector.shape_cast %72 : vector<1x64x32xbf16> to vector<64x32xbf16>
    %cst_43 = arith.constant dense<0.000000e+00> : vector<16x32xf32>
    %74 = tpu.matmul %1, %73, %cst_43 {dimension_numbers = #tpu.dot_dimension_numbers<[1], [0], [0], [1], [0, 0, 1, 1], [], []>} : vector<16x64xbf16>, vector<64x32xbf16>, vector<16x32xf32> -> vector<16x32xf32>
    %c1_44 = arith.constant 1 : index
    %c0_45 = arith.constant 0 : index
    %c0_46 = arith.constant 0 : index
    %75 = vector.load %arg4[%c1_44, %c0_45, %c0_46] : memref<8x1x32xf32, #tpu.memory_space<vmem>>, vector<1x1x32xf32>
    %76 = vector.shape_cast %75 : vector<1x1x32xf32> to vector<1x32xf32>
    %77 = vector.broadcast %76 : vector<1x32xf32> to vector<16x32xf32>
    %78 = arith.addf %74, %77 : vector<16x32xf32>
    %c1_47 = arith.constant 1 : index
    %c0_48 = arith.constant 0 : index
    %c0_49 = arith.constant 0 : index
    %79 = vector.load %arg5[%c1_47, %c0_48, %c0_49] : memref<8x64x32xbf16, #tpu.memory_space<vmem>>, vector<1x64x32xbf16>
    %80 = vector.shape_cast %79 : vector<1x64x32xbf16> to vector<64x32xbf16>
    %cst_50 = arith.constant dense<0.000000e+00> : vector<16x32xf32>
    %81 = tpu.matmul %1, %80, %cst_50 {dimension_numbers = #tpu.dot_dimension_numbers<[1], [0], [0], [1], [0, 0, 1, 1], [], []>} : vector<16x64xbf16>, vector<64x32xbf16>, vector<16x32xf32> -> vector<16x32xf32>
    %c1_51 = arith.constant 1 : index
    %c0_52 = arith.constant 0 : index
    %c0_53 = arith.constant 0 : index
    %82 = vector.load %arg6[%c1_51, %c0_52, %c0_53] : memref<8x1x32xf32, #tpu.memory_space<vmem>>, vector<1x1x32xf32>
    %83 = vector.shape_cast %82 : vector<1x1x32xf32> to vector<1x32xf32>
    %84 = vector.broadcast %83 : vector<1x32xf32> to vector<16x32xf32>
    %85 = arith.addf %81, %84 : vector<16x32xf32>
    %86 = arith.truncf %71 : vector<16x32xf32> to vector<16x32xbf16>
    %87 = arith.truncf %78 : vector<16x32xf32> to vector<16x32xbf16>
    %88 = arith.truncf %85 : vector<16x32xf32> to vector<16x32xbf16>
    %89 = vector.extract_strided_slice %86 {offsets = [0, 0], sizes = [8, 32], strides = [1, 1]} : vector<16x32xbf16> to vector<8x32xbf16>
    %90 = vector.extract_strided_slice %87 {offsets = [0, 0], sizes = [8, 32], strides = [1, 1]} : vector<16x32xbf16> to vector<8x32xbf16>
    %cst_54 = arith.constant dense<0.000000e+00> : vector<8x8xf32>
    %91 = tpu.matmul %89, %90, %cst_54 {dimension_numbers = #tpu.dot_dimension_numbers<[1], [1], [0], [0], [0, 0, 1, 0], [], []>} : vector<8x32xbf16>, vector<8x32xbf16>, vector<8x8xf32> -> vector<8x8xf32>
    %cst_55 = arith.constant dense<0xFF800000> : vector<8xf32>
    %92 = vector.multi_reduction <maximumf>, %91, %cst_55 [1] : vector<8x8xf32> to vector<8xf32>
    %93 = vector.shape_cast %92 : vector<8xf32> to vector<8x1xf32>
    %94 = vector.broadcast %93 : vector<8x1xf32> to vector<8x8xf32>
    %95 = arith.subf %91, %94 : vector<8x8xf32>
    %96 = math.exp %95 : vector<8x8xf32>
    %cst_56 = arith.constant dense<0.000000e+00> : vector<8xf32>
    %97 = vector.multi_reduction <add>, %96, %cst_56 [1] : vector<8x8xf32> to vector<8xf32>
    %98 = vector.shape_cast %97 : vector<8xf32> to vector<8x1xf32>
    %99 = tpu.reciprocal %98 {approx = true} : vector<8x1xf32> -> vector<8x1xf32>
    %100 = vector.broadcast %99 : vector<8x1xf32> to vector<8x8xf32>
    %101 = arith.mulf %96, %100 : vector<8x8xf32>
    %102 = arith.truncf %101 : vector<8x8xf32> to vector<8x8xbf16>
    %103 = vector.extract_strided_slice %88 {offsets = [0, 0], sizes = [8, 32], strides = [1, 1]} : vector<16x32xbf16> to vector<8x32xbf16>
    %cst_57 = arith.constant dense<0.000000e+00> : vector<8x32xf32>
    %104 = tpu.matmul %102, %103, %cst_57 {dimension_numbers = #tpu.dot_dimension_numbers<[1], [0], [0], [1], [0, 0, 1, 1], [], []>} : vector<8x8xbf16>, vector<8x32xbf16>, vector<8x32xf32> -> vector<8x32xf32>
    %105 = vector.extract_strided_slice %86 {offsets = [8, 0], sizes = [8, 32], strides = [1, 1]} : vector<16x32xbf16> to vector<8x32xbf16>
    %106 = vector.extract_strided_slice %87 {offsets = [8, 0], sizes = [8, 32], strides = [1, 1]} : vector<16x32xbf16> to vector<8x32xbf16>
    %cst_58 = arith.constant dense<0.000000e+00> : vector<8x8xf32>
    %107 = tpu.matmul %105, %106, %cst_58 {dimension_numbers = #tpu.dot_dimension_numbers<[1], [1], [0], [0], [0, 0, 1, 0], [], []>} : vector<8x32xbf16>, vector<8x32xbf16>, vector<8x8xf32> -> vector<8x8xf32>
    %cst_59 = arith.constant dense<0xFF800000> : vector<8xf32>
    %108 = vector.multi_reduction <maximumf>, %107, %cst_59 [1] : vector<8x8xf32> to vector<8xf32>
    %109 = vector.shape_cast %108 : vector<8xf32> to vector<8x1xf32>
    %110 = vector.broadcast %109 : vector<8x1xf32> to vector<8x8xf32>
    %111 = arith.subf %107, %110 : vector<8x8xf32>
    %112 = math.exp %111 : vector<8x8xf32>
    %cst_60 = arith.constant dense<0.000000e+00> : vector<8xf32>
    %113 = vector.multi_reduction <add>, %112, %cst_60 [1] : vector<8x8xf32> to vector<8xf32>
    %114 = vector.shape_cast %113 : vector<8xf32> to vector<8x1xf32>
    %115 = tpu.reciprocal %114 {approx = true} : vector<8x1xf32> -> vector<8x1xf32>
    %116 = vector.broadcast %115 : vector<8x1xf32> to vector<8x8xf32>
    %117 = arith.mulf %112, %116 : vector<8x8xf32>
    %118 = arith.truncf %117 : vector<8x8xf32> to vector<8x8xbf16>
    %119 = vector.extract_strided_slice %88 {offsets = [8, 0], sizes = [8, 32], strides = [1, 1]} : vector<16x32xbf16> to vector<8x32xbf16>
    %cst_61 = arith.constant dense<0.000000e+00> : vector<8x32xf32>
    %120 = tpu.matmul %118, %119, %cst_61 {dimension_numbers = #tpu.dot_dimension_numbers<[1], [0], [0], [1], [0, 0, 1, 1], [], []>} : vector<8x8xbf16>, vector<8x32xbf16>, vector<8x32xf32> -> vector<8x32xf32>
    %121 = tpu.concatenate %104, %120 in 0 : vector<8x32xf32>, vector<8x32xf32> -> vector<16x32xf32>
    %122 = arith.truncf %121 : vector<16x32xf32> to vector<16x32xbf16>
    %c1_62 = arith.constant 1 : index
    %c0_63 = arith.constant 0 : index
    %c0_64 = arith.constant 0 : index
    %123 = vector.load %arg7[%c1_62, %c0_63, %c0_64] : memref<8x32x64xbf16, #tpu.memory_space<vmem>>, vector<1x32x64xbf16>
    %124 = vector.shape_cast %123 : vector<1x32x64xbf16> to vector<32x64xbf16>
    %cst_65 = arith.constant dense<0.000000e+00> : vector<16x64xf32>
    %125 = tpu.matmul %122, %124, %cst_65 {dimension_numbers = #tpu.dot_dimension_numbers<[1], [0], [0], [1], [0, 0, 1, 1], [], []>} : vector<16x32xbf16>, vector<32x64xbf16>, vector<16x64xf32> -> vector<16x64xf32>
    %126 = arith.addf %64, %125 : vector<16x64xf32>
    %c0_66 = arith.constant 0 : index
    %c0_67 = arith.constant 0 : index
    %c0_68 = arith.constant 0 : index
    %127 = vector.load %arg8[%c0_66, %c0_67, %c0_68] : memref<4x1x64xf32, #tpu.memory_space<vmem>>, vector<1x1x64xf32>
    %128 = vector.shape_cast %127 : vector<1x1x64xf32> to vector<1x64xf32>
    %129 = vector.broadcast %128 : vector<1x64xf32> to vector<16x64xf32>
    %130 = arith.addf %126, %129 : vector<16x64xf32>
    %131 = arith.addf %0, %130 : vector<16x64xf32>
    %c0_69 = arith.constant 0 : index
    %c0_70 = arith.constant 0 : index
    %c0_71 = arith.constant 0 : index
    %132 = vector.load %arg13[%c0_69, %c0_70, %c0_71] : memref<4x1x64xf32, #tpu.memory_space<vmem>>, vector<1x1x64xf32>
    %133 = vector.shape_cast %132 : vector<1x1x64xf32> to vector<1x64xf32>
    %c0_72 = arith.constant 0 : index
    %c0_73 = arith.constant 0 : index
    %c0_74 = arith.constant 0 : index
    %134 = vector.load %arg14[%c0_72, %c0_73, %c0_74] : memref<4x1x64xf32, #tpu.memory_space<vmem>>, vector<1x1x64xf32>
    %135 = vector.shape_cast %134 : vector<1x1x64xf32> to vector<1x64xf32>
    %cst_75 = arith.constant dense<0.000000e+00> : vector<16xf32>
    %136 = vector.multi_reduction <add>, %131, %cst_75 [1] : vector<16x64xf32> to vector<16xf32>
    %137 = vector.shape_cast %136 : vector<16xf32> to vector<16x1xf32>
    %cst_76 = arith.constant 6.400000e+01 : f32
    %138 = vector.broadcast %cst_76 : f32 to vector<16x1xf32>
    %139 = arith.divf %137, %138 : vector<16x1xf32>
    %140 = vector.broadcast %139 : vector<16x1xf32> to vector<16x64xf32>
    %141 = arith.subf %131, %140 : vector<16x64xf32>
    %142 = arith.mulf %141, %141 : vector<16x64xf32>
    %cst_77 = arith.constant dense<0.000000e+00> : vector<16xf32>
    %143 = vector.multi_reduction <add>, %142, %cst_77 [1] : vector<16x64xf32> to vector<16xf32>
    %144 = vector.shape_cast %143 : vector<16xf32> to vector<16x1xf32>
    %cst_78 = arith.constant 6.400000e+01 : f32
    %145 = vector.broadcast %cst_78 : f32 to vector<16x1xf32>
    %146 = arith.divf %144, %145 : vector<16x1xf32>
    %147 = vector.broadcast %139 : vector<16x1xf32> to vector<16x64xf32>
    %148 = arith.subf %131, %147 : vector<16x64xf32>
    %cst_79 = arith.constant 9.99999974E-6 : f32
    %149 = vector.broadcast %cst_79 : f32 to vector<16x1xf32>
    %150 = arith.addf %146, %149 : vector<16x1xf32>
    %151 = math.rsqrt %150 : vector<16x1xf32>
    %152 = vector.broadcast %151 : vector<16x1xf32> to vector<16x64xf32>
    %153 = arith.mulf %148, %152 : vector<16x64xf32>
    %154 = vector.broadcast %133 : vector<1x64xf32> to vector<16x64xf32>
    %155 = arith.mulf %153, %154 : vector<16x64xf32>
    %156 = vector.broadcast %135 : vector<1x64xf32> to vector<16x64xf32>
    %157 = arith.addf %155, %156 : vector<16x64xf32>
    %158 = arith.truncf %157 : vector<16x64xf32> to vector<16x64xbf16>
    %c0_80 = arith.constant 0 : index
    %c0_81 = arith.constant 0 : index
    %c0_82 = arith.constant 0 : index
    %159 = vector.load %arg9[%c0_80, %c0_81, %c0_82] : memref<4x64x64xbf16, #tpu.memory_space<vmem>>, vector<1x64x64xbf16>
    %160 = vector.shape_cast %159 : vector<1x64x64xbf16> to vector<64x64xbf16>
    %cst_83 = arith.constant dense<0.000000e+00> : vector<16x64xf32>
    %161 = tpu.matmul %158, %160, %cst_83 {dimension_numbers = #tpu.dot_dimension_numbers<[1], [0], [0], [1], [0, 0, 1, 1], [], []>} : vector<16x64xbf16>, vector<64x64xbf16>, vector<16x64xf32> -> vector<16x64xf32>
    %c0_84 = arith.constant 0 : index
    %c0_85 = arith.constant 0 : index
    %c0_86 = arith.constant 0 : index
    %162 = vector.load %arg10[%c0_84, %c0_85, %c0_86] : memref<4x1x64xf32, #tpu.memory_space<vmem>>, vector<1x1x64xf32>
    %163 = vector.shape_cast %162 : vector<1x1x64xf32> to vector<1x64xf32>
    %164 = vector.broadcast %163 : vector<1x64xf32> to vector<16x64xf32>
    %165 = arith.addf %161, %164 : vector<16x64xf32>
    %cst_87 = arith.constant 0.000000e+00 : f32
    %166 = vector.broadcast %cst_87 : f32 to vector<16x64xf32>
    %167 = arith.maximumf %165, %166 : vector<16x64xf32>
    %168 = arith.truncf %167 : vector<16x64xf32> to vector<16x64xbf16>
    %c0_88 = arith.constant 0 : index
    %c0_89 = arith.constant 0 : index
    %c0_90 = arith.constant 0 : index
    %169 = vector.load %arg11[%c0_88, %c0_89, %c0_90] : memref<4x64x64xbf16, #tpu.memory_space<vmem>>, vector<1x64x64xbf16>
    %170 = vector.shape_cast %169 : vector<1x64x64xbf16> to vector<64x64xbf16>
    %cst_91 = arith.constant dense<0.000000e+00> : vector<16x64xf32>
    %171 = tpu.matmul %168, %170, %cst_91 {dimension_numbers = #tpu.dot_dimension_numbers<[1], [0], [0], [1], [0, 0, 1, 1], [], []>} : vector<16x64xbf16>, vector<64x64xbf16>, vector<16x64xf32> -> vector<16x64xf32>
    %c0_92 = arith.constant 0 : index
    %c0_93 = arith.constant 0 : index
    %c0_94 = arith.constant 0 : index
    %172 = vector.load %arg12[%c0_92, %c0_93, %c0_94] : memref<4x1x64xf32, #tpu.memory_space<vmem>>, vector<1x1x64xf32>
    %173 = vector.shape_cast %172 : vector<1x1x64xf32> to vector<1x64xf32>
    %174 = vector.broadcast %173 : vector<1x64xf32> to vector<16x64xf32>
    %175 = arith.addf %171, %174 : vector<16x64xf32>
    %176 = arith.addf %157, %175 : vector<16x64xf32>
    %c0_95 = arith.constant 0 : index
    %c0_96 = arith.constant 0 : index
    %c0_97 = arith.constant 0 : index
    %177 = vector.load %arg15[%c0_95, %c0_96, %c0_97] : memref<4x1x64xf32, #tpu.memory_space<vmem>>, vector<1x1x64xf32>
    %178 = vector.shape_cast %177 : vector<1x1x64xf32> to vector<1x64xf32>
    %c0_98 = arith.constant 0 : index
    %c0_99 = arith.constant 0 : index
    %c0_100 = arith.constant 0 : index
    %179 = vector.load %arg16[%c0_98, %c0_99, %c0_100] : memref<4x1x64xf32, #tpu.memory_space<vmem>>, vector<1x1x64xf32>
    %180 = vector.shape_cast %179 : vector<1x1x64xf32> to vector<1x64xf32>
    %cst_101 = arith.constant dense<0.000000e+00> : vector<16xf32>
    %181 = vector.multi_reduction <add>, %176, %cst_101 [1] : vector<16x64xf32> to vector<16xf32>
    %182 = vector.shape_cast %181 : vector<16xf32> to vector<16x1xf32>
    %cst_102 = arith.constant 6.400000e+01 : f32
    %183 = vector.broadcast %cst_102 : f32 to vector<16x1xf32>
    %184 = arith.divf %182, %183 : vector<16x1xf32>
    %185 = vector.broadcast %184 : vector<16x1xf32> to vector<16x64xf32>
    %186 = arith.subf %176, %185 : vector<16x64xf32>
    %187 = arith.mulf %186, %186 : vector<16x64xf32>
    %cst_103 = arith.constant dense<0.000000e+00> : vector<16xf32>
    %188 = vector.multi_reduction <add>, %187, %cst_103 [1] : vector<16x64xf32> to vector<16xf32>
    %189 = vector.shape_cast %188 : vector<16xf32> to vector<16x1xf32>
    %cst_104 = arith.constant 6.400000e+01 : f32
    %190 = vector.broadcast %cst_104 : f32 to vector<16x1xf32>
    %191 = arith.divf %189, %190 : vector<16x1xf32>
    %192 = vector.broadcast %184 : vector<16x1xf32> to vector<16x64xf32>
    %193 = arith.subf %176, %192 : vector<16x64xf32>
    %cst_105 = arith.constant 9.99999974E-6 : f32
    %194 = vector.broadcast %cst_105 : f32 to vector<16x1xf32>
    %195 = arith.addf %191, %194 : vector<16x1xf32>
    %196 = math.rsqrt %195 : vector<16x1xf32>
    %197 = vector.broadcast %196 : vector<16x1xf32> to vector<16x64xf32>
    %198 = arith.mulf %193, %197 : vector<16x64xf32>
    %199 = vector.broadcast %178 : vector<1x64xf32> to vector<16x64xf32>
    %200 = arith.mulf %198, %199 : vector<16x64xf32>
    %201 = vector.broadcast %180 : vector<1x64xf32> to vector<16x64xf32>
    %202 = arith.addf %200, %201 : vector<16x64xf32>
    %203 = arith.truncf %202 : vector<16x64xf32> to vector<16x64xbf16>
    %cst_106 = arith.constant 0.000000e+00 : f32
    %204 = vector.broadcast %cst_106 : f32 to vector<16x64xf32>
    %c2 = arith.constant 2 : index
    %c0_107 = arith.constant 0 : index
    %c0_108 = arith.constant 0 : index
    %205 = vector.load %arg1[%c2, %c0_107, %c0_108] : memref<8x64x32xbf16, #tpu.memory_space<vmem>>, vector<1x64x32xbf16>
    %206 = vector.shape_cast %205 : vector<1x64x32xbf16> to vector<64x32xbf16>
    %cst_109 = arith.constant dense<0.000000e+00> : vector<16x32xf32>
    %207 = tpu.matmul %203, %206, %cst_109 {dimension_numbers = #tpu.dot_dimension_numbers<[1], [0], [0], [1], [0, 0, 1, 1], [], []>} : vector<16x64xbf16>, vector<64x32xbf16>, vector<16x32xf32> -> vector<16x32xf32>
    %c2_110 = arith.constant 2 : index
    %c0_111 = arith.constant 0 : index
    %c0_112 = arith.constant 0 : index
    %208 = vector.load %arg2[%c2_110, %c0_111, %c0_112] : memref<8x1x32xf32, #tpu.memory_space<vmem>>, vector<1x1x32xf32>
    %209 = vector.shape_cast %208 : vector<1x1x32xf32> to vector<1x32xf32>
    %210 = vector.broadcast %209 : vector<1x32xf32> to vector<16x32xf32>
    %211 = arith.addf %207, %210 : vector<16x32xf32>
    %c2_113 = arith.constant 2 : index
    %c0_114 = arith.constant 0 : index
    %c0_115 = arith.constant 0 : index
    %212 = vector.load %arg3[%c2_113, %c0_114, %c0_115] : memref<8x64x32xbf16, #tpu.memory_space<vmem>>, vector<1x64x32xbf16>
    %213 = vector.shape_cast %212 : vector<1x64x32xbf16> to vector<64x32xbf16>
    %cst_116 = arith.constant dense<0.000000e+00> : vector<16x32xf32>
    %214 = tpu.matmul %203, %213, %cst_116 {dimension_numbers = #tpu.dot_dimension_numbers<[1], [0], [0], [1], [0, 0, 1, 1], [], []>} : vector<16x64xbf16>, vector<64x32xbf16>, vector<16x32xf32> -> vector<16x32xf32>
    %c2_117 = arith.constant 2 : index
    %c0_118 = arith.constant 0 : index
    %c0_119 = arith.constant 0 : index
    %215 = vector.load %arg4[%c2_117, %c0_118, %c0_119] : memref<8x1x32xf32, #tpu.memory_space<vmem>>, vector<1x1x32xf32>
    %216 = vector.shape_cast %215 : vector<1x1x32xf32> to vector<1x32xf32>
    %217 = vector.broadcast %216 : vector<1x32xf32> to vector<16x32xf32>
    %218 = arith.addf %214, %217 : vector<16x32xf32>
    %c2_120 = arith.constant 2 : index
    %c0_121 = arith.constant 0 : index
    %c0_122 = arith.constant 0 : index
    %219 = vector.load %arg5[%c2_120, %c0_121, %c0_122] : memref<8x64x32xbf16, #tpu.memory_space<vmem>>, vector<1x64x32xbf16>
    %220 = vector.shape_cast %219 : vector<1x64x32xbf16> to vector<64x32xbf16>
    %cst_123 = arith.constant dense<0.000000e+00> : vector<16x32xf32>
    %221 = tpu.matmul %203, %220, %cst_123 {dimension_numbers = #tpu.dot_dimension_numbers<[1], [0], [0], [1], [0, 0, 1, 1], [], []>} : vector<16x64xbf16>, vector<64x32xbf16>, vector<16x32xf32> -> vector<16x32xf32>
    %c2_124 = arith.constant 2 : index
    %c0_125 = arith.constant 0 : index
    %c0_126 = arith.constant 0 : index
    %222 = vector.load %arg6[%c2_124, %c0_125, %c0_126] : memref<8x1x32xf32, #tpu.memory_space<vmem>>, vector<1x1x32xf32>
    %223 = vector.shape_cast %222 : vector<1x1x32xf32> to vector<1x32xf32>
    %224 = vector.broadcast %223 : vector<1x32xf32> to vector<16x32xf32>
    %225 = arith.addf %221, %224 : vector<16x32xf32>
    %226 = arith.truncf %211 : vector<16x32xf32> to vector<16x32xbf16>
    %227 = arith.truncf %218 : vector<16x32xf32> to vector<16x32xbf16>
    %228 = arith.truncf %225 : vector<16x32xf32> to vector<16x32xbf16>
    %229 = vector.extract_strided_slice %226 {offsets = [0, 0], sizes = [8, 32], strides = [1, 1]} : vector<16x32xbf16> to vector<8x32xbf16>
    %230 = vector.extract_strided_slice %227 {offsets = [0, 0], sizes = [8, 32], strides = [1, 1]} : vector<16x32xbf16> to vector<8x32xbf16>
    %cst_127 = arith.constant dense<0.000000e+00> : vector<8x8xf32>
    %231 = tpu.matmul %229, %230, %cst_127 {dimension_numbers = #tpu.dot_dimension_numbers<[1], [1], [0], [0], [0, 0, 1, 0], [], []>} : vector<8x32xbf16>, vector<8x32xbf16>, vector<8x8xf32> -> vector<8x8xf32>
    %cst_128 = arith.constant dense<0xFF800000> : vector<8xf32>
    %232 = vector.multi_reduction <maximumf>, %231, %cst_128 [1] : vector<8x8xf32> to vector<8xf32>
    %233 = vector.shape_cast %232 : vector<8xf32> to vector<8x1xf32>
    %234 = vector.broadcast %233 : vector<8x1xf32> to vector<8x8xf32>
    %235 = arith.subf %231, %234 : vector<8x8xf32>
    %236 = math.exp %235 : vector<8x8xf32>
    %cst_129 = arith.constant dense<0.000000e+00> : vector<8xf32>
    %237 = vector.multi_reduction <add>, %236, %cst_129 [1] : vector<8x8xf32> to vector<8xf32>
    %238 = vector.shape_cast %237 : vector<8xf32> to vector<8x1xf32>
    %239 = tpu.reciprocal %238 {approx = true} : vector<8x1xf32> -> vector<8x1xf32>
    %240 = vector.broadcast %239 : vector<8x1xf32> to vector<8x8xf32>
    %241 = arith.mulf %236, %240 : vector<8x8xf32>
    %242 = arith.truncf %241 : vector<8x8xf32> to vector<8x8xbf16>
    %243 = vector.extract_strided_slice %228 {offsets = [0, 0], sizes = [8, 32], strides = [1, 1]} : vector<16x32xbf16> to vector<8x32xbf16>
    %cst_130 = arith.constant dense<0.000000e+00> : vector<8x32xf32>
    %244 = tpu.matmul %242, %243, %cst_130 {dimension_numbers = #tpu.dot_dimension_numbers<[1], [0], [0], [1], [0, 0, 1, 1], [], []>} : vector<8x8xbf16>, vector<8x32xbf16>, vector<8x32xf32> -> vector<8x32xf32>
    %245 = vector.extract_strided_slice %226 {offsets = [8, 0], sizes = [8, 32], strides = [1, 1]} : vector<16x32xbf16> to vector<8x32xbf16>
    %246 = vector.extract_strided_slice %227 {offsets = [8, 0], sizes = [8, 32], strides = [1, 1]} : vector<16x32xbf16> to vector<8x32xbf16>
    %cst_131 = arith.constant dense<0.000000e+00> : vector<8x8xf32>
    %247 = tpu.matmul %245, %246, %cst_131 {dimension_numbers = #tpu.dot_dimension_numbers<[1], [1], [0], [0], [0, 0, 1, 0], [], []>} : vector<8x32xbf16>, vector<8x32xbf16>, vector<8x8xf32> -> vector<8x8xf32>
    %cst_132 = arith.constant dense<0xFF800000> : vector<8xf32>
    %248 = vector.multi_reduction <maximumf>, %247, %cst_132 [1] : vector<8x8xf32> to vector<8xf32>
    %249 = vector.shape_cast %248 : vector<8xf32> to vector<8x1xf32>
    %250 = vector.broadcast %249 : vector<8x1xf32> to vector<8x8xf32>
    %251 = arith.subf %247, %250 : vector<8x8xf32>
    %252 = math.exp %251 : vector<8x8xf32>
    %cst_133 = arith.constant dense<0.000000e+00> : vector<8xf32>
    %253 = vector.multi_reduction <add>, %252, %cst_133 [1] : vector<8x8xf32> to vector<8xf32>
    %254 = vector.shape_cast %253 : vector<8xf32> to vector<8x1xf32>
    %255 = tpu.reciprocal %254 {approx = true} : vector<8x1xf32> -> vector<8x1xf32>
    %256 = vector.broadcast %255 : vector<8x1xf32> to vector<8x8xf32>
    %257 = arith.mulf %252, %256 : vector<8x8xf32>
    %258 = arith.truncf %257 : vector<8x8xf32> to vector<8x8xbf16>
    %259 = vector.extract_strided_slice %228 {offsets = [8, 0], sizes = [8, 32], strides = [1, 1]} : vector<16x32xbf16> to vector<8x32xbf16>
    %cst_134 = arith.constant dense<0.000000e+00> : vector<8x32xf32>
    %260 = tpu.matmul %258, %259, %cst_134 {dimension_numbers = #tpu.dot_dimension_numbers<[1], [0], [0], [1], [0, 0, 1, 1], [], []>} : vector<8x8xbf16>, vector<8x32xbf16>, vector<8x32xf32> -> vector<8x32xf32>
    %261 = tpu.concatenate %244, %260 in 0 : vector<8x32xf32>, vector<8x32xf32> -> vector<16x32xf32>
    %262 = arith.truncf %261 : vector<16x32xf32> to vector<16x32xbf16>
    %c2_135 = arith.constant 2 : index
    %c0_136 = arith.constant 0 : index
    %c0_137 = arith.constant 0 : index
    %263 = vector.load %arg7[%c2_135, %c0_136, %c0_137] : memref<8x32x64xbf16, #tpu.memory_space<vmem>>, vector<1x32x64xbf16>
    %264 = vector.shape_cast %263 : vector<1x32x64xbf16> to vector<32x64xbf16>
    %cst_138 = arith.constant dense<0.000000e+00> : vector<16x64xf32>
    %265 = tpu.matmul %262, %264, %cst_138 {dimension_numbers = #tpu.dot_dimension_numbers<[1], [0], [0], [1], [0, 0, 1, 1], [], []>} : vector<16x32xbf16>, vector<32x64xbf16>, vector<16x64xf32> -> vector<16x64xf32>
    %266 = arith.addf %204, %265 : vector<16x64xf32>
    %c3 = arith.constant 3 : index
    %c0_139 = arith.constant 0 : index
    %c0_140 = arith.constant 0 : index
    %267 = vector.load %arg1[%c3, %c0_139, %c0_140] : memref<8x64x32xbf16, #tpu.memory_space<vmem>>, vector<1x64x32xbf16>
    %268 = vector.shape_cast %267 : vector<1x64x32xbf16> to vector<64x32xbf16>
    %cst_141 = arith.constant dense<0.000000e+00> : vector<16x32xf32>
    %269 = tpu.matmul %203, %268, %cst_141 {dimension_numbers = #tpu.dot_dimension_numbers<[1], [0], [0], [1], [0, 0, 1, 1], [], []>} : vector<16x64xbf16>, vector<64x32xbf16>, vector<16x32xf32> -> vector<16x32xf32>
    %c3_142 = arith.constant 3 : index
    %c0_143 = arith.constant 0 : index
    %c0_144 = arith.constant 0 : index
    %270 = vector.load %arg2[%c3_142, %c0_143, %c0_144] : memref<8x1x32xf32, #tpu.memory_space<vmem>>, vector<1x1x32xf32>
    %271 = vector.shape_cast %270 : vector<1x1x32xf32> to vector<1x32xf32>
    %272 = vector.broadcast %271 : vector<1x32xf32> to vector<16x32xf32>
    %273 = arith.addf %269, %272 : vector<16x32xf32>
    %c3_145 = arith.constant 3 : index
    %c0_146 = arith.constant 0 : index
    %c0_147 = arith.constant 0 : index
    %274 = vector.load %arg3[%c3_145, %c0_146, %c0_147] : memref<8x64x32xbf16, #tpu.memory_space<vmem>>, vector<1x64x32xbf16>
    %275 = vector.shape_cast %274 : vector<1x64x32xbf16> to vector<64x32xbf16>
    %cst_148 = arith.constant dense<0.000000e+00> : vector<16x32xf32>
    %276 = tpu.matmul %203, %275, %cst_148 {dimension_numbers = #tpu.dot_dimension_numbers<[1], [0], [0], [1], [0, 0, 1, 1], [], []>} : vector<16x64xbf16>, vector<64x32xbf16>, vector<16x32xf32> -> vector<16x32xf32>
    %c3_149 = arith.constant 3 : index
    %c0_150 = arith.constant 0 : index
    %c0_151 = arith.constant 0 : index
    %277 = vector.load %arg4[%c3_149, %c0_150, %c0_151] : memref<8x1x32xf32, #tpu.memory_space<vmem>>, vector<1x1x32xf32>
    %278 = vector.shape_cast %277 : vector<1x1x32xf32> to vector<1x32xf32>
    %279 = vector.broadcast %278 : vector<1x32xf32> to vector<16x32xf32>
    %280 = arith.addf %276, %279 : vector<16x32xf32>
    %c3_152 = arith.constant 3 : index
    %c0_153 = arith.constant 0 : index
    %c0_154 = arith.constant 0 : index
    %281 = vector.load %arg5[%c3_152, %c0_153, %c0_154] : memref<8x64x32xbf16, #tpu.memory_space<vmem>>, vector<1x64x32xbf16>
    %282 = vector.shape_cast %281 : vector<1x64x32xbf16> to vector<64x32xbf16>
    %cst_155 = arith.constant dense<0.000000e+00> : vector<16x32xf32>
    %283 = tpu.matmul %203, %282, %cst_155 {dimension_numbers = #tpu.dot_dimension_numbers<[1], [0], [0], [1], [0, 0, 1, 1], [], []>} : vector<16x64xbf16>, vector<64x32xbf16>, vector<16x32xf32> -> vector<16x32xf32>
    %c3_156 = arith.constant 3 : index
    %c0_157 = arith.constant 0 : index
    %c0_158 = arith.constant 0 : index
    %284 = vector.load %arg6[%c3_156, %c0_157, %c0_158] : memref<8x1x32xf32, #tpu.memory_space<vmem>>, vector<1x1x32xf32>
    %285 = vector.shape_cast %284 : vector<1x1x32xf32> to vector<1x32xf32>
    %286 = vector.broadcast %285 : vector<1x32xf32> to vector<16x32xf32>
    %287 = arith.addf %283, %286 : vector<16x32xf32>
    %288 = arith.truncf %273 : vector<16x32xf32> to vector<16x32xbf16>
    %289 = arith.truncf %280 : vector<16x32xf32> to vector<16x32xbf16>
    %290 = arith.truncf %287 : vector<16x32xf32> to vector<16x32xbf16>
    %291 = vector.extract_strided_slice %288 {offsets = [0, 0], sizes = [8, 32], strides = [1, 1]} : vector<16x32xbf16> to vector<8x32xbf16>
    %292 = vector.extract_strided_slice %289 {offsets = [0, 0], sizes = [8, 32], strides = [1, 1]} : vector<16x32xbf16> to vector<8x32xbf16>
    %cst_159 = arith.constant dense<0.000000e+00> : vector<8x8xf32>
    %293 = tpu.matmul %291, %292, %cst_159 {dimension_numbers = #tpu.dot_dimension_numbers<[1], [1], [0], [0], [0, 0, 1, 0], [], []>} : vector<8x32xbf16>, vector<8x32xbf16>, vector<8x8xf32> -> vector<8x8xf32>
    %cst_160 = arith.constant dense<0xFF800000> : vector<8xf32>
    %294 = vector.multi_reduction <maximumf>, %293, %cst_160 [1] : vector<8x8xf32> to vector<8xf32>
    %295 = vector.shape_cast %294 : vector<8xf32> to vector<8x1xf32>
    %296 = vector.broadcast %295 : vector<8x1xf32> to vector<8x8xf32>
    %297 = arith.subf %293, %296 : vector<8x8xf32>
    %298 = math.exp %297 : vector<8x8xf32>
    %cst_161 = arith.constant dense<0.000000e+00> : vector<8xf32>
    %299 = vector.multi_reduction <add>, %298, %cst_161 [1] : vector<8x8xf32> to vector<8xf32>
    %300 = vector.shape_cast %299 : vector<8xf32> to vector<8x1xf32>
    %301 = tpu.reciprocal %300 {approx = true} : vector<8x1xf32> -> vector<8x1xf32>
    %302 = vector.broadcast %301 : vector<8x1xf32> to vector<8x8xf32>
    %303 = arith.mulf %298, %302 : vector<8x8xf32>
    %304 = arith.truncf %303 : vector<8x8xf32> to vector<8x8xbf16>
    %305 = vector.extract_strided_slice %290 {offsets = [0, 0], sizes = [8, 32], strides = [1, 1]} : vector<16x32xbf16> to vector<8x32xbf16>
    %cst_162 = arith.constant dense<0.000000e+00> : vector<8x32xf32>
    %306 = tpu.matmul %304, %305, %cst_162 {dimension_numbers = #tpu.dot_dimension_numbers<[1], [0], [0], [1], [0, 0, 1, 1], [], []>} : vector<8x8xbf16>, vector<8x32xbf16>, vector<8x32xf32> -> vector<8x32xf32>
    %307 = vector.extract_strided_slice %288 {offsets = [8, 0], sizes = [8, 32], strides = [1, 1]} : vector<16x32xbf16> to vector<8x32xbf16>
    %308 = vector.extract_strided_slice %289 {offsets = [8, 0], sizes = [8, 32], strides = [1, 1]} : vector<16x32xbf16> to vector<8x32xbf16>
    %cst_163 = arith.constant dense<0.000000e+00> : vector<8x8xf32>
    %309 = tpu.matmul %307, %308, %cst_163 {dimension_numbers = #tpu.dot_dimension_numbers<[1], [1], [0], [0], [0, 0, 1, 0], [], []>} : vector<8x32xbf16>, vector<8x32xbf16>, vector<8x8xf32> -> vector<8x8xf32>
    %cst_164 = arith.constant dense<0xFF800000> : vector<8xf32>
    %310 = vector.multi_reduction <maximumf>, %309, %cst_164 [1] : vector<8x8xf32> to vector<8xf32>
    %311 = vector.shape_cast %310 : vector<8xf32> to vector<8x1xf32>
    %312 = vector.broadcast %311 : vector<8x1xf32> to vector<8x8xf32>
    %313 = arith.subf %309, %312 : vector<8x8xf32>
    %314 = math.exp %313 : vector<8x8xf32>
    %cst_165 = arith.constant dense<0.000000e+00> : vector<8xf32>
    %315 = vector.multi_reduction <add>, %314, %cst_165 [1] : vector<8x8xf32> to vector<8xf32>
    %316 = vector.shape_cast %315 : vector<8xf32> to vector<8x1xf32>
    %317 = tpu.reciprocal %316 {approx = true} : vector<8x1xf32> -> vector<8x1xf32>
    %318 = vector.broadcast %317 : vector<8x1xf32> to vector<8x8xf32>
    %319 = arith.mulf %314, %318 : vector<8x8xf32>
    %320 = arith.truncf %319 : vector<8x8xf32> to vector<8x8xbf16>
    %321 = vector.extract_strided_slice %290 {offsets = [8, 0], sizes = [8, 32], strides = [1, 1]} : vector<16x32xbf16> to vector<8x32xbf16>
    %cst_166 = arith.constant dense<0.000000e+00> : vector<8x32xf32>
    %322 = tpu.matmul %320, %321, %cst_166 {dimension_numbers = #tpu.dot_dimension_numbers<[1], [0], [0], [1], [0, 0, 1, 1], [], []>} : vector<8x8xbf16>, vector<8x32xbf16>, vector<8x32xf32> -> vector<8x32xf32>
    %323 = tpu.concatenate %306, %322 in 0 : vector<8x32xf32>, vector<8x32xf32> -> vector<16x32xf32>
    %324 = arith.truncf %323 : vector<16x32xf32> to vector<16x32xbf16>
    %c3_167 = arith.constant 3 : index
    %c0_168 = arith.constant 0 : index
    %c0_169 = arith.constant 0 : index
    %325 = vector.load %arg7[%c3_167, %c0_168, %c0_169] : memref<8x32x64xbf16, #tpu.memory_space<vmem>>, vector<1x32x64xbf16>
    %326 = vector.shape_cast %325 : vector<1x32x64xbf16> to vector<32x64xbf16>
    %cst_170 = arith.constant dense<0.000000e+00> : vector<16x64xf32>
    %327 = tpu.matmul %324, %326, %cst_170 {dimension_numbers = #tpu.dot_dimension_numbers<[1], [0], [0], [1], [0, 0, 1, 1], [], []>} : vector<16x32xbf16>, vector<32x64xbf16>, vector<16x64xf32> -> vector<16x64xf32>
    %328 = arith.addf %266, %327 : vector<16x64xf32>
    %c1_171 = arith.constant 1 : index
    %c0_172 = arith.constant 0 : index
    %c0_173 = arith.constant 0 : index
    %329 = vector.load %arg8[%c1_171, %c0_172, %c0_173] : memref<4x1x64xf32, #tpu.memory_space<vmem>>, vector<1x1x64xf32>
    %330 = vector.shape_cast %329 : vector<1x1x64xf32> to vector<1x64xf32>
    %331 = vector.broadcast %330 : vector<1x64xf32> to vector<16x64xf32>
    %332 = arith.addf %328, %331 : vector<16x64xf32>
    %333 = arith.addf %202, %332 : vector<16x64xf32>
    %c1_174 = arith.constant 1 : index
    %c0_175 = arith.constant 0 : index
    %c0_176 = arith.constant 0 : index
    %334 = vector.load %arg13[%c1_174, %c0_175, %c0_176] : memref<4x1x64xf32, #tpu.memory_space<vmem>>, vector<1x1x64xf32>
    %335 = vector.shape_cast %334 : vector<1x1x64xf32> to vector<1x64xf32>
    %c1_177 = arith.constant 1 : index
    %c0_178 = arith.constant 0 : index
    %c0_179 = arith.constant 0 : index
    %336 = vector.load %arg14[%c1_177, %c0_178, %c0_179] : memref<4x1x64xf32, #tpu.memory_space<vmem>>, vector<1x1x64xf32>
    %337 = vector.shape_cast %336 : vector<1x1x64xf32> to vector<1x64xf32>
    %cst_180 = arith.constant dense<0.000000e+00> : vector<16xf32>
    %338 = vector.multi_reduction <add>, %333, %cst_180 [1] : vector<16x64xf32> to vector<16xf32>
    %339 = vector.shape_cast %338 : vector<16xf32> to vector<16x1xf32>
    %cst_181 = arith.constant 6.400000e+01 : f32
    %340 = vector.broadcast %cst_181 : f32 to vector<16x1xf32>
    %341 = arith.divf %339, %340 : vector<16x1xf32>
    %342 = vector.broadcast %341 : vector<16x1xf32> to vector<16x64xf32>
    %343 = arith.subf %333, %342 : vector<16x64xf32>
    %344 = arith.mulf %343, %343 : vector<16x64xf32>
    %cst_182 = arith.constant dense<0.000000e+00> : vector<16xf32>
    %345 = vector.multi_reduction <add>, %344, %cst_182 [1] : vector<16x64xf32> to vector<16xf32>
    %346 = vector.shape_cast %345 : vector<16xf32> to vector<16x1xf32>
    %cst_183 = arith.constant 6.400000e+01 : f32
    %347 = vector.broadcast %cst_183 : f32 to vector<16x1xf32>
    %348 = arith.divf %346, %347 : vector<16x1xf32>
    %349 = vector.broadcast %341 : vector<16x1xf32> to vector<16x64xf32>
    %350 = arith.subf %333, %349 : vector<16x64xf32>
    %cst_184 = arith.constant 9.99999974E-6 : f32
    %351 = vector.broadcast %cst_184 : f32 to vector<16x1xf32>
    %352 = arith.addf %348, %351 : vector<16x1xf32>
    %353 = math.rsqrt %352 : vector<16x1xf32>
    %354 = vector.broadcast %353 : vector<16x1xf32> to vector<16x64xf32>
    %355 = arith.mulf %350, %354 : vector<16x64xf32>
    %356 = vector.broadcast %335 : vector<1x64xf32> to vector<16x64xf32>
    %357 = arith.mulf %355, %356 : vector<16x64xf32>
    %358 = vector.broadcast %337 : vector<1x64xf32> to vector<16x64xf32>
    %359 = arith.addf %357, %358 : vector<16x64xf32>
    %360 = arith.truncf %359 : vector<16x64xf32> to vector<16x64xbf16>
    %c1_185 = arith.constant 1 : index
    %c0_186 = arith.constant 0 : index
    %c0_187 = arith.constant 0 : index
    %361 = vector.load %arg9[%c1_185, %c0_186, %c0_187] : memref<4x64x64xbf16, #tpu.memory_space<vmem>>, vector<1x64x64xbf16>
    %362 = vector.shape_cast %361 : vector<1x64x64xbf16> to vector<64x64xbf16>
    %cst_188 = arith.constant dense<0.000000e+00> : vector<16x64xf32>
    %363 = tpu.matmul %360, %362, %cst_188 {dimension_numbers = #tpu.dot_dimension_numbers<[1], [0], [0], [1], [0, 0, 1, 1], [], []>} : vector<16x64xbf16>, vector<64x64xbf16>, vector<16x64xf32> -> vector<16x64xf32>
    %c1_189 = arith.constant 1 : index
    %c0_190 = arith.constant 0 : index
    %c0_191 = arith.constant 0 : index
    %364 = vector.load %arg10[%c1_189, %c0_190, %c0_191] : memref<4x1x64xf32, #tpu.memory_space<vmem>>, vector<1x1x64xf32>
    %365 = vector.shape_cast %364 : vector<1x1x64xf32> to vector<1x64xf32>
    %366 = vector.broadcast %365 : vector<1x64xf32> to vector<16x64xf32>
    %367 = arith.addf %363, %366 : vector<16x64xf32>
    %cst_192 = arith.constant 0.000000e+00 : f32
    %368 = vector.broadcast %cst_192 : f32 to vector<16x64xf32>
    %369 = arith.maximumf %367, %368 : vector<16x64xf32>
    %370 = arith.truncf %369 : vector<16x64xf32> to vector<16x64xbf16>
    %c1_193 = arith.constant 1 : index
    %c0_194 = arith.constant 0 : index
    %c0_195 = arith.constant 0 : index
    %371 = vector.load %arg11[%c1_193, %c0_194, %c0_195] : memref<4x64x64xbf16, #tpu.memory_space<vmem>>, vector<1x64x64xbf16>
    %372 = vector.shape_cast %371 : vector<1x64x64xbf16> to vector<64x64xbf16>
    %cst_196 = arith.constant dense<0.000000e+00> : vector<16x64xf32>
    %373 = tpu.matmul %370, %372, %cst_196 {dimension_numbers = #tpu.dot_dimension_numbers<[1], [0], [0], [1], [0, 0, 1, 1], [], []>} : vector<16x64xbf16>, vector<64x64xbf16>, vector<16x64xf32> -> vector<16x64xf32>
    %c1_197 = arith.constant 1 : index
    %c0_198 = arith.constant 0 : index
    %c0_199 = arith.constant 0 : index
    %374 = vector.load %arg12[%c1_197, %c0_198, %c0_199] : memref<4x1x64xf32, #tpu.memory_space<vmem>>, vector<1x1x64xf32>
    %375 = vector.shape_cast %374 : vector<1x1x64xf32> to vector<1x64xf32>
    %376 = vector.broadcast %375 : vector<1x64xf32> to vector<16x64xf32>
    %377 = arith.addf %373, %376 : vector<16x64xf32>
    %378 = arith.addf %359, %377 : vector<16x64xf32>
    %c1_200 = arith.constant 1 : index
    %c0_201 = arith.constant 0 : index
    %c0_202 = arith.constant 0 : index
    %379 = vector.load %arg15[%c1_200, %c0_201, %c0_202] : memref<4x1x64xf32, #tpu.memory_space<vmem>>, vector<1x1x64xf32>
    %380 = vector.shape_cast %379 : vector<1x1x64xf32> to vector<1x64xf32>
    %c1_203 = arith.constant 1 : index
    %c0_204 = arith.constant 0 : index
    %c0_205 = arith.constant 0 : index
    %381 = vector.load %arg16[%c1_203, %c0_204, %c0_205] : memref<4x1x64xf32, #tpu.memory_space<vmem>>, vector<1x1x64xf32>
    %382 = vector.shape_cast %381 : vector<1x1x64xf32> to vector<1x64xf32>
    %cst_206 = arith.constant dense<0.000000e+00> : vector<16xf32>
    %383 = vector.multi_reduction <add>, %378, %cst_206 [1] : vector<16x64xf32> to vector<16xf32>
    %384 = vector.shape_cast %383 : vector<16xf32> to vector<16x1xf32>
    %cst_207 = arith.constant 6.400000e+01 : f32
    %385 = vector.broadcast %cst_207 : f32 to vector<16x1xf32>
    %386 = arith.divf %384, %385 : vector<16x1xf32>
    %387 = vector.broadcast %386 : vector<16x1xf32> to vector<16x64xf32>
    %388 = arith.subf %378, %387 : vector<16x64xf32>
    %389 = arith.mulf %388, %388 : vector<16x64xf32>
    %cst_208 = arith.constant dense<0.000000e+00> : vector<16xf32>
    %390 = vector.multi_reduction <add>, %389, %cst_208 [1] : vector<16x64xf32> to vector<16xf32>
    %391 = vector.shape_cast %390 : vector<16xf32> to vector<16x1xf32>
    %cst_209 = arith.constant 6.400000e+01 : f32
    %392 = vector.broadcast %cst_209 : f32 to vector<16x1xf32>
    %393 = arith.divf %391, %392 : vector<16x1xf32>
    %394 = vector.broadcast %386 : vector<16x1xf32> to vector<16x64xf32>
    %395 = arith.subf %378, %394 : vector<16x64xf32>
    %cst_210 = arith.constant 9.99999974E-6 : f32
    %396 = vector.broadcast %cst_210 : f32 to vector<16x1xf32>
    %397 = arith.addf %393, %396 : vector<16x1xf32>
    %398 = math.rsqrt %397 : vector<16x1xf32>
    %399 = vector.broadcast %398 : vector<16x1xf32> to vector<16x64xf32>
    %400 = arith.mulf %395, %399 : vector<16x64xf32>
    %401 = vector.broadcast %380 : vector<1x64xf32> to vector<16x64xf32>
    %402 = arith.mulf %400, %401 : vector<16x64xf32>
    %403 = vector.broadcast %382 : vector<1x64xf32> to vector<16x64xf32>
    %404 = arith.addf %402, %403 : vector<16x64xf32>
    %405 = arith.truncf %404 : vector<16x64xf32> to vector<16x64xbf16>
    %cst_211 = arith.constant 0.000000e+00 : f32
    %406 = vector.broadcast %cst_211 : f32 to vector<16x64xf32>
    %c4 = arith.constant 4 : index
    %c0_212 = arith.constant 0 : index
    %c0_213 = arith.constant 0 : index
    %407 = vector.load %arg1[%c4, %c0_212, %c0_213] : memref<8x64x32xbf16, #tpu.memory_space<vmem>>, vector<1x64x32xbf16>
    %408 = vector.shape_cast %407 : vector<1x64x32xbf16> to vector<64x32xbf16>
    %cst_214 = arith.constant dense<0.000000e+00> : vector<16x32xf32>
    %409 = tpu.matmul %405, %408, %cst_214 {dimension_numbers = #tpu.dot_dimension_numbers<[1], [0], [0], [1], [0, 0, 1, 1], [], []>} : vector<16x64xbf16>, vector<64x32xbf16>, vector<16x32xf32> -> vector<16x32xf32>
    %c4_215 = arith.constant 4 : index
    %c0_216 = arith.constant 0 : index
    %c0_217 = arith.constant 0 : index
    %410 = vector.load %arg2[%c4_215, %c0_216, %c0_217] : memref<8x1x32xf32, #tpu.memory_space<vmem>>, vector<1x1x32xf32>
    %411 = vector.shape_cast %410 : vector<1x1x32xf32> to vector<1x32xf32>
    %412 = vector.broadcast %411 : vector<1x32xf32> to vector<16x32xf32>
    %413 = arith.addf %409, %412 : vector<16x32xf32>
    %c4_218 = arith.constant 4 : index
    %c0_219 = arith.constant 0 : index
    %c0_220 = arith.constant 0 : index
    %414 = vector.load %arg3[%c4_218, %c0_219, %c0_220] : memref<8x64x32xbf16, #tpu.memory_space<vmem>>, vector<1x64x32xbf16>
    %415 = vector.shape_cast %414 : vector<1x64x32xbf16> to vector<64x32xbf16>
    %cst_221 = arith.constant dense<0.000000e+00> : vector<16x32xf32>
    %416 = tpu.matmul %405, %415, %cst_221 {dimension_numbers = #tpu.dot_dimension_numbers<[1], [0], [0], [1], [0, 0, 1, 1], [], []>} : vector<16x64xbf16>, vector<64x32xbf16>, vector<16x32xf32> -> vector<16x32xf32>
    %c4_222 = arith.constant 4 : index
    %c0_223 = arith.constant 0 : index
    %c0_224 = arith.constant 0 : index
    %417 = vector.load %arg4[%c4_222, %c0_223, %c0_224] : memref<8x1x32xf32, #tpu.memory_space<vmem>>, vector<1x1x32xf32>
    %418 = vector.shape_cast %417 : vector<1x1x32xf32> to vector<1x32xf32>
    %419 = vector.broadcast %418 : vector<1x32xf32> to vector<16x32xf32>
    %420 = arith.addf %416, %419 : vector<16x32xf32>
    %c4_225 = arith.constant 4 : index
    %c0_226 = arith.constant 0 : index
    %c0_227 = arith.constant 0 : index
    %421 = vector.load %arg5[%c4_225, %c0_226, %c0_227] : memref<8x64x32xbf16, #tpu.memory_space<vmem>>, vector<1x64x32xbf16>
    %422 = vector.shape_cast %421 : vector<1x64x32xbf16> to vector<64x32xbf16>
    %cst_228 = arith.constant dense<0.000000e+00> : vector<16x32xf32>
    %423 = tpu.matmul %405, %422, %cst_228 {dimension_numbers = #tpu.dot_dimension_numbers<[1], [0], [0], [1], [0, 0, 1, 1], [], []>} : vector<16x64xbf16>, vector<64x32xbf16>, vector<16x32xf32> -> vector<16x32xf32>
    %c4_229 = arith.constant 4 : index
    %c0_230 = arith.constant 0 : index
    %c0_231 = arith.constant 0 : index
    %424 = vector.load %arg6[%c4_229, %c0_230, %c0_231] : memref<8x1x32xf32, #tpu.memory_space<vmem>>, vector<1x1x32xf32>
    %425 = vector.shape_cast %424 : vector<1x1x32xf32> to vector<1x32xf32>
    %426 = vector.broadcast %425 : vector<1x32xf32> to vector<16x32xf32>
    %427 = arith.addf %423, %426 : vector<16x32xf32>
    %428 = arith.truncf %413 : vector<16x32xf32> to vector<16x32xbf16>
    %429 = arith.truncf %420 : vector<16x32xf32> to vector<16x32xbf16>
    %430 = arith.truncf %427 : vector<16x32xf32> to vector<16x32xbf16>
    %431 = vector.extract_strided_slice %428 {offsets = [0, 0], sizes = [8, 32], strides = [1, 1]} : vector<16x32xbf16> to vector<8x32xbf16>
    %432 = vector.extract_strided_slice %429 {offsets = [0, 0], sizes = [8, 32], strides = [1, 1]} : vector<16x32xbf16> to vector<8x32xbf16>
    %cst_232 = arith.constant dense<0.000000e+00> : vector<8x8xf32>
    %433 = tpu.matmul %431, %432, %cst_232 {dimension_numbers = #tpu.dot_dimension_numbers<[1], [1], [0], [0], [0, 0, 1, 0], [], []>} : vector<8x32xbf16>, vector<8x32xbf16>, vector<8x8xf32> -> vector<8x8xf32>
    %cst_233 = arith.constant dense<0xFF800000> : vector<8xf32>
    %434 = vector.multi_reduction <maximumf>, %433, %cst_233 [1] : vector<8x8xf32> to vector<8xf32>
    %435 = vector.shape_cast %434 : vector<8xf32> to vector<8x1xf32>
    %436 = vector.broadcast %435 : vector<8x1xf32> to vector<8x8xf32>
    %437 = arith.subf %433, %436 : vector<8x8xf32>
    %438 = math.exp %437 : vector<8x8xf32>
    %cst_234 = arith.constant dense<0.000000e+00> : vector<8xf32>
    %439 = vector.multi_reduction <add>, %438, %cst_234 [1] : vector<8x8xf32> to vector<8xf32>
    %440 = vector.shape_cast %439 : vector<8xf32> to vector<8x1xf32>
    %441 = tpu.reciprocal %440 {approx = true} : vector<8x1xf32> -> vector<8x1xf32>
    %442 = vector.broadcast %441 : vector<8x1xf32> to vector<8x8xf32>
    %443 = arith.mulf %438, %442 : vector<8x8xf32>
    %444 = arith.truncf %443 : vector<8x8xf32> to vector<8x8xbf16>
    %445 = vector.extract_strided_slice %430 {offsets = [0, 0], sizes = [8, 32], strides = [1, 1]} : vector<16x32xbf16> to vector<8x32xbf16>
    %cst_235 = arith.constant dense<0.000000e+00> : vector<8x32xf32>
    %446 = tpu.matmul %444, %445, %cst_235 {dimension_numbers = #tpu.dot_dimension_numbers<[1], [0], [0], [1], [0, 0, 1, 1], [], []>} : vector<8x8xbf16>, vector<8x32xbf16>, vector<8x32xf32> -> vector<8x32xf32>
    %447 = vector.extract_strided_slice %428 {offsets = [8, 0], sizes = [8, 32], strides = [1, 1]} : vector<16x32xbf16> to vector<8x32xbf16>
    %448 = vector.extract_strided_slice %429 {offsets = [8, 0], sizes = [8, 32], strides = [1, 1]} : vector<16x32xbf16> to vector<8x32xbf16>
    %cst_236 = arith.constant dense<0.000000e+00> : vector<8x8xf32>
    %449 = tpu.matmul %447, %448, %cst_236 {dimension_numbers = #tpu.dot_dimension_numbers<[1], [1], [0], [0], [0, 0, 1, 0], [], []>} : vector<8x32xbf16>, vector<8x32xbf16>, vector<8x8xf32> -> vector<8x8xf32>
    %cst_237 = arith.constant dense<0xFF800000> : vector<8xf32>
    %450 = vector.multi_reduction <maximumf>, %449, %cst_237 [1] : vector<8x8xf32> to vector<8xf32>
    %451 = vector.shape_cast %450 : vector<8xf32> to vector<8x1xf32>
    %452 = vector.broadcast %451 : vector<8x1xf32> to vector<8x8xf32>
    %453 = arith.subf %449, %452 : vector<8x8xf32>
    %454 = math.exp %453 : vector<8x8xf32>
    %cst_238 = arith.constant dense<0.000000e+00> : vector<8xf32>
    %455 = vector.multi_reduction <add>, %454, %cst_238 [1] : vector<8x8xf32> to vector<8xf32>
    %456 = vector.shape_cast %455 : vector<8xf32> to vector<8x1xf32>
    %457 = tpu.reciprocal %456 {approx = true} : vector<8x1xf32> -> vector<8x1xf32>
    %458 = vector.broadcast %457 : vector<8x1xf32> to vector<8x8xf32>
    %459 = arith.mulf %454, %458 : vector<8x8xf32>
    %460 = arith.truncf %459 : vector<8x8xf32> to vector<8x8xbf16>
    %461 = vector.extract_strided_slice %430 {offsets = [8, 0], sizes = [8, 32], strides = [1, 1]} : vector<16x32xbf16> to vector<8x32xbf16>
    %cst_239 = arith.constant dense<0.000000e+00> : vector<8x32xf32>
    %462 = tpu.matmul %460, %461, %cst_239 {dimension_numbers = #tpu.dot_dimension_numbers<[1], [0], [0], [1], [0, 0, 1, 1], [], []>} : vector<8x8xbf16>, vector<8x32xbf16>, vector<8x32xf32> -> vector<8x32xf32>
    %463 = tpu.concatenate %446, %462 in 0 : vector<8x32xf32>, vector<8x32xf32> -> vector<16x32xf32>
    %464 = arith.truncf %463 : vector<16x32xf32> to vector<16x32xbf16>
    %c4_240 = arith.constant 4 : index
    %c0_241 = arith.constant 0 : index
    %c0_242 = arith.constant 0 : index
    %465 = vector.load %arg7[%c4_240, %c0_241, %c0_242] : memref<8x32x64xbf16, #tpu.memory_space<vmem>>, vector<1x32x64xbf16>
    %466 = vector.shape_cast %465 : vector<1x32x64xbf16> to vector<32x64xbf16>
    %cst_243 = arith.constant dense<0.000000e+00> : vector<16x64xf32>
    %467 = tpu.matmul %464, %466, %cst_243 {dimension_numbers = #tpu.dot_dimension_numbers<[1], [0], [0], [1], [0, 0, 1, 1], [], []>} : vector<16x32xbf16>, vector<32x64xbf16>, vector<16x64xf32> -> vector<16x64xf32>
    %468 = arith.addf %406, %467 : vector<16x64xf32>
    %c5 = arith.constant 5 : index
    %c0_244 = arith.constant 0 : index
    %c0_245 = arith.constant 0 : index
    %469 = vector.load %arg1[%c5, %c0_244, %c0_245] : memref<8x64x32xbf16, #tpu.memory_space<vmem>>, vector<1x64x32xbf16>
    %470 = vector.shape_cast %469 : vector<1x64x32xbf16> to vector<64x32xbf16>
    %cst_246 = arith.constant dense<0.000000e+00> : vector<16x32xf32>
    %471 = tpu.matmul %405, %470, %cst_246 {dimension_numbers = #tpu.dot_dimension_numbers<[1], [0], [0], [1], [0, 0, 1, 1], [], []>} : vector<16x64xbf16>, vector<64x32xbf16>, vector<16x32xf32> -> vector<16x32xf32>
    %c5_247 = arith.constant 5 : index
    %c0_248 = arith.constant 0 : index
    %c0_249 = arith.constant 0 : index
    %472 = vector.load %arg2[%c5_247, %c0_248, %c0_249] : memref<8x1x32xf32, #tpu.memory_space<vmem>>, vector<1x1x32xf32>
    %473 = vector.shape_cast %472 : vector<1x1x32xf32> to vector<1x32xf32>
    %474 = vector.broadcast %473 : vector<1x32xf32> to vector<16x32xf32>
    %475 = arith.addf %471, %474 : vector<16x32xf32>
    %c5_250 = arith.constant 5 : index
    %c0_251 = arith.constant 0 : index
    %c0_252 = arith.constant 0 : index
    %476 = vector.load %arg3[%c5_250, %c0_251, %c0_252] : memref<8x64x32xbf16, #tpu.memory_space<vmem>>, vector<1x64x32xbf16>
    %477 = vector.shape_cast %476 : vector<1x64x32xbf16> to vector<64x32xbf16>
    %cst_253 = arith.constant dense<0.000000e+00> : vector<16x32xf32>
    %478 = tpu.matmul %405, %477, %cst_253 {dimension_numbers = #tpu.dot_dimension_numbers<[1], [0], [0], [1], [0, 0, 1, 1], [], []>} : vector<16x64xbf16>, vector<64x32xbf16>, vector<16x32xf32> -> vector<16x32xf32>
    %c5_254 = arith.constant 5 : index
    %c0_255 = arith.constant 0 : index
    %c0_256 = arith.constant 0 : index
    %479 = vector.load %arg4[%c5_254, %c0_255, %c0_256] : memref<8x1x32xf32, #tpu.memory_space<vmem>>, vector<1x1x32xf32>
    %480 = vector.shape_cast %479 : vector<1x1x32xf32> to vector<1x32xf32>
    %481 = vector.broadcast %480 : vector<1x32xf32> to vector<16x32xf32>
    %482 = arith.addf %478, %481 : vector<16x32xf32>
    %c5_257 = arith.constant 5 : index
    %c0_258 = arith.constant 0 : index
    %c0_259 = arith.constant 0 : index
    %483 = vector.load %arg5[%c5_257, %c0_258, %c0_259] : memref<8x64x32xbf16, #tpu.memory_space<vmem>>, vector<1x64x32xbf16>
    %484 = vector.shape_cast %483 : vector<1x64x32xbf16> to vector<64x32xbf16>
    %cst_260 = arith.constant dense<0.000000e+00> : vector<16x32xf32>
    %485 = tpu.matmul %405, %484, %cst_260 {dimension_numbers = #tpu.dot_dimension_numbers<[1], [0], [0], [1], [0, 0, 1, 1], [], []>} : vector<16x64xbf16>, vector<64x32xbf16>, vector<16x32xf32> -> vector<16x32xf32>
    %c5_261 = arith.constant 5 : index
    %c0_262 = arith.constant 0 : index
    %c0_263 = arith.constant 0 : index
    %486 = vector.load %arg6[%c5_261, %c0_262, %c0_263] : memref<8x1x32xf32, #tpu.memory_space<vmem>>, vector<1x1x32xf32>
    %487 = vector.shape_cast %486 : vector<1x1x32xf32> to vector<1x32xf32>
    %488 = vector.broadcast %487 : vector<1x32xf32> to vector<16x32xf32>
    %489 = arith.addf %485, %488 : vector<16x32xf32>
    %490 = arith.truncf %475 : vector<16x32xf32> to vector<16x32xbf16>
    %491 = arith.truncf %482 : vector<16x32xf32> to vector<16x32xbf16>
    %492 = arith.truncf %489 : vector<16x32xf32> to vector<16x32xbf16>
    %493 = vector.extract_strided_slice %490 {offsets = [0, 0], sizes = [8, 32], strides = [1, 1]} : vector<16x32xbf16> to vector<8x32xbf16>
    %494 = vector.extract_strided_slice %491 {offsets = [0, 0], sizes = [8, 32], strides = [1, 1]} : vector<16x32xbf16> to vector<8x32xbf16>
    %cst_264 = arith.constant dense<0.000000e+00> : vector<8x8xf32>
    %495 = tpu.matmul %493, %494, %cst_264 {dimension_numbers = #tpu.dot_dimension_numbers<[1], [1], [0], [0], [0, 0, 1, 0], [], []>} : vector<8x32xbf16>, vector<8x32xbf16>, vector<8x8xf32> -> vector<8x8xf32>
    %cst_265 = arith.constant dense<0xFF800000> : vector<8xf32>
    %496 = vector.multi_reduction <maximumf>, %495, %cst_265 [1] : vector<8x8xf32> to vector<8xf32>
    %497 = vector.shape_cast %496 : vector<8xf32> to vector<8x1xf32>
    %498 = vector.broadcast %497 : vector<8x1xf32> to vector<8x8xf32>
    %499 = arith.subf %495, %498 : vector<8x8xf32>
    %500 = math.exp %499 : vector<8x8xf32>
    %cst_266 = arith.constant dense<0.000000e+00> : vector<8xf32>
    %501 = vector.multi_reduction <add>, %500, %cst_266 [1] : vector<8x8xf32> to vector<8xf32>
    %502 = vector.shape_cast %501 : vector<8xf32> to vector<8x1xf32>
    %503 = tpu.reciprocal %502 {approx = true} : vector<8x1xf32> -> vector<8x1xf32>
    %504 = vector.broadcast %503 : vector<8x1xf32> to vector<8x8xf32>
    %505 = arith.mulf %500, %504 : vector<8x8xf32>
    %506 = arith.truncf %505 : vector<8x8xf32> to vector<8x8xbf16>
    %507 = vector.extract_strided_slice %492 {offsets = [0, 0], sizes = [8, 32], strides = [1, 1]} : vector<16x32xbf16> to vector<8x32xbf16>
    %cst_267 = arith.constant dense<0.000000e+00> : vector<8x32xf32>
    %508 = tpu.matmul %506, %507, %cst_267 {dimension_numbers = #tpu.dot_dimension_numbers<[1], [0], [0], [1], [0, 0, 1, 1], [], []>} : vector<8x8xbf16>, vector<8x32xbf16>, vector<8x32xf32> -> vector<8x32xf32>
    %509 = vector.extract_strided_slice %490 {offsets = [8, 0], sizes = [8, 32], strides = [1, 1]} : vector<16x32xbf16> to vector<8x32xbf16>
    %510 = vector.extract_strided_slice %491 {offsets = [8, 0], sizes = [8, 32], strides = [1, 1]} : vector<16x32xbf16> to vector<8x32xbf16>
    %cst_268 = arith.constant dense<0.000000e+00> : vector<8x8xf32>
    %511 = tpu.matmul %509, %510, %cst_268 {dimension_numbers = #tpu.dot_dimension_numbers<[1], [1], [0], [0], [0, 0, 1, 0], [], []>} : vector<8x32xbf16>, vector<8x32xbf16>, vector<8x8xf32> -> vector<8x8xf32>
    %cst_269 = arith.constant dense<0xFF800000> : vector<8xf32>
    %512 = vector.multi_reduction <maximumf>, %511, %cst_269 [1] : vector<8x8xf32> to vector<8xf32>
    %513 = vector.shape_cast %512 : vector<8xf32> to vector<8x1xf32>
    %514 = vector.broadcast %513 : vector<8x1xf32> to vector<8x8xf32>
    %515 = arith.subf %511, %514 : vector<8x8xf32>
    %516 = math.exp %515 : vector<8x8xf32>
    %cst_270 = arith.constant dense<0.000000e+00> : vector<8xf32>
    %517 = vector.multi_reduction <add>, %516, %cst_270 [1] : vector<8x8xf32> to vector<8xf32>
    %518 = vector.shape_cast %517 : vector<8xf32> to vector<8x1xf32>
    %519 = tpu.reciprocal %518 {approx = true} : vector<8x1xf32> -> vector<8x1xf32>
    %520 = vector.broadcast %519 : vector<8x1xf32> to vector<8x8xf32>
    %521 = arith.mulf %516, %520 : vector<8x8xf32>
    %522 = arith.truncf %521 : vector<8x8xf32> to vector<8x8xbf16>
    %523 = vector.extract_strided_slice %492 {offsets = [8, 0], sizes = [8, 32], strides = [1, 1]} : vector<16x32xbf16> to vector<8x32xbf16>
    %cst_271 = arith.constant dense<0.000000e+00> : vector<8x32xf32>
    %524 = tpu.matmul %522, %523, %cst_271 {dimension_numbers = #tpu.dot_dimension_numbers<[1], [0], [0], [1], [0, 0, 1, 1], [], []>} : vector<8x8xbf16>, vector<8x32xbf16>, vector<8x32xf32> -> vector<8x32xf32>
    %525 = tpu.concatenate %508, %524 in 0 : vector<8x32xf32>, vector<8x32xf32> -> vector<16x32xf32>
    %526 = arith.truncf %525 : vector<16x32xf32> to vector<16x32xbf16>
    %c5_272 = arith.constant 5 : index
    %c0_273 = arith.constant 0 : index
    %c0_274 = arith.constant 0 : index
    %527 = vector.load %arg7[%c5_272, %c0_273, %c0_274] : memref<8x32x64xbf16, #tpu.memory_space<vmem>>, vector<1x32x64xbf16>
    %528 = vector.shape_cast %527 : vector<1x32x64xbf16> to vector<32x64xbf16>
    %cst_275 = arith.constant dense<0.000000e+00> : vector<16x64xf32>
    %529 = tpu.matmul %526, %528, %cst_275 {dimension_numbers = #tpu.dot_dimension_numbers<[1], [0], [0], [1], [0, 0, 1, 1], [], []>} : vector<16x32xbf16>, vector<32x64xbf16>, vector<16x64xf32> -> vector<16x64xf32>
    %530 = arith.addf %468, %529 : vector<16x64xf32>
    %c2_276 = arith.constant 2 : index
    %c0_277 = arith.constant 0 : index
    %c0_278 = arith.constant 0 : index
    %531 = vector.load %arg8[%c2_276, %c0_277, %c0_278] : memref<4x1x64xf32, #tpu.memory_space<vmem>>, vector<1x1x64xf32>
    %532 = vector.shape_cast %531 : vector<1x1x64xf32> to vector<1x64xf32>
    %533 = vector.broadcast %532 : vector<1x64xf32> to vector<16x64xf32>
    %534 = arith.addf %530, %533 : vector<16x64xf32>
    %535 = arith.addf %404, %534 : vector<16x64xf32>
    %c2_279 = arith.constant 2 : index
    %c0_280 = arith.constant 0 : index
    %c0_281 = arith.constant 0 : index
    %536 = vector.load %arg13[%c2_279, %c0_280, %c0_281] : memref<4x1x64xf32, #tpu.memory_space<vmem>>, vector<1x1x64xf32>
    %537 = vector.shape_cast %536 : vector<1x1x64xf32> to vector<1x64xf32>
    %c2_282 = arith.constant 2 : index
    %c0_283 = arith.constant 0 : index
    %c0_284 = arith.constant 0 : index
    %538 = vector.load %arg14[%c2_282, %c0_283, %c0_284] : memref<4x1x64xf32, #tpu.memory_space<vmem>>, vector<1x1x64xf32>
    %539 = vector.shape_cast %538 : vector<1x1x64xf32> to vector<1x64xf32>
    %cst_285 = arith.constant dense<0.000000e+00> : vector<16xf32>
    %540 = vector.multi_reduction <add>, %535, %cst_285 [1] : vector<16x64xf32> to vector<16xf32>
    %541 = vector.shape_cast %540 : vector<16xf32> to vector<16x1xf32>
    %cst_286 = arith.constant 6.400000e+01 : f32
    %542 = vector.broadcast %cst_286 : f32 to vector<16x1xf32>
    %543 = arith.divf %541, %542 : vector<16x1xf32>
    %544 = vector.broadcast %543 : vector<16x1xf32> to vector<16x64xf32>
    %545 = arith.subf %535, %544 : vector<16x64xf32>
    %546 = arith.mulf %545, %545 : vector<16x64xf32>
    %cst_287 = arith.constant dense<0.000000e+00> : vector<16xf32>
    %547 = vector.multi_reduction <add>, %546, %cst_287 [1] : vector<16x64xf32> to vector<16xf32>
    %548 = vector.shape_cast %547 : vector<16xf32> to vector<16x1xf32>
    %cst_288 = arith.constant 6.400000e+01 : f32
    %549 = vector.broadcast %cst_288 : f32 to vector<16x1xf32>
    %550 = arith.divf %548, %549 : vector<16x1xf32>
    %551 = vector.broadcast %543 : vector<16x1xf32> to vector<16x64xf32>
    %552 = arith.subf %535, %551 : vector<16x64xf32>
    %cst_289 = arith.constant 9.99999974E-6 : f32
    %553 = vector.broadcast %cst_289 : f32 to vector<16x1xf32>
    %554 = arith.addf %550, %553 : vector<16x1xf32>
    %555 = math.rsqrt %554 : vector<16x1xf32>
    %556 = vector.broadcast %555 : vector<16x1xf32> to vector<16x64xf32>
    %557 = arith.mulf %552, %556 : vector<16x64xf32>
    %558 = vector.broadcast %537 : vector<1x64xf32> to vector<16x64xf32>
    %559 = arith.mulf %557, %558 : vector<16x64xf32>
    %560 = vector.broadcast %539 : vector<1x64xf32> to vector<16x64xf32>
    %561 = arith.addf %559, %560 : vector<16x64xf32>
    %562 = arith.truncf %561 : vector<16x64xf32> to vector<16x64xbf16>
    %c2_290 = arith.constant 2 : index
    %c0_291 = arith.constant 0 : index
    %c0_292 = arith.constant 0 : index
    %563 = vector.load %arg9[%c2_290, %c0_291, %c0_292] : memref<4x64x64xbf16, #tpu.memory_space<vmem>>, vector<1x64x64xbf16>
    %564 = vector.shape_cast %563 : vector<1x64x64xbf16> to vector<64x64xbf16>
    %cst_293 = arith.constant dense<0.000000e+00> : vector<16x64xf32>
    %565 = tpu.matmul %562, %564, %cst_293 {dimension_numbers = #tpu.dot_dimension_numbers<[1], [0], [0], [1], [0, 0, 1, 1], [], []>} : vector<16x64xbf16>, vector<64x64xbf16>, vector<16x64xf32> -> vector<16x64xf32>
    %c2_294 = arith.constant 2 : index
    %c0_295 = arith.constant 0 : index
    %c0_296 = arith.constant 0 : index
    %566 = vector.load %arg10[%c2_294, %c0_295, %c0_296] : memref<4x1x64xf32, #tpu.memory_space<vmem>>, vector<1x1x64xf32>
    %567 = vector.shape_cast %566 : vector<1x1x64xf32> to vector<1x64xf32>
    %568 = vector.broadcast %567 : vector<1x64xf32> to vector<16x64xf32>
    %569 = arith.addf %565, %568 : vector<16x64xf32>
    %cst_297 = arith.constant 0.000000e+00 : f32
    %570 = vector.broadcast %cst_297 : f32 to vector<16x64xf32>
    %571 = arith.maximumf %569, %570 : vector<16x64xf32>
    %572 = arith.truncf %571 : vector<16x64xf32> to vector<16x64xbf16>
    %c2_298 = arith.constant 2 : index
    %c0_299 = arith.constant 0 : index
    %c0_300 = arith.constant 0 : index
    %573 = vector.load %arg11[%c2_298, %c0_299, %c0_300] : memref<4x64x64xbf16, #tpu.memory_space<vmem>>, vector<1x64x64xbf16>
    %574 = vector.shape_cast %573 : vector<1x64x64xbf16> to vector<64x64xbf16>
    %cst_301 = arith.constant dense<0.000000e+00> : vector<16x64xf32>
    %575 = tpu.matmul %572, %574, %cst_301 {dimension_numbers = #tpu.dot_dimension_numbers<[1], [0], [0], [1], [0, 0, 1, 1], [], []>} : vector<16x64xbf16>, vector<64x64xbf16>, vector<16x64xf32> -> vector<16x64xf32>
    %c2_302 = arith.constant 2 : index
    %c0_303 = arith.constant 0 : index
    %c0_304 = arith.constant 0 : index
    %576 = vector.load %arg12[%c2_302, %c0_303, %c0_304] : memref<4x1x64xf32, #tpu.memory_space<vmem>>, vector<1x1x64xf32>
    %577 = vector.shape_cast %576 : vector<1x1x64xf32> to vector<1x64xf32>
    %578 = vector.broadcast %577 : vector<1x64xf32> to vector<16x64xf32>
    %579 = arith.addf %575, %578 : vector<16x64xf32>
    %580 = arith.addf %561, %579 : vector<16x64xf32>
    %c2_305 = arith.constant 2 : index
    %c0_306 = arith.constant 0 : index
    %c0_307 = arith.constant 0 : index
    %581 = vector.load %arg15[%c2_305, %c0_306, %c0_307] : memref<4x1x64xf32, #tpu.memory_space<vmem>>, vector<1x1x64xf32>
    %582 = vector.shape_cast %581 : vector<1x1x64xf32> to vector<1x64xf32>
    %c2_308 = arith.constant 2 : index
    %c0_309 = arith.constant 0 : index
    %c0_310 = arith.constant 0 : index
    %583 = vector.load %arg16[%c2_308, %c0_309, %c0_310] : memref<4x1x64xf32, #tpu.memory_space<vmem>>, vector<1x1x64xf32>
    %584 = vector.shape_cast %583 : vector<1x1x64xf32> to vector<1x64xf32>
    %cst_311 = arith.constant dense<0.000000e+00> : vector<16xf32>
    %585 = vector.multi_reduction <add>, %580, %cst_311 [1] : vector<16x64xf32> to vector<16xf32>
    %586 = vector.shape_cast %585 : vector<16xf32> to vector<16x1xf32>
    %cst_312 = arith.constant 6.400000e+01 : f32
    %587 = vector.broadcast %cst_312 : f32 to vector<16x1xf32>
    %588 = arith.divf %586, %587 : vector<16x1xf32>
    %589 = vector.broadcast %588 : vector<16x1xf32> to vector<16x64xf32>
    %590 = arith.subf %580, %589 : vector<16x64xf32>
    %591 = arith.mulf %590, %590 : vector<16x64xf32>
    %cst_313 = arith.constant dense<0.000000e+00> : vector<16xf32>
    %592 = vector.multi_reduction <add>, %591, %cst_313 [1] : vector<16x64xf32> to vector<16xf32>
    %593 = vector.shape_cast %592 : vector<16xf32> to vector<16x1xf32>
    %cst_314 = arith.constant 6.400000e+01 : f32
    %594 = vector.broadcast %cst_314 : f32 to vector<16x1xf32>
    %595 = arith.divf %593, %594 : vector<16x1xf32>
    %596 = vector.broadcast %588 : vector<16x1xf32> to vector<16x64xf32>
    %597 = arith.subf %580, %596 : vector<16x64xf32>
    %cst_315 = arith.constant 9.99999974E-6 : f32
    %598 = vector.broadcast %cst_315 : f32 to vector<16x1xf32>
    %599 = arith.addf %595, %598 : vector<16x1xf32>
    %600 = math.rsqrt %599 : vector<16x1xf32>
    %601 = vector.broadcast %600 : vector<16x1xf32> to vector<16x64xf32>
    %602 = arith.mulf %597, %601 : vector<16x64xf32>
    %603 = vector.broadcast %582 : vector<1x64xf32> to vector<16x64xf32>
    %604 = arith.mulf %602, %603 : vector<16x64xf32>
    %605 = vector.broadcast %584 : vector<1x64xf32> to vector<16x64xf32>
    %606 = arith.addf %604, %605 : vector<16x64xf32>
    %607 = arith.truncf %606 : vector<16x64xf32> to vector<16x64xbf16>
    %cst_316 = arith.constant 0.000000e+00 : f32
    %608 = vector.broadcast %cst_316 : f32 to vector<16x64xf32>
    %c6 = arith.constant 6 : index
    %c0_317 = arith.constant 0 : index
    %c0_318 = arith.constant 0 : index
    %609 = vector.load %arg1[%c6, %c0_317, %c0_318] : memref<8x64x32xbf16, #tpu.memory_space<vmem>>, vector<1x64x32xbf16>
    %610 = vector.shape_cast %609 : vector<1x64x32xbf16> to vector<64x32xbf16>
    %cst_319 = arith.constant dense<0.000000e+00> : vector<16x32xf32>
    %611 = tpu.matmul %607, %610, %cst_319 {dimension_numbers = #tpu.dot_dimension_numbers<[1], [0], [0], [1], [0, 0, 1, 1], [], []>} : vector<16x64xbf16>, vector<64x32xbf16>, vector<16x32xf32> -> vector<16x32xf32>
    %c6_320 = arith.constant 6 : index
    %c0_321 = arith.constant 0 : index
    %c0_322 = arith.constant 0 : index
    %612 = vector.load %arg2[%c6_320, %c0_321, %c0_322] : memref<8x1x32xf32, #tpu.memory_space<vmem>>, vector<1x1x32xf32>
    %613 = vector.shape_cast %612 : vector<1x1x32xf32> to vector<1x32xf32>
    %614 = vector.broadcast %613 : vector<1x32xf32> to vector<16x32xf32>
    %615 = arith.addf %611, %614 : vector<16x32xf32>
    %c6_323 = arith.constant 6 : index
    %c0_324 = arith.constant 0 : index
    %c0_325 = arith.constant 0 : index
    %616 = vector.load %arg3[%c6_323, %c0_324, %c0_325] : memref<8x64x32xbf16, #tpu.memory_space<vmem>>, vector<1x64x32xbf16>
    %617 = vector.shape_cast %616 : vector<1x64x32xbf16> to vector<64x32xbf16>
    %cst_326 = arith.constant dense<0.000000e+00> : vector<16x32xf32>
    %618 = tpu.matmul %607, %617, %cst_326 {dimension_numbers = #tpu.dot_dimension_numbers<[1], [0], [0], [1], [0, 0, 1, 1], [], []>} : vector<16x64xbf16>, vector<64x32xbf16>, vector<16x32xf32> -> vector<16x32xf32>
    %c6_327 = arith.constant 6 : index
    %c0_328 = arith.constant 0 : index
    %c0_329 = arith.constant 0 : index
    %619 = vector.load %arg4[%c6_327, %c0_328, %c0_329] : memref<8x1x32xf32, #tpu.memory_space<vmem>>, vector<1x1x32xf32>
    %620 = vector.shape_cast %619 : vector<1x1x32xf32> to vector<1x32xf32>
    %621 = vector.broadcast %620 : vector<1x32xf32> to vector<16x32xf32>
    %622 = arith.addf %618, %621 : vector<16x32xf32>
    %c6_330 = arith.constant 6 : index
    %c0_331 = arith.constant 0 : index
    %c0_332 = arith.constant 0 : index
    %623 = vector.load %arg5[%c6_330, %c0_331, %c0_332] : memref<8x64x32xbf16, #tpu.memory_space<vmem>>, vector<1x64x32xbf16>
    %624 = vector.shape_cast %623 : vector<1x64x32xbf16> to vector<64x32xbf16>
    %cst_333 = arith.constant dense<0.000000e+00> : vector<16x32xf32>
    %625 = tpu.matmul %607, %624, %cst_333 {dimension_numbers = #tpu.dot_dimension_numbers<[1], [0], [0], [1], [0, 0, 1, 1], [], []>} : vector<16x64xbf16>, vector<64x32xbf16>, vector<16x32xf32> -> vector<16x32xf32>
    %c6_334 = arith.constant 6 : index
    %c0_335 = arith.constant 0 : index
    %c0_336 = arith.constant 0 : index
    %626 = vector.load %arg6[%c6_334, %c0_335, %c0_336] : memref<8x1x32xf32, #tpu.memory_space<vmem>>, vector<1x1x32xf32>
    %627 = vector.shape_cast %626 : vector<1x1x32xf32> to vector<1x32xf32>
    %628 = vector.broadcast %627 : vector<1x32xf32> to vector<16x32xf32>
    %629 = arith.addf %625, %628 : vector<16x32xf32>
    %630 = arith.truncf %615 : vector<16x32xf32> to vector<16x32xbf16>
    %631 = arith.truncf %622 : vector<16x32xf32> to vector<16x32xbf16>
    %632 = arith.truncf %629 : vector<16x32xf32> to vector<16x32xbf16>
    %633 = vector.extract_strided_slice %630 {offsets = [0, 0], sizes = [8, 32], strides = [1, 1]} : vector<16x32xbf16> to vector<8x32xbf16>
    %634 = vector.extract_strided_slice %631 {offsets = [0, 0], sizes = [8, 32], strides = [1, 1]} : vector<16x32xbf16> to vector<8x32xbf16>
    %cst_337 = arith.constant dense<0.000000e+00> : vector<8x8xf32>
    %635 = tpu.matmul %633, %634, %cst_337 {dimension_numbers = #tpu.dot_dimension_numbers<[1], [1], [0], [0], [0, 0, 1, 0], [], []>} : vector<8x32xbf16>, vector<8x32xbf16>, vector<8x8xf32> -> vector<8x8xf32>
    %cst_338 = arith.constant dense<0xFF800000> : vector<8xf32>
    %636 = vector.multi_reduction <maximumf>, %635, %cst_338 [1] : vector<8x8xf32> to vector<8xf32>
    %637 = vector.shape_cast %636 : vector<8xf32> to vector<8x1xf32>
    %638 = vector.broadcast %637 : vector<8x1xf32> to vector<8x8xf32>
    %639 = arith.subf %635, %638 : vector<8x8xf32>
    %640 = math.exp %639 : vector<8x8xf32>
    %cst_339 = arith.constant dense<0.000000e+00> : vector<8xf32>
    %641 = vector.multi_reduction <add>, %640, %cst_339 [1] : vector<8x8xf32> to vector<8xf32>
    %642 = vector.shape_cast %641 : vector<8xf32> to vector<8x1xf32>
    %643 = tpu.reciprocal %642 {approx = true} : vector<8x1xf32> -> vector<8x1xf32>
    %644 = vector.broadcast %643 : vector<8x1xf32> to vector<8x8xf32>
    %645 = arith.mulf %640, %644 : vector<8x8xf32>
    %646 = arith.truncf %645 : vector<8x8xf32> to vector<8x8xbf16>
    %647 = vector.extract_strided_slice %632 {offsets = [0, 0], sizes = [8, 32], strides = [1, 1]} : vector<16x32xbf16> to vector<8x32xbf16>
    %cst_340 = arith.constant dense<0.000000e+00> : vector<8x32xf32>
    %648 = tpu.matmul %646, %647, %cst_340 {dimension_numbers = #tpu.dot_dimension_numbers<[1], [0], [0], [1], [0, 0, 1, 1], [], []>} : vector<8x8xbf16>, vector<8x32xbf16>, vector<8x32xf32> -> vector<8x32xf32>
    %649 = vector.extract_strided_slice %630 {offsets = [8, 0], sizes = [8, 32], strides = [1, 1]} : vector<16x32xbf16> to vector<8x32xbf16>
    %650 = vector.extract_strided_slice %631 {offsets = [8, 0], sizes = [8, 32], strides = [1, 1]} : vector<16x32xbf16> to vector<8x32xbf16>
    %cst_341 = arith.constant dense<0.000000e+00> : vector<8x8xf32>
    %651 = tpu.matmul %649, %650, %cst_341 {dimension_numbers = #tpu.dot_dimension_numbers<[1], [1], [0], [0], [0, 0, 1, 0], [], []>} : vector<8x32xbf16>, vector<8x32xbf16>, vector<8x8xf32> -> vector<8x8xf32>
    %cst_342 = arith.constant dense<0xFF800000> : vector<8xf32>
    %652 = vector.multi_reduction <maximumf>, %651, %cst_342 [1] : vector<8x8xf32> to vector<8xf32>
    %653 = vector.shape_cast %652 : vector<8xf32> to vector<8x1xf32>
    %654 = vector.broadcast %653 : vector<8x1xf32> to vector<8x8xf32>
    %655 = arith.subf %651, %654 : vector<8x8xf32>
    %656 = math.exp %655 : vector<8x8xf32>
    %cst_343 = arith.constant dense<0.000000e+00> : vector<8xf32>
    %657 = vector.multi_reduction <add>, %656, %cst_343 [1] : vector<8x8xf32> to vector<8xf32>
    %658 = vector.shape_cast %657 : vector<8xf32> to vector<8x1xf32>
    %659 = tpu.reciprocal %658 {approx = true} : vector<8x1xf32> -> vector<8x1xf32>
    %660 = vector.broadcast %659 : vector<8x1xf32> to vector<8x8xf32>
    %661 = arith.mulf %656, %660 : vector<8x8xf32>
    %662 = arith.truncf %661 : vector<8x8xf32> to vector<8x8xbf16>
    %663 = vector.extract_strided_slice %632 {offsets = [8, 0], sizes = [8, 32], strides = [1, 1]} : vector<16x32xbf16> to vector<8x32xbf16>
    %cst_344 = arith.constant dense<0.000000e+00> : vector<8x32xf32>
    %664 = tpu.matmul %662, %663, %cst_344 {dimension_numbers = #tpu.dot_dimension_numbers<[1], [0], [0], [1], [0, 0, 1, 1], [], []>} : vector<8x8xbf16>, vector<8x32xbf16>, vector<8x32xf32> -> vector<8x32xf32>
    %665 = tpu.concatenate %648, %664 in 0 : vector<8x32xf32>, vector<8x32xf32> -> vector<16x32xf32>
    %666 = arith.truncf %665 : vector<16x32xf32> to vector<16x32xbf16>
    %c6_345 = arith.constant 6 : index
    %c0_346 = arith.constant 0 : index
    %c0_347 = arith.constant 0 : index
    %667 = vector.load %arg7[%c6_345, %c0_346, %c0_347] : memref<8x32x64xbf16, #tpu.memory_space<vmem>>, vector<1x32x64xbf16>
    %668 = vector.shape_cast %667 : vector<1x32x64xbf16> to vector<32x64xbf16>
    %cst_348 = arith.constant dense<0.000000e+00> : vector<16x64xf32>
    %669 = tpu.matmul %666, %668, %cst_348 {dimension_numbers = #tpu.dot_dimension_numbers<[1], [0], [0], [1], [0, 0, 1, 1], [], []>} : vector<16x32xbf16>, vector<32x64xbf16>, vector<16x64xf32> -> vector<16x64xf32>
    %670 = arith.addf %608, %669 : vector<16x64xf32>
    %c7 = arith.constant 7 : index
    %c0_349 = arith.constant 0 : index
    %c0_350 = arith.constant 0 : index
    %671 = vector.load %arg1[%c7, %c0_349, %c0_350] : memref<8x64x32xbf16, #tpu.memory_space<vmem>>, vector<1x64x32xbf16>
    %672 = vector.shape_cast %671 : vector<1x64x32xbf16> to vector<64x32xbf16>
    %cst_351 = arith.constant dense<0.000000e+00> : vector<16x32xf32>
    %673 = tpu.matmul %607, %672, %cst_351 {dimension_numbers = #tpu.dot_dimension_numbers<[1], [0], [0], [1], [0, 0, 1, 1], [], []>} : vector<16x64xbf16>, vector<64x32xbf16>, vector<16x32xf32> -> vector<16x32xf32>
    %c7_352 = arith.constant 7 : index
    %c0_353 = arith.constant 0 : index
    %c0_354 = arith.constant 0 : index
    %674 = vector.load %arg2[%c7_352, %c0_353, %c0_354] : memref<8x1x32xf32, #tpu.memory_space<vmem>>, vector<1x1x32xf32>
    %675 = vector.shape_cast %674 : vector<1x1x32xf32> to vector<1x32xf32>
    %676 = vector.broadcast %675 : vector<1x32xf32> to vector<16x32xf32>
    %677 = arith.addf %673, %676 : vector<16x32xf32>
    %c7_355 = arith.constant 7 : index
    %c0_356 = arith.constant 0 : index
    %c0_357 = arith.constant 0 : index
    %678 = vector.load %arg3[%c7_355, %c0_356, %c0_357] : memref<8x64x32xbf16, #tpu.memory_space<vmem>>, vector<1x64x32xbf16>
    %679 = vector.shape_cast %678 : vector<1x64x32xbf16> to vector<64x32xbf16>
    %cst_358 = arith.constant dense<0.000000e+00> : vector<16x32xf32>
    %680 = tpu.matmul %607, %679, %cst_358 {dimension_numbers = #tpu.dot_dimension_numbers<[1], [0], [0], [1], [0, 0, 1, 1], [], []>} : vector<16x64xbf16>, vector<64x32xbf16>, vector<16x32xf32> -> vector<16x32xf32>
    %c7_359 = arith.constant 7 : index
    %c0_360 = arith.constant 0 : index
    %c0_361 = arith.constant 0 : index
    %681 = vector.load %arg4[%c7_359, %c0_360, %c0_361] : memref<8x1x32xf32, #tpu.memory_space<vmem>>, vector<1x1x32xf32>
    %682 = vector.shape_cast %681 : vector<1x1x32xf32> to vector<1x32xf32>
    %683 = vector.broadcast %682 : vector<1x32xf32> to vector<16x32xf32>
    %684 = arith.addf %680, %683 : vector<16x32xf32>
    %c7_362 = arith.constant 7 : index
    %c0_363 = arith.constant 0 : index
    %c0_364 = arith.constant 0 : index
    %685 = vector.load %arg5[%c7_362, %c0_363, %c0_364] : memref<8x64x32xbf16, #tpu.memory_space<vmem>>, vector<1x64x32xbf16>
    %686 = vector.shape_cast %685 : vector<1x64x32xbf16> to vector<64x32xbf16>
    %cst_365 = arith.constant dense<0.000000e+00> : vector<16x32xf32>
    %687 = tpu.matmul %607, %686, %cst_365 {dimension_numbers = #tpu.dot_dimension_numbers<[1], [0], [0], [1], [0, 0, 1, 1], [], []>} : vector<16x64xbf16>, vector<64x32xbf16>, vector<16x32xf32> -> vector<16x32xf32>
    %c7_366 = arith.constant 7 : index
    %c0_367 = arith.constant 0 : index
    %c0_368 = arith.constant 0 : index
    %688 = vector.load %arg6[%c7_366, %c0_367, %c0_368] : memref<8x1x32xf32, #tpu.memory_space<vmem>>, vector<1x1x32xf32>
    %689 = vector.shape_cast %688 : vector<1x1x32xf32> to vector<1x32xf32>
    %690 = vector.broadcast %689 : vector<1x32xf32> to vector<16x32xf32>
    %691 = arith.addf %687, %690 : vector<16x32xf32>
    %692 = arith.truncf %677 : vector<16x32xf32> to vector<16x32xbf16>
    %693 = arith.truncf %684 : vector<16x32xf32> to vector<16x32xbf16>
    %694 = arith.truncf %691 : vector<16x32xf32> to vector<16x32xbf16>
    %695 = vector.extract_strided_slice %692 {offsets = [0, 0], sizes = [8, 32], strides = [1, 1]} : vector<16x32xbf16> to vector<8x32xbf16>
    %696 = vector.extract_strided_slice %693 {offsets = [0, 0], sizes = [8, 32], strides = [1, 1]} : vector<16x32xbf16> to vector<8x32xbf16>
    %cst_369 = arith.constant dense<0.000000e+00> : vector<8x8xf32>
    %697 = tpu.matmul %695, %696, %cst_369 {dimension_numbers = #tpu.dot_dimension_numbers<[1], [1], [0], [0], [0, 0, 1, 0], [], []>} : vector<8x32xbf16>, vector<8x32xbf16>, vector<8x8xf32> -> vector<8x8xf32>
    %cst_370 = arith.constant dense<0xFF800000> : vector<8xf32>
    %698 = vector.multi_reduction <maximumf>, %697, %cst_370 [1] : vector<8x8xf32> to vector<8xf32>
    %699 = vector.shape_cast %698 : vector<8xf32> to vector<8x1xf32>
    %700 = vector.broadcast %699 : vector<8x1xf32> to vector<8x8xf32>
    %701 = arith.subf %697, %700 : vector<8x8xf32>
    %702 = math.exp %701 : vector<8x8xf32>
    %cst_371 = arith.constant dense<0.000000e+00> : vector<8xf32>
    %703 = vector.multi_reduction <add>, %702, %cst_371 [1] : vector<8x8xf32> to vector<8xf32>
    %704 = vector.shape_cast %703 : vector<8xf32> to vector<8x1xf32>
    %705 = tpu.reciprocal %704 {approx = true} : vector<8x1xf32> -> vector<8x1xf32>
    %706 = vector.broadcast %705 : vector<8x1xf32> to vector<8x8xf32>
    %707 = arith.mulf %702, %706 : vector<8x8xf32>
    %708 = arith.truncf %707 : vector<8x8xf32> to vector<8x8xbf16>
    %709 = vector.extract_strided_slice %694 {offsets = [0, 0], sizes = [8, 32], strides = [1, 1]} : vector<16x32xbf16> to vector<8x32xbf16>
    %cst_372 = arith.constant dense<0.000000e+00> : vector<8x32xf32>
    %710 = tpu.matmul %708, %709, %cst_372 {dimension_numbers = #tpu.dot_dimension_numbers<[1], [0], [0], [1], [0, 0, 1, 1], [], []>} : vector<8x8xbf16>, vector<8x32xbf16>, vector<8x32xf32> -> vector<8x32xf32>
    %711 = vector.extract_strided_slice %692 {offsets = [8, 0], sizes = [8, 32], strides = [1, 1]} : vector<16x32xbf16> to vector<8x32xbf16>
    %712 = vector.extract_strided_slice %693 {offsets = [8, 0], sizes = [8, 32], strides = [1, 1]} : vector<16x32xbf16> to vector<8x32xbf16>
    %cst_373 = arith.constant dense<0.000000e+00> : vector<8x8xf32>
    %713 = tpu.matmul %711, %712, %cst_373 {dimension_numbers = #tpu.dot_dimension_numbers<[1], [1], [0], [0], [0, 0, 1, 0], [], []>} : vector<8x32xbf16>, vector<8x32xbf16>, vector<8x8xf32> -> vector<8x8xf32>
    %cst_374 = arith.constant dense<0xFF800000> : vector<8xf32>
    %714 = vector.multi_reduction <maximumf>, %713, %cst_374 [1] : vector<8x8xf32> to vector<8xf32>
    %715 = vector.shape_cast %714 : vector<8xf32> to vector<8x1xf32>
    %716 = vector.broadcast %715 : vector<8x1xf32> to vector<8x8xf32>
    %717 = arith.subf %713, %716 : vector<8x8xf32>
    %718 = math.exp %717 : vector<8x8xf32>
    %cst_375 = arith.constant dense<0.000000e+00> : vector<8xf32>
    %719 = vector.multi_reduction <add>, %718, %cst_375 [1] : vector<8x8xf32> to vector<8xf32>
    %720 = vector.shape_cast %719 : vector<8xf32> to vector<8x1xf32>
    %721 = tpu.reciprocal %720 {approx = true} : vector<8x1xf32> -> vector<8x1xf32>
    %722 = vector.broadcast %721 : vector<8x1xf32> to vector<8x8xf32>
    %723 = arith.mulf %718, %722 : vector<8x8xf32>
    %724 = arith.truncf %723 : vector<8x8xf32> to vector<8x8xbf16>
    %725 = vector.extract_strided_slice %694 {offsets = [8, 0], sizes = [8, 32], strides = [1, 1]} : vector<16x32xbf16> to vector<8x32xbf16>
    %cst_376 = arith.constant dense<0.000000e+00> : vector<8x32xf32>
    %726 = tpu.matmul %724, %725, %cst_376 {dimension_numbers = #tpu.dot_dimension_numbers<[1], [0], [0], [1], [0, 0, 1, 1], [], []>} : vector<8x8xbf16>, vector<8x32xbf16>, vector<8x32xf32> -> vector<8x32xf32>
    %727 = tpu.concatenate %710, %726 in 0 : vector<8x32xf32>, vector<8x32xf32> -> vector<16x32xf32>
    %728 = arith.truncf %727 : vector<16x32xf32> to vector<16x32xbf16>
    %c7_377 = arith.constant 7 : index
    %c0_378 = arith.constant 0 : index
    %c0_379 = arith.constant 0 : index
    %729 = vector.load %arg7[%c7_377, %c0_378, %c0_379] : memref<8x32x64xbf16, #tpu.memory_space<vmem>>, vector<1x32x64xbf16>
    %730 = vector.shape_cast %729 : vector<1x32x64xbf16> to vector<32x64xbf16>
    %cst_380 = arith.constant dense<0.000000e+00> : vector<16x64xf32>
    %731 = tpu.matmul %728, %730, %cst_380 {dimension_numbers = #tpu.dot_dimension_numbers<[1], [0], [0], [1], [0, 0, 1, 1], [], []>} : vector<16x32xbf16>, vector<32x64xbf16>, vector<16x64xf32> -> vector<16x64xf32>
    %732 = arith.addf %670, %731 : vector<16x64xf32>
    %c3_381 = arith.constant 3 : index
    %c0_382 = arith.constant 0 : index
    %c0_383 = arith.constant 0 : index
    %733 = vector.load %arg8[%c3_381, %c0_382, %c0_383] : memref<4x1x64xf32, #tpu.memory_space<vmem>>, vector<1x1x64xf32>
    %734 = vector.shape_cast %733 : vector<1x1x64xf32> to vector<1x64xf32>
    %735 = vector.broadcast %734 : vector<1x64xf32> to vector<16x64xf32>
    %736 = arith.addf %732, %735 : vector<16x64xf32>
    %737 = arith.addf %606, %736 : vector<16x64xf32>
    %c3_384 = arith.constant 3 : index
    %c0_385 = arith.constant 0 : index
    %c0_386 = arith.constant 0 : index
    %738 = vector.load %arg13[%c3_384, %c0_385, %c0_386] : memref<4x1x64xf32, #tpu.memory_space<vmem>>, vector<1x1x64xf32>
    %739 = vector.shape_cast %738 : vector<1x1x64xf32> to vector<1x64xf32>
    %c3_387 = arith.constant 3 : index
    %c0_388 = arith.constant 0 : index
    %c0_389 = arith.constant 0 : index
    %740 = vector.load %arg14[%c3_387, %c0_388, %c0_389] : memref<4x1x64xf32, #tpu.memory_space<vmem>>, vector<1x1x64xf32>
    %741 = vector.shape_cast %740 : vector<1x1x64xf32> to vector<1x64xf32>
    %cst_390 = arith.constant dense<0.000000e+00> : vector<16xf32>
    %742 = vector.multi_reduction <add>, %737, %cst_390 [1] : vector<16x64xf32> to vector<16xf32>
    %743 = vector.shape_cast %742 : vector<16xf32> to vector<16x1xf32>
    %cst_391 = arith.constant 6.400000e+01 : f32
    %744 = vector.broadcast %cst_391 : f32 to vector<16x1xf32>
    %745 = arith.divf %743, %744 : vector<16x1xf32>
    %746 = vector.broadcast %745 : vector<16x1xf32> to vector<16x64xf32>
    %747 = arith.subf %737, %746 : vector<16x64xf32>
    %748 = arith.mulf %747, %747 : vector<16x64xf32>
    %cst_392 = arith.constant dense<0.000000e+00> : vector<16xf32>
    %749 = vector.multi_reduction <add>, %748, %cst_392 [1] : vector<16x64xf32> to vector<16xf32>
    %750 = vector.shape_cast %749 : vector<16xf32> to vector<16x1xf32>
    %cst_393 = arith.constant 6.400000e+01 : f32
    %751 = vector.broadcast %cst_393 : f32 to vector<16x1xf32>
    %752 = arith.divf %750, %751 : vector<16x1xf32>
    %753 = vector.broadcast %745 : vector<16x1xf32> to vector<16x64xf32>
    %754 = arith.subf %737, %753 : vector<16x64xf32>
    %cst_394 = arith.constant 9.99999974E-6 : f32
    %755 = vector.broadcast %cst_394 : f32 to vector<16x1xf32>
    %756 = arith.addf %752, %755 : vector<16x1xf32>
    %757 = math.rsqrt %756 : vector<16x1xf32>
    %758 = vector.broadcast %757 : vector<16x1xf32> to vector<16x64xf32>
    %759 = arith.mulf %754, %758 : vector<16x64xf32>
    %760 = vector.broadcast %739 : vector<1x64xf32> to vector<16x64xf32>
    %761 = arith.mulf %759, %760 : vector<16x64xf32>
    %762 = vector.broadcast %741 : vector<1x64xf32> to vector<16x64xf32>
    %763 = arith.addf %761, %762 : vector<16x64xf32>
    %764 = arith.truncf %763 : vector<16x64xf32> to vector<16x64xbf16>
    %c3_395 = arith.constant 3 : index
    %c0_396 = arith.constant 0 : index
    %c0_397 = arith.constant 0 : index
    %765 = vector.load %arg9[%c3_395, %c0_396, %c0_397] : memref<4x64x64xbf16, #tpu.memory_space<vmem>>, vector<1x64x64xbf16>
    %766 = vector.shape_cast %765 : vector<1x64x64xbf16> to vector<64x64xbf16>
    %cst_398 = arith.constant dense<0.000000e+00> : vector<16x64xf32>
    %767 = tpu.matmul %764, %766, %cst_398 {dimension_numbers = #tpu.dot_dimension_numbers<[1], [0], [0], [1], [0, 0, 1, 1], [], []>} : vector<16x64xbf16>, vector<64x64xbf16>, vector<16x64xf32> -> vector<16x64xf32>
    %c3_399 = arith.constant 3 : index
    %c0_400 = arith.constant 0 : index
    %c0_401 = arith.constant 0 : index
    %768 = vector.load %arg10[%c3_399, %c0_400, %c0_401] : memref<4x1x64xf32, #tpu.memory_space<vmem>>, vector<1x1x64xf32>
    %769 = vector.shape_cast %768 : vector<1x1x64xf32> to vector<1x64xf32>
    %770 = vector.broadcast %769 : vector<1x64xf32> to vector<16x64xf32>
    %771 = arith.addf %767, %770 : vector<16x64xf32>
    %cst_402 = arith.constant 0.000000e+00 : f32
    %772 = vector.broadcast %cst_402 : f32 to vector<16x64xf32>
    %773 = arith.maximumf %771, %772 : vector<16x64xf32>
    %774 = arith.truncf %773 : vector<16x64xf32> to vector<16x64xbf16>
    %c3_403 = arith.constant 3 : index
    %c0_404 = arith.constant 0 : index
    %c0_405 = arith.constant 0 : index
    %775 = vector.load %arg11[%c3_403, %c0_404, %c0_405] : memref<4x64x64xbf16, #tpu.memory_space<vmem>>, vector<1x64x64xbf16>
    %776 = vector.shape_cast %775 : vector<1x64x64xbf16> to vector<64x64xbf16>
    %cst_406 = arith.constant dense<0.000000e+00> : vector<16x64xf32>
    %777 = tpu.matmul %774, %776, %cst_406 {dimension_numbers = #tpu.dot_dimension_numbers<[1], [0], [0], [1], [0, 0, 1, 1], [], []>} : vector<16x64xbf16>, vector<64x64xbf16>, vector<16x64xf32> -> vector<16x64xf32>
    %c3_407 = arith.constant 3 : index
    %c0_408 = arith.constant 0 : index
    %c0_409 = arith.constant 0 : index
    %778 = vector.load %arg12[%c3_407, %c0_408, %c0_409] : memref<4x1x64xf32, #tpu.memory_space<vmem>>, vector<1x1x64xf32>
    %779 = vector.shape_cast %778 : vector<1x1x64xf32> to vector<1x64xf32>
    %780 = vector.broadcast %779 : vector<1x64xf32> to vector<16x64xf32>
    %781 = arith.addf %777, %780 : vector<16x64xf32>
    %782 = arith.addf %763, %781 : vector<16x64xf32>
    %c3_410 = arith.constant 3 : index
    %c0_411 = arith.constant 0 : index
    %c0_412 = arith.constant 0 : index
    %783 = vector.load %arg15[%c3_410, %c0_411, %c0_412] : memref<4x1x64xf32, #tpu.memory_space<vmem>>, vector<1x1x64xf32>
    %784 = vector.shape_cast %783 : vector<1x1x64xf32> to vector<1x64xf32>
    %c3_413 = arith.constant 3 : index
    %c0_414 = arith.constant 0 : index
    %c0_415 = arith.constant 0 : index
    %785 = vector.load %arg16[%c3_413, %c0_414, %c0_415] : memref<4x1x64xf32, #tpu.memory_space<vmem>>, vector<1x1x64xf32>
    %786 = vector.shape_cast %785 : vector<1x1x64xf32> to vector<1x64xf32>
    %cst_416 = arith.constant dense<0.000000e+00> : vector<16xf32>
    %787 = vector.multi_reduction <add>, %782, %cst_416 [1] : vector<16x64xf32> to vector<16xf32>
    %788 = vector.shape_cast %787 : vector<16xf32> to vector<16x1xf32>
    %cst_417 = arith.constant 6.400000e+01 : f32
    %789 = vector.broadcast %cst_417 : f32 to vector<16x1xf32>
    %790 = arith.divf %788, %789 : vector<16x1xf32>
    %791 = vector.broadcast %790 : vector<16x1xf32> to vector<16x64xf32>
    %792 = arith.subf %782, %791 : vector<16x64xf32>
    %793 = arith.mulf %792, %792 : vector<16x64xf32>
    %cst_418 = arith.constant dense<0.000000e+00> : vector<16xf32>
    %794 = vector.multi_reduction <add>, %793, %cst_418 [1] : vector<16x64xf32> to vector<16xf32>
    %795 = vector.shape_cast %794 : vector<16xf32> to vector<16x1xf32>
    %cst_419 = arith.constant 6.400000e+01 : f32
    %796 = vector.broadcast %cst_419 : f32 to vector<16x1xf32>
    %797 = arith.divf %795, %796 : vector<16x1xf32>
    %798 = vector.broadcast %790 : vector<16x1xf32> to vector<16x64xf32>
    %799 = arith.subf %782, %798 : vector<16x64xf32>
    %cst_420 = arith.constant 9.99999974E-6 : f32
    %800 = vector.broadcast %cst_420 : f32 to vector<16x1xf32>
    %801 = arith.addf %797, %800 : vector<16x1xf32>
    %802 = math.rsqrt %801 : vector<16x1xf32>
    %803 = vector.broadcast %802 : vector<16x1xf32> to vector<16x64xf32>
    %804 = arith.mulf %799, %803 : vector<16x64xf32>
    %805 = vector.broadcast %784 : vector<1x64xf32> to vector<16x64xf32>
    %806 = arith.mulf %804, %805 : vector<16x64xf32>
    %807 = vector.broadcast %786 : vector<1x64xf32> to vector<16x64xf32>
    %808 = arith.addf %806, %807 : vector<16x64xf32>
    %c0_421 = arith.constant 0 : index
    %c0_422 = arith.constant 0 : index
    %809 = vector.load %arg17[%c0_421, %c0_422] : memref<16x64xf32, #tpu.memory_space<vmem>>, vector<16x64xf32>
    tpu.vector_store %arg17[%c0_421, %c0_422], %808 {strides = array<i32>} : memref<16x64xf32, #tpu.memory_space<vmem>>, vector<16x64xf32>,
    return
  }
}

</mosaic_0001>

<llo_original>
// kernel: encoder_forward.1
$region0: #{encoder_forward.1}
  #allocation0 [shape = 'u32[]', space=smem, size = 0x4, offset = 0x4, fixed_abs, tag = 'smem constant byte address 0x4 - core index']
  #allocation1 [shape = 'u32[144,128]{1,0:T(1,128)}', space=vmem, size = 0x12000, scoped, tag = 'internal scratch']
  %s0 = inlined_call_operand.vmem [shape: f32[16,64], index: 0, kind: input, shape index: {}]
  %s1 = inlined_call_operand.vmem [shape: bf16[8,64,32], index: 1, kind: input, shape index: {}]
  %s2 = inlined_call_operand.vmem [shape: f32[8,1,32], index: 2, kind: input, shape index: {}]
  %s3 = inlined_call_operand.vmem [shape: bf16[8,64,32], index: 3, kind: input, shape index: {}]
  %s4 = inlined_call_operand.vmem [shape: f32[8,1,32], index: 4, kind: input, shape index: {}]
  %s5 = inlined_call_operand.vmem [shape: bf16[8,64,32], index: 5, kind: input, shape index: {}]
  %s6 = inlined_call_operand.vmem [shape: f32[8,1,32], index: 6, kind: input, shape index: {}]
  %s7 = inlined_call_operand.vmem [shape: bf16[8,32,64], index: 7, kind: input, shape index: {}]
  %s8 = inlined_call_operand.vmem [shape: f32[4,1,64], index: 8, kind: input, shape index: {}]
  %s9 = inlined_call_operand.vmem [shape: bf16[4,64,64], index: 9, kind: input, shape index: {}]
  %s10 = inlined_call_operand.vmem [shape: f32[4,1,64], index: 10, kind: input, shape index: {}]
  %s11 = inlined_call_operand.vmem [shape: bf16[4,64,64], index: 11, kind: input, shape index: {}]
  %s12 = inlined_call_operand.vmem [shape: f32[4,1,64], index: 12, kind: input, shape index: {}]
  %s13 = inlined_call_operand.vmem [shape: f32[4,1,64], index: 13, kind: input, shape index: {}]
  %s14 = inlined_call_operand.vmem [shape: f32[4,1,64], index: 14, kind: input, shape index: {}]
  %s15 = inlined_call_operand.vmem [shape: f32[4,1,64], index: 15, kind: input, shape index: {}]
  %s16 = inlined_call_operand.vmem [shape: f32[4,1,64], index: 16, kind: input, shape index: {}]
  %s17 = inlined_call_operand.hbm [shape: f32[16,64], index: 17, kind: output, shape index: {}]
  %s18 = sld [smem:[#allocation0]]
  $region78: #{encoder_forward.1} parent=0
    _
  %s20 = ssub.s32 1, %s18
  %s21 = scalar_select 0, %s20, %s18
  $region1: #{encoder_forward.1} parent=0
    #allocation2 [shape = 'u8[8192]{0}', space=vmem, size = 0x2000, scoped, tag = 'output window, operand 0, single buffered']
    #allocation3 [shape = 's32[1]{0}', space=sflag, size = 0x4, scoped, tag = 'scoped memory for encoder_forward.1']
    %22 = vsyncpa [#allocation3], 0
    // Predicated region
    $region2: #{encoder_forward.1} parent=1 // pred_check
      _
    $region3: #{encoder_forward.1} parent=1 // pred_check_branch
      %24 = sbr.rel (0) target = $region5
    $region4: #{encoder_forward.1} parent=1 // pred_region
      _
    $region5: #{encoder_forward.1} parent=1 // pred_fallthru
      _
    // Predicated region
    $region6: #{encoder_forward.1} parent=1 // pred_check
      _
    $region7: #{encoder_forward.1} parent=1 // pred_check_branch
      %26 = sbr.rel (0) target = $region9
    $region8: #{encoder_forward.1} parent=1 // pred_region
      _
    $region9: #{encoder_forward.1} parent=1 // pred_fallthru
      _
    // Predicated region
    $region10: #{encoder_forward.1} parent=1 // pred_check
      _
    $region11: #{encoder_forward.1} parent=1 // pred_check_branch
      %28 = sbr.rel (0) target = $region13
    $region12: #{encoder_forward.1} parent=1 // pred_region
      _
    $region13: #{encoder_forward.1} parent=1 // pred_fallthru
      _
    // Predicated region
    $region14: #{encoder_forward.1} parent=1 // pred_check
      _
    $region15: #{encoder_forward.1} parent=1 // pred_check_branch
      %30 = sbr.rel (0) target = $region17
    $region16: #{encoder_forward.1} parent=1 // pred_region
      _
    $region17: #{encoder_forward.1} parent=1 // pred_fallthru
      _
    // Predicated region
    $region18: #{encoder_forward.1} parent=1 // pred_check
      _
    $region19: #{encoder_forward.1} parent=1 // pred_check_branch
      %32 = sbr.rel (0) target = $region21
    $region20: #{encoder_forward.1} parent=1 // pred_region
      _
    $region21: #{encoder_forward.1} parent=1 // pred_fallthru
      _
    // Predicated region
    $region22: #{encoder_forward.1} parent=1 // pred_check
      _
    $region23: #{encoder_forward.1} parent=1 // pred_check_branch
      %34 = sbr.rel (0) target = $region25
    $region24: #{encoder_forward.1} parent=1 // pred_region
      _
    $region25: #{encoder_forward.1} parent=1 // pred_fallthru
      _
    // Predicated region
    $region26: #{encoder_forward.1} parent=1 // pred_check
      _
    $region27: #{encoder_forward.1} parent=1 // pred_check_branch
      %36 = sbr.rel (0) target = $region29
    $region28: #{encoder_forward.1} parent=1 // pred_region
      _
    $region29: #{encoder_forward.1} parent=1 // pred_fallthru
      _
    // Predicated region
    $region30: #{encoder_forward.1} parent=1 // pred_check
      _
    $region31: #{encoder_forward.1} parent=1 // pred_check_branch
      %38 = sbr.rel (0) target = $region33
    $region32: #{encoder_forward.1} parent=1 // pred_region
      _
    $region33: #{encoder_forward.1} parent=1 // pred_fallthru
      _
    // Predicated region
    $region34: #{encoder_forward.1} parent=1 // pred_check
      _
    $region35: #{encoder_forward.1} parent=1 // pred_check_branch
      %40 = sbr.rel (0) target = $region37
    $region36: #{encoder_forward.1} parent=1 // pred_region
      _
    $region37: #{encoder_forward.1} parent=1 // pred_fallthru
      _
    // Predicated region
    $region38: #{encoder_forward.1} parent=1 // pred_check
      _
    $region39: #{encoder_forward.1} parent=1 // pred_check_branch
      %42 = sbr.rel (0) target = $region41
    $region40: #{encoder_forward.1} parent=1 // pred_region
      _
    $region41: #{encoder_forward.1} parent=1 // pred_fallthru
      _
    // Predicated region
    $region42: #{encoder_forward.1} parent=1 // pred_check
      _
    $region43: #{encoder_forward.1} parent=1 // pred_check_branch
      %44 = sbr.rel (0) target = $region45
    $region44: #{encoder_forward.1} parent=1 // pred_region
      _
    $region45: #{encoder_forward.1} parent=1 // pred_fallthru
      _
    // Predicated region
    $region46: #{encoder_forward.1} parent=1 // pred_check
      _
    $region47: #{encoder_forward.1} parent=1 // pred_check_branch
      %46 = sbr.rel (0) target = $region49
    $region48: #{encoder_forward.1} parent=1 // pred_region
      _
    $region49: #{encoder_forward.1} parent=1 // pred_fallthru
      _
    // Predicated region
    $region50: #{encoder_forward.1} parent=1 // pred_check
      _
    $region51: #{encoder_forward.1} parent=1 // pred_check_branch
      %48 = sbr.rel (0) target = $region53
    $region52: #{encoder_forward.1} parent=1 // pred_region
      _
    $region53: #{encoder_forward.1} parent=1 // pred_fallthru
      _
    // Predicated region
    $region54: #{encoder_forward.1} parent=1 // pred_check
      _
    $region55: #{encoder_forward.1} parent=1 // pred_check_branch
      %50 = sbr.rel (0) target = $region57
    $region56: #{encoder_forward.1} parent=1 // pred_region
      _
    $region57: #{encoder_forward.1} parent=1 // pred_fallthru
      _
    // Predicated region
    $region58: #{encoder_forward.1} parent=1 // pred_check
      _
    $region59: #{encoder_forward.1} parent=1 // pred_check_branch
      %52 = sbr.rel (0) target = $region61
    $region60: #{encoder_forward.1} parent=1 // pred_region
      _
    $region61: #{encoder_forward.1} parent=1 // pred_fallthru
      _
    // Predicated region
    $region62: #{encoder_forward.1} parent=1 // pred_check
      _
    $region63: #{encoder_forward.1} parent=1 // pred_check_branch
      %54 = sbr.rel (0) target = $region65
    $region64: #{encoder_forward.1} parent=1 // pred_region
      _
    $region65: #{encoder_forward.1} parent=1 // pred_fallthru
      _
    // Predicated region
    $region66: #{encoder_forward.1} parent=1 // pred_check
      _
    $region67: #{encoder_forward.1} parent=1 // pred_check_branch
      %56 = sbr.rel (0) target = $region69
    $region68: #{encoder_forward.1} parent=1 // pred_region
      _
    $region69: #{encoder_forward.1} parent=1 // pred_fallthru
      _
    %v58 = vld [vmem:[%s0] sm:$0xff]
    %v59 = vld [vmem:[%s0 + $0x8] sm:$0xff]
    %v60 = vpack.c.bf16 %v59, %v58
    %v61 = vld [vmem:[%s1] sm:$0xf]
    %v62 = vld [vmem:[%s1 + $0x4] sm:$0xf]
    %v63 = vld [vmem:[%s1 + $0x8] sm:$0xf]
    %v64 = vld [vmem:[%s1 + $0xc] sm:$0xf]
    %v65 = vld [vmem:[%s1 + $0x10] sm:$0xf]
    %v66 = vld [vmem:[%s1 + $0x14] sm:$0xf]
    %v67 = vld [vmem:[%s1 + $0x18] sm:$0xf]
    %v68 = vld [vmem:[%s1 + $0x1c] sm:$0xf]
    %v69 = vld [vmem:[%s2] sm:$0x1]
    %v71 = vlaneseq
    %v72 = vshrl.u32 %v71, 7
    %v73 = vsub.s32 0, %v72
    %v74 = vrot.slane %v69, %v73
    %v84 = vunpack.c.l.b16 %v61
    %v85 = vunpack.c.l.b16 %v62
    %v86 = vunpack.c.l.b16 %v63
    %v87 = vunpack.c.l.b16 %v64
    %v88 = vunpack.c.l.b16 %v65
    %v89 = vunpack.c.l.b16 %v66
    %v90 = vunpack.c.l.b16 %v67
    %v91 = vunpack.c.l.b16 %v68
    %v92 = vpack.c.b16 %v85, %v84
    %v93 = vpack.c.b16 %v87, %v86
    %v94 = vpack.c.b16 %v89, %v88
    %v95 = vpack.c.b16 %v91, %v90
    %vm100 = vcmask 523264
    %v102 = vsel %vm100, %v60, 0
    %104 = vmatprep.subr.bf16.mxu0 0
    %105 = vmatpush1.bf16.msra.mxu0 %v92
    %106 = vmatprep.subr.bf16.mxu0 0
    %107 = vmatpush1.bf16.msra.mxu0 %v93
    %108 = vmatprep.subr.bf16.mxu0 0
    %109 = vmatpush1.bf16.msra.mxu0 %v94
    %110 = vmatprep.subr.bf16.mxu0 0
    %111 = vmatpush1.bf16.msra.mxu0 %v95
    %112 = vmatprep.subr.bf16.mxu0 0
    %113 = vmatpush1.bf16.msra.mxu0 0
    %114 = vmatprep.subr.bf16.mxu0 0
    %115 = vmatpush1.bf16.msra.mxu0 0
    %116 = vmatprep.subr.bf16.mxu0 0
    %117 = vmatpush1.bf16.msra.mxu0 0
    %118 = vmatprep.subr.bf16.mxu0 0
    %119 = vmatpush1.bf16.msra.mxu0 0
    %120 = vmatprep.subr.bf16.mxu0 0
    %121 = vmatpush1.bf16.msra.mxu0 0
    %122 = vmatprep.subr.bf16.mxu0 0
    %123 = vmatpush1.bf16.msra.mxu0 0
    %124 = vmatprep.subr.bf16.mxu0 0
    %125 = vmatpush1.bf16.msra.mxu0 0
    %126 = vmatprep.subr.bf16.mxu0 0
    %127 = vmatpush1.bf16.msra.mxu0 0
    %128 = vmatprep.subr.bf16.mxu0 0
    %129 = vmatpush1.bf16.msra.mxu0 0
    %130 = vmatprep.subr.bf16.mxu0 0
    %131 = vmatpush1.bf16.msra.mxu0 0
    %132 = vmatprep.subr.bf16.mxu0 0
    %133 = vmatpush1.bf16.msra.mxu0 0
    %134 = vmatprep.subr.bf16.mxu0 0
    %135 = vmatpush1.bf16.msra.mxu0 0
    %136 = vmatprep.mubr.bf16.mxu0 0
    %137 = vmatmul.mubr.bf16.gmra.mrb[0].mxu0 %v102
    %v138 = vpop.f32.mrb[0].mxu0
    %v139 = vadd.f32 %v74, %v138
    %v140 = vpop.f32.mrb[0].mxu0
    %v141 = vpop.f32.mrb[0].mxu0
    %v142 = vadd.f32 %v74, %v141
    %v143 = vpop.f32.mrb[0].mxu0
    %144 = vdwg.mxu0
    %v145 = vld [vmem:[%s3] sm:$0xf]
    %v146 = vld [vmem:[%s3 + $0x4] sm:$0xf]
    %v147 = vld [vmem:[%s3 + $0x8] sm:$0xf]
    %v148 = vld [vmem:[%s3 + $0xc] sm:$0xf]
    %v149 = vld [vmem:[%s3 + $0x10] sm:$0xf]
    %v150 = vld [vmem:[%s3 + $0x14] sm:$0xf]
    %v151 = vld [vmem:[%s3 + $0x18] sm:$0xf]
    %v152 = vld [vmem:[%s3 + $0x1c] sm:$0xf]
    %v153 = vld [vmem:[%s4] sm:$0x1]
    %v155 = vlaneseq
    %v156 = vshrl.u32 %v155, 7
    %v157 = vsub.s32 0, %v156
    %v158 = vrot.slane %v153, %v157
    %v168 = vunpack.c.l.b16 %v145
    %v169 = vunpack.c.l.b16 %v146
    %v170 = vunpack.c.l.b16 %v147
    %v171 = vunpack.c.l.b16 %v148
    %v172 = vunpack.c.l.b16 %v149
    %v173 = vunpack.c.l.b16 %v150
    %v174 = vunpack.c.l.b16 %v151
    %v175 = vunpack.c.l.b16 %v152
    %v176 = vpack.c.b16 %v169, %v168
    %v177 = vpack.c.b16 %v171, %v170
    %v178 = vpack.c.b16 %v173, %v172
    %v179 = vpack.c.b16 %v175, %v174
    %184 = vmatprep.subr.bf16.mxu0 0
    %185 = vmatpush1.bf16.msra.mxu0 %v176
    %186 = vmatprep.subr.bf16.mxu0 0
    %187 = vmatpush1.bf16.msra.mxu0 %v177
    %188 = vmatprep.subr.bf16.mxu0 0
    %189 = vmatpush1.bf16.msra.mxu0 %v178
    %190 = vmatprep.subr.bf16.mxu0 0
    %191 = vmatpush1.bf16.msra.mxu0 %v179
    %192 = vmatprep.subr.bf16.mxu0 0
    %193 = vmatpush1.bf16.msra.mxu0 0
    %194 = vmatprep.subr.bf16.mxu0 0
    %195 = vmatpush1.bf16.msra.mxu0 0
    %196 = vmatprep.subr.bf16.mxu0 0
    %197 = vmatpush1.bf16.msra.mxu0 0
    %198 = vmatprep.subr.bf16.mxu0 0
    %199 = vmatpush1.bf16.msra.mxu0 0
    %200 = vmatprep.subr.bf16.mxu0 0
    %201 = vmatpush1.bf16.msra.mxu0 0
    %202 = vmatprep.subr.bf16.mxu0 0
    %203 = vmatpush1.bf16.msra.mxu0 0
    %204 = vmatprep.subr.bf16.mxu0 0
    %205 = vmatpush1.bf16.msra.mxu0 0
    %206 = vmatprep.subr.bf16.mxu0 0
    %207 = vmatpush1.bf16.msra.mxu0 0
    %208 = vmatprep.subr.bf16.mxu0 0
    %209 = vmatpush1.bf16.msra.mxu0 0
    %210 = vmatprep.subr.bf16.mxu0 0
    %211 = vmatpush1.bf16.msra.mxu0 0
    %212 = vmatprep.subr.bf16.mxu0 0
    %213 = vmatpush1.bf16.msra.mxu0 0
    %214 = vmatprep.subr.bf16.mxu0 0
    %215 = vmatpush1.bf16.msra.mxu0 0
    %216 = vmatprep.mubr.bf16.mxu0 0
    %217 = vmatmul.mubr.bf16.gmra.mrb[0].mxu0 %v102
    %v218 = vpop.f32.mrb[0].mxu0
    %v219 = vadd.f32 %v158, %v218
    %v220 = vpop.f32.mrb[0].mxu0
    %v221 = vpop.f32.mrb[0].mxu0
    %v222 = vadd.f32 %v158, %v221
    %v223 = vpop.f32.mrb[0].mxu0
    %224 = vdwg.mxu0
    %v225 = vld [vmem:[%s5] sm:$0xf]
    %v226 = vld [vmem:[%s5 + $0x4] sm:$0xf]
    %v227 = vld [vmem:[%s5 + $0x8] sm:$0xf]
    %v228 = vld [vmem:[%s5 + $0xc] sm:$0xf]
    %v229 = vld [vmem:[%s5 + $0x10] sm:$0xf]
    %v230 = vld [vmem:[%s5 + $0x14] sm:$0xf]
    %v231 = vld [vmem:[%s5 + $0x18] sm:$0xf]
    %v232 = vld [vmem:[%s5 + $0x1c] sm:$0xf]
    %v233 = vld [vmem:[%s6] sm:$0x1]
    %v235 = vlaneseq
    %v236 = vshrl.u32 %v235, 7
    %v237 = vsub.s32 0, %v236
    %v238 = vrot.slane %v233, %v237
    %v248 = vunpack.c.l.b16 %v225
    %v249 = vunpack.c.l.b16 %v226
    %v250 = vunpack.c.l.b16 %v227
    %v251 = vunpack.c.l.b16 %v228
    %v252 = vunpack.c.l.b16 %v229
    %v253 = vunpack.c.l.b16 %v230
    %v254 = vunpack.c.l.b16 %v231
    %v255 = vunpack.c.l.b16 %v232
    %v256 = vpack.c.b16 %v249, %v248
    %v257 = vpack.c.b16 %v251, %v250
    %v258 = vpack.c.b16 %v253, %v252
    %v259 = vpack.c.b16 %v255, %v254
    %264 = vmatprep.subr.bf16.mxu0 0
    %265 = vmatpush1.bf16.msra.mxu0 %v256
    %266 = vmatprep.subr.bf16.mxu0 0
    %267 = vmatpush1.bf16.msra.mxu0 %v257
    %268 = vmatprep.subr.bf16.mxu0 0
    %269 = vmatpush1.bf16.msra.mxu0 %v258
    %270 = vmatprep.subr.bf16.mxu0 0
    %271 = vmatpush1.bf16.msra.mxu0 %v259
    %272 = vmatprep.subr.bf16.mxu0 0
    %273 = vmatpush1.bf16.msra.mxu0 0
    %274 = vmatprep.subr.bf16.mxu0 0
    %275 = vmatpush1.bf16.msra.mxu0 0
    %276 = vmatprep.subr.bf16.mxu0 0
    %277 = vmatpush1.bf16.msra.mxu0 0
    %278 = vmatprep.subr.bf16.mxu0 0
    %279 = vmatpush1.bf16.msra.mxu0 0
    %280 = vmatprep.subr.bf16.mxu0 0
    %281 = vmatpush1.bf16.msra.mxu0 0
    %282 = vmatprep.subr.bf16.mxu0 0
    %283 = vmatpush1.bf16.msra.mxu0 0
    %284 = vmatprep.subr.bf16.mxu0 0
    %285 = vmatpush1.bf16.msra.mxu0 0
    %286 = vmatprep.subr.bf16.mxu0 0
    %287 = vmatpush1.bf16.msra.mxu0 0
    %288 = vmatprep.subr.bf16.mxu0 0
    %289 = vmatpush1.bf16.msra.mxu0 0
    %290 = vmatprep.subr.bf16.mxu0 0
    %291 = vmatpush1.bf16.msra.mxu0 0
    %292 = vmatprep.subr.bf16.mxu0 0
    %293 = vmatpush1.bf16.msra.mxu0 0
    %294 = vmatprep.subr.bf16.mxu0 0
    %295 = vmatpush1.bf16.msra.mxu0 0
    %296 = vmatprep.mubr.bf16.mxu0 0
    %297 = vmatmul.mubr.bf16.gmra.mrb[0].mxu0 %v102
    %v298 = vpop.f32.mrb[0].mxu0
    %v299 = vadd.f32 %v238, %v298
    %v300 = vpop.f32.mrb[0].mxu0
    %v301 = vpop.f32.mrb[0].mxu0
    %v302 = vadd.f32 %v238, %v301
    %v303 = vpop.f32.mrb[0].mxu0
    %304 = vdwg.mxu0
    %v305 = vpack.c.bf16 %v142, %v139
    %v306 = vpack.c.bf16 %v222, %v219
    %v307 = vpack.c.bf16 %v302, %v299
    %vm308 = vcmask 261120
    %v310 = vsel %vm308, %v305, 0
    %v313 = vsel %vm308, %v306, 0
    %315 = vmatprep.subr.bf16.mxu0 0
    %316 = vmatpush1.bf16.xpose.msra.mxu0 %v313
    %317 = vmatprep.subr.bf16.mxu0 0
    %318 = vmatpush1.bf16.xpose.msra.mxu0 0
    %319 = vmatprep.subr.bf16.mxu0 0
    %320 = vmatpush1.bf16.xpose.msra.mxu0 0
    %321 = vmatprep.subr.bf16.mxu0 0
    %322 = vmatpush1.bf16.xpose.msra.mxu0 0
    %323 = vmatprep.subr.bf16.mxu0 0
    %324 = vmatpush1.bf16.xpose.msra.mxu0 0
    %325 = vmatprep.subr.bf16.mxu0 0
    %326 = vmatpush1.bf16.xpose.msra.mxu0 0
    %327 = vmatprep.subr.bf16.mxu0 0
    %328 = vmatpush1.bf16.xpose.msra.mxu0 0
    %329 = vmatprep.subr.bf16.mxu0 0
    %330 = vmatpush1.bf16.xpose.msra.mxu0 0
    %331 = vmatprep.subr.bf16.mxu0 0
    %332 = vmatpush1.bf16.xpose.msra.mxu0 0
    %333 = vmatprep.subr.bf16.mxu0 0
    %334 = vmatpush1.bf16.xpose.msra.mxu0 0
    %335 = vmatprep.subr.bf16.mxu0 0
    %336 = vmatpush1.bf16.xpose.msra.mxu0 0
    %337 = vmatprep.subr.bf16.mxu0 0
    %338 = vmatpush1.bf16.xpose.msra.mxu0 0
    %339 = vmatprep.subr.bf16.mxu0 0
    %340 = vmatpush1.bf16.xpose.msra.mxu0 0
    %341 = vmatprep.subr.bf16.mxu0 0
    %342 = vmatpush1.bf16.xpose.msra.mxu0 0
    %343 = vmatprep.subr.bf16.mxu0 0
    %344 = vmatpush1.bf16.xpose.msra.mxu0 0
    %345 = vmatprep.subr.bf16.mxu0 0
    %346 = vmatpush1.bf16.xpose.msra.mxu0 0
    %347 = vmatprep.mubr.bf16.mxu0 0
    %348 = vmatmul.mubr.bf16.gmra.mrb[0].mxu0 %v310
    %v349 = vpop.f32.mrb[0].mxu0
    %v350 = vadd.f32 0.0, %v349
    %v351 = vpop.f32.mrb[0].mxu0
    %v352 = vpop.f32.mrb[0].mxu0
    %v353 = vpop.f32.mrb[0].mxu0
    %354 = vdwg.mxu0
    %vm355 = vcmask 64512
    %v356 = vsel %vm355, %v350, -inf
    %357 = vmax.xlane.f32.xlu0 %v356
    %v358 = vpop.xlane.xlu0 %357
    %v359 = vsub.f32 %v350, %v358
    %v360 = vmul.f32 %v359, 1.442695
    %v361 = vpow.pop %v360
    %v362 = vsel %vm355, %v361, 0.0
    %363 = vadd.xlane.f32.xlu0 %v362
    %v364 = vpop.xlane.xlu0 %363
    %v365 = vrcp.pop %v364
    %v366 = vmul.f32 %v361, %v365
    %v367 = vpack.c.bf16 %v366, %v366
    %v369 = vsel %vm355, %v367, 0
    %vm371 = vcmask 1043456
    %v373 = vsel %vm371, %v307, 0
    %375 = vmatprep.subr.bf16.mxu0 0
    %376 = vmatpush1.bf16.msra.mxu0 %v373
    %377 = vmatprep.subr.bf16.mxu0 0
    %378 = vmatpush1.bf16.msra.mxu0 0
    %379 = vmatprep.subr.bf16.mxu0 0
    %380 = vmatpush1.bf16.msra.mxu0 0
    %381 = vmatprep.subr.bf16.mxu0 0
    %382 = vmatpush1.bf16.msra.mxu0 0
    %383 = vmatprep.subr.bf16.mxu0 0
    %384 = vmatpush1.bf16.msra.mxu0 0
    %385 = vmatprep.subr.bf16.mxu0 0
    %386 = vmatpush1.bf16.msra.mxu0 0
    %387 = vmatprep.subr.bf16.mxu0 0
    %388 = vmatpush1.bf16.msra.mxu0 0
    %389 = vmatprep.subr.bf16.mxu0 0
    %390 = vmatpush1.bf16.msra.mxu0 0
    %391 = vmatprep.subr.bf16.mxu0 0
    %392 = vmatpush1.bf16.msra.mxu0 0
    %393 = vmatprep.subr.bf16.mxu0 0
    %394 = vmatpush1.bf16.msra.mxu0 0
    %395 = vmatprep.subr.bf16.mxu0 0
    %396 = vmatpush1.bf16.msra.mxu0 0
    %397 = vmatprep.subr.bf16.mxu0 0
    %398 = vmatpush1.bf16.msra.mxu0 0
    %399 = vmatprep.subr.bf16.mxu0 0
    %400 = vmatpush1.bf16.msra.mxu0 0
    %401 = vmatprep.subr.bf16.mxu0 0
    %402 = vmatpush1.bf16.msra.mxu0 0
    %403 = vmatprep.subr.bf16.mxu0 0
    %404 = vmatpush1.bf16.msra.mxu0 0
    %405 = vmatprep.subr.bf16.mxu0 0
    %406 = vmatpush1.bf16.msra.mxu0 0
    %407 = vmatprep.mubr.bf16.mxu0 0
    %408 = vmatmul.mubr.bf16.gmra.mrb[0].mxu0 %v369
    %v409 = vpop.f32.mrb[0].mxu0
    %v410 = vadd.f32 0.0, %v409
    %v411 = vpop.f32.mrb[0].mxu0
    %v412 = vpop.f32.mrb[0].mxu0
    %v413 = vpop.f32.mrb[0].mxu0
    %414 = vdwg.mxu0
    %v416 = vrot.slane %v305, 4
    %v418 = vrot.slane %v306, 4
    %v420 = vsel %vm308, %v416, 0
    %v423 = vsel %vm308, %v418, 0
    %425 = vmatprep.subr.bf16.mxu0 0
    %426 = vmatpush1.bf16.xpose.msra.mxu0 %v423
    %427 = vmatprep.subr.bf16.mxu0 0
    %428 = vmatpush1.bf16.xpose.msra.mxu0 0
    %429 = vmatprep.subr.bf16.mxu0 0
    %430 = vmatpush1.bf16.xpose.msra.mxu0 0
    %431 = vmatprep.subr.bf16.mxu0 0
    %432 = vmatpush1.bf16.xpose.msra.mxu0 0
    %433 = vmatprep.subr.bf16.mxu0 0
    %434 = vmatpush1.bf16.xpose.msra.mxu0 0
    %435 = vmatprep.subr.bf16.mxu0 0
    %436 = vmatpush1.bf16.xpose.msra.mxu0 0
    %437 = vmatprep.subr.bf16.mxu0 0
    %438 = vmatpush1.bf16.xpose.msra.mxu0 0
    %439 = vmatprep.subr.bf16.mxu0 0
    %440 = vmatpush1.bf16.xpose.msra.mxu0 0
    %441 = vmatprep.subr.bf16.mxu0 0
    %442 = vmatpush1.bf16.xpose.msra.mxu0 0
    %443 = vmatprep.subr.bf16.mxu0 0
    %444 = vmatpush1.bf16.xpose.msra.mxu0 0
    %445 = vmatprep.subr.bf16.mxu0 0
    %446 = vmatpush1.bf16.xpose.msra.mxu0 0
    %447 = vmatprep.subr.bf16.mxu0 0
    %448 = vmatpush1.bf16.xpose.msra.mxu0 0
    %449 = vmatprep.subr.bf16.mxu0 0
    %450 = vmatpush1.bf16.xpose.msra.mxu0 0
    %451 = vmatprep.subr.bf16.mxu0 0
    %452 = vmatpush1.bf16.xpose.msra.mxu0 0
    %453 = vmatprep.subr.bf16.mxu0 0
    %454 = vmatpush1.bf16.xpose.msra.mxu0 0
    %455 = vmatprep.subr.bf16.mxu0 0
    %456 = vmatpush1.bf16.xpose.msra.mxu0 0
    %457 = vmatprep.mubr.bf16.mxu0 0
    %458 = vmatmul.mubr.bf16.gmra.mrb[0].mxu0 %v420
    %v459 = vpop.f32.mrb[0].mxu0
    %v460 = vadd.f32 0.0, %v459
    %v461 = vpop.f32.mrb[0].mxu0
    %v462 = vpop.f32.mrb[0].mxu0
    %v463 = vpop.f32.mrb[0].mxu0
    %464 = vdwg.mxu0
    %v465 = vsel %vm355, %v460, -inf
    %466 = vmax.xlane.f32.xlu0 %v465
    %v467 = vpop.xlane.xlu0 %466
    %v468 = vsub.f32 %v460, %v467
    %v469 = vmul.f32 %v468, 1.442695
    %v470 = vpow.pop %v469
    %v471 = vsel %vm355, %v470, 0.0
    %472 = vadd.xlane.f32.xlu0 %v471
    %v473 = vpop.xlane.xlu0 %472
    %v474 = vrcp.pop %v473
    %v475 = vmul.f32 %v470, %v474
    %v476 = vpack.c.bf16 %v475, %v475
    %v478 = vrot.slane %v307, 4
    %v480 = vsel %vm355, %v476, 0
    %v483 = vsel %vm371, %v478, 0
    %485 = vmatprep.subr.bf16.mxu0 0
    %486 = vmatpush1.bf16.msra.mxu0 %v483
    %487 = vmatprep.subr.bf16.mxu0 0
    %488 = vmatpush1.bf16.msra.mxu0 0
    %489 = vmatprep.subr.bf16.mxu0 0
    %490 = vmatpush1.bf16.msra.mxu0 0
    %491 = vmatprep.subr.bf16.mxu0 0
    %492 = vmatpush1.bf16.msra.mxu0 0
    %493 = vmatprep.subr.bf16.mxu0 0
    %494 = vmatpush1.bf16.msra.mxu0 0
    %495 = vmatprep.subr.bf16.mxu0 0
    %496 = vmatpush1.bf16.msra.mxu0 0
    %497 = vmatprep.subr.bf16.mxu0 0
    %498 = vmatpush1.bf16.msra.mxu0 0
    %499 = vmatprep.subr.bf16.mxu0 0
    %500 = vmatpush1.bf16.msra.mxu0 0
    %501 = vmatprep.subr.bf16.mxu0 0
    %502 = vmatpush1.bf16.msra.mxu0 0
    %503 = vmatprep.subr.bf16.mxu0 0
    %504 = vmatpush1.bf16.msra.mxu0 0
    %505 = vmatprep.subr.bf16.mxu0 0
    %506 = vmatpush1.bf16.msra.mxu0 0
    %507 = vmatprep.subr.bf16.mxu0 0
    %508 = vmatpush1.bf16.msra.mxu0 0
    %509 = vmatprep.subr.bf16.mxu0 0
    %510 = vmatpush1.bf16.msra.mxu0 0
    %511 = vmatprep.subr.bf16.mxu0 0
    %512 = vmatpush1.bf16.msra.mxu0 0
    %513 = vmatprep.subr.bf16.mxu0 0
    %514 = vmatpush1.bf16.msra.mxu0 0
    %515 = vmatprep.subr.bf16.mxu0 0
    %516 = vmatpush1.bf16.msra.mxu0 0
    %517 = vmatprep.mubr.bf16.mxu0 0
    %518 = vmatmul.mubr.bf16.gmra.mrb[0].mxu0 %v480
    %v519 = vpop.f32.mrb[0].mxu0
    %v520 = vadd.f32 0.0, %v519
    %v521 = vpop.f32.mrb[0].mxu0
    %v522 = vpop.f32.mrb[0].mxu0
    %v523 = vpop.f32.mrb[0].mxu0
    %524 = vdwg.mxu0
    %v525 = vpack.c.bf16 %v520, %v410
    %v526 = vld [vmem:[%s7] sm:$0xf]
    %v527 = vld [vmem:[%s7 + $0x4] sm:$0xf]
    %v528 = vld [vmem:[%s7 + $0x8] sm:$0xf]
    %v529 = vld [vmem:[%s7 + $0xc] sm:$0xf]
    %s530 = scalar_lea.vmem %s1, 32
    %v531 = vld [vmem:[%s530] sm:$0xf]
    %v532 = vld [vmem:[%s530 + $0x4] sm:$0xf]
    %v533 = vld [vmem:[%s530 + $0x8] sm:$0xf]
    %v534 = vld [vmem:[%s530 + $0xc] sm:$0xf]
    %v535 = vld [vmem:[%s530 + $0x10] sm:$0xf]
    %v536 = vld [vmem:[%s530 + $0x14] sm:$0xf]
    %v537 = vld [vmem:[%s530 + $0x18] sm:$0xf]
    %v538 = vld [vmem:[%s530 + $0x1c] sm:$0xf]
    %s539 = scalar_lea.vmem %s2, 1
    %v540 = vld [vmem:[%s539] sm:$0x1]
    %v542 = vlaneseq
    %v543 = vshrl.u32 %v542, 7
    %v544 = vsub.s32 0, %v543
    %v545 = vrot.slane %v540, %v544
    %v555 = vunpack.c.l.b16 %v531
    %v556 = vunpack.c.l.b16 %v532
    %v557 = vunpack.c.l.b16 %v533
    %v558 = vunpack.c.l.b16 %v534
    %v559 = vunpack.c.l.b16 %v535
    %v560 = vunpack.c.l.b16 %v536
    %v561 = vunpack.c.l.b16 %v537
    %v562 = vunpack.c.l.b16 %v538
    %v563 = vpack.c.b16 %v556, %v555
    %v564 = vpack.c.b16 %v558, %v557
    %v565 = vpack.c.b16 %v560, %v559
    %v566 = vpack.c.b16 %v562, %v561
    %571 = vmatprep.subr.bf16.mxu0 0
    %572 = vmatpush1.bf16.msra.mxu0 %v563
    %573 = vmatprep.subr.bf16.mxu0 0
    %574 = vmatpush1.bf16.msra.mxu0 %v564
    %575 = vmatprep.subr.bf16.mxu0 0
    %576 = vmatpush1.bf16.msra.mxu0 %v565
    %577 = vmatprep.subr.bf16.mxu0 0
    %578 = vmatpush1.bf16.msra.mxu0 %v566
    %579 = vmatprep.subr.bf16.mxu0 0
    %580 = vmatpush1.bf16.msra.mxu0 0
    %581 = vmatprep.subr.bf16.mxu0 0
    %582 = vmatpush1.bf16.msra.mxu0 0
    %583 = vmatprep.subr.bf16.mxu0 0
    %584 = vmatpush1.bf16.msra.mxu0 0
    %585 = vmatprep.subr.bf16.mxu0 0
    %586 = vmatpush1.bf16.msra.mxu0 0
    %587 = vmatprep.subr.bf16.mxu0 0
    %588 = vmatpush1.bf16.msra.mxu0 0
    %589 = vmatprep.subr.bf16.mxu0 0
    %590 = vmatpush1.bf16.msra.mxu0 0
    %591 = vmatprep.subr.bf16.mxu0 0
    %592 = vmatpush1.bf16.msra.mxu0 0
    %593 = vmatprep.subr.bf16.mxu0 0
    %594 = vmatpush1.bf16.msra.mxu0 0
    %595 = vmatprep.subr.bf16.mxu0 0
    %596 = vmatpush1.bf16.msra.mxu0 0
    %597 = vmatprep.subr.bf16.mxu0 0
    %598 = vmatpush1.bf16.msra.mxu0 0
    %599 = vmatprep.subr.bf16.mxu0 0
    %600 = vmatpush1.bf16.msra.mxu0 0
    %601 = vmatprep.subr.bf16.mxu0 0
    %602 = vmatpush1.bf16.msra.mxu0 0
    %603 = vmatprep.mubr.bf16.mxu0 0
    %604 = vmatmul.mubr.bf16.gmra.mrb[0].mxu0 %v102
    %v605 = vpop.f32.mrb[0].mxu0
    %v606 = vadd.f32 %v545, %v605
    %v607 = vpop.f32.mrb[0].mxu0
    %v608 = vpop.f32.mrb[0].mxu0
    %v609 = vadd.f32 %v545, %v608
    %v610 = vpop.f32.mrb[0].mxu0
    %611 = vdwg.mxu0
    %s612 = scalar_lea.vmem %s3, 32
    %v613 = vld [vmem:[%s612] sm:$0xf]
    %v614 = vld [vmem:[%s612 + $0x4] sm:$0xf]
    %v615 = vld [vmem:[%s612 + $0x8] sm:$0xf]
    %v616 = vld [vmem:[%s612 + $0xc] sm:$0xf]
    %v617 = vld [vmem:[%s612 + $0x10] sm:$0xf]
    %v618 = vld [vmem:[%s612 + $0x14] sm:$0xf]
    %v619 = vld [vmem:[%s612 + $0x18] sm:$0xf]
    %v620 = vld [vmem:[%s612 + $0x1c] sm:$0xf]
    %s621 = scalar_lea.vmem %s4, 1
    %v622 = vld [vmem:[%s621] sm:$0x1]
    %v624 = vlaneseq
    %v625 = vshrl.u32 %v624, 7
    %v626 = vsub.s32 0, %v625
    %v627 = vrot.slane %v622, %v626
    %v637 = vunpack.c.l.b16 %v613
    %v638 = vunpack.c.l.b16 %v614
    %v639 = vunpack.c.l.b16 %v615
    %v640 = vunpack.c.l.b16 %v616
    %v641 = vunpack.c.l.b16 %v617
    %v642 = vunpack.c.l.b16 %v618
    %v643 = vunpack.c.l.b16 %v619
    %v644 = vunpack.c.l.b16 %v620
    %v645 = vpack.c.b16 %v638, %v637
    %v646 = vpack.c.b16 %v640, %v639
    %v647 = vpack.c.b16 %v642, %v641
    %v648 = vpack.c.b16 %v644, %v643
    %653 = vmatprep.subr.bf16.mxu0 0
    %654 = vmatpush1.bf16.msra.mxu0 %v645
    %655 = vmatprep.subr.bf16.mxu0 0
    %656 = vmatpush1.bf16.msra.mxu0 %v646
    %657 = vmatprep.subr.bf16.mxu0 0
    %658 = vmatpush1.bf16.msra.mxu0 %v647
    %659 = vmatprep.subr.bf16.mxu0 0
    %660 = vmatpush1.bf16.msra.mxu0 %v648
    %661 = vmatprep.subr.bf16.mxu0 0
    %662 = vmatpush1.bf16.msra.mxu0 0
    %663 = vmatprep.subr.bf16.mxu0 0
    %664 = vmatpush1.bf16.msra.mxu0 0
    %665 = vmatprep.subr.bf16.mxu0 0
    %666 = vmatpush1.bf16.msra.mxu0 0
    %667 = vmatprep.subr.bf16.mxu0 0
    %668 = vmatpush1.bf16.msra.mxu0 0
    %669 = vmatprep.subr.bf16.mxu0 0
    %670 = vmatpush1.bf16.msra.mxu0 0
    %671 = vmatprep.subr.bf16.mxu0 0
    %672 = vmatpush1.bf16.msra.mxu0 0
    %673 = vmatprep.subr.bf16.mxu0 0
    %674 = vmatpush1.bf16.msra.mxu0 0
    %675 = vmatprep.subr.bf16.mxu0 0
    %676 = vmatpush1.bf16.msra.mxu0 0
    %677 = vmatprep.subr.bf16.mxu0 0
    %678 = vmatpush1.bf16.msra.mxu0 0
    %679 = vmatprep.subr.bf16.mxu0 0
    %680 = vmatpush1.bf16.msra.mxu0 0
    %681 = vmatprep.subr.bf16.mxu0 0
    %682 = vmatpush1.bf16.msra.mxu0 0
    %683 = vmatprep.subr.bf16.mxu0 0
    %684 = vmatpush1.bf16.msra.mxu0 0
    %685 = vmatprep.mubr.bf16.mxu0 0
    %686 = vmatmul.mubr.bf16.gmra.mrb[0].mxu0 %v102
    %v687 = vpop.f32.mrb[0].mxu0
    %v688 = vadd.f32 %v627, %v687
    %v689 = vpop.f32.mrb[0].mxu0
    %v690 = vpop.f32.mrb[0].mxu0
    %v691 = vadd.f32 %v627, %v690
    %v692 = vpop.f32.mrb[0].mxu0
    %693 = vdwg.mxu0
    %s694 = scalar_lea.vmem %s5, 32
    %v695 = vld [vmem:[%s694] sm:$0xf]
    %v696 = vld [vmem:[%s694 + $0x4] sm:$0xf]
    %v697 = vld [vmem:[%s694 + $0x8] sm:$0xf]
    %v698 = vld [vmem:[%s694 + $0xc] sm:$0xf]
    %v699 = vld [vmem:[%s694 + $0x10] sm:$0xf]
    %v700 = vld [vmem:[%s694 + $0x14] sm:$0xf]
    %v701 = vld [vmem:[%s694 + $0x18] sm:$0xf]
    %v702 = vld [vmem:[%s694 + $0x1c] sm:$0xf]
    %s703 = scalar_lea.vmem %s6, 1
    %v704 = vld [vmem:[%s703] sm:$0x1]
    %v706 = vlaneseq
    %v707 = vshrl.u32 %v706, 7
    %v708 = vsub.s32 0, %v707
    %v709 = vrot.slane %v704, %v708
    %v719 = vunpack.c.l.b16 %v695
    %v720 = vunpack.c.l.b16 %v696
    %v721 = vunpack.c.l.b16 %v697
    %v722 = vunpack.c.l.b16 %v698
    %v723 = vunpack.c.l.b16 %v699
    %v724 = vunpack.c.l.b16 %v700
    %v725 = vunpack.c.l.b16 %v701
    %v726 = vunpack.c.l.b16 %v702
    %v727 = vpack.c.b16 %v720, %v719
    %v728 = vpack.c.b16 %v722, %v721
    %v729 = vpack.c.b16 %v724, %v723
    %v730 = vpack.c.b16 %v726, %v725
    %735 = vmatprep.subr.bf16.mxu0 0
    %736 = vmatpush1.bf16.msra.mxu0 %v727
    %737 = vmatprep.subr.bf16.mxu0 0
    %738 = vmatpush1.bf16.msra.mxu0 %v728
    %739 = vmatprep.subr.bf16.mxu0 0
    %740 = vmatpush1.bf16.msra.mxu0 %v729
    %741 = vmatprep.subr.bf16.mxu0 0
    %742 = vmatpush1.bf16.msra.mxu0 %v730
    %743 = vmatprep.subr.bf16.mxu0 0
    %744 = vmatpush1.bf16.msra.mxu0 0
    %745 = vmatprep.subr.bf16.mxu0 0
    %746 = vmatpush1.bf16.msra.mxu0 0
    %747 = vmatprep.subr.bf16.mxu0 0
    %748 = vmatpush1.bf16.msra.mxu0 0
    %749 = vmatprep.subr.bf16.mxu0 0
    %750 = vmatpush1.bf16.msra.mxu0 0
    %751 = vmatprep.subr.bf16.mxu0 0
    %752 = vmatpush1.bf16.msra.mxu0 0
    %753 = vmatprep.subr.bf16.mxu0 0
    %754 = vmatpush1.bf16.msra.mxu0 0
    %755 = vmatprep.subr.bf16.mxu0 0
    %756 = vmatpush1.bf16.msra.mxu0 0
    %757 = vmatprep.subr.bf16.mxu0 0
    %758 = vmatpush1.bf16.msra.mxu0 0
    %759 = vmatprep.subr.bf16.mxu0 0
    %760 = vmatpush1.bf16.msra.mxu0 0
    %761 = vmatprep.subr.bf16.mxu0 0
    %762 = vmatpush1.bf16.msra.mxu0 0
    %763 = vmatprep.subr.bf16.mxu0 0
    %764 = vmatpush1.bf16.msra.mxu0 0
    %765 = vmatprep.subr.bf16.mxu0 0
    %766 = vmatpush1.bf16.msra.mxu0 0
    %767 = vmatprep.mubr.bf16.mxu0 0
    %768 = vmatmul.mubr.bf16.gmra.mrb[0].mxu0 %v102
    %v769 = vpop.f32.mrb[0].mxu0
    %v770 = vadd.f32 %v709, %v769
    %v771 = vpop.f32.mrb[0].mxu0
    %v772 = vpop.f32.mrb[0].mxu0
    %v773 = vadd.f32 %v709, %v772
    %v774 = vpop.f32.mrb[0].mxu0
    %775 = vdwg.mxu0
    %v776 = vpack.c.bf16 %v609, %v606
    %v777 = vpack.c.bf16 %v691, %v688
    %v778 = vpack.c.bf16 %v773, %v770
    %v780 = vsel %vm308, %v776, 0
    %v783 = vsel %vm308, %v777, 0
    %785 = vmatprep.subr.bf16.mxu0 0
    %786 = vmatpush1.bf16.xpose.msra.mxu0 %v783
    %787 = vmatprep.subr.bf16.mxu0 0
    %788 = vmatpush1.bf16.xpose.msra.mxu0 0
    %789 = vmatprep.subr.bf16.mxu0 0
    %790 = vmatpush1.bf16.xpose.msra.mxu0 0
    %791 = vmatprep.subr.bf16.mxu0 0
    %792 = vmatpush1.bf16.xpose.msra.mxu0 0
    %793 = vmatprep.subr.bf16.mxu0 0
    %794 = vmatpush1.bf16.xpose.msra.mxu0 0
    %795 = vmatprep.subr.bf16.mxu0 0
    %796 = vmatpush1.bf16.xpose.msra.mxu0 0
    %797 = vmatprep.subr.bf16.mxu0 0
    %798 = vmatpush1.bf16.xpose.msra.mxu0 0
    %799 = vmatprep.subr.bf16.mxu0 0
    %800 = vmatpush1.bf16.xpose.msra.mxu0 0
    %801 = vmatprep.subr.bf16.mxu0 0
    %802 = vmatpush1.bf16.xpose.msra.mxu0 0
    %803 = vmatprep.subr.bf16.mxu0 0
    %804 = vmatpush1.bf16.xpose.msra.mxu0 0
    %805 = vmatprep.subr.bf16.mxu0 0
    %806 = vmatpush1.bf16.xpose.msra.mxu0 0
    %807 = vmatprep.subr.bf16.mxu0 0
    %808 = vmatpush1.bf16.xpose.msra.mxu0 0
    %809 = vmatprep.subr.bf16.mxu0 0
    %810 = vmatpush1.bf16.xpose.msra.mxu0 0
    %811 = vmatprep.subr.bf16.mxu0 0
    %812 = vmatpush1.bf16.xpose.msra.mxu0 0
    %813 = vmatprep.subr.bf16.mxu0 0
    %814 = vmatpush1.bf16.xpose.msra.mxu0 0
    %815 = vmatprep.subr.bf16.mxu0 0
    %816 = vmatpush1.bf16.xpose.msra.mxu0 0
    %817 = vmatprep.mubr.bf16.mxu0 0
    %818 = vmatmul.mubr.bf16.gmra.mrb[0].mxu0 %v780
    %v819 = vpop.f32.mrb[0].mxu0
    %v820 = vadd.f32 0.0, %v819
    %v821 = vpop.f32.mrb[0].mxu0
    %v822 = vpop.f32.mrb[0].mxu0
    %v823 = vpop.f32.mrb[0].mxu0
    %824 = vdwg.mxu0
    %v825 = vsel %vm355, %v820, -inf
    %826 = vmax.xlane.f32.xlu0 %v825
    %v827 = vpop.xlane.xlu0 %826
    %v828 = vsub.f32 %v820, %v827
    %v829 = vmul.f32 %v828, 1.442695
    %v830 = vpow.pop %v829
    %v831 = vsel %vm355, %v830, 0.0
    %832 = vadd.xlane.f32.xlu0 %v831
    %v833 = vpop.xlane.xlu0 %832
    %v834 = vrcp.pop %v833
    %v835 = vmul.f32 %v830, %v834
    %v836 = vpack.c.bf16 %v835, %v835
    %v838 = vsel %vm355, %v836, 0
    %v841 = vsel %vm371, %v778, 0
    %843 = vmatprep.subr.bf16.mxu0 0
    %844 = vmatpush1.bf16.msra.mxu0 %v841
    %845 = vmatprep.subr.bf16.mxu0 0
    %846 = vmatpush1.bf16.msra.mxu0 0
    %847 = vmatprep.subr.bf16.mxu0 0
    %848 = vmatpush1.bf16.msra.mxu0 0
    %849 = vmatprep.subr.bf16.mxu0 0
    %850 = vmatpush1.bf16.msra.mxu0 0
    %851 = vmatprep.subr.bf16.mxu0 0
    %852 = vmatpush1.bf16.msra.mxu0 0
    %853 = vmatprep.subr.bf16.mxu0 0
    %854 = vmatpush1.bf16.msra.mxu0 0
    %855 = vmatprep.subr.bf16.mxu0 0
    %856 = vmatpush1.bf16.msra.mxu0 0
    %857 = vmatprep.subr.bf16.mxu0 0
    %858 = vmatpush1.bf16.msra.mxu0 0
    %859 = vmatprep.subr.bf16.mxu0 0
    %860 = vmatpush1.bf16.msra.mxu0 0
    %861 = vmatprep.subr.bf16.mxu0 0
    %862 = vmatpush1.bf16.msra.mxu0 0
    %863 = vmatprep.subr.bf16.mxu0 0
    %864 = vmatpush1.bf16.msra.mxu0 0
    %865 = vmatprep.subr.bf16.mxu0 0
    %866 = vmatpush1.bf16.msra.mxu0 0
    %867 = vmatprep.subr.bf16.mxu0 0
    %868 = vmatpush1.bf16.msra.mxu0 0
    %869 = vmatprep.subr.bf16.mxu0 0
    %870 = vmatpush1.bf16.msra.mxu0 0
    %871 = vmatprep.subr.bf16.mxu0 0
    %872 = vmatpush1.bf16.msra.mxu0 0
    %873 = vmatprep.subr.bf16.mxu0 0
    %874 = vmatpush1.bf16.msra.mxu0 0
    %875 = vmatprep.mubr.bf16.mxu0 0
    %876 = vmatmul.mubr.bf16.gmra.mrb[0].mxu0 %v838
    %v877 = vpop.f32.mrb[0].mxu0
    %v878 = vadd.f32 0.0, %v877
    %v879 = vpop.f32.mrb[0].mxu0
    %v880 = vpop.f32.mrb[0].mxu0
    %v881 = vpop.f32.mrb[0].mxu0
    %882 = vdwg.mxu0
    %v884 = vrot.slane %v776, 4
    %v886 = vrot.slane %v777, 4
    %v888 = vsel %vm308, %v884, 0
    %v891 = vsel %vm308, %v886, 0
    %893 = vmatprep.subr.bf16.mxu0 0
    %894 = vmatpush1.bf16.xpose.msra.mxu0 %v891
    %895 = vmatprep.subr.bf16.mxu0 0
    %896 = vmatpush1.bf16.xpose.msra.mxu0 0
    %897 = vmatprep.subr.bf16.mxu0 0
    %898 = vmatpush1.bf16.xpose.msra.mxu0 0
    %899 = vmatprep.subr.bf16.mxu0 0
    %900 = vmatpush1.bf16.xpose.msra.mxu0 0
    %901 = vmatprep.subr.bf16.mxu0 0
    %902 = vmatpush1.bf16.xpose.msra.mxu0 0
    %903 = vmatprep.subr.bf16.mxu0 0
    %904 = vmatpush1.bf16.xpose.msra.mxu0 0
    %905 = vmatprep.subr.bf16.mxu0 0
    %906 = vmatpush1.bf16.xpose.msra.mxu0 0
    %907 = vmatprep.subr.bf16.mxu0 0
    %908 = vmatpush1.bf16.xpose.msra.mxu0 0
    %909 = vmatprep.subr.bf16.mxu0 0
    %910 = vmatpush1.bf16.xpose.msra.mxu0 0
    %911 = vmatprep.subr.bf16.mxu0 0
    %912 = vmatpush1.bf16.xpose.msra.mxu0 0
    %913 = vmatprep.subr.bf16.mxu0 0
    %914 = vmatpush1.bf16.xpose.msra.mxu0 0
    %915 = vmatprep.subr.bf16.mxu0 0
    %916 = vmatpush1.bf16.xpose.msra.mxu0 0
    %917 = vmatprep.subr.bf16.mxu0 0
    %918 = vmatpush1.bf16.xpose.msra.mxu0 0
    %919 = vmatprep.subr.bf16.mxu0 0
    %920 = vmatpush1.bf16.xpose.msra.mxu0 0
    %921 = vmatprep.subr.bf16.mxu0 0
    %922 = vmatpush1.bf16.xpose.msra.mxu0 0
    %923 = vmatprep.subr.bf16.mxu0 0
    %924 = vmatpush1.bf16.xpose.msra.mxu0 0
    %925 = vmatprep.mubr.bf16.mxu0 0
    %926 = vmatmul.mubr.bf16.gmra.mrb[0].mxu0 %v888
    %v927 = vpop.f32.mrb[0].mxu0
    %v928 = vadd.f32 0.0, %v927
    %v929 = vpop.f32.mrb[0].mxu0
    %v930 = vpop.f32.mrb[0].mxu0
    %v931 = vpop.f32.mrb[0].mxu0
    %932 = vdwg.mxu0
    %v933 = vsel %vm355, %v928, -inf
    %934 = vmax.xlane.f32.xlu0 %v933
    %v935 = vpop.xlane.xlu0 %934
    %v936 = vsub.f32 %v928, %v935
    %v937 = vmul.f32 %v936, 1.442695
    %v938 = vpow.pop %v937
    %v939 = vsel %vm355, %v938, 0.0
    %940 = vadd.xlane.f32.xlu0 %v939
    %v941 = vpop.xlane.xlu0 %940
    %v942 = vrcp.pop %v941
    %v943 = vmul.f32 %v938, %v942
    %v944 = vpack.c.bf16 %v943, %v943
    %v946 = vrot.slane %v778, 4
    %v948 = vsel %vm355, %v944, 0
    %v951 = vsel %vm371, %v946, 0
    %953 = vmatprep.subr.bf16.mxu0 0
    %954 = vmatpush1.bf16.msra.mxu0 %v951
    %955 = vmatprep.subr.bf16.mxu0 0
    %956 = vmatpush1.bf16.msra.mxu0 0
    %957 = vmatprep.subr.bf16.mxu0 0
    %958 = vmatpush1.bf16.msra.mxu0 0
    %959 = vmatprep.subr.bf16.mxu0 0
    %960 = vmatpush1.bf16.msra.mxu0 0
    %961 = vmatprep.subr.bf16.mxu0 0
    %962 = vmatpush1.bf16.msra.mxu0 0
    %963 = vmatprep.subr.bf16.mxu0 0
    %964 = vmatpush1.bf16.msra.mxu0 0
    %965 = vmatprep.subr.bf16.mxu0 0
    %966 = vmatpush1.bf16.msra.mxu0 0
    %967 = vmatprep.subr.bf16.mxu0 0
    %968 = vmatpush1.bf16.msra.mxu0 0
    %969 = vmatprep.subr.bf16.mxu0 0
    %970 = vmatpush1.bf16.msra.mxu0 0
    %971 = vmatprep.subr.bf16.mxu0 0
    %972 = vmatpush1.bf16.msra.mxu0 0
    %973 = vmatprep.subr.bf16.mxu0 0
    %974 = vmatpush1.bf16.msra.mxu0 0
    %975 = vmatprep.subr.bf16.mxu0 0
    %976 = vmatpush1.bf16.msra.mxu0 0
    %977 = vmatprep.subr.bf16.mxu0 0
    %978 = vmatpush1.bf16.msra.mxu0 0
    %979 = vmatprep.subr.bf16.mxu0 0
    %980 = vmatpush1.bf16.msra.mxu0 0
    %981 = vmatprep.subr.bf16.mxu0 0
    %982 = vmatpush1.bf16.msra.mxu0 0
    %983 = vmatprep.subr.bf16.mxu0 0
    %984 = vmatpush1.bf16.msra.mxu0 0
    %985 = vmatprep.mubr.bf16.mxu0 0
    %986 = vmatmul.mubr.bf16.gmra.mrb[0].mxu0 %v948
    %v987 = vpop.f32.mrb[0].mxu0
    %v988 = vadd.f32 0.0, %v987
    %v989 = vpop.f32.mrb[0].mxu0
    %v990 = vpop.f32.mrb[0].mxu0
    %v991 = vpop.f32.mrb[0].mxu0
    %992 = vdwg.mxu0
    %v993 = vpack.c.bf16 %v988, %v878
    %s994 = scalar_lea.vmem %s7, 16
    %v995 = vld [vmem:[%s994] sm:$0xf]
    %v996 = vld [vmem:[%s994 + $0x4] sm:$0xf]
    %v997 = vld [vmem:[%s994 + $0x8] sm:$0xf]
    %v998 = vld [vmem:[%s994 + $0xc] sm:$0xf]
    %v1003 = vunpack.c.l.b16 %v995
    %v1004 = vunpack.c.l.b16 %v996
    %v1005 = vunpack.c.l.b16 %v997
    %v1006 = vunpack.c.l.b16 %v998
    %v1007 = vpack.c.b16 %v1004, %v1003
    %v1008 = vpack.c.b16 %v1006, %v1005
    %v1012 = vsel %vm308, %v993, 0
    %1014 = vmatprep.subr.bf16.mxu0 0
    %1015 = vmatpush1.bf16.msra.mxu0 %v1007
    %1016 = vmatprep.subr.bf16.mxu0 0
    %1017 = vmatpush1.bf16.msra.mxu0 %v1008
    %1018 = vmatprep.subr.bf16.mxu0 0
    %1019 = vmatpush1.bf16.msra.mxu0 0
    %1020 = vmatprep.subr.bf16.mxu0 0
    %1021 = vmatpush1.bf16.msra.mxu0 0
    %1022 = vmatprep.subr.bf16.mxu0 0
    %1023 = vmatpush1.bf16.msra.mxu0 0
    %1024 = vmatprep.subr.bf16.mxu0 0
    %1025 = vmatpush1.bf16.msra.mxu0 0
    %1026 = vmatprep.subr.bf16.mxu0 0
    %1027 = vmatpush1.bf16.msra.mxu0 0
    %1028 = vmatprep.subr.bf16.mxu0 0
    %1029 = vmatpush1.bf16.msra.mxu0 0
    %1030 = vmatprep.subr.bf16.mxu0 0
    %1031 = vmatpush1.bf16.msra.mxu0 0
    %1032 = vmatprep.subr.bf16.mxu0 0
    %1033 = vmatpush1.bf16.msra.mxu0 0
    %1034 = vmatprep.subr.bf16.mxu0 0
    %1035 = vmatpush1.bf16.msra.mxu0 0
    %1036 = vmatprep.subr.bf16.mxu0 0
    %1037 = vmatpush1.bf16.msra.mxu0 0
    %1038 = vmatprep.subr.bf16.mxu0 0
    %1039 = vmatpush1.bf16.msra.mxu0 0
    %1040 = vmatprep.subr.bf16.mxu0 0
    %1041 = vmatpush1.bf16.msra.mxu0 0
    %1042 = vmatprep.subr.bf16.mxu0 0
    %1043 = vmatpush1.bf16.msra.mxu0 0
    %1044 = vmatprep.subr.bf16.mxu0 0
    %1045 = vmatpush1.bf16.msra.mxu0 0
    %1046 = vmatprep.mubr.bf16.mxu0 0
    %1047 = vmatmul.mubr.bf16.gmra.mrb[0].mxu0 %v1012
    %v1048 = vpop.f32.mrb[0].mxu0
    %v1049 = vadd.f32 0.0, %v1048
    %v1050 = vpop.f32.mrb[0].mxu0
    %v1051 = vpop.f32.mrb[0].mxu0
    %v1052 = vadd.f32 0.0, %v1051
    %v1053 = vpop.f32.mrb[0].mxu0
    %1054 = vdwg.mxu0
    %v1059 = vunpack.c.l.b16 %v526
    %v1060 = vunpack.c.l.b16 %v527
    %v1061 = vunpack.c.l.b16 %v528
    %v1062 = vunpack.c.l.b16 %v529
    %v1063 = vpack.c.b16 %v1060, %v1059
    %v1064 = vpack.c.b16 %v1062, %v1061
    %v1068 = vsel %vm308, %v525, 0
    %1070 = vmatprep.subr.bf16.mxu0 0
    %1071 = vmatpush1.bf16.msra.mxu0 %v1063
    %1072 = vmatprep.subr.bf16.mxu0 0
    %1073 = vmatpush1.bf16.msra.mxu0 %v1064
    %1074 = vmatprep.subr.bf16.mxu0 0
    %1075 = vmatpush1.bf16.msra.mxu0 0
    %1076 = vmatprep.subr.bf16.mxu0 0
    %1077 = vmatpush1.bf16.msra.mxu0 0
    %1078 = vmatprep.subr.bf16.mxu0 0
    %1079 = vmatpush1.bf16.msra.mxu0 0
    %1080 = vmatprep.subr.bf16.mxu0 0
    %1081 = vmatpush1.bf16.msra.mxu0 0
    %1082 = vmatprep.subr.bf16.mxu0 0
    %1083 = vmatpush1.bf16.msra.mxu0 0
    %1084 = vmatprep.subr.bf16.mxu0 0
    %1085 = vmatpush1.bf16.msra.mxu0 0
    %1086 = vmatprep.subr.bf16.mxu0 0
    %1087 = vmatpush1.bf16.msra.mxu0 0
    %1088 = vmatprep.subr.bf16.mxu0 0
    %1089 = vmatpush1.bf16.msra.mxu0 0
    %1090 = vmatprep.subr.bf16.mxu0 0
    %1091 = vmatpush1.bf16.msra.mxu0 0
    %1092 = vmatprep.subr.bf16.mxu0 0
    %1093 = vmatpush1.bf16.msra.mxu0 0
    %1094 = vmatprep.subr.bf16.mxu0 0
    %1095 = vmatpush1.bf16.msra.mxu0 0
    %1096 = vmatprep.subr.bf16.mxu0 0
    %1097 = vmatpush1.bf16.msra.mxu0 0
    %1098 = vmatprep.subr.bf16.mxu0 0
    %1099 = vmatpush1.bf16.msra.mxu0 0
    %1100 = vmatprep.subr.bf16.mxu0 0
    %1101 = vmatpush1.bf16.msra.mxu0 0
    %1102 = vmatprep.mubr.bf16.mxu0 0
    %1103 = vmatmul.mubr.bf16.gmra.mrb[0].mxu0 %v1068
    %v1104 = vpop.f32.mrb[0].mxu0
    %v1105 = vadd.f32 %v1049, %v1104
    %v1106 = vpop.f32.mrb[0].mxu0
    %v1107 = vpop.f32.mrb[0].mxu0
    %v1108 = vadd.f32 %v1052, %v1107
    %v1109 = vpop.f32.mrb[0].mxu0
    %1110 = vdwg.mxu0
    %v1111 = vld [vmem:[%s8] sm:$0x1]
    %v1113 = vlaneseq
    %v1114 = vshrl.u32 %v1113, 7
    %v1115 = vsub.s32 0, %v1114
    %v1116 = vrot.slane %v1111, %v1115
    %v1118 = vadd.f32 %v1105, %v1116
    %v1119 = vadd.f32 %v1108, %v1116
    %v1120 = vadd.f32 %v58, %v1118
    %v1121 = vadd.f32 %v59, %v1119
    %v1122 = vld [vmem:[%s13] sm:$0x1]
    %v1123 = vld [vmem:[%s14] sm:$0x1]
    %v1124 = vsel %vm100, %v1120, 0.0
    %1125 = vadd.xlane.f32.xlu0 %v1124
    %v1126 = vpop.xlane.xlu0 %1125
    %v1127 = vsel %vm100, %v1121, 0.0
    %1128 = vadd.xlane.f32.xlu0 %v1127
    %v1129 = vpop.xlane.xlu0 %1128
    %v1130 = vrcp.pop 64.0
    %v1131 = vmul.f32 %v1126, %v1130
    %v1132 = vmul.f32 %v1129, %v1130
    %v1133 = vsub.f32 %v1120, %v1131
    %v1134 = vsub.f32 %v1121, %v1132
    %v1135 = vmul.f32 %v1133, %v1133
    %v1136 = vmul.f32 %v1134, %v1134
    %v1137 = vsel %vm100, %v1135, 0.0
    %1138 = vadd.xlane.f32.xlu0 %v1137
    %v1139 = vpop.xlane.xlu0 %1138
    %v1140 = vsel %vm100, %v1136, 0.0
    %1141 = vadd.xlane.f32.xlu0 %v1140
    %v1142 = vpop.xlane.xlu0 %1141
    %v1143 = vmul.f32 %v1139, %v1130
    %v1144 = vmul.f32 %v1142, %v1130
    %v1145 = vadd.f32 %v1143, 1e-05
    %v1146 = vadd.f32 %v1144, 1e-05
    %v1147 = vrsqrt.pop %v1145
    %v1148 = vrsqrt.pop %v1146
    %v1149 = vmul.f32 %v1133, %v1147
    %v1150 = vmul.f32 %v1134, %v1148
    %v1152 = vlaneseq
    %v1153 = vshrl.u32 %v1152, 7
    %v1154 = vsub.s32 0, %v1153
    %v1155 = vrot.slane %v1122, %v1154
    %v1157 = vmul.f32 %v1149, %v1155
    %v1158 = vmul.f32 %v1150, %v1155
    %v1160 = vlaneseq
    %v1161 = vshrl.u32 %v1160, 7
    %v1162 = vsub.s32 0, %v1161
    %v1163 = vrot.slane %v1123, %v1162
    %v1165 = vadd.f32 %v1157, %v1163
    %v1166 = vadd.f32 %v1158, %v1163
    %v1167 = vpack.c.bf16 %v1166, %v1165
    %v1168 = vld [vmem:[%s9] sm:$0xf]
    %v1169 = vld [vmem:[%s9 + $0x4] sm:$0xf]
    %v1170 = vld [vmem:[%s9 + $0x8] sm:$0xf]
    %v1171 = vld [vmem:[%s9 + $0xc] sm:$0xf]
    %v1172 = vld [vmem:[%s9 + $0x10] sm:$0xf]
    %v1173 = vld [vmem:[%s9 + $0x14] sm:$0xf]
    %v1174 = vld [vmem:[%s9 + $0x18] sm:$0xf]
    %v1175 = vld [vmem:[%s9 + $0x1c] sm:$0xf]
    %v1176 = vld [vmem:[%s10] sm:$0x1]
    %v1178 = vlaneseq
    %v1179 = vshrl.u32 %v1178, 7
    %v1180 = vsub.s32 0, %v1179
    %v1181 = vrot.slane %v1176, %v1180
    %v1191 = vunpack.c.l.b16 %v1168
    %v1192 = vunpack.c.l.b16 %v1169
    %v1193 = vunpack.c.l.b16 %v1170
    %v1194 = vunpack.c.l.b16 %v1171
    %v1195 = vunpack.c.l.b16 %v1172
    %v1196 = vunpack.c.l.b16 %v1173
    %v1197 = vunpack.c.l.b16 %v1174
    %v1198 = vunpack.c.l.b16 %v1175
    %v1199 = vpack.c.b16 %v1192, %v1191
    %v1200 = vpack.c.b16 %v1194, %v1193
    %v1201 = vpack.c.b16 %v1196, %v1195
    %v1202 = vpack.c.b16 %v1198, %v1197
    %v1208 = vsel %vm100, %v1167, 0
    %1210 = vmatprep.subr.bf16.mxu0 0
    %1211 = vmatpush1.bf16.msra.mxu0 %v1199
    %1212 = vmatprep.subr.bf16.mxu0 0
    %1213 = vmatpush1.bf16.msra.mxu0 %v1200
    %1214 = vmatprep.subr.bf16.mxu0 0
    %1215 = vmatpush1.bf16.msra.mxu0 %v1201
    %1216 = vmatprep.subr.bf16.mxu0 0
    %1217 = vmatpush1.bf16.msra.mxu0 %v1202
    %1218 = vmatprep.subr.bf16.mxu0 0
    %1219 = vmatpush1.bf16.msra.mxu0 0
    %1220 = vmatprep.subr.bf16.mxu0 0
    %1221 = vmatpush1.bf16.msra.mxu0 0
    %1222 = vmatprep.subr.bf16.mxu0 0
    %1223 = vmatpush1.bf16.msra.mxu0 0
    %1224 = vmatprep.subr.bf16.mxu0 0
    %1225 = vmatpush1.bf16.msra.mxu0 0
    %1226 = vmatprep.subr.bf16.mxu0 0
    %1227 = vmatpush1.bf16.msra.mxu0 0
    %1228 = vmatprep.subr.bf16.mxu0 0
    %1229 = vmatpush1.bf16.msra.mxu0 0
    %1230 = vmatprep.subr.bf16.mxu0 0
    %1231 = vmatpush1.bf16.msra.mxu0 0
    %1232 = vmatprep.subr.bf16.mxu0 0
    %1233 = vmatpush1.bf16.msra.mxu0 0
    %1234 = vmatprep.subr.bf16.mxu0 0
    %1235 = vmatpush1.bf16.msra.mxu0 0
    %1236 = vmatprep.subr.bf16.mxu0 0
    %1237 = vmatpush1.bf16.msra.mxu0 0
    %1238 = vmatprep.subr.bf16.mxu0 0
    %1239 = vmatpush1.bf16.msra.mxu0 0
    %1240 = vmatprep.subr.bf16.mxu0 0
    %1241 = vmatpush1.bf16.msra.mxu0 0
    %1242 = vmatprep.mubr.bf16.mxu0 0
    %1243 = vmatmul.mubr.bf16.gmra.mrb[0].mxu0 %v1208
    %v1244 = vpop.f32.mrb[0].mxu0
    %v1245 = vadd.f32 %v1181, %v1244
    %v1246 = vpop.f32.mrb[0].mxu0
    %v1247 = vpop.f32.mrb[0].mxu0
    %v1248 = vadd.f32 %v1181, %v1247
    %v1249 = vpop.f32.mrb[0].mxu0
    %1250 = vdwg.mxu0
    %v1251 = vmax.f32 %v1245, 0.0
    %v1252 = vmax.f32 %v1248, 0.0
    %v1253 = vpack.c.bf16 %v1252, %v1251
    %v1254 = vld [vmem:[%s11] sm:$0xf]
    %v1255 = vld [vmem:[%s11 + $0x4] sm:$0xf]
    %v1256 = vld [vmem:[%s11 + $0x8] sm:$0xf]
    %v1257 = vld [vmem:[%s11 + $0xc] sm:$0xf]
    %v1258 = vld [vmem:[%s11 + $0x10] sm:$0xf]
    %v1259 = vld [vmem:[%s11 + $0x14] sm:$0xf]
    %v1260 = vld [vmem:[%s11 + $0x18] sm:$0xf]
    %v1261 = vld [vmem:[%s11 + $0x1c] sm:$0xf]
    %v1262 = vld [vmem:[%s12] sm:$0x1]
    %v1264 = vlaneseq
    %v1265 = vshrl.u32 %v1264, 7
    %v1266 = vsub.s32 0, %v1265
    %v1267 = vrot.slane %v1262, %v1266
    %v1277 = vunpack.c.l.b16 %v1254
    %v1278 = vunpack.c.l.b16 %v1255
    %v1279 = vunpack.c.l.b16 %v1256
    %v1280 = vunpack.c.l.b16 %v1257
    %v1281 = vunpack.c.l.b16 %v1258
    %v1282 = vunpack.c.l.b16 %v1259
    %v1283 = vunpack.c.l.b16 %v1260
    %v1284 = vunpack.c.l.b16 %v1261
    %v1285 = vpack.c.b16 %v1278, %v1277
    %v1286 = vpack.c.b16 %v1280, %v1279
    %v1287 = vpack.c.b16 %v1282, %v1281
    %v1288 = vpack.c.b16 %v1284, %v1283
    %v1294 = vsel %vm100, %v1253, 0
    %1296 = vmatprep.subr.bf16.mxu0 0
    %1297 = vmatpush1.bf16.msra.mxu0 %v1285
    %1298 = vmatprep.subr.bf16.mxu0 0
    %1299 = vmatpush1.bf16.msra.mxu0 %v1286
    %1300 = vmatprep.subr.bf16.mxu0 0
    %1301 = vmatpush1.bf16.msra.mxu0 %v1287
    %1302 = vmatprep.subr.bf16.mxu0 0
    %1303 = vmatpush1.bf16.msra.mxu0 %v1288
    %1304 = vmatprep.subr.bf16.mxu0 0
    %1305 = vmatpush1.bf16.msra.mxu0 0
    %1306 = vmatprep.subr.bf16.mxu0 0
    %1307 = vmatpush1.bf16.msra.mxu0 0
    %1308 = vmatprep.subr.bf16.mxu0 0
    %1309 = vmatpush1.bf16.msra.mxu0 0
    %1310 = vmatprep.subr.bf16.mxu0 0
    %1311 = vmatpush1.bf16.msra.mxu0 0
    %1312 = vmatprep.subr.bf16.mxu0 0
    %1313 = vmatpush1.bf16.msra.mxu0 0
    %1314 = vmatprep.subr.bf16.mxu0 0
    %1315 = vmatpush1.bf16.msra.mxu0 0
    %1316 = vmatprep.subr.bf16.mxu0 0
    %1317 = vmatpush1.bf16.msra.mxu0 0
    %1318 = vmatprep.subr.bf16.mxu0 0
    %1319 = vmatpush1.bf16.msra.mxu0 0
    %1320 = vmatprep.subr.bf16.mxu0 0
    %1321 = vmatpush1.bf16.msra.mxu0 0
    %1322 = vmatprep.subr.bf16.mxu0 0
    %1323 = vmatpush1.bf16.msra.mxu0 0
    %1324 = vmatprep.subr.bf16.mxu0 0
    %1325 = vmatpush1.bf16.msra.mxu0 0
    %1326 = vmatprep.subr.bf16.mxu0 0
    %1327 = vmatpush1.bf16.msra.mxu0 0
    %1328 = vmatprep.mubr.bf16.mxu0 0
    %1329 = vmatmul.mubr.bf16.gmra.mrb[0].mxu0 %v1294
    %v1330 = vpop.f32.mrb[0].mxu0
    %v1331 = vadd.f32 %v1267, %v1330
    %v1332 = vpop.f32.mrb[0].mxu0
    %v1333 = vpop.f32.mrb[0].mxu0
    %v1334 = vadd.f32 %v1267, %v1333
    %v1335 = vpop.f32.mrb[0].mxu0
    %1336 = vdwg.mxu0
    %v1337 = vadd.f32 %v1165, %v1331
    %v1338 = vadd.f32 %v1166, %v1334
    %v1339 = vld [vmem:[%s15] sm:$0x1]
    %v1340 = vld [vmem:[%s16] sm:$0x1]
    %v1341 = vsel %vm100, %v1337, 0.0
    %1342 = vadd.xlane.f32.xlu0 %v1341
    %v1343 = vpop.xlane.xlu0 %1342
    %v1344 = vsel %vm100, %v1338, 0.0
    %1345 = vadd.xlane.f32.xlu0 %v1344
    %v1346 = vpop.xlane.xlu0 %1345
    %v1347 = vmul.f32 %v1343, %v1130
    %v1348 = vmul.f32 %v1346, %v1130
    %v1349 = vsub.f32 %v1337, %v1347
    %v1350 = vsub.f32 %v1338, %v1348
    %v1351 = vmul.f32 %v1349, %v1349
    %v1352 = vmul.f32 %v1350, %v1350
    %v1353 = vsel %vm100, %v1351, 0.0
    %1354 = vadd.xlane.f32.xlu0 %v1353
    %v1355 = vpop.xlane.xlu0 %1354
    %v1356 = vsel %vm100, %v1352, 0.0
    %1357 = vadd.xlane.f32.xlu0 %v1356
    %v1358 = vpop.xlane.xlu0 %1357
    %v1359 = vmul.f32 %v1355, %v1130
    %v1360 = vmul.f32 %v1358, %v1130
    %v1361 = vadd.f32 %v1359, 1e-05
    %v1362 = vadd.f32 %v1360, 1e-05
    %v1363 = vrsqrt.pop %v1361
    %v1364 = vrsqrt.pop %v1362
    %v1365 = vmul.f32 %v1349, %v1363
    %v1366 = vmul.f32 %v1350, %v1364
    %v1368 = vlaneseq
    %v1369 = vshrl.u32 %v1368, 7
    %v1370 = vsub.s32 0, %v1369
    %v1371 = vrot.slane %v1339, %v1370
    %v1373 = vmul.f32 %v1365, %v1371
    %v1374 = vmul.f32 %v1366, %v1371
    %v1376 = vlaneseq
    %v1377 = vshrl.u32 %v1376, 7
    %v1378 = vsub.s32 0, %v1377
    %v1379 = vrot.slane %v1340, %v1378
    %v1381 = vadd.f32 %v1373, %v1379
    %v1382 = vadd.f32 %v1374, %v1379
    %v1383 = vpack.c.bf16 %v1382, %v1381
    %s1384 = scalar_lea.vmem %s1, 64
    %v1385 = vld [vmem:[%s1384] sm:$0xf]
    %v1386 = vld [vmem:[%s1384 + $0x4] sm:$0xf]
    %v1387 = vld [vmem:[%s1384 + $0x8] sm:$0xf]
    %v1388 = vld [vmem:[%s1384 + $0xc] sm:$0xf]
    %v1389 = vld [vmem:[%s1384 + $0x10] sm:$0xf]
    %v1390 = vld [vmem:[%s1384 + $0x14] sm:$0xf]
    %v1391 = vld [vmem:[%s1384 + $0x18] sm:$0xf]
    %v1392 = vld [vmem:[%s1384 + $0x1c] sm:$0xf]
    %s1393 = scalar_lea.vmem %s2, 2
    %v1394 = vld [vmem:[%s1393] sm:$0x1]
    %v1396 = vlaneseq
    %v1397 = vshrl.u32 %v1396, 7
    %v1398 = vsub.s32 0, %v1397
    %v1399 = vrot.slane %v1394, %v1398
    %v1409 = vunpack.c.l.b16 %v1385
    %v1410 = vunpack.c.l.b16 %v1386
    %v1411 = vunpack.c.l.b16 %v1387
    %v1412 = vunpack.c.l.b16 %v1388
    %v1413 = vunpack.c.l.b16 %v1389
    %v1414 = vunpack.c.l.b16 %v1390
    %v1415 = vunpack.c.l.b16 %v1391
    %v1416 = vunpack.c.l.b16 %v1392
    %v1417 = vpack.c.b16 %v1410, %v1409
    %v1418 = vpack.c.b16 %v1412, %v1411
    %v1419 = vpack.c.b16 %v1414, %v1413
    %v1420 = vpack.c.b16 %v1416, %v1415
    %v1426 = vsel %vm100, %v1383, 0
    %1428 = vmatprep.subr.bf16.mxu0 0
    %1429 = vmatpush1.bf16.msra.mxu0 %v1417
    %1430 = vmatprep.subr.bf16.mxu0 0
    %1431 = vmatpush1.bf16.msra.mxu0 %v1418
    %1432 = vmatprep.subr.bf16.mxu0 0
    %1433 = vmatpush1.bf16.msra.mxu0 %v1419
    %1434 = vmatprep.subr.bf16.mxu0 0
    %1435 = vmatpush1.bf16.msra.mxu0 %v1420
    %1436 = vmatprep.subr.bf16.mxu0 0
    %1437 = vmatpush1.bf16.msra.mxu0 0
    %1438 = vmatprep.subr.bf16.mxu0 0
    %1439 = vmatpush1.bf16.msra.mxu0 0
    %1440 = vmatprep.subr.bf16.mxu0 0
    %1441 = vmatpush1.bf16.msra.mxu0 0
    %1442 = vmatprep.subr.bf16.mxu0 0
    %1443 = vmatpush1.bf16.msra.mxu0 0
    %1444 = vmatprep.subr.bf16.mxu0 0
    %1445 = vmatpush1.bf16.msra.mxu0 0
    %1446 = vmatprep.subr.bf16.mxu0 0
    %1447 = vmatpush1.bf16.msra.mxu0 0
    %1448 = vmatprep.subr.bf16.mxu0 0
    %1449 = vmatpush1.bf16.msra.mxu0 0
    %1450 = vmatprep.subr.bf16.mxu0 0
    %1451 = vmatpush1.bf16.msra.mxu0 0
    %1452 = vmatprep.subr.bf16.mxu0 0
    %1453 = vmatpush1.bf16.msra.mxu0 0
    %1454 = vmatprep.subr.bf16.mxu0 0
    %1455 = vmatpush1.bf16.msra.mxu0 0
    %1456 = vmatprep.subr.bf16.mxu0 0
    %1457 = vmatpush1.bf16.msra.mxu0 0
    %1458 = vmatprep.subr.bf16.mxu0 0
    %1459 = vmatpush1.bf16.msra.mxu0 0
    %1460 = vmatprep.mubr.bf16.mxu0 0
    %1461 = vmatmul.mubr.bf16.gmra.mrb[0].mxu0 %v1426
    %v1462 = vpop.f32.mrb[0].mxu0
    %v1463 = vadd.f32 %v1399, %v1462
    %v1464 = vpop.f32.mrb[0].mxu0
    %v1465 = vpop.f32.mrb[0].mxu0
    %v1466 = vadd.f32 %v1399, %v1465
    %v1467 = vpop.f32.mrb[0].mxu0
    %1468 = vdwg.mxu0
    %s1469 = scalar_lea.vmem %s3, 64
    %v1470 = vld [vmem:[%s1469] sm:$0xf]
    %v1471 = vld [vmem:[%s1469 + $0x4] sm:$0xf]
    %v1472 = vld [vmem:[%s1469 + $0x8] sm:$0xf]
    %v1473 = vld [vmem:[%s1469 + $0xc] sm:$0xf]
    %v1474 = vld [vmem:[%s1469 + $0x10] sm:$0xf]
    %v1475 = vld [vmem:[%s1469 + $0x14] sm:$0xf]
    %v1476 = vld [vmem:[%s1469 + $0x18] sm:$0xf]
    %v1477 = vld [vmem:[%s1469 + $0x1c] sm:$0xf]
    %s1478 = scalar_lea.vmem %s4, 2
    %v1479 = vld [vmem:[%s1478] sm:$0x1]
    %v1481 = vlaneseq
    %v1482 = vshrl.u32 %v1481, 7
    %v1483 = vsub.s32 0, %v1482
    %v1484 = vrot.slane %v1479, %v1483
    %v1494 = vunpack.c.l.b16 %v1470
    %v1495 = vunpack.c.l.b16 %v1471
    %v1496 = vunpack.c.l.b16 %v1472
    %v1497 = vunpack.c.l.b16 %v1473
    %v1498 = vunpack.c.l.b16 %v1474
    %v1499 = vunpack.c.l.b16 %v1475
    %v1500 = vunpack.c.l.b16 %v1476
    %v1501 = vunpack.c.l.b16 %v1477
    %v1502 = vpack.c.b16 %v1495, %v1494
    %v1503 = vpack.c.b16 %v1497, %v1496
    %v1504 = vpack.c.b16 %v1499, %v1498
    %v1505 = vpack.c.b16 %v1501, %v1500
    %1510 = vmatprep.subr.bf16.mxu0 0
    %1511 = vmatpush1.bf16.msra.mxu0 %v1502
    %1512 = vmatprep.subr.bf16.mxu0 0
    %1513 = vmatpush1.bf16.msra.mxu0 %v1503
    %1514 = vmatprep.subr.bf16.mxu0 0
    %1515 = vmatpush1.bf16.msra.mxu0 %v1504
    %1516 = vmatprep.subr.bf16.mxu0 0
    %1517 = vmatpush1.bf16.msra.mxu0 %v1505
    %1518 = vmatprep.subr.bf16.mxu0 0
    %1519 = vmatpush1.bf16.msra.mxu0 0
    %1520 = vmatprep.subr.bf16.mxu0 0
    %1521 = vmatpush1.bf16.msra.mxu0 0
    %1522 = vmatprep.subr.bf16.mxu0 0
    %1523 = vmatpush1.bf16.msra.mxu0 0
    %1524 = vmatprep.subr.bf16.mxu0 0
    %1525 = vmatpush1.bf16.msra.mxu0 0
    %1526 = vmatprep.subr.bf16.mxu0 0
    %1527 = vmatpush1.bf16.msra.mxu0 0
    %1528 = vmatprep.subr.bf16.mxu0 0
    %1529 = vmatpush1.bf16.msra.mxu0 0
    %1530 = vmatprep.subr.bf16.mxu0 0
    %1531 = vmatpush1.bf16.msra.mxu0 0
    %1532 = vmatprep.subr.bf16.mxu0 0
    %1533 = vmatpush1.bf16.msra.mxu0 0
    %1534 = vmatprep.subr.bf16.mxu0 0
    %1535 = vmatpush1.bf16.msra.mxu0 0
    %1536 = vmatprep.subr.bf16.mxu0 0
    %1537 = vmatpush1.bf16.msra.mxu0 0
    %1538 = vmatprep.subr.bf16.mxu0 0
    %1539 = vmatpush1.bf16.msra.mxu0 0
    %1540 = vmatprep.subr.bf16.mxu0 0
    %1541 = vmatpush1.bf16.msra.mxu0 0
    %1542 = vmatprep.mubr.bf16.mxu0 0
    %1543 = vmatmul.mubr.bf16.gmra.mrb[0].mxu0 %v1426
    %v1544 = vpop.f32.mrb[0].mxu0
    %v1545 = vadd.f32 %v1484, %v1544
    %v1546 = vpop.f32.mrb[0].mxu0
    %v1547 = vpop.f32.mrb[0].mxu0
    %v1548 = vadd.f32 %v1484, %v1547
    %v1549 = vpop.f32.mrb[0].mxu0
    %1550 = vdwg.mxu0
    %s1551 = scalar_lea.vmem %s5, 64
    %v1552 = vld [vmem:[%s1551] sm:$0xf]
    %v1553 = vld [vmem:[%s1551 + $0x4] sm:$0xf]
    %v1554 = vld [vmem:[%s1551 + $0x8] sm:$0xf]
    %v1555 = vld [vmem:[%s1551 + $0xc] sm:$0xf]
    %v1556 = vld [vmem:[%s1551 + $0x10] sm:$0xf]
    %v1557 = vld [vmem:[%s1551 + $0x14] sm:$0xf]
    %v1558 = vld [vmem:[%s1551 + $0x18] sm:$0xf]
    %v1559 = vld [vmem:[%s1551 + $0x1c] sm:$0xf]
    %s1560 = scalar_lea.vmem %s6, 2
    %v1561 = vld [vmem:[%s1560] sm:$0x1]
    %v1563 = vlaneseq
    %v1564 = vshrl.u32 %v1563, 7
    %v1565 = vsub.s32 0, %v1564
    %v1566 = vrot.slane %v1561, %v1565
    %v1576 = vunpack.c.l.b16 %v1552
    %v1577 = vunpack.c.l.b16 %v1553
    %v1578 = vunpack.c.l.b16 %v1554
    %v1579 = vunpack.c.l.b16 %v1555
    %v1580 = vunpack.c.l.b16 %v1556
    %v1581 = vunpack.c.l.b16 %v1557
    %v1582 = vunpack.c.l.b16 %v1558
    %v1583 = vunpack.c.l.b16 %v1559
    %v1584 = vpack.c.b16 %v1577, %v1576
    %v1585 = vpack.c.b16 %v1579, %v1578
    %v1586 = vpack.c.b16 %v1581, %v1580
    %v1587 = vpack.c.b16 %v1583, %v1582
    %1592 = vmatprep.subr.bf16.mxu0 0
    %1593 = vmatpush1.bf16.msra.mxu0 %v1584
    %1594 = vmatprep.subr.bf16.mxu0 0
    %1595 = vmatpush1.bf16.msra.mxu0 %v1585
    %1596 = vmatprep.subr.bf16.mxu0 0
    %1597 = vmatpush1.bf16.msra.mxu0 %v1586
    %1598 = vmatprep.subr.bf16.mxu0 0
    %1599 = vmatpush1.bf16.msra.mxu0 %v1587
    %1600 = vmatprep.subr.bf16.mxu0 0
    %1601 = vmatpush1.bf16.msra.mxu0 0
    %1602 = vmatprep.subr.bf16.mxu0 0
    %1603 = vmatpush1.bf16.msra.mxu0 0
    %1604 = vmatprep.subr.bf16.mxu0 0
    %1605 = vmatpush1.bf16.msra.mxu0 0
    %1606 = vmatprep.subr.bf16.mxu0 0
    %1607 = vmatpush1.bf16.msra.mxu0 0
    %1608 = vmatprep.subr.bf16.mxu0 0
    %1609 = vmatpush1.bf16.msra.mxu0 0
    %1610 = vmatprep.subr.bf16.mxu0 0
    %1611 = vmatpush1.bf16.msra.mxu0 0
    %1612 = vmatprep.subr.bf16.mxu0 0
    %1613 = vmatpush1.bf16.msra.mxu0 0
    %1614 = vmatprep.subr.bf16.mxu0 0
    %1615 = vmatpush1.bf16.msra.mxu0 0
    %1616 = vmatprep.subr.bf16.mxu0 0
    %1617 = vmatpush1.bf16.msra.mxu0 0
    %1618 = vmatprep.subr.bf16.mxu0 0
    %1619 = vmatpush1.bf16.msra.mxu0 0
    %1620 = vmatprep.subr.bf16.mxu0 0
    %1621 = vmatpush1.bf16.msra.mxu0 0
    %1622 = vmatprep.subr.bf16.mxu0 0
    %1623 = vmatpush1.bf16.msra.mxu0 0
    %1624 = vmatprep.mubr.bf16.mxu0 0
    %1625 = vmatmul.mubr.bf16.gmra.mrb[0].mxu0 %v1426
    %v1626 = vpop.f32.mrb[0].mxu0
    %v1627 = vadd.f32 %v1566, %v1626
    %v1628 = vpop.f32.mrb[0].mxu0
    %v1629 = vpop.f32.mrb[0].mxu0
    %v1630 = vadd.f32 %v1566, %v1629
    %v1631 = vpop.f32.mrb[0].mxu0
    %1632 = vdwg.mxu0
    %v1633 = vpack.c.bf16 %v1466, %v1463
    %v1634 = vpack.c.bf16 %v1548, %v1545
    %v1635 = vpack.c.bf16 %v1630, %v1627
    %v1637 = vsel %vm308, %v1633, 0
    %v1640 = vsel %vm308, %v1634, 0
    %1642 = vmatprep.subr.bf16.mxu0 0
    %1643 = vmatpush1.bf16.xpose.msra.mxu0 %v1640
    %1644 = vmatprep.subr.bf16.mxu0 0
    %1645 = vmatpush1.bf16.xpose.msra.mxu0 0
    %1646 = vmatprep.subr.bf16.mxu0 0
    %1647 = vmatpush1.bf16.xpose.msra.mxu0 0
    %1648 = vmatprep.subr.bf16.mxu0 0
    %1649 = vmatpush1.bf16.xpose.msra.mxu0 0
    %1650 = vmatprep.subr.bf16.mxu0 0
    %1651 = vmatpush1.bf16.xpose.msra.mxu0 0
    %1652 = vmatprep.subr.bf16.mxu0 0
    %1653 = vmatpush1.bf16.xpose.msra.mxu0 0
    %1654 = vmatprep.subr.bf16.mxu0 0
    %1655 = vmatpush1.bf16.xpose.msra.mxu0 0
    %1656 = vmatprep.subr.bf16.mxu0 0
    %1657 = vmatpush1.bf16.xpose.msra.mxu0 0
    %1658 = vmatprep.subr.bf16.mxu0 0
    %1659 = vmatpush1.bf16.xpose.msra.mxu0 0
    %1660 = vmatprep.subr.bf16.mxu0 0
    %1661 = vmatpush1.bf16.xpose.msra.mxu0 0
    %1662 = vmatprep.subr.bf16.mxu0 0
    %1663 = vmatpush1.bf16.xpose.msra.mxu0 0
    %1664 = vmatprep.subr.bf16.mxu0 0
    %1665 = vmatpush1.bf16.xpose.msra.mxu0 0
    %1666 = vmatprep.subr.bf16.mxu0 0
    %1667 = vmatpush1.bf16.xpose.msra.mxu0 0
    %1668 = vmatprep.subr.bf16.mxu0 0
    %1669 = vmatpush1.bf16.xpose.msra.mxu0 0
    %1670 = vmatprep.subr.bf16.mxu0 0
    %1671 = vmatpush1.bf16.xpose.msra.mxu0 0
    %1672 = vmatprep.subr.bf16.mxu0 0
    %1673 = vmatpush1.bf16.xpose.msra.mxu0 0
    %1674 = vmatprep.mubr.bf16.mxu0 0
    %1675 = vmatmul.mubr.bf16.gmra.mrb[0].mxu0 %v1637
    %v1676 = vpop.f32.mrb[0].mxu0
    %v1677 = vadd.f32 0.0, %v1676
    %v1678 = vpop.f32.mrb[0].mxu0
    %v1679 = vpop.f32.mrb[0].mxu0
    %v1680 = vpop.f32.mrb[0].mxu0
    %1681 = vdwg.mxu0
    %v1682 = vsel %vm355, %v1677, -inf
    %1683 = vmax.xlane.f32.xlu0 %v1682
    %v1684 = vpop.xlane.xlu0 %1683
    %v1685 = vsub.f32 %v1677, %v1684
    %v1686 = vmul.f32 %v1685, 1.442695
    %v1687 = vpow.pop %v1686
    %v1688 = vsel %vm355, %v1687, 0.0
    %1689 = vadd.xlane.f32.xlu0 %v1688
    %v1690 = vpop.xlane.xlu0 %1689
    %v1691 = vrcp.pop %v1690
    %v1692 = vmul.f32 %v1687, %v1691
    %v1693 = vpack.c.bf16 %v1692, %v1692
    %v1695 = vsel %vm355, %v1693, 0
    %v1698 = vsel %vm371, %v1635, 0
    %1700 = vmatprep.subr.bf16.mxu0 0
    %1701 = vmatpush1.bf16.msra.mxu0 %v1698
    %1702 = vmatprep.subr.bf16.mxu0 0
    %1703 = vmatpush1.bf16.msra.mxu0 0
    %1704 = vmatprep.subr.bf16.mxu0 0
    %1705 = vmatpush1.bf16.msra.mxu0 0
    %1706 = vmatprep.subr.bf16.mxu0 0
    %1707 = vmatpush1.bf16.msra.mxu0 0
    %1708 = vmatprep.subr.bf16.mxu0 0
    %1709 = vmatpush1.bf16.msra.mxu0 0
    %1710 = vmatprep.subr.bf16.mxu0 0
    %1711 = vmatpush1.bf16.msra.mxu0 0
    %1712 = vmatprep.subr.bf16.mxu0 0
    %1713 = vmatpush1.bf16.msra.mxu0 0
    %1714 = vmatprep.subr.bf16.mxu0 0
    %1715 = vmatpush1.bf16.msra.mxu0 0
    %1716 = vmatprep.subr.bf16.mxu0 0
    %1717 = vmatpush1.bf16.msra.mxu0 0
    %1718 = vmatprep.subr.bf16.mxu0 0
    %1719 = vmatpush1.bf16.msra.mxu0 0
    %1720 = vmatprep.subr.bf16.mxu0 0
    %1721 = vmatpush1.bf16.msra.mxu0 0
    %1722 = vmatprep.subr.bf16.mxu0 0
    %1723 = vmatpush1.bf16.msra.mxu0 0
    %1724 = vmatprep.subr.bf16.mxu0 0
    %1725 = vmatpush1.bf16.msra.mxu0 0
    %1726 = vmatprep.subr.bf16.mxu0 0
    %1727 = vmatpush1.bf16.msra.mxu0 0
    %1728 = vmatprep.subr.bf16.mxu0 0
    %1729 = vmatpush1.bf16.msra.mxu0 0
    %1730 = vmatprep.subr.bf16.mxu0 0
    %1731 = vmatpush1.bf16.msra.mxu0 0
    %1732 = vmatprep.mubr.bf16.mxu0 0
    %1733 = vmatmul.mubr.bf16.gmra.mrb[0].mxu0 %v1695
    %v1734 = vpop.f32.mrb[0].mxu0
    %v1735 = vadd.f32 0.0, %v1734
    %v1736 = vpop.f32.mrb[0].mxu0
    %v1737 = vpop.f32.mrb[0].mxu0
    %v1738 = vpop.f32.mrb[0].mxu0
    %1739 = vdwg.mxu0
    %v1741 = vrot.slane %v1633, 4
    %v1743 = vrot.slane %v1634, 4
    %v1745 = vsel %vm308, %v1741, 0
    %v1748 = vsel %vm308, %v1743, 0
    %1750 = vmatprep.subr.bf16.mxu0 0
    %1751 = vmatpush1.bf16.xpose.msra.mxu0 %v1748
    %1752 = vmatprep.subr.bf16.mxu0 0
    %1753 = vmatpush1.bf16.xpose.msra.mxu0 0
    %1754 = vmatprep.subr.bf16.mxu0 0
    %1755 = vmatpush1.bf16.xpose.msra.mxu0 0
    %1756 = vmatprep.subr.bf16.mxu0 0
    %1757 = vmatpush1.bf16.xpose.msra.mxu0 0
    %1758 = vmatprep.subr.bf16.mxu0 0
    %1759 = vmatpush1.bf16.xpose.msra.mxu0 0
    %1760 = vmatprep.subr.bf16.mxu0 0
    %1761 = vmatpush1.bf16.xpose.msra.mxu0 0
    %1762 = vmatprep.subr.bf16.mxu0 0
    %1763 = vmatpush1.bf16.xpose.msra.mxu0 0
    %1764 = vmatprep.subr.bf16.mxu0 0
    %1765 = vmatpush1.bf16.xpose.msra.mxu0 0
    %1766 = vmatprep.subr.bf16.mxu0 0
    %1767 = vmatpush1.bf16.xpose.msra.mxu0 0
    %1768 = vmatprep.subr.bf16.mxu0 0
    %1769 = vmatpush1.bf16.xpose.msra.mxu0 0
    %1770 = vmatprep.subr.bf16.mxu0 0
    %1771 = vmatpush1.bf16.xpose.msra.mxu0 0
    %1772 = vmatprep.subr.bf16.mxu0 0
    %1773 = vmatpush1.bf16.xpose.msra.mxu0 0
    %1774 = vmatprep.subr.bf16.mxu0 0
    %1775 = vmatpush1.bf16.xpose.msra.mxu0 0
    %1776 = vmatprep.subr.bf16.mxu0 0
    %1777 = vmatpush1.bf16.xpose.msra.mxu0 0
    %1778 = vmatprep.subr.bf16.mxu0 0
    %1779 = vmatpush1.bf16.xpose.msra.mxu0 0
    %1780 = vmatprep.subr.bf16.mxu0 0
    %1781 = vmatpush1.bf16.xpose.msra.mxu0 0
    %1782 = vmatprep.mubr.bf16.mxu0 0
    %1783 = vmatmul.mubr.bf16.gmra.mrb[0].mxu0 %v1745
    %v1784 = vpop.f32.mrb[0].mxu0
    %v1785 = vadd.f32 0.0, %v1784
    %v1786 = vpop.f32.mrb[0].mxu0
    %v1787 = vpop.f32.mrb[0].mxu0
    %v1788 = vpop.f32.mrb[0].mxu0
    %1789 = vdwg.mxu0
    %v1790 = vsel %vm355, %v1785, -inf
    %1791 = vmax.xlane.f32.xlu0 %v1790
    %v1792 = vpop.xlane.xlu0 %1791
    %v1793 = vsub.f32 %v1785, %v1792
    %v1794 = vmul.f32 %v1793, 1.442695
    %v1795 = vpow.pop %v1794
    %v1796 = vsel %vm355, %v1795, 0.0
    %1797 = vadd.xlane.f32.xlu0 %v1796
    %v1798 = vpop.xlane.xlu0 %1797
    %v1799 = vrcp.pop %v1798
    %v1800 = vmul.f32 %v1795, %v1799
    %v1801 = vpack.c.bf16 %v1800, %v1800
    %v1803 = vrot.slane %v1635, 4
    %v1805 = vsel %vm355, %v1801, 0
    %v1808 = vsel %vm371, %v1803, 0
    %1810 = vmatprep.subr.bf16.mxu0 0
    %1811 = vmatpush1.bf16.msra.mxu0 %v1808
    %1812 = vmatprep.subr.bf16.mxu0 0
    %1813 = vmatpush1.bf16.msra.mxu0 0
    %1814 = vmatprep.subr.bf16.mxu0 0
    %1815 = vmatpush1.bf16.msra.mxu0 0
    %1816 = vmatprep.subr.bf16.mxu0 0
    %1817 = vmatpush1.bf16.msra.mxu0 0
    %1818 = vmatprep.subr.bf16.mxu0 0
    %1819 = vmatpush1.bf16.msra.mxu0 0
    %1820 = vmatprep.subr.bf16.mxu0 0
    %1821 = vmatpush1.bf16.msra.mxu0 0
    %1822 = vmatprep.subr.bf16.mxu0 0
    %1823 = vmatpush1.bf16.msra.mxu0 0
    %1824 = vmatprep.subr.bf16.mxu0 0
    %1825 = vmatpush1.bf16.msra.mxu0 0
    %1826 = vmatprep.subr.bf16.mxu0 0
    %1827 = vmatpush1.bf16.msra.mxu0 0
    %1828 = vmatprep.subr.bf16.mxu0 0
    %1829 = vmatpush1.bf16.msra.mxu0 0
    %1830 = vmatprep.subr.bf16.mxu0 0
    %1831 = vmatpush1.bf16.msra.mxu0 0
    %1832 = vmatprep.subr.bf16.mxu0 0
    %1833 = vmatpush1.bf16.msra.mxu0 0
    %1834 = vmatprep.subr.bf16.mxu0 0
    %1835 = vmatpush1.bf16.msra.mxu0 0
    %1836 = vmatprep.subr.bf16.mxu0 0
    %1837 = vmatpush1.bf16.msra.mxu0 0
    %1838 = vmatprep.subr.bf16.mxu0 0
    %1839 = vmatpush1.bf16.msra.mxu0 0
    %1840 = vmatprep.subr.bf16.mxu0 0
    %1841 = vmatpush1.bf16.msra.mxu0 0
    %1842 = vmatprep.mubr.bf16.mxu0 0
    %1843 = vmatmul.mubr.bf16.gmra.mrb[0].mxu0 %v1805
    %v1844 = vpop.f32.mrb[0].mxu0
    %v1845 = vadd.f32 0.0, %v1844
    %v1846 = vpop.f32.mrb[0].mxu0
    %v1847 = vpop.f32.mrb[0].mxu0
    %v1848 = vpop.f32.mrb[0].mxu0
    %1849 = vdwg.mxu0
    %v1850 = vpack.c.bf16 %v1845, %v1735
    %s1851 = scalar_lea.vmem %s7, 32
    %v1852 = vld [vmem:[%s1851] sm:$0xf]
    %v1853 = vld [vmem:[%s1851 + $0x4] sm:$0xf]
    %v1854 = vld [vmem:[%s1851 + $0x8] sm:$0xf]
    %v1855 = vld [vmem:[%s1851 + $0xc] sm:$0xf]
    %s1856 = scalar_lea.vmem %s1, 96
    %v1857 = vld [vmem:[%s1856] sm:$0xf]
    %v1858 = vld [vmem:[%s1856 + $0x4] sm:$0xf]
    %v1859 = vld [vmem:[%s1856 + $0x8] sm:$0xf]
    %v1860 = vld [vmem:[%s1856 + $0xc] sm:$0xf]
    %v1861 = vld [vmem:[%s1856 + $0x10] sm:$0xf]
    %v1862 = vld [vmem:[%s1856 + $0x14] sm:$0xf]
    %v1863 = vld [vmem:[%s1856 + $0x18] sm:$0xf]
    %v1864 = vld [vmem:[%s1856 + $0x1c] sm:$0xf]
    %s1865 = scalar_lea.vmem %s2, 3
    %v1866 = vld [vmem:[%s1865] sm:$0x1]
    %v1868 = vlaneseq
    %v1869 = vshrl.u32 %v1868, 7
    %v1870 = vsub.s32 0, %v1869
    %v1871 = vrot.slane %v1866, %v1870
    %v1881 = vunpack.c.l.b16 %v1857
    %v1882 = vunpack.c.l.b16 %v1858
    %v1883 = vunpack.c.l.b16 %v1859
    %v1884 = vunpack.c.l.b16 %v1860
    %v1885 = vunpack.c.l.b16 %v1861
    %v1886 = vunpack.c.l.b16 %v1862
    %v1887 = vunpack.c.l.b16 %v1863
    %v1888 = vunpack.c.l.b16 %v1864
    %v1889 = vpack.c.b16 %v1882, %v1881
    %v1890 = vpack.c.b16 %v1884, %v1883
    %v1891 = vpack.c.b16 %v1886, %v1885
    %v1892 = vpack.c.b16 %v1888, %v1887
    %1897 = vmatprep.subr.bf16.mxu0 0
    %1898 = vmatpush1.bf16.msra.mxu0 %v1889
    %1899 = vmatprep.subr.bf16.mxu0 0
    %1900 = vmatpush1.bf16.msra.mxu0 %v1890
    %1901 = vmatprep.subr.bf16.mxu0 0
    %1902 = vmatpush1.bf16.msra.mxu0 %v1891
    %1903 = vmatprep.subr.bf16.mxu0 0
    %1904 = vmatpush1.bf16.msra.mxu0 %v1892
    %1905 = vmatprep.subr.bf16.mxu0 0
    %1906 = vmatpush1.bf16.msra.mxu0 0
    %1907 = vmatprep.subr.bf16.mxu0 0
    %1908 = vmatpush1.bf16.msra.mxu0 0
    %1909 = vmatprep.subr.bf16.mxu0 0
    %1910 = vmatpush1.bf16.msra.mxu0 0
    %1911 = vmatprep.subr.bf16.mxu0 0
    %1912 = vmatpush1.bf16.msra.mxu0 0
    %1913 = vmatprep.subr.bf16.mxu0 0
    %1914 = vmatpush1.bf16.msra.mxu0 0
    %1915 = vmatprep.subr.bf16.mxu0 0
    %1916 = vmatpush1.bf16.msra.mxu0 0
    %1917 = vmatprep.subr.bf16.mxu0 0
    %1918 = vmatpush1.bf16.msra.mxu0 0
    %1919 = vmatprep.subr.bf16.mxu0 0
    %1920 = vmatpush1.bf16.msra.mxu0 0
    %1921 = vmatprep.subr.bf16.mxu0 0
    %1922 = vmatpush1.bf16.msra.mxu0 0
    %1923 = vmatprep.subr.bf16.mxu0 0
    %1924 = vmatpush1.bf16.msra.mxu0 0
    %1925 = vmatprep.subr.bf16.mxu0 0
    %1926 = vmatpush1.bf16.msra.mxu0 0
    %1927 = vmatprep.subr.bf16.mxu0 0
    %1928 = vmatpush1.bf16.msra.mxu0 0
    %1929 = vmatprep.mubr.bf16.mxu0 0
    %1930 = vmatmul.mubr.bf16.gmra.mrb[0].mxu0 %v1426
    %v1931 = vpop.f32.mrb[0].mxu0
    %v1932 = vadd.f32 %v1871, %v1931
    %v1933 = vpop.f32.mrb[0].mxu0
    %v1934 = vpop.f32.mrb[0].mxu0
    %v1935 = vadd.f32 %v1871, %v1934
    %v1936 = vpop.f32.mrb[0].mxu0
    %1937 = vdwg.mxu0
    %s1938 = scalar_lea.vmem %s3, 96
    %v1939 = vld [vmem:[%s1938] sm:$0xf]
    %v1940 = vld [vmem:[%s1938 + $0x4] sm:$0xf]
    %v1941 = vld [vmem:[%s1938 + $0x8] sm:$0xf]
    %v1942 = vld [vmem:[%s1938 + $0xc] sm:$0xf]
    %v1943 = vld [vmem:[%s1938 + $0x10] sm:$0xf]
    %v1944 = vld [vmem:[%s1938 + $0x14] sm:$0xf]
    %v1945 = vld [vmem:[%s1938 + $0x18] sm:$0xf]
    %v1946 = vld [vmem:[%s1938 + $0x1c] sm:$0xf]
    %s1947 = scalar_lea.vmem %s4, 3
    %v1948 = vld [vmem:[%s1947] sm:$0x1]
    %v1950 = vlaneseq
    %v1951 = vshrl.u32 %v1950, 7
    %v1952 = vsub.s32 0, %v1951
    %v1953 = vrot.slane %v1948, %v1952
    %v1963 = vunpack.c.l.b16 %v1939
    %v1964 = vunpack.c.l.b16 %v1940
    %v1965 = vunpack.c.l.b16 %v1941
    %v1966 = vunpack.c.l.b16 %v1942
    %v1967 = vunpack.c.l.b16 %v1943
    %v1968 = vunpack.c.l.b16 %v1944
    %v1969 = vunpack.c.l.b16 %v1945
    %v1970 = vunpack.c.l.b16 %v1946
    %v1971 = vpack.c.b16 %v1964, %v1963
    %v1972 = vpack.c.b16 %v1966, %v1965
    %v1973 = vpack.c.b16 %v1968, %v1967
    %v1974 = vpack.c.b16 %v1970, %v1969
    %1979 = vmatprep.subr.bf16.mxu0 0
    %1980 = vmatpush1.bf16.msra.mxu0 %v1971
    %1981 = vmatprep.subr.bf16.mxu0 0
    %1982 = vmatpush1.bf16.msra.mxu0 %v1972
    %1983 = vmatprep.subr.bf16.mxu0 0
    %1984 = vmatpush1.bf16.msra.mxu0 %v1973
    %1985 = vmatprep.subr.bf16.mxu0 0
    %1986 = vmatpush1.bf16.msra.mxu0 %v1974
    %1987 = vmatprep.subr.bf16.mxu0 0
    %1988 = vmatpush1.bf16.msra.mxu0 0
    %1989 = vmatprep.subr.bf16.mxu0 0
    %1990 = vmatpush1.bf16.msra.mxu0 0
    %1991 = vmatprep.subr.bf16.mxu0 0
    %1992 = vmatpush1.bf16.msra.mxu0 0
    %1993 = vmatprep.subr.bf16.mxu0 0
    %1994 = vmatpush1.bf16.msra.mxu0 0
    %1995 = vmatprep.subr.bf16.mxu0 0
    %1996 = vmatpush1.bf16.msra.mxu0 0
    %1997 = vmatprep.subr.bf16.mxu0 0
    %1998 = vmatpush1.bf16.msra.mxu0 0
    %1999 = vmatprep.subr.bf16.mxu0 0
    %2000 = vmatpush1.bf16.msra.mxu0 0
    %2001 = vmatprep.subr.bf16.mxu0 0
    %2002 = vmatpush1.bf16.msra.mxu0 0
    %2003 = vmatprep.subr.bf16.mxu0 0
    %2004 = vmatpush1.bf16.msra.mxu0 0
    %2005 = vmatprep.subr.bf16.mxu0 0
    %2006 = vmatpush1.bf16.msra.mxu0 0
    %2007 = vmatprep.subr.bf16.mxu0 0
    %2008 = vmatpush1.bf16.msra.mxu0 0
    %2009 = vmatprep.subr.bf16.mxu0 0
    %2010 = vmatpush1.bf16.msra.mxu0 0
    %2011 = vmatprep.mubr.bf16.mxu0 0
    %2012 = vmatmul.mubr.bf16.gmra.mrb[0].mxu0 %v1426
    %v2013 = vpop.f32.mrb[0].mxu0
    %v2014 = vadd.f32 %v1953, %v2013
    %v2015 = vpop.f32.mrb[0].mxu0
    %v2016 = vpop.f32.mrb[0].mxu0
    %v2017 = vadd.f32 %v1953, %v2016
    %v2018 = vpop.f32.mrb[0].mxu0
    %2019 = vdwg.mxu0
    %s2020 = scalar_lea.vmem %s5, 96
    %v2021 = vld [vmem:[%s2020] sm:$0xf]
    %v2022 = vld [vmem:[%s2020 + $0x4] sm:$0xf]
    %v2023 = vld [vmem:[%s2020 + $0x8] sm:$0xf]
    %v2024 = vld [vmem:[%s2020 + $0xc] sm:$0xf]
    %v2025 = vld [vmem:[%s2020 + $0x10] sm:$0xf]
    %v2026 = vld [vmem:[%s2020 + $0x14] sm:$0xf]
    %v2027 = vld [vmem:[%s2020 + $0x18] sm:$0xf]
    %v2028 = vld [vmem:[%s2020 + $0x1c] sm:$0xf]
    %s2029 = scalar_lea.vmem %s6, 3
    %v2030 = vld [vmem:[%s2029] sm:$0x1]
    %v2032 = vlaneseq
    %v2033 = vshrl.u32 %v2032, 7
    %v2034 = vsub.s32 0, %v2033
    %v2035 = vrot.slane %v2030, %v2034
    %v2045 = vunpack.c.l.b16 %v2021
    %v2046 = vunpack.c.l.b16 %v2022
    %v2047 = vunpack.c.l.b16 %v2023
    %v2048 = vunpack.c.l.b16 %v2024
    %v2049 = vunpack.c.l.b16 %v2025
    %v2050 = vunpack.c.l.b16 %v2026
    %v2051 = vunpack.c.l.b16 %v2027
    %v2052 = vunpack.c.l.b16 %v2028
    %v2053 = vpack.c.b16 %v2046, %v2045
    %v2054 = vpack.c.b16 %v2048, %v2047
    %v2055 = vpack.c.b16 %v2050, %v2049
    %v2056 = vpack.c.b16 %v2052, %v2051
    %2061 = vmatprep.subr.bf16.mxu0 0
    %2062 = vmatpush1.bf16.msra.mxu0 %v2053
    %2063 = vmatprep.subr.bf16.mxu0 0
    %2064 = vmatpush1.bf16.msra.mxu0 %v2054
    %2065 = vmatprep.subr.bf16.mxu0 0
    %2066 = vmatpush1.bf16.msra.mxu0 %v2055
    %2067 = vmatprep.subr.bf16.mxu0 0
    %2068 = vmatpush1.bf16.msra.mxu0 %v2056
    %2069 = vmatprep.subr.bf16.mxu0 0
    %2070 = vmatpush1.bf16.msra.mxu0 0
    %2071 = vmatprep.subr.bf16.mxu0 0
    %2072 = vmatpush1.bf16.msra.mxu0 0
    %2073 = vmatprep.subr.bf16.mxu0 0
    %2074 = vmatpush1.bf16.msra.mxu0 0
    %2075 = vmatprep.subr.bf16.mxu0 0
    %2076 = vmatpush1.bf16.msra.mxu0 0
    %2077 = vmatprep.subr.bf16.mxu0 0
    %2078 = vmatpush1.bf16.msra.mxu0 0
    %2079 = vmatprep.subr.bf16.mxu0 0
    %2080 = vmatpush1.bf16.msra.mxu0 0
    %2081 = vmatprep.subr.bf16.mxu0 0
    %2082 = vmatpush1.bf16.msra.mxu0 0
    %2083 = vmatprep.subr.bf16.mxu0 0
    %2084 = vmatpush1.bf16.msra.mxu0 0
    %2085 = vmatprep.subr.bf16.mxu0 0
    %2086 = vmatpush1.bf16.msra.mxu0 0
    %2087 = vmatprep.subr.bf16.mxu0 0
    %2088 = vmatpush1.bf16.msra.mxu0 0
    %2089 = vmatprep.subr.bf16.mxu0 0
    %2090 = vmatpush1.bf16.msra.mxu0 0
    %2091 = vmatprep.subr.bf16.mxu0 0
    %2092 = vmatpush1.bf16.msra.mxu0 0
    %2093 = vmatprep.mubr.bf16.mxu0 0
    %2094 = vmatmul.mubr.bf16.gmra.mrb[0].mxu0 %v1426
    %v2095 = vpop.f32.mrb[0].mxu0
    %v2096 = vadd.f32 %v2035, %v2095
    %v2097 = vpop.f32.mrb[0].mxu0
    %v2098 = vpop.f32.mrb[0].mxu0
    %v2099 = vadd.f32 %v2035, %v2098
    %v2100 = vpop.f32.mrb[0].mxu0
    %2101 = vdwg.mxu0
    %v2102 = vpack.c.bf16 %v1935, %v1932
    %v2103 = vpack.c.bf16 %v2017, %v2014
    %v2104 = vpack.c.bf16 %v2099, %v2096
    %v2106 = vsel %vm308, %v2102, 0
    %v2109 = vsel %vm308, %v2103, 0
    %2111 = vmatprep.subr.bf16.mxu0 0
    %2112 = vmatpush1.bf16.xpose.msra.mxu0 %v2109
    %2113 = vmatprep.subr.bf16.mxu0 0
    %2114 = vmatpush1.bf16.xpose.msra.mxu0 0
    %2115 = vmatprep.subr.bf16.mxu0 0
    %2116 = vmatpush1.bf16.xpose.msra.mxu0 0
    %2117 = vmatprep.subr.bf16.mxu0 0
    %2118 = vmatpush1.bf16.xpose.msra.mxu0 0
    %2119 = vmatprep.subr.bf16.mxu0 0
    %2120 = vmatpush1.bf16.xpose.msra.mxu0 0
    %2121 = vmatprep.subr.bf16.mxu0 0
    %2122 = vmatpush1.bf16.xpose.msra.mxu0 0
    %2123 = vmatprep.subr.bf16.mxu0 0
    %2124 = vmatpush1.bf16.xpose.msra.mxu0 0
    %2125 = vmatprep.subr.bf16.mxu0 0
    %2126 = vmatpush1.bf16.xpose.msra.mxu0 0
    %2127 = vmatprep.subr.bf16.mxu0 0
    %2128 = vmatpush1.bf16.xpose.msra.mxu0 0
    %2129 = vmatprep.subr.bf16.mxu0 0
    %2130 = vmatpush1.bf16.xpose.msra.mxu0 0
    %2131 = vmatprep.subr.bf16.mxu0 0
    %2132 = vmatpush1.bf16.xpose.msra.mxu0 0
    %2133 = vmatprep.subr.bf16.mxu0 0
    %2134 = vmatpush1.bf16.xpose.msra.mxu0 0
    %2135 = vmatprep.subr.bf16.mxu0 0
    %2136 = vmatpush1.bf16.xpose.msra.mxu0 0
    %2137 = vmatprep.subr.bf16.mxu0 0
    %2138 = vmatpush1.bf16.xpose.msra.mxu0 0
    %2139 = vmatprep.subr.bf16.mxu0 0
    %2140 = vmatpush1.bf16.xpose.msra.mxu0 0
    %2141 = vmatprep.subr.bf16.mxu0 0
    %2142 = vmatpush1.bf16.xpose.msra.mxu0 0
    %2143 = vmatprep.mubr.bf16.mxu0 0
    %2144 = vmatmul.mubr.bf16.gmra.mrb[0].mxu0 %v2106
    %v2145 = vpop.f32.mrb[0].mxu0
    %v2146 = vadd.f32 0.0, %v2145
    %v2147 = vpop.f32.mrb[0].mxu0
    %v2148 = vpop.f32.mrb[0].mxu0
    %v2149 = vpop.f32.mrb[0].mxu0
    %2150 = vdwg.mxu0
    %v2151 = vsel %vm355, %v2146, -inf
    %2152 = vmax.xlane.f32.xlu0 %v2151
    %v2153 = vpop.xlane.xlu0 %2152
    %v2154 = vsub.f32 %v2146, %v2153
    %v2155 = vmul.f32 %v2154, 1.442695
    %v2156 = vpow.pop %v2155
    %v2157 = vsel %vm355, %v2156, 0.0
    %2158 = vadd.xlane.f32.xlu0 %v2157
    %v2159 = vpop.xlane.xlu0 %2158
    %v2160 = vrcp.pop %v2159
    %v2161 = vmul.f32 %v2156, %v2160
    %v2162 = vpack.c.bf16 %v2161, %v2161
    %v2164 = vsel %vm355, %v2162, 0
    %v2167 = vsel %vm371, %v2104, 0
    %2169 = vmatprep.subr.bf16.mxu0 0
    %2170 = vmatpush1.bf16.msra.mxu0 %v2167
    %2171 = vmatprep.subr.bf16.mxu0 0
    %2172 = vmatpush1.bf16.msra.mxu0 0
    %2173 = vmatprep.subr.bf16.mxu0 0
    %2174 = vmatpush1.bf16.msra.mxu0 0
    %2175 = vmatprep.subr.bf16.mxu0 0
    %2176 = vmatpush1.bf16.msra.mxu0 0
    %2177 = vmatprep.subr.bf16.mxu0 0
    %2178 = vmatpush1.bf16.msra.mxu0 0
    %2179 = vmatprep.subr.bf16.mxu0 0
    %2180 = vmatpush1.bf16.msra.mxu0 0
    %2181 = vmatprep.subr.bf16.mxu0 0
    %2182 = vmatpush1.bf16.msra.mxu0 0
    %2183 = vmatprep.subr.bf16.mxu0 0
    %2184 = vmatpush1.bf16.msra.mxu0 0
    %2185 = vmatprep.subr.bf16.mxu0 0
    %2186 = vmatpush1.bf16.msra.mxu0 0
    %2187 = vmatprep.subr.bf16.mxu0 0
    %2188 = vmatpush1.bf16.msra.mxu0 0
    %2189 = vmatprep.subr.bf16.mxu0 0
    %2190 = vmatpush1.bf16.msra.mxu0 0
    %2191 = vmatprep.subr.bf16.mxu0 0
    %2192 = vmatpush1.bf16.msra.mxu0 0
    %2193 = vmatprep.subr.bf16.mxu0 0
    %2194 = vmatpush1.bf16.msra.mxu0 0
    %2195 = vmatprep.subr.bf16.mxu0 0
    %2196 = vmatpush1.bf16.msra.mxu0 0
    %2197 = vmatprep.subr.bf16.mxu0 0
    %2198 = vmatpush1.bf16.msra.mxu0 0
    %2199 = vmatprep.subr.bf16.mxu0 0
    %2200 = vmatpush1.bf16.msra.mxu0 0
    %2201 = vmatprep.mubr.bf16.mxu0 0
    %2202 = vmatmul.mubr.bf16.gmra.mrb[0].mxu0 %v2164
    %v2203 = vpop.f32.mrb[0].mxu0
    %v2204 = vadd.f32 0.0, %v2203
    %v2205 = vpop.f32.mrb[0].mxu0
    %v2206 = vpop.f32.mrb[0].mxu0
    %v2207 = vpop.f32.mrb[0].mxu0
    %2208 = vdwg.mxu0
    %v2210 = vrot.slane %v2102, 4
    %v2212 = vrot.slane %v2103, 4
    %v2214 = vsel %vm308, %v2210, 0
    %v2217 = vsel %vm308, %v2212, 0
    %2219 = vmatprep.subr.bf16.mxu0 0
    %2220 = vmatpush1.bf16.xpose.msra.mxu0 %v2217
    %2221 = vmatprep.subr.bf16.mxu0 0
    %2222 = vmatpush1.bf16.xpose.msra.mxu0 0
    %2223 = vmatprep.subr.bf16.mxu0 0
    %2224 = vmatpush1.bf16.xpose.msra.mxu0 0
    %2225 = vmatprep.subr.bf16.mxu0 0
    %2226 = vmatpush1.bf16.xpose.msra.mxu0 0
    %2227 = vmatprep.subr.bf16.mxu0 0
    %2228 = vmatpush1.bf16.xpose.msra.mxu0 0
    %2229 = vmatprep.subr.bf16.mxu0 0
    %2230 = vmatpush1.bf16.xpose.msra.mxu0 0
    %2231 = vmatprep.subr.bf16.mxu0 0
    %2232 = vmatpush1.bf16.xpose.msra.mxu0 0
    %2233 = vmatprep.subr.bf16.mxu0 0
    %2234 = vmatpush1.bf16.xpose.msra.mxu0 0
    %2235 = vmatprep.subr.bf16.mxu0 0
    %2236 = vmatpush1.bf16.xpose.msra.mxu0 0
    %2237 = vmatprep.subr.bf16.mxu0 0
    %2238 = vmatpush1.bf16.xpose.msra.mxu0 0
    %2239 = vmatprep.subr.bf16.mxu0 0
    %2240 = vmatpush1.bf16.xpose.msra.mxu0 0
    %2241 = vmatprep.subr.bf16.mxu0 0
    %2242 = vmatpush1.bf16.xpose.msra.mxu0 0
    %2243 = vmatprep.subr.bf16.mxu0 0
    %2244 = vmatpush1.bf16.xpose.msra.mxu0 0
    %2245 = vmatprep.subr.bf16.mxu0 0
    %2246 = vmatpush1.bf16.xpose.msra.mxu0 0
    %2247 = vmatprep.subr.bf16.mxu0 0
    %2248 = vmatpush1.bf16.xpose.msra.mxu0 0
    %2249 = vmatprep.subr.bf16.mxu0 0
    %2250 = vmatpush1.bf16.xpose.msra.mxu0 0
    %2251 = vmatprep.mubr.bf16.mxu0 0
    %2252 = vmatmul.mubr.bf16.gmra.mrb[0].mxu0 %v2214
    %v2253 = vpop.f32.mrb[0].mxu0
    %v2254 = vadd.f32 0.0, %v2253
    %v2255 = vpop.f32.mrb[0].mxu0
    %v2256 = vpop.f32.mrb[0].mxu0
    %v2257 = vpop.f32.mrb[0].mxu0
    %2258 = vdwg.mxu0
    %v2259 = vsel %vm355, %v2254, -inf
    %2260 = vmax.xlane.f32.xlu0 %v2259
    %v2261 = vpop.xlane.xlu0 %2260
    %v2262 = vsub.f32 %v2254, %v2261
    %v2263 = vmul.f32 %v2262, 1.442695
    %v2264 = vpow.pop %v2263
    %v2265 = vsel %vm355, %v2264, 0.0
    %2266 = vadd.xlane.f32.xlu0 %v2265
    %v2267 = vpop.xlane.xlu0 %2266
    %v2268 = vrcp.pop %v2267
    %v2269 = vmul.f32 %v2264, %v2268
    %v2270 = vpack.c.bf16 %v2269, %v2269
    %v2272 = vrot.slane %v2104, 4
    %v2274 = vsel %vm355, %v2270, 0
    %v2277 = vsel %vm371, %v2272, 0
    %2279 = vmatprep.subr.bf16.mxu0 0
    %2280 = vmatpush1.bf16.msra.mxu0 %v2277
    %2281 = vmatprep.subr.bf16.mxu0 0
    %2282 = vmatpush1.bf16.msra.mxu0 0
    %2283 = vmatprep.subr.bf16.mxu0 0
    %2284 = vmatpush1.bf16.msra.mxu0 0
    %2285 = vmatprep.subr.bf16.mxu0 0
    %2286 = vmatpush1.bf16.msra.mxu0 0
    %2287 = vmatprep.subr.bf16.mxu0 0
    %2288 = vmatpush1.bf16.msra.mxu0 0
    %2289 = vmatprep.subr.bf16.mxu0 0
    %2290 = vmatpush1.bf16.msra.mxu0 0
    %2291 = vmatprep.subr.bf16.mxu0 0
    %2292 = vmatpush1.bf16.msra.mxu0 0
    %2293 = vmatprep.subr.bf16.mxu0 0
    %2294 = vmatpush1.bf16.msra.mxu0 0
    %2295 = vmatprep.subr.bf16.mxu0 0
    %2296 = vmatpush1.bf16.msra.mxu0 0
    %2297 = vmatprep.subr.bf16.mxu0 0
    %2298 = vmatpush1.bf16.msra.mxu0 0
    %2299 = vmatprep.subr.bf16.mxu0 0
    %2300 = vmatpush1.bf16.msra.mxu0 0
    %2301 = vmatprep.subr.bf16.mxu0 0
    %2302 = vmatpush1.bf16.msra.mxu0 0
    %2303 = vmatprep.subr.bf16.mxu0 0
    %2304 = vmatpush1.bf16.msra.mxu0 0
    %2305 = vmatprep.subr.bf16.mxu0 0
    %2306 = vmatpush1.bf16.msra.mxu0 0
    %2307 = vmatprep.subr.bf16.mxu0 0
    %2308 = vmatpush1.bf16.msra.mxu0 0
    %2309 = vmatprep.subr.bf16.mxu0 0
    %2310 = vmatpush1.bf16.msra.mxu0 0
    %2311 = vmatprep.mubr.bf16.mxu0 0
    %2312 = vmatmul.mubr.bf16.gmra.mrb[0].mxu0 %v2274
    %v2313 = vpop.f32.mrb[0].mxu0
    %v2314 = vadd.f32 0.0, %v2313
    %v2315 = vpop.f32.mrb[0].mxu0
    %v2316 = vpop.f32.mrb[0].mxu0
    %v2317 = vpop.f32.mrb[0].mxu0
    %2318 = vdwg.mxu0
    %v2319 = vpack.c.bf16 %v2314, %v2204
    %s2320 = scalar_lea.vmem %s7, 48
    %v2321 = vld [vmem:[%s2320] sm:$0xf]
    %v2322 = vld [vmem:[%s2320 + $0x4] sm:$0xf]
    %v2323 = vld [vmem:[%s2320 + $0x8] sm:$0xf]
    %v2324 = vld [vmem:[%s2320 + $0xc] sm:$0xf]
    %v2329 = vunpack.c.l.b16 %v2321
    %v2330 = vunpack.c.l.b16 %v2322
    %v2331 = vunpack.c.l.b16 %v2323
    %v2332 = vunpack.c.l.b16 %v2324
    %v2333 = vpack.c.b16 %v2330, %v2329
    %v2334 = vpack.c.b16 %v2332, %v2331
    %v2338 = vsel %vm308, %v2319, 0
    %2340 = vmatprep.subr.bf16.mxu0 0
    %2341 = vmatpush1.bf16.msra.mxu0 %v2333
    %2342 = vmatprep.subr.bf16.mxu0 0
    %2343 = vmatpush1.bf16.msra.mxu0 %v2334
    %2344 = vmatprep.subr.bf16.mxu0 0
    %2345 = vmatpush1.bf16.msra.mxu0 0
    %2346 = vmatprep.subr.bf16.mxu0 0
    %2347 = vmatpush1.bf16.msra.mxu0 0
    %2348 = vmatprep.subr.bf16.mxu0 0
    %2349 = vmatpush1.bf16.msra.mxu0 0
    %2350 = vmatprep.subr.bf16.mxu0 0
    %2351 = vmatpush1.bf16.msra.mxu0 0
    %2352 = vmatprep.subr.bf16.mxu0 0
    %2353 = vmatpush1.bf16.msra.mxu0 0
    %2354 = vmatprep.subr.bf16.mxu0 0
    %2355 = vmatpush1.bf16.msra.mxu0 0
    %2356 = vmatprep.subr.bf16.mxu0 0
    %2357 = vmatpush1.bf16.msra.mxu0 0
    %2358 = vmatprep.subr.bf16.mxu0 0
    %2359 = vmatpush1.bf16.msra.mxu0 0
    %2360 = vmatprep.subr.bf16.mxu0 0
    %2361 = vmatpush1.bf16.msra.mxu0 0
    %2362 = vmatprep.subr.bf16.mxu0 0
    %2363 = vmatpush1.bf16.msra.mxu0 0
    %2364 = vmatprep.subr.bf16.mxu0 0
    %2365 = vmatpush1.bf16.msra.mxu0 0
    %2366 = vmatprep.subr.bf16.mxu0 0
    %2367 = vmatpush1.bf16.msra.mxu0 0
    %2368 = vmatprep.subr.bf16.mxu0 0
    %2369 = vmatpush1.bf16.msra.mxu0 0
    %2370 = vmatprep.subr.bf16.mxu0 0
    %2371 = vmatpush1.bf16.msra.mxu0 0
    %2372 = vmatprep.mubr.bf16.mxu0 0
    %2373 = vmatmul.mubr.bf16.gmra.mrb[0].mxu0 %v2338
    %v2374 = vpop.f32.mrb[0].mxu0
    %v2375 = vadd.f32 0.0, %v2374
    %v2376 = vpop.f32.mrb[0].mxu0
    %v2377 = vpop.f32.mrb[0].mxu0
    %v2378 = vadd.f32 0.0, %v2377
    %v2379 = vpop.f32.mrb[0].mxu0
    %2380 = vdwg.mxu0
    %v2385 = vunpack.c.l.b16 %v1852
    %v2386 = vunpack.c.l.b16 %v1853
    %v2387 = vunpack.c.l.b16 %v1854
    %v2388 = vunpack.c.l.b16 %v1855
    %v2389 = vpack.c.b16 %v2386, %v2385
    %v2390 = vpack.c.b16 %v2388, %v2387
    %v2394 = vsel %vm308, %v1850, 0
    %2396 = vmatprep.subr.bf16.mxu0 0
    %2397 = vmatpush1.bf16.msra.mxu0 %v2389
    %2398 = vmatprep.subr.bf16.mxu0 0
    %2399 = vmatpush1.bf16.msra.mxu0 %v2390
    %2400 = vmatprep.subr.bf16.mxu0 0
    %2401 = vmatpush1.bf16.msra.mxu0 0
    %2402 = vmatprep.subr.bf16.mxu0 0
    %2403 = vmatpush1.bf16.msra.mxu0 0
    %2404 = vmatprep.subr.bf16.mxu0 0
    %2405 = vmatpush1.bf16.msra.mxu0 0
    %2406 = vmatprep.subr.bf16.mxu0 0
    %2407 = vmatpush1.bf16.msra.mxu0 0
    %2408 = vmatprep.subr.bf16.mxu0 0
    %2409 = vmatpush1.bf16.msra.mxu0 0
    %2410 = vmatprep.subr.bf16.mxu0 0
    %2411 = vmatpush1.bf16.msra.mxu0 0
    %2412 = vmatprep.subr.bf16.mxu0 0
    %2413 = vmatpush1.bf16.msra.mxu0 0
    %2414 = vmatprep.subr.bf16.mxu0 0
    %2415 = vmatpush1.bf16.msra.mxu0 0
    %2416 = vmatprep.subr.bf16.mxu0 0
    %2417 = vmatpush1.bf16.msra.mxu0 0
    %2418 = vmatprep.subr.bf16.mxu0 0
    %2419 = vmatpush1.bf16.msra.mxu0 0
    %2420 = vmatprep.subr.bf16.mxu0 0
    %2421 = vmatpush1.bf16.msra.mxu0 0
    %2422 = vmatprep.subr.bf16.mxu0 0
    %2423 = vmatpush1.bf16.msra.mxu0 0
    %2424 = vmatprep.subr.bf16.mxu0 0
    %2425 = vmatpush1.bf16.msra.mxu0 0
    %2426 = vmatprep.subr.bf16.mxu0 0
    %2427 = vmatpush1.bf16.msra.mxu0 0
    %2428 = vmatprep.mubr.bf16.mxu0 0
    %2429 = vmatmul.mubr.bf16.gmra.mrb[0].mxu0 %v2394
    %v2430 = vpop.f32.mrb[0].mxu0
    %v2431 = vadd.f32 %v2375, %v2430
    %v2432 = vpop.f32.mrb[0].mxu0
    %v2433 = vpop.f32.mrb[0].mxu0
    %v2434 = vadd.f32 %v2378, %v2433
    %v2435 = vpop.f32.mrb[0].mxu0
    %2436 = vdwg.mxu0
    %s2437 = scalar_lea.vmem %s8, 1
    %v2438 = vld [vmem:[%s2437] sm:$0x1]
    %v2440 = vlaneseq
    %v2441 = vshrl.u32 %v2440, 7
    %v2442 = vsub.s32 0, %v2441
    %v2443 = vrot.slane %v2438, %v2442
    %v2445 = vadd.f32 %v2431, %v2443
    %v2446 = vadd.f32 %v2434, %v2443
    %v2447 = vadd.f32 %v1381, %v2445
    %v2448 = vadd.f32 %v1382, %v2446
    %s2449 = scalar_lea.vmem %s13, 1
    %v2450 = vld [vmem:[%s2449] sm:$0x1]
    %s2451 = scalar_lea.vmem %s14, 1
    %v2452 = vld [vmem:[%s2451] sm:$0x1]
    %v2453 = vsel %vm100, %v2447, 0.0
    %2454 = vadd.xlane.f32.xlu0 %v2453
    %v2455 = vpop.xlane.xlu0 %2454
    %v2456 = vsel %vm100, %v2448, 0.0
    %2457 = vadd.xlane.f32.xlu0 %v2456
    %v2458 = vpop.xlane.xlu0 %2457
    %v2459 = vmul.f32 %v2455, %v1130
    %v2460 = vmul.f32 %v2458, %v1130
    %v2461 = vsub.f32 %v2447, %v2459
    %v2462 = vsub.f32 %v2448, %v2460
    %v2463 = vmul.f32 %v2461, %v2461
    %v2464 = vmul.f32 %v2462, %v2462
    %v2465 = vsel %vm100, %v2463, 0.0
    %2466 = vadd.xlane.f32.xlu0 %v2465
    %v2467 = vpop.xlane.xlu0 %2466
    %v2468 = vsel %vm100, %v2464, 0.0
    %2469 = vadd.xlane.f32.xlu0 %v2468
    %v2470 = vpop.xlane.xlu0 %2469
    %v2471 = vmul.f32 %v2467, %v1130
    %v2472 = vmul.f32 %v2470, %v1130
    %v2473 = vadd.f32 %v2471, 1e-05
    %v2474 = vadd.f32 %v2472, 1e-05
    %v2475 = vrsqrt.pop %v2473
    %v2476 = vrsqrt.pop %v2474
    %v2477 = vmul.f32 %v2461, %v2475
    %v2478 = vmul.f32 %v2462, %v2476
    %v2480 = vlaneseq
    %v2481 = vshrl.u32 %v2480, 7
    %v2482 = vsub.s32 0, %v2481
    %v2483 = vrot.slane %v2450, %v2482
    %v2485 = vmul.f32 %v2477, %v2483
    %v2486 = vmul.f32 %v2478, %v2483
    %v2488 = vlaneseq
    %v2489 = vshrl.u32 %v2488, 7
    %v2490 = vsub.s32 0, %v2489
    %v2491 = vrot.slane %v2452, %v2490
    %v2493 = vadd.f32 %v2485, %v2491
    %v2494 = vadd.f32 %v2486, %v2491
    %v2495 = vpack.c.bf16 %v2494, %v2493
    %s2496 = scalar_lea.vmem %s9, 32
    %v2497 = vld [vmem:[%s2496] sm:$0xf]
    %v2498 = vld [vmem:[%s2496 + $0x4] sm:$0xf]
    %v2499 = vld [vmem:[%s2496 + $0x8] sm:$0xf]
    %v2500 = vld [vmem:[%s2496 + $0xc] sm:$0xf]
    %v2501 = vld [vmem:[%s2496 + $0x10] sm:$0xf]
    %v2502 = vld [vmem:[%s2496 + $0x14] sm:$0xf]
    %v2503 = vld [vmem:[%s2496 + $0x18] sm:$0xf]
    %v2504 = vld [vmem:[%s2496 + $0x1c] sm:$0xf]
    %s2505 = scalar_lea.vmem %s10, 1
    %v2506 = vld [vmem:[%s2505] sm:$0x1]
    %v2508 = vlaneseq
    %v2509 = vshrl.u32 %v2508, 7
    %v2510 = vsub.s32 0, %v2509
    %v2511 = vrot.slane %v2506, %v2510
    %v2521 = vunpack.c.l.b16 %v2497
    %v2522 = vunpack.c.l.b16 %v2498
    %v2523 = vunpack.c.l.b16 %v2499
    %v2524 = vunpack.c.l.b16 %v2500
    %v2525 = vunpack.c.l.b16 %v2501
    %v2526 = vunpack.c.l.b16 %v2502
    %v2527 = vunpack.c.l.b16 %v2503
    %v2528 = vunpack.c.l.b16 %v2504
    %v2529 = vpack.c.b16 %v2522, %v2521
    %v2530 = vpack.c.b16 %v2524, %v2523
    %v2531 = vpack.c.b16 %v2526, %v2525
    %v2532 = vpack.c.b16 %v2528, %v2527
    %v2538 = vsel %vm100, %v2495, 0
    %2540 = vmatprep.subr.bf16.mxu0 0
    %2541 = vmatpush1.bf16.msra.mxu0 %v2529
    %2542 = vmatprep.subr.bf16.mxu0 0
    %2543 = vmatpush1.bf16.msra.mxu0 %v2530
    %2544 = vmatprep.subr.bf16.mxu0 0
    %2545 = vmatpush1.bf16.msra.mxu0 %v2531
    %2546 = vmatprep.subr.bf16.mxu0 0
    %2547 = vmatpush1.bf16.msra.mxu0 %v2532
    %2548 = vmatprep.subr.bf16.mxu0 0
    %2549 = vmatpush1.bf16.msra.mxu0 0
    %2550 = vmatprep.subr.bf16.mxu0 0
    %2551 = vmatpush1.bf16.msra.mxu0 0
    %2552 = vmatprep.subr.bf16.mxu0 0
    %2553 = vmatpush1.bf16.msra.mxu0 0
    %2554 = vmatprep.subr.bf16.mxu0 0
    %2555 = vmatpush1.bf16.msra.mxu0 0
    %2556 = vmatprep.subr.bf16.mxu0 0
    %2557 = vmatpush1.bf16.msra.mxu0 0
    %2558 = vmatprep.subr.bf16.mxu0 0
    %2559 = vmatpush1.bf16.msra.mxu0 0
    %2560 = vmatprep.subr.bf16.mxu0 0
    %2561 = vmatpush1.bf16.msra.mxu0 0
    %2562 = vmatprep.subr.bf16.mxu0 0
    %2563 = vmatpush1.bf16.msra.mxu0 0
    %2564 = vmatprep.subr.bf16.mxu0 0
    %2565 = vmatpush1.bf16.msra.mxu0 0
    %2566 = vmatprep.subr.bf16.mxu0 0
    %2567 = vmatpush1.bf16.msra.mxu0 0
    %2568 = vmatprep.subr.bf16.mxu0 0
    %2569 = vmatpush1.bf16.msra.mxu0 0
    %2570 = vmatprep.subr.bf16.mxu0 0
    %2571 = vmatpush1.bf16.msra.mxu0 0
    %2572 = vmatprep.mubr.bf16.mxu0 0
    %2573 = vmatmul.mubr.bf16.gmra.mrb[0].mxu0 %v2538
    %v2574 = vpop.f32.mrb[0].mxu0
    %v2575 = vadd.f32 %v2511, %v2574
    %v2576 = vpop.f32.mrb[0].mxu0
    %v2577 = vpop.f32.mrb[0].mxu0
    %v2578 = vadd.f32 %v2511, %v2577
    %v2579 = vpop.f32.mrb[0].mxu0
    %2580 = vdwg.mxu0
    %v2581 = vmax.f32 %v2575, 0.0
    %v2582 = vmax.f32 %v2578, 0.0
    %v2583 = vpack.c.bf16 %v2582, %v2581
    %s2584 = scalar_lea.vmem %s11, 32
    %v2585 = vld [vmem:[%s2584] sm:$0xf]
    %v2586 = vld [vmem:[%s2584 + $0x4] sm:$0xf]
    %v2587 = vld [vmem:[%s2584 + $0x8] sm:$0xf]
    %v2588 = vld [vmem:[%s2584 + $0xc] sm:$0xf]
    %v2589 = vld [vmem:[%s2584 + $0x10] sm:$0xf]
    %v2590 = vld [vmem:[%s2584 + $0x14] sm:$0xf]
    %v2591 = vld [vmem:[%s2584 + $0x18] sm:$0xf]
    %v2592 = vld [vmem:[%s2584 + $0x1c] sm:$0xf]
    %s2593 = scalar_lea.vmem %s12, 1
    %v2594 = vld [vmem:[%s2593] sm:$0x1]
    %v2596 = vlaneseq
    %v2597 = vshrl.u32 %v2596, 7
    %v2598 = vsub.s32 0, %v2597
    %v2599 = vrot.slane %v2594, %v2598
    %v2609 = vunpack.c.l.b16 %v2585
    %v2610 = vunpack.c.l.b16 %v2586
    %v2611 = vunpack.c.l.b16 %v2587
    %v2612 = vunpack.c.l.b16 %v2588
    %v2613 = vunpack.c.l.b16 %v2589
    %v2614 = vunpack.c.l.b16 %v2590
    %v2615 = vunpack.c.l.b16 %v2591
    %v2616 = vunpack.c.l.b16 %v2592
    %v2617 = vpack.c.b16 %v2610, %v2609
    %v2618 = vpack.c.b16 %v2612, %v2611
    %v2619 = vpack.c.b16 %v2614, %v2613
    %v2620 = vpack.c.b16 %v2616, %v2615
    %v2626 = vsel %vm100, %v2583, 0
    %2628 = vmatprep.subr.bf16.mxu0 0
    %2629 = vmatpush1.bf16.msra.mxu0 %v2617
    %2630 = vmatprep.subr.bf16.mxu0 0
    %2631 = vmatpush1.bf16.msra.mxu0 %v2618
    %2632 = vmatprep.subr.bf16.mxu0 0
    %2633 = vmatpush1.bf16.msra.mxu0 %v2619
    %2634 = vmatprep.subr.bf16.mxu0 0
    %2635 = vmatpush1.bf16.msra.mxu0 %v2620
    %2636 = vmatprep.subr.bf16.mxu0 0
    %2637 = vmatpush1.bf16.msra.mxu0 0
    %2638 = vmatprep.subr.bf16.mxu0 0
    %2639 = vmatpush1.bf16.msra.mxu0 0
    %2640 = vmatprep.subr.bf16.mxu0 0
    %2641 = vmatpush1.bf16.msra.mxu0 0
    %2642 = vmatprep.subr.bf16.mxu0 0
    %2643 = vmatpush1.bf16.msra.mxu0 0
    %2644 = vmatprep.subr.bf16.mxu0 0
    %2645 = vmatpush1.bf16.msra.mxu0 0
    %2646 = vmatprep.subr.bf16.mxu0 0
    %2647 = vmatpush1.bf16.msra.mxu0 0
    %2648 = vmatprep.subr.bf16.mxu0 0
    %2649 = vmatpush1.bf16.msra.mxu0 0
    %2650 = vmatprep.subr.bf16.mxu0 0
    %2651 = vmatpush1.bf16.msra.mxu0 0
    %2652 = vmatprep.subr.bf16.mxu0 0
    %2653 = vmatpush1.bf16.msra.mxu0 0
    %2654 = vmatprep.subr.bf16.mxu0 0
    %2655 = vmatpush1.bf16.msra.mxu0 0
    %2656 = vmatprep.subr.bf16.mxu0 0
    %2657 = vmatpush1.bf16.msra.mxu0 0
    %2658 = vmatprep.subr.bf16.mxu0 0
    %2659 = vmatpush1.bf16.msra.mxu0 0
    %2660 = vmatprep.mubr.bf16.mxu0 0
    %2661 = vmatmul.mubr.bf16.gmra.mrb[0].mxu0 %v2626
    %v2662 = vpop.f32.mrb[0].mxu0
    %v2663 = vadd.f32 %v2599, %v2662
    %v2664 = vpop.f32.mrb[0].mxu0
    %v2665 = vpop.f32.mrb[0].mxu0
    %v2666 = vadd.f32 %v2599, %v2665
    %v2667 = vpop.f32.mrb[0].mxu0
    %2668 = vdwg.mxu0
    %v2669 = vadd.f32 %v2493, %v2663
    %v2670 = vadd.f32 %v2494, %v2666
    %s2671 = scalar_lea.vmem %s15, 1
    %v2672 = vld [vmem:[%s2671] sm:$0x1]
    %s2673 = scalar_lea.vmem %s16, 1
    %v2674 = vld [vmem:[%s2673] sm:$0x1]
    %v2675 = vsel %vm100, %v2669, 0.0
    %2676 = vadd.xlane.f32.xlu0 %v2675
    %v2677 = vpop.xlane.xlu0 %2676
    %v2678 = vsel %vm100, %v2670, 0.0
    %2679 = vadd.xlane.f32.xlu0 %v2678
    %v2680 = vpop.xlane.xlu0 %2679
    %v2681 = vmul.f32 %v2677, %v1130
    %v2682 = vmul.f32 %v2680, %v1130
    %v2683 = vsub.f32 %v2669, %v2681
    %v2684 = vsub.f32 %v2670, %v2682
    %v2685 = vmul.f32 %v2683, %v2683
    %v2686 = vmul.f32 %v2684, %v2684
    %v2687 = vsel %vm100, %v2685, 0.0
    %2688 = vadd.xlane.f32.xlu0 %v2687
    %v2689 = vpop.xlane.xlu0 %2688
    %v2690 = vsel %vm100, %v2686, 0.0
    %2691 = vadd.xlane.f32.xlu0 %v2690
    %v2692 = vpop.xlane.xlu0 %2691
    %v2693 = vmul.f32 %v2689, %v1130
    %v2694 = vmul.f32 %v2692, %v1130
    %v2695 = vadd.f32 %v2693, 1e-05
    %v2696 = vadd.f32 %v2694, 1e-05
    %v2697 = vrsqrt.pop %v2695
    %v2698 = vrsqrt.pop %v2696
    %v2699 = vmul.f32 %v2683, %v2697
    %v2700 = vmul.f32 %v2684, %v2698
    %v2702 = vlaneseq
    %v2703 = vshrl.u32 %v2702, 7
    %v2704 = vsub.s32 0, %v2703
    %v2705 = vrot.slane %v2672, %v2704
    %v2707 = vmul.f32 %v2699, %v2705
    %v2708 = vmul.f32 %v2700, %v2705
    %v2710 = vlaneseq
    %v2711 = vshrl.u32 %v2710, 7
    %v2712 = vsub.s32 0, %v2711
    %v2713 = vrot.slane %v2674, %v2712
    %v2715 = vadd.f32 %v2707, %v2713
    %v2716 = vadd.f32 %v2708, %v2713
    %v2717 = vpack.c.bf16 %v2716, %v2715
    %s2718 = scalar_lea.vmem %s1, 128
    %v2719 = vld [vmem:[%s2718] sm:$0xf]
    %v2720 = vld [vmem:[%s2718 + $0x4] sm:$0xf]
    %v2721 = vld [vmem:[%s2718 + $0x8] sm:$0xf]
    %v2722 = vld [vmem:[%s2718 + $0xc] sm:$0xf]
    %v2723 = vld [vmem:[%s2718 + $0x10] sm:$0xf]
    %v2724 = vld [vmem:[%s2718 + $0x14] sm:$0xf]
    %v2725 = vld [vmem:[%s2718 + $0x18] sm:$0xf]
    %v2726 = vld [vmem:[%s2718 + $0x1c] sm:$0xf]
    %s2727 = scalar_lea.vmem %s2, 4
    %v2728 = vld [vmem:[%s2727] sm:$0x1]
    %v2730 = vlaneseq
    %v2731 = vshrl.u32 %v2730, 7
    %v2732 = vsub.s32 0, %v2731
    %v2733 = vrot.slane %v2728, %v2732
    %v2743 = vunpack.c.l.b16 %v2719
    %v2744 = vunpack.c.l.b16 %v2720
    %v2745 = vunpack.c.l.b16 %v2721
    %v2746 = vunpack.c.l.b16 %v2722
    %v2747 = vunpack.c.l.b16 %v2723
    %v2748 = vunpack.c.l.b16 %v2724
    %v2749 = vunpack.c.l.b16 %v2725
    %v2750 = vunpack.c.l.b16 %v2726
    %v2751 = vpack.c.b16 %v2744, %v2743
    %v2752 = vpack.c.b16 %v2746, %v2745
    %v2753 = vpack.c.b16 %v2748, %v2747
    %v2754 = vpack.c.b16 %v2750, %v2749
    %v2760 = vsel %vm100, %v2717, 0
    %2762 = vmatprep.subr.bf16.mxu0 0
    %2763 = vmatpush1.bf16.msra.mxu0 %v2751
    %2764 = vmatprep.subr.bf16.mxu0 0
    %2765 = vmatpush1.bf16.msra.mxu0 %v2752
    %2766 = vmatprep.subr.bf16.mxu0 0
    %2767 = vmatpush1.bf16.msra.mxu0 %v2753
    %2768 = vmatprep.subr.bf16.mxu0 0
    %2769 = vmatpush1.bf16.msra.mxu0 %v2754
    %2770 = vmatprep.subr.bf16.mxu0 0
    %2771 = vmatpush1.bf16.msra.mxu0 0
    %2772 = vmatprep.subr.bf16.mxu0 0
    %2773 = vmatpush1.bf16.msra.mxu0 0
    %2774 = vmatprep.subr.bf16.mxu0 0
    %2775 = vmatpush1.bf16.msra.mxu0 0
    %2776 = vmatprep.subr.bf16.mxu0 0
    %2777 = vmatpush1.bf16.msra.mxu0 0
    %2778 = vmatprep.subr.bf16.mxu0 0
    %2779 = vmatpush1.bf16.msra.mxu0 0
    %2780 = vmatprep.subr.bf16.mxu0 0
    %2781 = vmatpush1.bf16.msra.mxu0 0
    %2782 = vmatprep.subr.bf16.mxu0 0
    %2783 = vmatpush1.bf16.msra.mxu0 0
    %2784 = vmatprep.subr.bf16.mxu0 0
    %2785 = vmatpush1.bf16.msra.mxu0 0
    %2786 = vmatprep.subr.bf16.mxu0 0
    %2787 = vmatpush1.bf16.msra.mxu0 0
    %2788 = vmatprep.subr.bf16.mxu0 0
    %2789 = vmatpush1.bf16.msra.mxu0 0
    %2790 = vmatprep.subr.bf16.mxu0 0
    %2791 = vmatpush1.bf16.msra.mxu0 0
    %2792 = vmatprep.subr.bf16.mxu0 0
    %2793 = vmatpush1.bf16.msra.mxu0 0
    %2794 = vmatprep.mubr.bf16.mxu0 0
    %2795 = vmatmul.mubr.bf16.gmra.mrb[0].mxu0 %v2760
    %v2796 = vpop.f32.mrb[0].mxu0
    %v2797 = vadd.f32 %v2733, %v2796
    %v2798 = vpop.f32.mrb[0].mxu0
    %v2799 = vpop.f32.mrb[0].mxu0
    %v2800 = vadd.f32 %v2733, %v2799
    %v2801 = vpop.f32.mrb[0].mxu0
    %2802 = vdwg.mxu0
    %s2803 = scalar_lea.vmem %s3, 128
    %v2804 = vld [vmem:[%s2803] sm:$0xf]
    %v2805 = vld [vmem:[%s2803 + $0x4] sm:$0xf]
    %v2806 = vld [vmem:[%s2803 + $0x8] sm:$0xf]
    %v2807 = vld [vmem:[%s2803 + $0xc] sm:$0xf]
    %v2808 = vld [vmem:[%s2803 + $0x10] sm:$0xf]
    %v2809 = vld [vmem:[%s2803 + $0x14] sm:$0xf]
    %v2810 = vld [vmem:[%s2803 + $0x18] sm:$0xf]
    %v2811 = vld [vmem:[%s2803 + $0x1c] sm:$0xf]
    %s2812 = scalar_lea.vmem %s4, 4
    %v2813 = vld [vmem:[%s2812] sm:$0x1]
    %v2815 = vlaneseq
    %v2816 = vshrl.u32 %v2815, 7
    %v2817 = vsub.s32 0, %v2816
    %v2818 = vrot.slane %v2813, %v2817
    %v2828 = vunpack.c.l.b16 %v2804
    %v2829 = vunpack.c.l.b16 %v2805
    %v2830 = vunpack.c.l.b16 %v2806
    %v2831 = vunpack.c.l.b16 %v2807
    %v2832 = vunpack.c.l.b16 %v2808
    %v2833 = vunpack.c.l.b16 %v2809
    %v2834 = vunpack.c.l.b16 %v2810
    %v2835 = vunpack.c.l.b16 %v2811
    %v2836 = vpack.c.b16 %v2829, %v2828
    %v2837 = vpack.c.b16 %v2831, %v2830
    %v2838 = vpack.c.b16 %v2833, %v2832
    %v2839 = vpack.c.b16 %v2835, %v2834
    %2844 = vmatprep.subr.bf16.mxu0 0
    %2845 = vmatpush1.bf16.msra.mxu0 %v2836
    %2846 = vmatprep.subr.bf16.mxu0 0
    %2847 = vmatpush1.bf16.msra.mxu0 %v2837
    %2848 = vmatprep.subr.bf16.mxu0 0
    %2849 = vmatpush1.bf16.msra.mxu0 %v2838
    %2850 = vmatprep.subr.bf16.mxu0 0
    %2851 = vmatpush1.bf16.msra.mxu0 %v2839
    %2852 = vmatprep.subr.bf16.mxu0 0
    %2853 = vmatpush1.bf16.msra.mxu0 0
    %2854 = vmatprep.subr.bf16.mxu0 0
    %2855 = vmatpush1.bf16.msra.mxu0 0
    %2856 = vmatprep.subr.bf16.mxu0 0
    %2857 = vmatpush1.bf16.msra.mxu0 0
    %2858 = vmatprep.subr.bf16.mxu0 0
    %2859 = vmatpush1.bf16.msra.mxu0 0
    %2860 = vmatprep.subr.bf16.mxu0 0
    %2861 = vmatpush1.bf16.msra.mxu0 0
    %2862 = vmatprep.subr.bf16.mxu0 0
    %2863 = vmatpush1.bf16.msra.mxu0 0
    %2864 = vmatprep.subr.bf16.mxu0 0
    %2865 = vmatpush1.bf16.msra.mxu0 0
    %2866 = vmatprep.subr.bf16.mxu0 0
    %2867 = vmatpush1.bf16.msra.mxu0 0
    %2868 = vmatprep.subr.bf16.mxu0 0
    %2869 = vmatpush1.bf16.msra.mxu0 0
    %2870 = vmatprep.subr.bf16.mxu0 0
    %2871 = vmatpush1.bf16.msra.mxu0 0
    %2872 = vmatprep.subr.bf16.mxu0 0
    %2873 = vmatpush1.bf16.msra.mxu0 0
    %2874 = vmatprep.subr.bf16.mxu0 0
    %2875 = vmatpush1.bf16.msra.mxu0 0
    %2876 = vmatprep.mubr.bf16.mxu0 0
    %2877 = vmatmul.mubr.bf16.gmra.mrb[0].mxu0 %v2760
    %v2878 = vpop.f32.mrb[0].mxu0
    %v2879 = vadd.f32 %v2818, %v2878
    %v2880 = vpop.f32.mrb[0].mxu0
    %v2881 = vpop.f32.mrb[0].mxu0
    %v2882 = vadd.f32 %v2818, %v2881
    %v2883 = vpop.f32.mrb[0].mxu0
    %2884 = vdwg.mxu0
    %s2885 = scalar_lea.vmem %s5, 128
    %v2886 = vld [vmem:[%s2885] sm:$0xf]
    %v2887 = vld [vmem:[%s2885 + $0x4] sm:$0xf]
    %v2888 = vld [vmem:[%s2885 + $0x8] sm:$0xf]
    %v2889 = vld [vmem:[%s2885 + $0xc] sm:$0xf]
    %v2890 = vld [vmem:[%s2885 + $0x10] sm:$0xf]
    %v2891 = vld [vmem:[%s2885 + $0x14] sm:$0xf]
    %v2892 = vld [vmem:[%s2885 + $0x18] sm:$0xf]
    %v2893 = vld [vmem:[%s2885 + $0x1c] sm:$0xf]
    %s2894 = scalar_lea.vmem %s6, 4
    %v2895 = vld [vmem:[%s2894] sm:$0x1]
    %v2897 = vlaneseq
    %v2898 = vshrl.u32 %v2897, 7
    %v2899 = vsub.s32 0, %v2898
    %v2900 = vrot.slane %v2895, %v2899
    %v2910 = vunpack.c.l.b16 %v2886
    %v2911 = vunpack.c.l.b16 %v2887
    %v2912 = vunpack.c.l.b16 %v2888
    %v2913 = vunpack.c.l.b16 %v2889
    %v2914 = vunpack.c.l.b16 %v2890
    %v2915 = vunpack.c.l.b16 %v2891
    %v2916 = vunpack.c.l.b16 %v2892
    %v2917 = vunpack.c.l.b16 %v2893
    %v2918 = vpack.c.b16 %v2911, %v2910
    %v2919 = vpack.c.b16 %v2913, %v2912
    %v2920 = vpack.c.b16 %v2915, %v2914
    %v2921 = vpack.c.b16 %v2917, %v2916
    %2926 = vmatprep.subr.bf16.mxu0 0
    %2927 = vmatpush1.bf16.msra.mxu0 %v2918
    %2928 = vmatprep.subr.bf16.mxu0 0
    %2929 = vmatpush1.bf16.msra.mxu0 %v2919
    %2930 = vmatprep.subr.bf16.mxu0 0
    %2931 = vmatpush1.bf16.msra.mxu0 %v2920
    %2932 = vmatprep.subr.bf16.mxu0 0
    %2933 = vmatpush1.bf16.msra.mxu0 %v2921
    %2934 = vmatprep.subr.bf16.mxu0 0
    %2935 = vmatpush1.bf16.msra.mxu0 0
    %2936 = vmatprep.subr.bf16.mxu0 0
    %2937 = vmatpush1.bf16.msra.mxu0 0
    %2938 = vmatprep.subr.bf16.mxu0 0
    %2939 = vmatpush1.bf16.msra.mxu0 0
    %2940 = vmatprep.subr.bf16.mxu0 0
    %2941 = vmatpush1.bf16.msra.mxu0 0
    %2942 = vmatprep.subr.bf16.mxu0 0
    %2943 = vmatpush1.bf16.msra.mxu0 0
    %2944 = vmatprep.subr.bf16.mxu0 0
    %2945 = vmatpush1.bf16.msra.mxu0 0
    %2946 = vmatprep.subr.bf16.mxu0 0
    %2947 = vmatpush1.bf16.msra.mxu0 0
    %2948 = vmatprep.subr.bf16.mxu0 0
    %2949 = vmatpush1.bf16.msra.mxu0 0
    %2950 = vmatprep.subr.bf16.mxu0 0
    %2951 = vmatpush1.bf16.msra.mxu0 0
    %2952 = vmatprep.subr.bf16.mxu0 0
    %2953 = vmatpush1.bf16.msra.mxu0 0
    %2954 = vmatprep.subr.bf16.mxu0 0
    %2955 = vmatpush1.bf16.msra.mxu0 0
    %2956 = vmatprep.subr.bf16.mxu0 0
    %2957 = vmatpush1.bf16.msra.mxu0 0
    %2958 = vmatprep.mubr.bf16.mxu0 0
    %2959 = vmatmul.mubr.bf16.gmra.mrb[0].mxu0 %v2760
    %v2960 = vpop.f32.mrb[0].mxu0
    %v2961 = vadd.f32 %v2900, %v2960
    %v2962 = vpop.f32.mrb[0].mxu0
    %v2963 = vpop.f32.mrb[0].mxu0
    %v2964 = vadd.f32 %v2900, %v2963
    %v2965 = vpop.f32.mrb[0].mxu0
    %2966 = vdwg.mxu0
    %v2967 = vpack.c.bf16 %v2800, %v2797
    %v2968 = vpack.c.bf16 %v2882, %v2879
    %v2969 = vpack.c.bf16 %v2964, %v2961
    %v2971 = vsel %vm308, %v2967, 0
    %v2974 = vsel %vm308, %v2968, 0
    %2976 = vmatprep.subr.bf16.mxu0 0
    %2977 = vmatpush1.bf16.xpose.msra.mxu0 %v2974
    %2978 = vmatprep.subr.bf16.mxu0 0
    %2979 = vmatpush1.bf16.xpose.msra.mxu0 0
    %2980 = vmatprep.subr.bf16.mxu0 0
    %2981 = vmatpush1.bf16.xpose.msra.mxu0 0
    %2982 = vmatprep.subr.bf16.mxu0 0
    %2983 = vmatpush1.bf16.xpose.msra.mxu0 0
    %2984 = vmatprep.subr.bf16.mxu0 0
    %2985 = vmatpush1.bf16.xpose.msra.mxu0 0
    %2986 = vmatprep.subr.bf16.mxu0 0
    %2987 = vmatpush1.bf16.xpose.msra.mxu0 0
    %2988 = vmatprep.subr.bf16.mxu0 0
    %2989 = vmatpush1.bf16.xpose.msra.mxu0 0
    %2990 = vmatprep.subr.bf16.mxu0 0
    %2991 = vmatpush1.bf16.xpose.msra.mxu0 0
    %2992 = vmatprep.subr.bf16.mxu0 0
    %2993 = vmatpush1.bf16.xpose.msra.mxu0 0
    %2994 = vmatprep.subr.bf16.mxu0 0
    %2995 = vmatpush1.bf16.xpose.msra.mxu0 0
    %2996 = vmatprep.subr.bf16.mxu0 0
    %2997 = vmatpush1.bf16.xpose.msra.mxu0 0
    %2998 = vmatprep.subr.bf16.mxu0 0
    %2999 = vmatpush1.bf16.xpose.msra.mxu0 0
    %3000 = vmatprep.subr.bf16.mxu0 0
    %3001 = vmatpush1.bf16.xpose.msra.mxu0 0
    %3002 = vmatprep.subr.bf16.mxu0 0
    %3003 = vmatpush1.bf16.xpose.msra.mxu0 0
    %3004 = vmatprep.subr.bf16.mxu0 0
    %3005 = vmatpush1.bf16.xpose.msra.mxu0 0
    %3006 = vmatprep.subr.bf16.mxu0 0
    %3007 = vmatpush1.bf16.xpose.msra.mxu0 0
    %3008 = vmatprep.mubr.bf16.mxu0 0
    %3009 = vmatmul.mubr.bf16.gmra.mrb[0].mxu0 %v2971
    %v3010 = vpop.f32.mrb[0].mxu0
    %v3011 = vadd.f32 0.0, %v3010
    %v3012 = vpop.f32.mrb[0].mxu0
    %v3013 = vpop.f32.mrb[0].mxu0
    %v3014 = vpop.f32.mrb[0].mxu0
    %3015 = vdwg.mxu0
    %v3016 = vsel %vm355, %v3011, -inf
    %3017 = vmax.xlane.f32.xlu0 %v3016
    %v3018 = vpop.xlane.xlu0 %3017
    %v3019 = vsub.f32 %v3011, %v3018
    %v3020 = vmul.f32 %v3019, 1.442695
    %v3021 = vpow.pop %v3020
    %v3022 = vsel %vm355, %v3021, 0.0
    %3023 = vadd.xlane.f32.xlu0 %v3022
    %v3024 = vpop.xlane.xlu0 %3023
    %v3025 = vrcp.pop %v3024
    %v3026 = vmul.f32 %v3021, %v3025
    %v3027 = vpack.c.bf16 %v3026, %v3026
    %v3029 = vsel %vm355, %v3027, 0
    %v3032 = vsel %vm371, %v2969, 0
    %3034 = vmatprep.subr.bf16.mxu0 0
    %3035 = vmatpush1.bf16.msra.mxu0 %v3032
    %3036 = vmatprep.subr.bf16.mxu0 0
    %3037 = vmatpush1.bf16.msra.mxu0 0
    %3038 = vmatprep.subr.bf16.mxu0 0
    %3039 = vmatpush1.bf16.msra.mxu0 0
    %3040 = vmatprep.subr.bf16.mxu0 0
    %3041 = vmatpush1.bf16.msra.mxu0 0
    %3042 = vmatprep.subr.bf16.mxu0 0
    %3043 = vmatpush1.bf16.msra.mxu0 0
    %3044 = vmatprep.subr.bf16.mxu0 0
    %3045 = vmatpush1.bf16.msra.mxu0 0
    %3046 = vmatprep.subr.bf16.mxu0 0
    %3047 = vmatpush1.bf16.msra.mxu0 0
    %3048 = vmatprep.subr.bf16.mxu0 0
    %3049 = vmatpush1.bf16.msra.mxu0 0
    %3050 = vmatprep.subr.bf16.mxu0 0
    %3051 = vmatpush1.bf16.msra.mxu0 0
    %3052 = vmatprep.subr.bf16.mxu0 0
    %3053 = vmatpush1.bf16.msra.mxu0 0
    %3054 = vmatprep.subr.bf16.mxu0 0
    %3055 = vmatpush1.bf16.msra.mxu0 0
    %3056 = vmatprep.subr.bf16.mxu0 0
    %3057 = vmatpush1.bf16.msra.mxu0 0
    %3058 = vmatprep.subr.bf16.mxu0 0
    %3059 = vmatpush1.bf16.msra.mxu0 0
    %3060 = vmatprep.subr.bf16.mxu0 0
    %3061 = vmatpush1.bf16.msra.mxu0 0
    %3062 = vmatprep.subr.bf16.mxu0 0
    %3063 = vmatpush1.bf16.msra.mxu0 0
    %3064 = vmatprep.subr.bf16.mxu0 0
    %3065 = vmatpush1.bf16.msra.mxu0 0
    %3066 = vmatprep.mubr.bf16.mxu0 0
    %3067 = vmatmul.mubr.bf16.gmra.mrb[0].mxu0 %v3029
    %v3068 = vpop.f32.mrb[0].mxu0
    %v3069 = vadd.f32 0.0, %v3068
    %v3070 = vpop.f32.mrb[0].mxu0
    %v3071 = vpop.f32.mrb[0].mxu0
    %v3072 = vpop.f32.mrb[0].mxu0
    %3073 = vdwg.mxu0
    %v3075 = vrot.slane %v2967, 4
    %v3077 = vrot.slane %v2968, 4
    %v3079 = vsel %vm308, %v3075, 0
    %v3082 = vsel %vm308, %v3077, 0
    %3084 = vmatprep.subr.bf16.mxu0 0
    %3085 = vmatpush1.bf16.xpose.msra.mxu0 %v3082
    %3086 = vmatprep.subr.bf16.mxu0 0
    %3087 = vmatpush1.bf16.xpose.msra.mxu0 0
    %3088 = vmatprep.subr.bf16.mxu0 0
    %3089 = vmatpush1.bf16.xpose.msra.mxu0 0
    %3090 = vmatprep.subr.bf16.mxu0 0
    %3091 = vmatpush1.bf16.xpose.msra.mxu0 0
    %3092 = vmatprep.subr.bf16.mxu0 0
    %3093 = vmatpush1.bf16.xpose.msra.mxu0 0
    %3094 = vmatprep.subr.bf16.mxu0 0
    %3095 = vmatpush1.bf16.xpose.msra.mxu0 0
    %3096 = vmatprep.subr.bf16.mxu0 0
    %3097 = vmatpush1.bf16.xpose.msra.mxu0 0
    %3098 = vmatprep.subr.bf16.mxu0 0
    %3099 = vmatpush1.bf16.xpose.msra.mxu0 0
    %3100 = vmatprep.subr.bf16.mxu0 0
    %3101 = vmatpush1.bf16.xpose.msra.mxu0 0
    %3102 = vmatprep.subr.bf16.mxu0 0
    %3103 = vmatpush1.bf16.xpose.msra.mxu0 0
    %3104 = vmatprep.subr.bf16.mxu0 0
    %3105 = vmatpush1.bf16.xpose.msra.mxu0 0
    %3106 = vmatprep.subr.bf16.mxu0 0
    %3107 = vmatpush1.bf16.xpose.msra.mxu0 0
    %3108 = vmatprep.subr.bf16.mxu0 0
    %3109 = vmatpush1.bf16.xpose.msra.mxu0 0
    %3110 = vmatprep.subr.bf16.mxu0 0
    %3111 = vmatpush1.bf16.xpose.msra.mxu0 0
    %3112 = vmatprep.subr.bf16.mxu0 0
    %3113 = vmatpush1.bf16.xpose.msra.mxu0 0
    %3114 = vmatprep.subr.bf16.mxu0 0
    %3115 = vmatpush1.bf16.xpose.msra.mxu0 0
    %3116 = vmatprep.mubr.bf16.mxu0 0
    %3117 = vmatmul.mubr.bf16.gmra.mrb[0].mxu0 %v3079
    %v3118 = vpop.f32.mrb[0].mxu0
    %v3119 = vadd.f32 0.0, %v3118
    %v3120 = vpop.f32.mrb[0].mxu0
    %v3121 = vpop.f32.mrb[0].mxu0
    %v3122 = vpop.f32.mrb[0].mxu0
    %3123 = vdwg.mxu0
    %v3124 = vsel %vm355, %v3119, -inf
    %3125 = vmax.xlane.f32.xlu0 %v3124
    %v3126 = vpop.xlane.xlu0 %3125
    %v3127 = vsub.f32 %v3119, %v3126
    %v3128 = vmul.f32 %v3127, 1.442695
    %v3129 = vpow.pop %v3128
    %v3130 = vsel %vm355, %v3129, 0.0
    %3131 = vadd.xlane.f32.xlu0 %v3130
    %v3132 = vpop.xlane.xlu0 %3131
    %v3133 = vrcp.pop %v3132
    %v3134 = vmul.f32 %v3129, %v3133
    %v3135 = vpack.c.bf16 %v3134, %v3134
    %v3137 = vrot.slane %v2969, 4
    %v3139 = vsel %vm355, %v3135, 0
    %v3142 = vsel %vm371, %v3137, 0
    %3144 = vmatprep.subr.bf16.mxu0 0
    %3145 = vmatpush1.bf16.msra.mxu0 %v3142
    %3146 = vmatprep.subr.bf16.mxu0 0
    %3147 = vmatpush1.bf16.msra.mxu0 0
    %3148 = vmatprep.subr.bf16.mxu0 0
    %3149 = vmatpush1.bf16.msra.mxu0 0
    %3150 = vmatprep.subr.bf16.mxu0 0
    %3151 = vmatpush1.bf16.msra.mxu0 0
    %3152 = vmatprep.subr.bf16.mxu0 0
    %3153 = vmatpush1.bf16.msra.mxu0 0
    %3154 = vmatprep.subr.bf16.mxu0 0
    %3155 = vmatpush1.bf16.msra.mxu0 0
    %3156 = vmatprep.subr.bf16.mxu0 0
    %3157 = vmatpush1.bf16.msra.mxu0 0
    %3158 = vmatprep.subr.bf16.mxu0 0
    %3159 = vmatpush1.bf16.msra.mxu0 0
    %3160 = vmatprep.subr.bf16.mxu0 0
    %3161 = vmatpush1.bf16.msra.mxu0 0
    %3162 = vmatprep.subr.bf16.mxu0 0
    %3163 = vmatpush1.bf16.msra.mxu0 0
    %3164 = vmatprep.subr.bf16.mxu0 0
    %3165 = vmatpush1.bf16.msra.mxu0 0
    %3166 = vmatprep.subr.bf16.mxu0 0
    %3167 = vmatpush1.bf16.msra.mxu0 0
    %3168 = vmatprep.subr.bf16.mxu0 0
    %3169 = vmatpush1.bf16.msra.mxu0 0
    %3170 = vmatprep.subr.bf16.mxu0 0
    %3171 = vmatpush1.bf16.msra.mxu0 0
    %3172 = vmatprep.subr.bf16.mxu0 0
    %3173 = vmatpush1.bf16.msra.mxu0 0
    %3174 = vmatprep.subr.bf16.mxu0 0
    %3175 = vmatpush1.bf16.msra.mxu0 0
    %3176 = vmatprep.mubr.bf16.mxu0 0
    %3177 = vmatmul.mubr.bf16.gmra.mrb[0].mxu0 %v3139
    %v3178 = vpop.f32.mrb[0].mxu0
    %v3179 = vadd.f32 0.0, %v3178
    %v3180 = vpop.f32.mrb[0].mxu0
    %v3181 = vpop.f32.mrb[0].mxu0
    %v3182 = vpop.f32.mrb[0].mxu0
    %3183 = vdwg.mxu0
    %v3184 = vpack.c.bf16 %v3179, %v3069
    %s3185 = scalar_lea.vmem %s7, 64
    %v3186 = vld [vmem:[%s3185] sm:$0xf]
    %v3187 = vld [vmem:[%s3185 + $0x4] sm:$0xf]
    %v3188 = vld [vmem:[%s3185 + $0x8] sm:$0xf]
    %v3189 = vld [vmem:[%s3185 + $0xc] sm:$0xf]
    %s3190 = scalar_lea.vmem %s1, 160
    %v3191 = vld [vmem:[%s3190] sm:$0xf]
    %v3192 = vld [vmem:[%s3190 + $0x4] sm:$0xf]
    %v3193 = vld [vmem:[%s3190 + $0x8] sm:$0xf]
    %v3194 = vld [vmem:[%s3190 + $0xc] sm:$0xf]
    %v3195 = vld [vmem:[%s3190 + $0x10] sm:$0xf]
    %v3196 = vld [vmem:[%s3190 + $0x14] sm:$0xf]
    %v3197 = vld [vmem:[%s3190 + $0x18] sm:$0xf]
    %v3198 = vld [vmem:[%s3190 + $0x1c] sm:$0xf]
    %s3199 = scalar_lea.vmem %s2, 5
    %v3200 = vld [vmem:[%s3199] sm:$0x1]
    %v3202 = vlaneseq
    %v3203 = vshrl.u32 %v3202, 7
    %v3204 = vsub.s32 0, %v3203
    %v3205 = vrot.slane %v3200, %v3204
    %v3215 = vunpack.c.l.b16 %v3191
    %v3216 = vunpack.c.l.b16 %v3192
    %v3217 = vunpack.c.l.b16 %v3193
    %v3218 = vunpack.c.l.b16 %v3194
    %v3219 = vunpack.c.l.b16 %v3195
    %v3220 = vunpack.c.l.b16 %v3196
    %v3221 = vunpack.c.l.b16 %v3197
    %v3222 = vunpack.c.l.b16 %v3198
    %v3223 = vpack.c.b16 %v3216, %v3215
    %v3224 = vpack.c.b16 %v3218, %v3217
    %v3225 = vpack.c.b16 %v3220, %v3219
    %v3226 = vpack.c.b16 %v3222, %v3221
    %3231 = vmatprep.subr.bf16.mxu0 0
    %3232 = vmatpush1.bf16.msra.mxu0 %v3223
    %3233 = vmatprep.subr.bf16.mxu0 0
    %3234 = vmatpush1.bf16.msra.mxu0 %v3224
    %3235 = vmatprep.subr.bf16.mxu0 0
    %3236 = vmatpush1.bf16.msra.mxu0 %v3225
    %3237 = vmatprep.subr.bf16.mxu0 0
    %3238 = vmatpush1.bf16.msra.mxu0 %v3226
    %3239 = vmatprep.subr.bf16.mxu0 0
    %3240 = vmatpush1.bf16.msra.mxu0 0
    %3241 = vmatprep.subr.bf16.mxu0 0
    %3242 = vmatpush1.bf16.msra.mxu0 0
    %3243 = vmatprep.subr.bf16.mxu0 0
    %3244 = vmatpush1.bf16.msra.mxu0 0
    %3245 = vmatprep.subr.bf16.mxu0 0
    %3246 = vmatpush1.bf16.msra.mxu0 0
    %3247 = vmatprep.subr.bf16.mxu0 0
    %3248 = vmatpush1.bf16.msra.mxu0 0
    %3249 = vmatprep.subr.bf16.mxu0 0
    %3250 = vmatpush1.bf16.msra.mxu0 0
    %3251 = vmatprep.subr.bf16.mxu0 0
    %3252 = vmatpush1.bf16.msra.mxu0 0
    %3253 = vmatprep.subr.bf16.mxu0 0
    %3254 = vmatpush1.bf16.msra.mxu0 0
    %3255 = vmatprep.subr.bf16.mxu0 0
    %3256 = vmatpush1.bf16.msra.mxu0 0
    %3257 = vmatprep.subr.bf16.mxu0 0
    %3258 = vmatpush1.bf16.msra.mxu0 0
    %3259 = vmatprep.subr.bf16.mxu0 0
    %3260 = vmatpush1.bf16.msra.mxu0 0
    %3261 = vmatprep.subr.bf16.mxu0 0
    %3262 = vmatpush1.bf16.msra.mxu0 0
    %3263 = vmatprep.mubr.bf16.mxu0 0
    %3264 = vmatmul.mubr.bf16.gmra.mrb[0].mxu0 %v2760
    %v3265 = vpop.f32.mrb[0].mxu0
    %v3266 = vadd.f32 %v3205, %v3265
    %v3267 = vpop.f32.mrb[0].mxu0
    %v3268 = vpop.f32.mrb[0].mxu0
    %v3269 = vadd.f32 %v3205, %v3268
    %v3270 = vpop.f32.mrb[0].mxu0
    %3271 = vdwg.mxu0
    %s3272 = scalar_lea.vmem %s3, 160
    %v3273 = vld [vmem:[%s3272] sm:$0xf]
    %v3274 = vld [vmem:[%s3272 + $0x4] sm:$0xf]
    %v3275 = vld [vmem:[%s3272 + $0x8] sm:$0xf]
    %v3276 = vld [vmem:[%s3272 + $0xc] sm:$0xf]
    %v3277 = vld [vmem:[%s3272 + $0x10] sm:$0xf]
    %v3278 = vld [vmem:[%s3272 + $0x14] sm:$0xf]
    %v3279 = vld [vmem:[%s3272 + $0x18] sm:$0xf]
    %v3280 = vld [vmem:[%s3272 + $0x1c] sm:$0xf]
    %s3281 = scalar_lea.vmem %s4, 5
    %v3282 = vld [vmem:[%s3281] sm:$0x1]
    %v3284 = vlaneseq
    %v3285 = vshrl.u32 %v3284, 7
    %v3286 = vsub.s32 0, %v3285
    %v3287 = vrot.slane %v3282, %v3286
    %v3297 = vunpack.c.l.b16 %v3273
    %v3298 = vunpack.c.l.b16 %v3274
    %v3299 = vunpack.c.l.b16 %v3275
    %v3300 = vunpack.c.l.b16 %v3276
    %v3301 = vunpack.c.l.b16 %v3277
    %v3302 = vunpack.c.l.b16 %v3278
    %v3303 = vunpack.c.l.b16 %v3279
    %v3304 = vunpack.c.l.b16 %v3280
    %v3305 = vpack.c.b16 %v3298, %v3297
    %v3306 = vpack.c.b16 %v3300, %v3299
    %v3307 = vpack.c.b16 %v3302, %v3301
    %v3308 = vpack.c.b16 %v3304, %v3303
    %3313 = vmatprep.subr.bf16.mxu0 0
    %3314 = vmatpush1.bf16.msra.mxu0 %v3305
    %3315 = vmatprep.subr.bf16.mxu0 0
    %3316 = vmatpush1.bf16.msra.mxu0 %v3306
    %3317 = vmatprep.subr.bf16.mxu0 0
    %3318 = vmatpush1.bf16.msra.mxu0 %v3307
    %3319 = vmatprep.subr.bf16.mxu0 0
    %3320 = vmatpush1.bf16.msra.mxu0 %v3308
    %3321 = vmatprep.subr.bf16.mxu0 0
    %3322 = vmatpush1.bf16.msra.mxu0 0
    %3323 = vmatprep.subr.bf16.mxu0 0
    %3324 = vmatpush1.bf16.msra.mxu0 0
    %3325 = vmatprep.subr.bf16.mxu0 0
    %3326 = vmatpush1.bf16.msra.mxu0 0
    %3327 = vmatprep.subr.bf16.mxu0 0
    %3328 = vmatpush1.bf16.msra.mxu0 0
    %3329 = vmatprep.subr.bf16.mxu0 0
    %3330 = vmatpush1.bf16.msra.mxu0 0
    %3331 = vmatprep.subr.bf16.mxu0 0
    %3332 = vmatpush1.bf16.msra.mxu0 0
    %3333 = vmatprep.subr.bf16.mxu0 0
    %3334 = vmatpush1.bf16.msra.mxu0 0
    %3335 = vmatprep.subr.bf16.mxu0 0
    %3336 = vmatpush1.bf16.msra.mxu0 0
    %3337 = vmatprep.subr.bf16.mxu0 0
    %3338 = vmatpush1.bf16.msra.mxu0 0
    %3339 = vmatprep.subr.bf16.mxu0 0
    %3340 = vmatpush1.bf16.msra.mxu0 0
    %3341 = vmatprep.subr.bf16.mxu0 0
    %3342 = vmatpush1.bf16.msra.mxu0 0
    %3343 = vmatprep.subr.bf16.mxu0 0
    %3344 = vmatpush1.bf16.msra.mxu0 0
    %3345 = vmatprep.mubr.bf16.mxu0 0
    %3346 = vmatmul.mubr.bf16.gmra.mrb[0].mxu0 %v2760
    %v3347 = vpop.f32.mrb[0].mxu0
    %v3348 = vadd.f32 %v3287, %v3347
    %v3349 = vpop.f32.mrb[0].mxu0
    %v3350 = vpop.f32.mrb[0].mxu0
    %v3351 = vadd.f32 %v3287, %v3350
    %v3352 = vpop.f32.mrb[0].mxu0
    %3353 = vdwg.mxu0
    %s3354 = scalar_lea.vmem %s5, 160
    %v3355 = vld [vmem:[%s3354] sm:$0xf]
    %v3356 = vld [vmem:[%s3354 + $0x4] sm:$0xf]
    %v3357 = vld [vmem:[%s3354 + $0x8] sm:$0xf]
    %v3358 = vld [vmem:[%s3354 + $0xc] sm:$0xf]
    %v3359 = vld [vmem:[%s3354 + $0x10] sm:$0xf]
    %v3360 = vld [vmem:[%s3354 + $0x14] sm:$0xf]
    %v3361 = vld [vmem:[%s3354 + $0x18] sm:$0xf]
    %v3362 = vld [vmem:[%s3354 + $0x1c] sm:$0xf]
    %s3363 = scalar_lea.vmem %s6, 5
    %v3364 = vld [vmem:[%s3363] sm:$0x1]
    %v3366 = vlaneseq
    %v3367 = vshrl.u32 %v3366, 7
    %v3368 = vsub.s32 0, %v3367
    %v3369 = vrot.slane %v3364, %v3368
    %v3379 = vunpack.c.l.b16 %v3355
    %v3380 = vunpack.c.l.b16 %v3356
    %v3381 = vunpack.c.l.b16 %v3357
    %v3382 = vunpack.c.l.b16 %v3358
    %v3383 = vunpack.c.l.b16 %v3359
    %v3384 = vunpack.c.l.b16 %v3360
    %v3385 = vunpack.c.l.b16 %v3361
    %v3386 = vunpack.c.l.b16 %v3362
    %v3387 = vpack.c.b16 %v3380, %v3379
    %v3388 = vpack.c.b16 %v3382, %v3381
    %v3389 = vpack.c.b16 %v3384, %v3383
    %v3390 = vpack.c.b16 %v3386, %v3385
    %3395 = vmatprep.subr.bf16.mxu0 0
    %3396 = vmatpush1.bf16.msra.mxu0 %v3387
    %3397 = vmatprep.subr.bf16.mxu0 0
    %3398 = vmatpush1.bf16.msra.mxu0 %v3388
    %3399 = vmatprep.subr.bf16.mxu0 0
    %3400 = vmatpush1.bf16.msra.mxu0 %v3389
    %3401 = vmatprep.subr.bf16.mxu0 0
    %3402 = vmatpush1.bf16.msra.mxu0 %v3390
    %3403 = vmatprep.subr.bf16.mxu0 0
    %3404 = vmatpush1.bf16.msra.mxu0 0
    %3405 = vmatprep.subr.bf16.mxu0 0
    %3406 = vmatpush1.bf16.msra.mxu0 0
    %3407 = vmatprep.subr.bf16.mxu0 0
    %3408 = vmatpush1.bf16.msra.mxu0 0
    %3409 = vmatprep.subr.bf16.mxu0 0
    %3410 = vmatpush1.bf16.msra.mxu0 0
    %3411 = vmatprep.subr.bf16.mxu0 0
    %3412 = vmatpush1.bf16.msra.mxu0 0
    %3413 = vmatprep.subr.bf16.mxu0 0
    %3414 = vmatpush1.bf16.msra.mxu0 0
    %3415 = vmatprep.subr.bf16.mxu0 0
    %3416 = vmatpush1.bf16.msra.mxu0 0
    %3417 = vmatprep.subr.bf16.mxu0 0
    %3418 = vmatpush1.bf16.msra.mxu0 0
    %3419 = vmatprep.subr.bf16.mxu0 0
    %3420 = vmatpush1.bf16.msra.mxu0 0
    %3421 = vmatprep.subr.bf16.mxu0 0
    %3422 = vmatpush1.bf16.msra.mxu0 0
    %3423 = vmatprep.subr.bf16.mxu0 0
    %3424 = vmatpush1.bf16.msra.mxu0 0
    %3425 = vmatprep.subr.bf16.mxu0 0
    %3426 = vmatpush1.bf16.msra.mxu0 0
    %3427 = vmatprep.mubr.bf16.mxu0 0
    %3428 = vmatmul.mubr.bf16.gmra.mrb[0].mxu0 %v2760
    %v3429 = vpop.f32.mrb[0].mxu0
    %v3430 = vadd.f32 %v3369, %v3429
    %v3431 = vpop.f32.mrb[0].mxu0
    %v3432 = vpop.f32.mrb[0].mxu0
    %v3433 = vadd.f32 %v3369, %v3432
    %v3434 = vpop.f32.mrb[0].mxu0
    %3435 = vdwg.mxu0
    %v3436 = vpack.c.bf16 %v3269, %v3266
    %v3437 = vpack.c.bf16 %v3351, %v3348
    %v3438 = vpack.c.bf16 %v3433, %v3430
    %v3440 = vsel %vm308, %v3436, 0
    %v3443 = vsel %vm308, %v3437, 0
    %3445 = vmatprep.subr.bf16.mxu0 0
    %3446 = vmatpush1.bf16.xpose.msra.mxu0 %v3443
    %3447 = vmatprep.subr.bf16.mxu0 0
    %3448 = vmatpush1.bf16.xpose.msra.mxu0 0
    %3449 = vmatprep.subr.bf16.mxu0 0
    %3450 = vmatpush1.bf16.xpose.msra.mxu0 0
    %3451 = vmatprep.subr.bf16.mxu0 0
    %3452 = vmatpush1.bf16.xpose.msra.mxu0 0
    %3453 = vmatprep.subr.bf16.mxu0 0
    %3454 = vmatpush1.bf16.xpose.msra.mxu0 0
    %3455 = vmatprep.subr.bf16.mxu0 0
    %3456 = vmatpush1.bf16.xpose.msra.mxu0 0
    %3457 = vmatprep.subr.bf16.mxu0 0
    %3458 = vmatpush1.bf16.xpose.msra.mxu0 0
    %3459 = vmatprep.subr.bf16.mxu0 0
    %3460 = vmatpush1.bf16.xpose.msra.mxu0 0
    %3461 = vmatprep.subr.bf16.mxu0 0
    %3462 = vmatpush1.bf16.xpose.msra.mxu0 0
    %3463 = vmatprep.subr.bf16.mxu0 0
    %3464 = vmatpush1.bf16.xpose.msra.mxu0 0
    %3465 = vmatprep.subr.bf16.mxu0 0
    %3466 = vmatpush1.bf16.xpose.msra.mxu0 0
    %3467 = vmatprep.subr.bf16.mxu0 0
    %3468 = vmatpush1.bf16.xpose.msra.mxu0 0
    %3469 = vmatprep.subr.bf16.mxu0 0
    %3470 = vmatpush1.bf16.xpose.msra.mxu0 0
    %3471 = vmatprep.subr.bf16.mxu0 0
    %3472 = vmatpush1.bf16.xpose.msra.mxu0 0
    %3473 = vmatprep.subr.bf16.mxu0 0
    %3474 = vmatpush1.bf16.xpose.msra.mxu0 0
    %3475 = vmatprep.subr.bf16.mxu0 0
    %3476 = vmatpush1.bf16.xpose.msra.mxu0 0
    %3477 = vmatprep.mubr.bf16.mxu0 0
    %3478 = vmatmul.mubr.bf16.gmra.mrb[0].mxu0 %v3440
    %v3479 = vpop.f32.mrb[0].mxu0
    %v3480 = vadd.f32 0.0, %v3479
    %v3481 = vpop.f32.mrb[0].mxu0
    %v3482 = vpop.f32.mrb[0].mxu0
    %v3483 = vpop.f32.mrb[0].mxu0
    %3484 = vdwg.mxu0
    %v3485 = vsel %vm355, %v3480, -inf
    %3486 = vmax.xlane.f32.xlu0 %v3485
    %v3487 = vpop.xlane.xlu0 %3486
    %v3488 = vsub.f32 %v3480, %v3487
    %v3489 = vmul.f32 %v3488, 1.442695
    %v3490 = vpow.pop %v3489
    %v3491 = vsel %vm355, %v3490, 0.0
    %3492 = vadd.xlane.f32.xlu0 %v3491
    %v3493 = vpop.xlane.xlu0 %3492
    %v3494 = vrcp.pop %v3493
    %v3495 = vmul.f32 %v3490, %v3494
    %v3496 = vpack.c.bf16 %v3495, %v3495
    %v3498 = vsel %vm355, %v3496, 0
    %v3501 = vsel %vm371, %v3438, 0
    %3503 = vmatprep.subr.bf16.mxu0 0
    %3504 = vmatpush1.bf16.msra.mxu0 %v3501
    %3505 = vmatprep.subr.bf16.mxu0 0
    %3506 = vmatpush1.bf16.msra.mxu0 0
    %3507 = vmatprep.subr.bf16.mxu0 0
    %3508 = vmatpush1.bf16.msra.mxu0 0
    %3509 = vmatprep.subr.bf16.mxu0 0
    %3510 = vmatpush1.bf16.msra.mxu0 0
    %3511 = vmatprep.subr.bf16.mxu0 0
    %3512 = vmatpush1.bf16.msra.mxu0 0
    %3513 = vmatprep.subr.bf16.mxu0 0
    %3514 = vmatpush1.bf16.msra.mxu0 0
    %3515 = vmatprep.subr.bf16.mxu0 0
    %3516 = vmatpush1.bf16.msra.mxu0 0
    %3517 = vmatprep.subr.bf16.mxu0 0
    %3518 = vmatpush1.bf16.msra.mxu0 0
    %3519 = vmatprep.subr.bf16.mxu0 0
    %3520 = vmatpush1.bf16.msra.mxu0 0
    %3521 = vmatprep.subr.bf16.mxu0 0
    %3522 = vmatpush1.bf16.msra.mxu0 0
    %3523 = vmatprep.subr.bf16.mxu0 0
    %3524 = vmatpush1.bf16.msra.mxu0 0
    %3525 = vmatprep.subr.bf16.mxu0 0
    %3526 = vmatpush1.bf16.msra.mxu0 0
    %3527 = vmatprep.subr.bf16.mxu0 0
    %3528 = vmatpush1.bf16.msra.mxu0 0
    %3529 = vmatprep.subr.bf16.mxu0 0
    %3530 = vmatpush1.bf16.msra.mxu0 0
    %3531 = vmatprep.subr.bf16.mxu0 0
    %3532 = vmatpush1.bf16.msra.mxu0 0
    %3533 = vmatprep.subr.bf16.mxu0 0
    %3534 = vmatpush1.bf16.msra.mxu0 0
    %3535 = vmatprep.mubr.bf16.mxu0 0
    %3536 = vmatmul.mubr.bf16.gmra.mrb[0].mxu0 %v3498
    %v3537 = vpop.f32.mrb[0].mxu0
    %v3538 = vadd.f32 0.0, %v3537
    %v3539 = vpop.f32.mrb[0].mxu0
    %v3540 = vpop.f32.mrb[0].mxu0
    %v3541 = vpop.f32.mrb[0].mxu0
    %3542 = vdwg.mxu0
    %v3544 = vrot.slane %v3436, 4
    %v3546 = vrot.slane %v3437, 4
    %v3548 = vsel %vm308, %v3544, 0
    %v3551 = vsel %vm308, %v3546, 0
    %3553 = vmatprep.subr.bf16.mxu0 0
    %3554 = vmatpush1.bf16.xpose.msra.mxu0 %v3551
    %3555 = vmatprep.subr.bf16.mxu0 0
    %3556 = vmatpush1.bf16.xpose.msra.mxu0 0
    %3557 = vmatprep.subr.bf16.mxu0 0
    %3558 = vmatpush1.bf16.xpose.msra.mxu0 0
    %3559 = vmatprep.subr.bf16.mxu0 0
    %3560 = vmatpush1.bf16.xpose.msra.mxu0 0
    %3561 = vmatprep.subr.bf16.mxu0 0
    %3562 = vmatpush1.bf16.xpose.msra.mxu0 0
    %3563 = vmatprep.subr.bf16.mxu0 0
    %3564 = vmatpush1.bf16.xpose.msra.mxu0 0
    %3565 = vmatprep.subr.bf16.mxu0 0
    %3566 = vmatpush1.bf16.xpose.msra.mxu0 0
    %3567 = vmatprep.subr.bf16.mxu0 0
    %3568 = vmatpush1.bf16.xpose.msra.mxu0 0
    %3569 = vmatprep.subr.bf16.mxu0 0
    %3570 = vmatpush1.bf16.xpose.msra.mxu0 0
    %3571 = vmatprep.subr.bf16.mxu0 0
    %3572 = vmatpush1.bf16.xpose.msra.mxu0 0
    %3573 = vmatprep.subr.bf16.mxu0 0
    %3574 = vmatpush1.bf16.xpose.msra.mxu0 0
    %3575 = vmatprep.subr.bf16.mxu0 0
    %3576 = vmatpush1.bf16.xpose.msra.mxu0 0
    %3577 = vmatprep.subr.bf16.mxu0 0
    %3578 = vmatpush1.bf16.xpose.msra.mxu0 0
    %3579 = vmatprep.subr.bf16.mxu0 0
    %3580 = vmatpush1.bf16.xpose.msra.mxu0 0
    %3581 = vmatprep.subr.bf16.mxu0 0
    %3582 = vmatpush1.bf16.xpose.msra.mxu0 0
    %3583 = vmatprep.subr.bf16.mxu0 0
    %3584 = vmatpush1.bf16.xpose.msra.mxu0 0
    %3585 = vmatprep.mubr.bf16.mxu0 0
    %3586 = vmatmul.mubr.bf16.gmra.mrb[0].mxu0 %v3548
    %v3587 = vpop.f32.mrb[0].mxu0
    %v3588 = vadd.f32 0.0, %v3587
    %v3589 = vpop.f32.mrb[0].mxu0
    %v3590 = vpop.f32.mrb[0].mxu0
    %v3591 = vpop.f32.mrb[0].mxu0
    %3592 = vdwg.mxu0
    %v3593 = vsel %vm355, %v3588, -inf
    %3594 = vmax.xlane.f32.xlu0 %v3593
    %v3595 = vpop.xlane.xlu0 %3594
    %v3596 = vsub.f32 %v3588, %v3595
    %v3597 = vmul.f32 %v3596, 1.442695
    %v3598 = vpow.pop %v3597
    %v3599 = vsel %vm355, %v3598, 0.0
    %3600 = vadd.xlane.f32.xlu0 %v3599
    %v3601 = vpop.xlane.xlu0 %3600
    %v3602 = vrcp.pop %v3601
    %v3603 = vmul.f32 %v3598, %v3602
    %v3604 = vpack.c.bf16 %v3603, %v3603
    %v3606 = vrot.slane %v3438, 4
    %v3608 = vsel %vm355, %v3604, 0
    %v3611 = vsel %vm371, %v3606, 0
    %3613 = vmatprep.subr.bf16.mxu0 0
    %3614 = vmatpush1.bf16.msra.mxu0 %v3611
    %3615 = vmatprep.subr.bf16.mxu0 0
    %3616 = vmatpush1.bf16.msra.mxu0 0
    %3617 = vmatprep.subr.bf16.mxu0 0
    %3618 = vmatpush1.bf16.msra.mxu0 0
    %3619 = vmatprep.subr.bf16.mxu0 0
    %3620 = vmatpush1.bf16.msra.mxu0 0
    %3621 = vmatprep.subr.bf16.mxu0 0
    %3622 = vmatpush1.bf16.msra.mxu0 0
    %3623 = vmatprep.subr.bf16.mxu0 0
    %3624 = vmatpush1.bf16.msra.mxu0 0
    %3625 = vmatprep.subr.bf16.mxu0 0
    %3626 = vmatpush1.bf16.msra.mxu0 0
    %3627 = vmatprep.subr.bf16.mxu0 0
    %3628 = vmatpush1.bf16.msra.mxu0 0
    %3629 = vmatprep.subr.bf16.mxu0 0
    %3630 = vmatpush1.bf16.msra.mxu0 0
    %3631 = vmatprep.subr.bf16.mxu0 0
    %3632 = vmatpush1.bf16.msra.mxu0 0
    %3633 = vmatprep.subr.bf16.mxu0 0
    %3634 = vmatpush1.bf16.msra.mxu0 0
    %3635 = vmatprep.subr.bf16.mxu0 0
    %3636 = vmatpush1.bf16.msra.mxu0 0
    %3637 = vmatprep.subr.bf16.mxu0 0
    %3638 = vmatpush1.bf16.msra.mxu0 0
    %3639 = vmatprep.subr.bf16.mxu0 0
    %3640 = vmatpush1.bf16.msra.mxu0 0
    %3641 = vmatprep.subr.bf16.mxu0 0
    %3642 = vmatpush1.bf16.msra.mxu0 0
    %3643 = vmatprep.subr.bf16.mxu0 0
    %3644 = vmatpush1.bf16.msra.mxu0 0
    %3645 = vmatprep.mubr.bf16.mxu0 0
    %3646 = vmatmul.mubr.bf16.gmra.mrb[0].mxu0 %v3608
    %v3647 = vpop.f32.mrb[0].mxu0
    %v3648 = vadd.f32 0.0, %v3647
    %v3649 = vpop.f32.mrb[0].mxu0
    %v3650 = vpop.f32.mrb[0].mxu0
    %v3651 = vpop.f32.mrb[0].mxu0
    %3652 = vdwg.mxu0
    %v3653 = vpack.c.bf16 %v3648, %v3538
    %s3654 = scalar_lea.vmem %s7, 80
    %v3655 = vld [vmem:[%s3654] sm:$0xf]
    %v3656 = vld [vmem:[%s3654 + $0x4] sm:$0xf]
    %v3657 = vld [vmem:[%s3654 + $0x8] sm:$0xf]
    %v3658 = vld [vmem:[%s3654 + $0xc] sm:$0xf]
    %v3663 = vunpack.c.l.b16 %v3655
    %v3664 = vunpack.c.l.b16 %v3656
    %v3665 = vunpack.c.l.b16 %v3657
    %v3666 = vunpack.c.l.b16 %v3658
    %v3667 = vpack.c.b16 %v3664, %v3663
    %v3668 = vpack.c.b16 %v3666, %v3665
    %v3672 = vsel %vm308, %v3653, 0
    %3674 = vmatprep.subr.bf16.mxu0 0
    %3675 = vmatpush1.bf16.msra.mxu0 %v3667
    %3676 = vmatprep.subr.bf16.mxu0 0
    %3677 = vmatpush1.bf16.msra.mxu0 %v3668
    %3678 = vmatprep.subr.bf16.mxu0 0
    %3679 = vmatpush1.bf16.msra.mxu0 0
    %3680 = vmatprep.subr.bf16.mxu0 0
    %3681 = vmatpush1.bf16.msra.mxu0 0
    %3682 = vmatprep.subr.bf16.mxu0 0
    %3683 = vmatpush1.bf16.msra.mxu0 0
    %3684 = vmatprep.subr.bf16.mxu0 0
    %3685 = vmatpush1.bf16.msra.mxu0 0
    %3686 = vmatprep.subr.bf16.mxu0 0
    %3687 = vmatpush1.bf16.msra.mxu0 0
    %3688 = vmatprep.subr.bf16.mxu0 0
    %3689 = vmatpush1.bf16.msra.mxu0 0
    %3690 = vmatprep.subr.bf16.mxu0 0
    %3691 = vmatpush1.bf16.msra.mxu0 0
    %3692 = vmatprep.subr.bf16.mxu0 0
    %3693 = vmatpush1.bf16.msra.mxu0 0
    %3694 = vmatprep.subr.bf16.mxu0 0
    %3695 = vmatpush1.bf16.msra.mxu0 0
    %3696 = vmatprep.subr.bf16.mxu0 0
    %3697 = vmatpush1.bf16.msra.mxu0 0
    %3698 = vmatprep.subr.bf16.mxu0 0
    %3699 = vmatpush1.bf16.msra.mxu0 0
    %3700 = vmatprep.subr.bf16.mxu0 0
    %3701 = vmatpush1.bf16.msra.mxu0 0
    %3702 = vmatprep.subr.bf16.mxu0 0
    %3703 = vmatpush1.bf16.msra.mxu0 0
    %3704 = vmatprep.subr.bf16.mxu0 0
    %3705 = vmatpush1.bf16.msra.mxu0 0
    %3706 = vmatprep.mubr.bf16.mxu0 0
    %3707 = vmatmul.mubr.bf16.gmra.mrb[0].mxu0 %v3672
    %v3708 = vpop.f32.mrb[0].mxu0
    %v3709 = vadd.f32 0.0, %v3708
    %v3710 = vpop.f32.mrb[0].mxu0
    %v3711 = vpop.f32.mrb[0].mxu0
    %v3712 = vadd.f32 0.0, %v3711
    %v3713 = vpop.f32.mrb[0].mxu0
    %3714 = vdwg.mxu0
    %v3719 = vunpack.c.l.b16 %v3186
    %v3720 = vunpack.c.l.b16 %v3187
    %v3721 = vunpack.c.l.b16 %v3188
    %v3722 = vunpack.c.l.b16 %v3189
    %v3723 = vpack.c.b16 %v3720, %v3719
    %v3724 = vpack.c.b16 %v3722, %v3721
    %v3728 = vsel %vm308, %v3184, 0
    %3730 = vmatprep.subr.bf16.mxu0 0
    %3731 = vmatpush1.bf16.msra.mxu0 %v3723
    %3732 = vmatprep.subr.bf16.mxu0 0
    %3733 = vmatpush1.bf16.msra.mxu0 %v3724
    %3734 = vmatprep.subr.bf16.mxu0 0
    %3735 = vmatpush1.bf16.msra.mxu0 0
    %3736 = vmatprep.subr.bf16.mxu0 0
    %3737 = vmatpush1.bf16.msra.mxu0 0
    %3738 = vmatprep.subr.bf16.mxu0 0
    %3739 = vmatpush1.bf16.msra.mxu0 0
    %3740 = vmatprep.subr.bf16.mxu0 0
    %3741 = vmatpush1.bf16.msra.mxu0 0
    %3742 = vmatprep.subr.bf16.mxu0 0
    %3743 = vmatpush1.bf16.msra.mxu0 0
    %3744 = vmatprep.subr.bf16.mxu0 0
    %3745 = vmatpush1.bf16.msra.mxu0 0
    %3746 = vmatprep.subr.bf16.mxu0 0
    %3747 = vmatpush1.bf16.msra.mxu0 0
    %3748 = vmatprep.subr.bf16.mxu0 0
    %3749 = vmatpush1.bf16.msra.mxu0 0
    %3750 = vmatprep.subr.bf16.mxu0 0
    %3751 = vmatpush1.bf16.msra.mxu0 0
    %3752 = vmatprep.subr.bf16.mxu0 0
    %3753 = vmatpush1.bf16.msra.mxu0 0
    %3754 = vmatprep.subr.bf16.mxu0 0
    %3755 = vmatpush1.bf16.msra.mxu0 0
    %3756 = vmatprep.subr.bf16.mxu0 0
    %3757 = vmatpush1.bf16.msra.mxu0 0
    %3758 = vmatprep.subr.bf16.mxu0 0
    %3759 = vmatpush1.bf16.msra.mxu0 0
    %3760 = vmatprep.subr.bf16.mxu0 0
    %3761 = vmatpush1.bf16.msra.mxu0 0
    %3762 = vmatprep.mubr.bf16.mxu0 0
    %3763 = vmatmul.mubr.bf16.gmra.mrb[0].mxu0 %v3728
    %v3764 = vpop.f32.mrb[0].mxu0
    %v3765 = vadd.f32 %v3709, %v3764
    %v3766 = vpop.f32.mrb[0].mxu0
    %v3767 = vpop.f32.mrb[0].mxu0
    %v3768 = vadd.f32 %v3712, %v3767
    %v3769 = vpop.f32.mrb[0].mxu0
    %3770 = vdwg.mxu0
    %s3771 = scalar_lea.vmem %s8, 2
    %v3772 = vld [vmem:[%s3771] sm:$0x1]
    %v3774 = vlaneseq
    %v3775 = vshrl.u32 %v3774, 7
    %v3776 = vsub.s32 0, %v3775
    %v3777 = vrot.slane %v3772, %v3776
    %v3779 = vadd.f32 %v3765, %v3777
    %v3780 = vadd.f32 %v3768, %v3777
    %v3781 = vadd.f32 %v2715, %v3779
    %v3782 = vadd.f32 %v2716, %v3780
    %s3783 = scalar_lea.vmem %s13, 2
    %v3784 = vld [vmem:[%s3783] sm:$0x1]
    %s3785 = scalar_lea.vmem %s14, 2
    %v3786 = vld [vmem:[%s3785] sm:$0x1]
    %v3787 = vsel %vm100, %v3781, 0.0
    %3788 = vadd.xlane.f32.xlu0 %v3787
    %v3789 = vpop.xlane.xlu0 %3788
    %v3790 = vsel %vm100, %v3782, 0.0
    %3791 = vadd.xlane.f32.xlu0 %v3790
    %v3792 = vpop.xlane.xlu0 %3791
    %v3793 = vmul.f32 %v3789, %v1130
    %v3794 = vmul.f32 %v3792, %v1130
    %v3795 = vsub.f32 %v3781, %v3793
    %v3796 = vsub.f32 %v3782, %v3794
    %v3797 = vmul.f32 %v3795, %v3795
    %v3798 = vmul.f32 %v3796, %v3796
    %v3799 = vsel %vm100, %v3797, 0.0
    %3800 = vadd.xlane.f32.xlu0 %v3799
    %v3801 = vpop.xlane.xlu0 %3800
    %v3802 = vsel %vm100, %v3798, 0.0
    %3803 = vadd.xlane.f32.xlu0 %v3802
    %v3804 = vpop.xlane.xlu0 %3803
    %v3805 = vmul.f32 %v3801, %v1130
    %v3806 = vmul.f32 %v3804, %v1130
    %v3807 = vadd.f32 %v3805, 1e-05
    %v3808 = vadd.f32 %v3806, 1e-05
    %v3809 = vrsqrt.pop %v3807
    %v3810 = vrsqrt.pop %v3808
    %v3811 = vmul.f32 %v3795, %v3809
    %v3812 = vmul.f32 %v3796, %v3810
    %v3814 = vlaneseq
    %v3815 = vshrl.u32 %v3814, 7
    %v3816 = vsub.s32 0, %v3815
    %v3817 = vrot.slane %v3784, %v3816
    %v3819 = vmul.f32 %v3811, %v3817
    %v3820 = vmul.f32 %v3812, %v3817
    %v3822 = vlaneseq
    %v3823 = vshrl.u32 %v3822, 7
    %v3824 = vsub.s32 0, %v3823
    %v3825 = vrot.slane %v3786, %v3824
    %v3827 = vadd.f32 %v3819, %v3825
    %v3828 = vadd.f32 %v3820, %v3825
    %v3829 = vpack.c.bf16 %v3828, %v3827
    %s3830 = scalar_lea.vmem %s9, 64
    %v3831 = vld [vmem:[%s3830] sm:$0xf]
    %v3832 = vld [vmem:[%s3830 + $0x4] sm:$0xf]
    %v3833 = vld [vmem:[%s3830 + $0x8] sm:$0xf]
    %v3834 = vld [vmem:[%s3830 + $0xc] sm:$0xf]
    %v3835 = vld [vmem:[%s3830 + $0x10] sm:$0xf]
    %v3836 = vld [vmem:[%s3830 + $0x14] sm:$0xf]
    %v3837 = vld [vmem:[%s3830 + $0x18] sm:$0xf]
    %v3838 = vld [vmem:[%s3830 + $0x1c] sm:$0xf]
    %s3839 = scalar_lea.vmem %s10, 2
    %v3840 = vld [vmem:[%s3839] sm:$0x1]
    %v3842 = vlaneseq
    %v3843 = vshrl.u32 %v3842, 7
    %v3844 = vsub.s32 0, %v3843
    %v3845 = vrot.slane %v3840, %v3844
    %v3855 = vunpack.c.l.b16 %v3831
    %v3856 = vunpack.c.l.b16 %v3832
    %v3857 = vunpack.c.l.b16 %v3833
    %v3858 = vunpack.c.l.b16 %v3834
    %v3859 = vunpack.c.l.b16 %v3835
    %v3860 = vunpack.c.l.b16 %v3836
    %v3861 = vunpack.c.l.b16 %v3837
    %v3862 = vunpack.c.l.b16 %v3838
    %v3863 = vpack.c.b16 %v3856, %v3855
    %v3864 = vpack.c.b16 %v3858, %v3857
    %v3865 = vpack.c.b16 %v3860, %v3859
    %v3866 = vpack.c.b16 %v3862, %v3861
    %v3872 = vsel %vm100, %v3829, 0
    %3874 = vmatprep.subr.bf16.mxu0 0
    %3875 = vmatpush1.bf16.msra.mxu0 %v3863
    %3876 = vmatprep.subr.bf16.mxu0 0
    %3877 = vmatpush1.bf16.msra.mxu0 %v3864
    %3878 = vmatprep.subr.bf16.mxu0 0
    %3879 = vmatpush1.bf16.msra.mxu0 %v3865
    %3880 = vmatprep.subr.bf16.mxu0 0
    %3881 = vmatpush1.bf16.msra.mxu0 %v3866
    %3882 = vmatprep.subr.bf16.mxu0 0
    %3883 = vmatpush1.bf16.msra.mxu0 0
    %3884 = vmatprep.subr.bf16.mxu0 0
    %3885 = vmatpush1.bf16.msra.mxu0 0
    %3886 = vmatprep.subr.bf16.mxu0 0
    %3887 = vmatpush1.bf16.msra.mxu0 0
    %3888 = vmatprep.subr.bf16.mxu0 0
    %3889 = vmatpush1.bf16.msra.mxu0 0
    %3890 = vmatprep.subr.bf16.mxu0 0
    %3891 = vmatpush1.bf16.msra.mxu0 0
    %3892 = vmatprep.subr.bf16.mxu0 0
    %3893 = vmatpush1.bf16.msra.mxu0 0
    %3894 = vmatprep.subr.bf16.mxu0 0
    %3895 = vmatpush1.bf16.msra.mxu0 0
    %3896 = vmatprep.subr.bf16.mxu0 0
    %3897 = vmatpush1.bf16.msra.mxu0 0
    %3898 = vmatprep.subr.bf16.mxu0 0
    %3899 = vmatpush1.bf16.msra.mxu0 0
    %3900 = vmatprep.subr.bf16.mxu0 0
    %3901 = vmatpush1.bf16.msra.mxu0 0
    %3902 = vmatprep.subr.bf16.mxu0 0
    %3903 = vmatpush1.bf16.msra.mxu0 0
    %3904 = vmatprep.subr.bf16.mxu0 0
    %3905 = vmatpush1.bf16.msra.mxu0 0
    %3906 = vmatprep.mubr.bf16.mxu0 0
    %3907 = vmatmul.mubr.bf16.gmra.mrb[0].mxu0 %v3872
    %v3908 = vpop.f32.mrb[0].mxu0
    %v3909 = vadd.f32 %v3845, %v3908
    %v3910 = vpop.f32.mrb[0].mxu0
    %v3911 = vpop.f32.mrb[0].mxu0
    %v3912 = vadd.f32 %v3845, %v3911
    %v3913 = vpop.f32.mrb[0].mxu0
    %3914 = vdwg.mxu0
    %v3915 = vmax.f32 %v3909, 0.0
    %v3916 = vmax.f32 %v3912, 0.0
    %v3917 = vpack.c.bf16 %v3916, %v3915
    %s3918 = scalar_lea.vmem %s11, 64
    %v3919 = vld [vmem:[%s3918] sm:$0xf]
    %v3920 = vld [vmem:[%s3918 + $0x4] sm:$0xf]
    %v3921 = vld [vmem:[%s3918 + $0x8] sm:$0xf]
    %v3922 = vld [vmem:[%s3918 + $0xc] sm:$0xf]
    %v3923 = vld [vmem:[%s3918 + $0x10] sm:$0xf]
    %v3924 = vld [vmem:[%s3918 + $0x14] sm:$0xf]
    %v3925 = vld [vmem:[%s3918 + $0x18] sm:$0xf]
    %v3926 = vld [vmem:[%s3918 + $0x1c] sm:$0xf]
    %s3927 = scalar_lea.vmem %s12, 2
    %v3928 = vld [vmem:[%s3927] sm:$0x1]
    %v3930 = vlaneseq
    %v3931 = vshrl.u32 %v3930, 7
    %v3932 = vsub.s32 0, %v3931
    %v3933 = vrot.slane %v3928, %v3932
    %v3943 = vunpack.c.l.b16 %v3919
    %v3944 = vunpack.c.l.b16 %v3920
    %v3945 = vunpack.c.l.b16 %v3921
    %v3946 = vunpack.c.l.b16 %v3922
    %v3947 = vunpack.c.l.b16 %v3923
    %v3948 = vunpack.c.l.b16 %v3924
    %v3949 = vunpack.c.l.b16 %v3925
    %v3950 = vunpack.c.l.b16 %v3926
    %v3951 = vpack.c.b16 %v3944, %v3943
    %v3952 = vpack.c.b16 %v3946, %v3945
    %v3953 = vpack.c.b16 %v3948, %v3947
    %v3954 = vpack.c.b16 %v3950, %v3949
    %v3960 = vsel %vm100, %v3917, 0
    %3962 = vmatprep.subr.bf16.mxu0 0
    %3963 = vmatpush1.bf16.msra.mxu0 %v3951
    %3964 = vmatprep.subr.bf16.mxu0 0
    %3965 = vmatpush1.bf16.msra.mxu0 %v3952
    %3966 = vmatprep.subr.bf16.mxu0 0
    %3967 = vmatpush1.bf16.msra.mxu0 %v3953
    %3968 = vmatprep.subr.bf16.mxu0 0
    %3969 = vmatpush1.bf16.msra.mxu0 %v3954
    %3970 = vmatprep.subr.bf16.mxu0 0
    %3971 = vmatpush1.bf16.msra.mxu0 0
    %3972 = vmatprep.subr.bf16.mxu0 0
    %3973 = vmatpush1.bf16.msra.mxu0 0
    %3974 = vmatprep.subr.bf16.mxu0 0
    %3975 = vmatpush1.bf16.msra.mxu0 0
    %3976 = vmatprep.subr.bf16.mxu0 0
    %3977 = vmatpush1.bf16.msra.mxu0 0
    %3978 = vmatprep.subr.bf16.mxu0 0
    %3979 = vmatpush1.bf16.msra.mxu0 0
    %3980 = vmatprep.subr.bf16.mxu0 0
    %3981 = vmatpush1.bf16.msra.mxu0 0
    %3982 = vmatprep.subr.bf16.mxu0 0
    %3983 = vmatpush1.bf16.msra.mxu0 0
    %3984 = vmatprep.subr.bf16.mxu0 0
    %3985 = vmatpush1.bf16.msra.mxu0 0
    %3986 = vmatprep.subr.bf16.mxu0 0
    %3987 = vmatpush1.bf16.msra.mxu0 0
    %3988 = vmatprep.subr.bf16.mxu0 0
    %3989 = vmatpush1.bf16.msra.mxu0 0
    %3990 = vmatprep.subr.bf16.mxu0 0
    %3991 = vmatpush1.bf16.msra.mxu0 0
    %3992 = vmatprep.subr.bf16.mxu0 0
    %3993 = vmatpush1.bf16.msra.mxu0 0
    %3994 = vmatprep.mubr.bf16.mxu0 0
    %3995 = vmatmul.mubr.bf16.gmra.mrb[0].mxu0 %v3960
    %v3996 = vpop.f32.mrb[0].mxu0
    %v3997 = vadd.f32 %v3933, %v3996
    %v3998 = vpop.f32.mrb[0].mxu0
    %v3999 = vpop.f32.mrb[0].mxu0
    %v4000 = vadd.f32 %v3933, %v3999
    %v4001 = vpop.f32.mrb[0].mxu0
    %4002 = vdwg.mxu0
    %v4003 = vadd.f32 %v3827, %v3997
    %v4004 = vadd.f32 %v3828, %v4000
    %s4005 = scalar_lea.vmem %s15, 2
    %v4006 = vld [vmem:[%s4005] sm:$0x1]
    %s4007 = scalar_lea.vmem %s16, 2
    %v4008 = vld [vmem:[%s4007] sm:$0x1]
    %v4009 = vsel %vm100, %v4003, 0.0
    %4010 = vadd.xlane.f32.xlu0 %v4009
    %v4011 = vpop.xlane.xlu0 %4010
    %v4012 = vsel %vm100, %v4004, 0.0
    %4013 = vadd.xlane.f32.xlu0 %v4012
    %v4014 = vpop.xlane.xlu0 %4013
    %v4015 = vmul.f32 %v4011, %v1130
    %v4016 = vmul.f32 %v4014, %v1130
    %v4017 = vsub.f32 %v4003, %v4015
    %v4018 = vsub.f32 %v4004, %v4016
    %v4019 = vmul.f32 %v4017, %v4017
    %v4020 = vmul.f32 %v4018, %v4018
    %v4021 = vsel %vm100, %v4019, 0.0
    %4022 = vadd.xlane.f32.xlu0 %v4021
    %v4023 = vpop.xlane.xlu0 %4022
    %v4024 = vsel %vm100, %v4020, 0.0
    %4025 = vadd.xlane.f32.xlu0 %v4024
    %v4026 = vpop.xlane.xlu0 %4025
    %v4027 = vmul.f32 %v4023, %v1130
    %v4028 = vmul.f32 %v4026, %v1130
    %v4029 = vadd.f32 %v4027, 1e-05
    %v4030 = vadd.f32 %v4028, 1e-05
    %v4031 = vrsqrt.pop %v4029
    %v4032 = vrsqrt.pop %v4030
    %v4033 = vmul.f32 %v4017, %v4031
    %v4034 = vmul.f32 %v4018, %v4032
    %v4036 = vlaneseq
    %v4037 = vshrl.u32 %v4036, 7
    %v4038 = vsub.s32 0, %v4037
    %v4039 = vrot.slane %v4006, %v4038
    %v4041 = vmul.f32 %v4033, %v4039
    %v4042 = vmul.f32 %v4034, %v4039
    %v4044 = vlaneseq
    %v4045 = vshrl.u32 %v4044, 7
    %v4046 = vsub.s32 0, %v4045
    %v4047 = vrot.slane %v4008, %v4046
    %v4049 = vadd.f32 %v4041, %v4047
    %v4050 = vadd.f32 %v4042, %v4047
    %v4051 = vpack.c.bf16 %v4050, %v4049
    %s4052 = scalar_lea.vmem %s1, 192
    %v4053 = vld [vmem:[%s4052] sm:$0xf]
    %v4054 = vld [vmem:[%s4052 + $0x4] sm:$0xf]
    %v4055 = vld [vmem:[%s4052 + $0x8] sm:$0xf]
    %v4056 = vld [vmem:[%s4052 + $0xc] sm:$0xf]
    %v4057 = vld [vmem:[%s4052 + $0x10] sm:$0xf]
    %v4058 = vld [vmem:[%s4052 + $0x14] sm:$0xf]
    %v4059 = vld [vmem:[%s4052 + $0x18] sm:$0xf]
    %v4060 = vld [vmem:[%s4052 + $0x1c] sm:$0xf]
    %s4061 = scalar_lea.vmem %s2, 6
    %v4062 = vld [vmem:[%s4061] sm:$0x1]
    %v4064 = vlaneseq
    %v4065 = vshrl.u32 %v4064, 7
    %v4066 = vsub.s32 0, %v4065
    %v4067 = vrot.slane %v4062, %v4066
    %v4077 = vunpack.c.l.b16 %v4053
    %v4078 = vunpack.c.l.b16 %v4054
    %v4079 = vunpack.c.l.b16 %v4055
    %v4080 = vunpack.c.l.b16 %v4056
    %v4081 = vunpack.c.l.b16 %v4057
    %v4082 = vunpack.c.l.b16 %v4058
    %v4083 = vunpack.c.l.b16 %v4059
    %v4084 = vunpack.c.l.b16 %v4060
    %v4085 = vpack.c.b16 %v4078, %v4077
    %v4086 = vpack.c.b16 %v4080, %v4079
    %v4087 = vpack.c.b16 %v4082, %v4081
    %v4088 = vpack.c.b16 %v4084, %v4083
    %v4094 = vsel %vm100, %v4051, 0
    %4096 = vmatprep.subr.bf16.mxu0 0
    %4097 = vmatpush1.bf16.msra.mxu0 %v4085
    %4098 = vmatprep.subr.bf16.mxu0 0
    %4099 = vmatpush1.bf16.msra.mxu0 %v4086
    %4100 = vmatprep.subr.bf16.mxu0 0
    %4101 = vmatpush1.bf16.msra.mxu0 %v4087
    %4102 = vmatprep.subr.bf16.mxu0 0
    %4103 = vmatpush1.bf16.msra.mxu0 %v4088
    %4104 = vmatprep.subr.bf16.mxu0 0
    %4105 = vmatpush1.bf16.msra.mxu0 0
    %4106 = vmatprep.subr.bf16.mxu0 0
    %4107 = vmatpush1.bf16.msra.mxu0 0
    %4108 = vmatprep.subr.bf16.mxu0 0
    %4109 = vmatpush1.bf16.msra.mxu0 0
    %4110 = vmatprep.subr.bf16.mxu0 0
    %4111 = vmatpush1.bf16.msra.mxu0 0
    %4112 = vmatprep.subr.bf16.mxu0 0
    %4113 = vmatpush1.bf16.msra.mxu0 0
    %4114 = vmatprep.subr.bf16.mxu0 0
    %4115 = vmatpush1.bf16.msra.mxu0 0
    %4116 = vmatprep.subr.bf16.mxu0 0
    %4117 = vmatpush1.bf16.msra.mxu0 0
    %4118 = vmatprep.subr.bf16.mxu0 0
    %4119 = vmatpush1.bf16.msra.mxu0 0
    %4120 = vmatprep.subr.bf16.mxu0 0
    %4121 = vmatpush1.bf16.msra.mxu0 0
    %4122 = vmatprep.subr.bf16.mxu0 0
    %4123 = vmatpush1.bf16.msra.mxu0 0
    %4124 = vmatprep.subr.bf16.mxu0 0
    %4125 = vmatpush1.bf16.msra.mxu0 0
    %4126 = vmatprep.subr.bf16.mxu0 0
    %4127 = vmatpush1.bf16.msra.mxu0 0
    %4128 = vmatprep.mubr.bf16.mxu0 0
    %4129 = vmatmul.mubr.bf16.gmra.mrb[0].mxu0 %v4094
    %v4130 = vpop.f32.mrb[0].mxu0
    %v4131 = vadd.f32 %v4067, %v4130
    %v4132 = vpop.f32.mrb[0].mxu0
    %v4133 = vpop.f32.mrb[0].mxu0
    %v4134 = vadd.f32 %v4067, %v4133
    %v4135 = vpop.f32.mrb[0].mxu0
    %4136 = vdwg.mxu0
    %s4137 = scalar_lea.vmem %s3, 192
    %v4138 = vld [vmem:[%s4137] sm:$0xf]
    %v4139 = vld [vmem:[%s4137 + $0x4] sm:$0xf]
    %v4140 = vld [vmem:[%s4137 + $0x8] sm:$0xf]
    %v4141 = vld [vmem:[%s4137 + $0xc] sm:$0xf]
    %v4142 = vld [vmem:[%s4137 + $0x10] sm:$0xf]
    %v4143 = vld [vmem:[%s4137 + $0x14] sm:$0xf]
    %v4144 = vld [vmem:[%s4137 + $0x18] sm:$0xf]
    %v4145 = vld [vmem:[%s4137 + $0x1c] sm:$0xf]
    %s4146 = scalar_lea.vmem %s4, 6
    %v4147 = vld [vmem:[%s4146] sm:$0x1]
    %v4149 = vlaneseq
    %v4150 = vshrl.u32 %v4149, 7
    %v4151 = vsub.s32 0, %v4150
    %v4152 = vrot.slane %v4147, %v4151
    %v4162 = vunpack.c.l.b16 %v4138
    %v4163 = vunpack.c.l.b16 %v4139
    %v4164 = vunpack.c.l.b16 %v4140
    %v4165 = vunpack.c.l.b16 %v4141
    %v4166 = vunpack.c.l.b16 %v4142
    %v4167 = vunpack.c.l.b16 %v4143
    %v4168 = vunpack.c.l.b16 %v4144
    %v4169 = vunpack.c.l.b16 %v4145
    %v4170 = vpack.c.b16 %v4163, %v4162
    %v4171 = vpack.c.b16 %v4165, %v4164
    %v4172 = vpack.c.b16 %v4167, %v4166
    %v4173 = vpack.c.b16 %v4169, %v4168
    %4178 = vmatprep.subr.bf16.mxu0 0
    %4179 = vmatpush1.bf16.msra.mxu0 %v4170
    %4180 = vmatprep.subr.bf16.mxu0 0
    %4181 = vmatpush1.bf16.msra.mxu0 %v4171
    %4182 = vmatprep.subr.bf16.mxu0 0
    %4183 = vmatpush1.bf16.msra.mxu0 %v4172
    %4184 = vmatprep.subr.bf16.mxu0 0
    %4185 = vmatpush1.bf16.msra.mxu0 %v4173
    %4186 = vmatprep.subr.bf16.mxu0 0
    %4187 = vmatpush1.bf16.msra.mxu0 0
    %4188 = vmatprep.subr.bf16.mxu0 0
    %4189 = vmatpush1.bf16.msra.mxu0 0
    %4190 = vmatprep.subr.bf16.mxu0 0
    %4191 = vmatpush1.bf16.msra.mxu0 0
    %4192 = vmatprep.subr.bf16.mxu0 0
    %4193 = vmatpush1.bf16.msra.mxu0 0
    %4194 = vmatprep.subr.bf16.mxu0 0
    %4195 = vmatpush1.bf16.msra.mxu0 0
    %4196 = vmatprep.subr.bf16.mxu0 0
    %4197 = vmatpush1.bf16.msra.mxu0 0
    %4198 = vmatprep.subr.bf16.mxu0 0
    %4199 = vmatpush1.bf16.msra.mxu0 0
    %4200 = vmatprep.subr.bf16.mxu0 0
    %4201 = vmatpush1.bf16.msra.mxu0 0
    %4202 = vmatprep.subr.bf16.mxu0 0
    %4203 = vmatpush1.bf16.msra.mxu0 0
    %4204 = vmatprep.subr.bf16.mxu0 0
    %4205 = vmatpush1.bf16.msra.mxu0 0
    %4206 = vmatprep.subr.bf16.mxu0 0
    %4207 = vmatpush1.bf16.msra.mxu0 0
    %4208 = vmatprep.subr.bf16.mxu0 0
    %4209 = vmatpush1.bf16.msra.mxu0 0
    %4210 = vmatprep.mubr.bf16.mxu0 0
    %4211 = vmatmul.mubr.bf16.gmra.mrb[0].mxu0 %v4094
    %v4212 = vpop.f32.mrb[0].mxu0
    %v4213 = vadd.f32 %v4152, %v4212
    %v4214 = vpop.f32.mrb[0].mxu0
    %v4215 = vpop.f32.mrb[0].mxu0
    %v4216 = vadd.f32 %v4152, %v4215
    %v4217 = vpop.f32.mrb[0].mxu0
    %4218 = vdwg.mxu0
    %s4219 = scalar_lea.vmem %s5, 192
    %v4220 = vld [vmem:[%s4219] sm:$0xf]
    %v4221 = vld [vmem:[%s4219 + $0x4] sm:$0xf]
    %v4222 = vld [vmem:[%s4219 + $0x8] sm:$0xf]
    %v4223 = vld [vmem:[%s4219 + $0xc] sm:$0xf]
    %v4224 = vld [vmem:[%s4219 + $0x10] sm:$0xf]
    %v4225 = vld [vmem:[%s4219 + $0x14] sm:$0xf]
    %v4226 = vld [vmem:[%s4219 + $0x18] sm:$0xf]
    %v4227 = vld [vmem:[%s4219 + $0x1c] sm:$0xf]
    %s4228 = scalar_lea.vmem %s6, 6
    %v4229 = vld [vmem:[%s4228] sm:$0x1]
    %v4231 = vlaneseq
    %v4232 = vshrl.u32 %v4231, 7
    %v4233 = vsub.s32 0, %v4232
    %v4234 = vrot.slane %v4229, %v4233
    %v4244 = vunpack.c.l.b16 %v4220
    %v4245 = vunpack.c.l.b16 %v4221
    %v4246 = vunpack.c.l.b16 %v4222
    %v4247 = vunpack.c.l.b16 %v4223
    %v4248 = vunpack.c.l.b16 %v4224
    %v4249 = vunpack.c.l.b16 %v4225
    %v4250 = vunpack.c.l.b16 %v4226
    %v4251 = vunpack.c.l.b16 %v4227
    %v4252 = vpack.c.b16 %v4245, %v4244
    %v4253 = vpack.c.b16 %v4247, %v4246
    %v4254 = vpack.c.b16 %v4249, %v4248
    %v4255 = vpack.c.b16 %v4251, %v4250
    %4260 = vmatprep.subr.bf16.mxu0 0
    %4261 = vmatpush1.bf16.msra.mxu0 %v4252
    %4262 = vmatprep.subr.bf16.mxu0 0
    %4263 = vmatpush1.bf16.msra.mxu0 %v4253
    %4264 = vmatprep.subr.bf16.mxu0 0
    %4265 = vmatpush1.bf16.msra.mxu0 %v4254
    %4266 = vmatprep.subr.bf16.mxu0 0
    %4267 = vmatpush1.bf16.msra.mxu0 %v4255
    %4268 = vmatprep.subr.bf16.mxu0 0
    %4269 = vmatpush1.bf16.msra.mxu0 0
    %4270 = vmatprep.subr.bf16.mxu0 0
    %4271 = vmatpush1.bf16.msra.mxu0 0
    %4272 = vmatprep.subr.bf16.mxu0 0
    %4273 = vmatpush1.bf16.msra.mxu0 0
    %4274 = vmatprep.subr.bf16.mxu0 0
    %4275 = vmatpush1.bf16.msra.mxu0 0
    %4276 = vmatprep.subr.bf16.mxu0 0
    %4277 = vmatpush1.bf16.msra.mxu0 0
    %4278 = vmatprep.subr.bf16.mxu0 0
    %4279 = vmatpush1.bf16.msra.mxu0 0
    %4280 = vmatprep.subr.bf16.mxu0 0
    %4281 = vmatpush1.bf16.msra.mxu0 0
    %4282 = vmatprep.subr.bf16.mxu0 0
    %4283 = vmatpush1.bf16.msra.mxu0 0
    %4284 = vmatprep.subr.bf16.mxu0 0
    %4285 = vmatpush1.bf16.msra.mxu0 0
    %4286 = vmatprep.subr.bf16.mxu0 0
    %4287 = vmatpush1.bf16.msra.mxu0 0
    %4288 = vmatprep.subr.bf16.mxu0 0
    %4289 = vmatpush1.bf16.msra.mxu0 0
    %4290 = vmatprep.subr.bf16.mxu0 0
    %4291 = vmatpush1.bf16.msra.mxu0 0
    %4292 = vmatprep.mubr.bf16.mxu0 0
    %4293 = vmatmul.mubr.bf16.gmra.mrb[0].mxu0 %v4094
    %v4294 = vpop.f32.mrb[0].mxu0
    %v4295 = vadd.f32 %v4234, %v4294
    %v4296 = vpop.f32.mrb[0].mxu0
    %v4297 = vpop.f32.mrb[0].mxu0
    %v4298 = vadd.f32 %v4234, %v4297
    %v4299 = vpop.f32.mrb[0].mxu0
    %4300 = vdwg.mxu0
    %v4301 = vpack.c.bf16 %v4134, %v4131
    %v4302 = vpack.c.bf16 %v4216, %v4213
    %v4303 = vpack.c.bf16 %v4298, %v4295
    %v4305 = vsel %vm308, %v4301, 0
    %v4308 = vsel %vm308, %v4302, 0
    %4310 = vmatprep.subr.bf16.mxu0 0
    %4311 = vmatpush1.bf16.xpose.msra.mxu0 %v4308
    %4312 = vmatprep.subr.bf16.mxu0 0
    %4313 = vmatpush1.bf16.xpose.msra.mxu0 0
    %4314 = vmatprep.subr.bf16.mxu0 0
    %4315 = vmatpush1.bf16.xpose.msra.mxu0 0
    %4316 = vmatprep.subr.bf16.mxu0 0
    %4317 = vmatpush1.bf16.xpose.msra.mxu0 0
    %4318 = vmatprep.subr.bf16.mxu0 0
    %4319 = vmatpush1.bf16.xpose.msra.mxu0 0
    %4320 = vmatprep.subr.bf16.mxu0 0
    %4321 = vmatpush1.bf16.xpose.msra.mxu0 0
    %4322 = vmatprep.subr.bf16.mxu0 0
    %4323 = vmatpush1.bf16.xpose.msra.mxu0 0
    %4324 = vmatprep.subr.bf16.mxu0 0
    %4325 = vmatpush1.bf16.xpose.msra.mxu0 0
    %4326 = vmatprep.subr.bf16.mxu0 0
    %4327 = vmatpush1.bf16.xpose.msra.mxu0 0
    %4328 = vmatprep.subr.bf16.mxu0 0
    %4329 = vmatpush1.bf16.xpose.msra.mxu0 0
    %4330 = vmatprep.subr.bf16.mxu0 0
    %4331 = vmatpush1.bf16.xpose.msra.mxu0 0
    %4332 = vmatprep.subr.bf16.mxu0 0
    %4333 = vmatpush1.bf16.xpose.msra.mxu0 0
    %4334 = vmatprep.subr.bf16.mxu0 0
    %4335 = vmatpush1.bf16.xpose.msra.mxu0 0
    %4336 = vmatprep.subr.bf16.mxu0 0
    %4337 = vmatpush1.bf16.xpose.msra.mxu0 0
    %4338 = vmatprep.subr.bf16.mxu0 0
    %4339 = vmatpush1.bf16.xpose.msra.mxu0 0
    %4340 = vmatprep.subr.bf16.mxu0 0
    %4341 = vmatpush1.bf16.xpose.msra.mxu0 0
    %4342 = vmatprep.mubr.bf16.mxu0 0
    %4343 = vmatmul.mubr.bf16.gmra.mrb[0].mxu0 %v4305
    %v4344 = vpop.f32.mrb[0].mxu0
    %v4345 = vadd.f32 0.0, %v4344
    %v4346 = vpop.f32.mrb[0].mxu0
    %v4347 = vpop.f32.mrb[0].mxu0
    %v4348 = vpop.f32.mrb[0].mxu0
    %4349 = vdwg.mxu0
    %v4350 = vsel %vm355, %v4345, -inf
    %4351 = vmax.xlane.f32.xlu0 %v4350
    %v4352 = vpop.xlane.xlu0 %4351
    %v4353 = vsub.f32 %v4345, %v4352
    %v4354 = vmul.f32 %v4353, 1.442695
    %v4355 = vpow.pop %v4354
    %v4356 = vsel %vm355, %v4355, 0.0
    %4357 = vadd.xlane.f32.xlu0 %v4356
    %v4358 = vpop.xlane.xlu0 %4357
    %v4359 = vrcp.pop %v4358
    %v4360 = vmul.f32 %v4355, %v4359
    %v4361 = vpack.c.bf16 %v4360, %v4360
    %v4363 = vsel %vm355, %v4361, 0
    %v4366 = vsel %vm371, %v4303, 0
    %4368 = vmatprep.subr.bf16.mxu0 0
    %4369 = vmatpush1.bf16.msra.mxu0 %v4366
    %4370 = vmatprep.subr.bf16.mxu0 0
    %4371 = vmatpush1.bf16.msra.mxu0 0
    %4372 = vmatprep.subr.bf16.mxu0 0
    %4373 = vmatpush1.bf16.msra.mxu0 0
    %4374 = vmatprep.subr.bf16.mxu0 0
    %4375 = vmatpush1.bf16.msra.mxu0 0
    %4376 = vmatprep.subr.bf16.mxu0 0
    %4377 = vmatpush1.bf16.msra.mxu0 0
    %4378 = vmatprep.subr.bf16.mxu0 0
    %4379 = vmatpush1.bf16.msra.mxu0 0
    %4380 = vmatprep.subr.bf16.mxu0 0
    %4381 = vmatpush1.bf16.msra.mxu0 0
    %4382 = vmatprep.subr.bf16.mxu0 0
    %4383 = vmatpush1.bf16.msra.mxu0 0
    %4384 = vmatprep.subr.bf16.mxu0 0
    %4385 = vmatpush1.bf16.msra.mxu0 0
    %4386 = vmatprep.subr.bf16.mxu0 0
    %4387 = vmatpush1.bf16.msra.mxu0 0
    %4388 = vmatprep.subr.bf16.mxu0 0
    %4389 = vmatpush1.bf16.msra.mxu0 0
    %4390 = vmatprep.subr.bf16.mxu0 0
    %4391 = vmatpush1.bf16.msra.mxu0 0
    %4392 = vmatprep.subr.bf16.mxu0 0
    %4393 = vmatpush1.bf16.msra.mxu0 0
    %4394 = vmatprep.subr.bf16.mxu0 0
    %4395 = vmatpush1.bf16.msra.mxu0 0
    %4396 = vmatprep.subr.bf16.mxu0 0
    %4397 = vmatpush1.bf16.msra.mxu0 0
    %4398 = vmatprep.subr.bf16.mxu0 0
    %4399 = vmatpush1.bf16.msra.mxu0 0
    %4400 = vmatprep.mubr.bf16.mxu0 0
    %4401 = vmatmul.mubr.bf16.gmra.mrb[0].mxu0 %v4363
    %v4402 = vpop.f32.mrb[0].mxu0
    %v4403 = vadd.f32 0.0, %v4402
    %v4404 = vpop.f32.mrb[0].mxu0
    %v4405 = vpop.f32.mrb[0].mxu0
    %v4406 = vpop.f32.mrb[0].mxu0
    %4407 = vdwg.mxu0
    %v4409 = vrot.slane %v4301, 4
    %v4411 = vrot.slane %v4302, 4
    %v4413 = vsel %vm308, %v4409, 0
    %v4416 = vsel %vm308, %v4411, 0
    %4418 = vmatprep.subr.bf16.mxu0 0
    %4419 = vmatpush1.bf16.xpose.msra.mxu0 %v4416
    %4420 = vmatprep.subr.bf16.mxu0 0
    %4421 = vmatpush1.bf16.xpose.msra.mxu0 0
    %4422 = vmatprep.subr.bf16.mxu0 0
    %4423 = vmatpush1.bf16.xpose.msra.mxu0 0
    %4424 = vmatprep.subr.bf16.mxu0 0
    %4425 = vmatpush1.bf16.xpose.msra.mxu0 0
    %4426 = vmatprep.subr.bf16.mxu0 0
    %4427 = vmatpush1.bf16.xpose.msra.mxu0 0
    %4428 = vmatprep.subr.bf16.mxu0 0
    %4429 = vmatpush1.bf16.xpose.msra.mxu0 0
    %4430 = vmatprep.subr.bf16.mxu0 0
    %4431 = vmatpush1.bf16.xpose.msra.mxu0 0
    %4432 = vmatprep.subr.bf16.mxu0 0
    %4433 = vmatpush1.bf16.xpose.msra.mxu0 0
    %4434 = vmatprep.subr.bf16.mxu0 0
    %4435 = vmatpush1.bf16.xpose.msra.mxu0 0
    %4436 = vmatprep.subr.bf16.mxu0 0
    %4437 = vmatpush1.bf16.xpose.msra.mxu0 0
    %4438 = vmatprep.subr.bf16.mxu0 0
    %4439 = vmatpush1.bf16.xpose.msra.mxu0 0
    %4440 = vmatprep.subr.bf16.mxu0 0
    %4441 = vmatpush1.bf16.xpose.msra.mxu0 0
    %4442 = vmatprep.subr.bf16.mxu0 0
    %4443 = vmatpush1.bf16.xpose.msra.mxu0 0
    %4444 = vmatprep.subr.bf16.mxu0 0
    %4445 = vmatpush1.bf16.xpose.msra.mxu0 0
    %4446 = vmatprep.subr.bf16.mxu0 0
    %4447 = vmatpush1.bf16.xpose.msra.mxu0 0
    %4448 = vmatprep.subr.bf16.mxu0 0
    %4449 = vmatpush1.bf16.xpose.msra.mxu0 0
    %4450 = vmatprep.mubr.bf16.mxu0 0
    %4451 = vmatmul.mubr.bf16.gmra.mrb[0].mxu0 %v4413
    %v4452 = vpop.f32.mrb[0].mxu0
    %v4453 = vadd.f32 0.0, %v4452
    %v4454 = vpop.f32.mrb[0].mxu0
    %v4455 = vpop.f32.mrb[0].mxu0
    %v4456 = vpop.f32.mrb[0].mxu0
    %4457 = vdwg.mxu0
    %v4458 = vsel %vm355, %v4453, -inf
    %4459 = vmax.xlane.f32.xlu0 %v4458
    %v4460 = vpop.xlane.xlu0 %4459
    %v4461 = vsub.f32 %v4453, %v4460
    %v4462 = vmul.f32 %v4461, 1.442695
    %v4463 = vpow.pop %v4462
    %v4464 = vsel %vm355, %v4463, 0.0
    %4465 = vadd.xlane.f32.xlu0 %v4464
    %v4466 = vpop.xlane.xlu0 %4465
    %v4467 = vrcp.pop %v4466
    %v4468 = vmul.f32 %v4463, %v4467
    %v4469 = vpack.c.bf16 %v4468, %v4468
    %v4471 = vrot.slane %v4303, 4
    %v4473 = vsel %vm355, %v4469, 0
    %v4476 = vsel %vm371, %v4471, 0
    %4478 = vmatprep.subr.bf16.mxu0 0
    %4479 = vmatpush1.bf16.msra.mxu0 %v4476
    %4480 = vmatprep.subr.bf16.mxu0 0
    %4481 = vmatpush1.bf16.msra.mxu0 0
    %4482 = vmatprep.subr.bf16.mxu0 0
    %4483 = vmatpush1.bf16.msra.mxu0 0
    %4484 = vmatprep.subr.bf16.mxu0 0
    %4485 = vmatpush1.bf16.msra.mxu0 0
    %4486 = vmatprep.subr.bf16.mxu0 0
    %4487 = vmatpush1.bf16.msra.mxu0 0
    %4488 = vmatprep.subr.bf16.mxu0 0
    %4489 = vmatpush1.bf16.msra.mxu0 0
    %4490 = vmatprep.subr.bf16.mxu0 0
    %4491 = vmatpush1.bf16.msra.mxu0 0
    %4492 = vmatprep.subr.bf16.mxu0 0
    %4493 = vmatpush1.bf16.msra.mxu0 0
    %4494 = vmatprep.subr.bf16.mxu0 0
    %4495 = vmatpush1.bf16.msra.mxu0 0
    %4496 = vmatprep.subr.bf16.mxu0 0
    %4497 = vmatpush1.bf16.msra.mxu0 0
    %4498 = vmatprep.subr.bf16.mxu0 0
    %4499 = vmatpush1.bf16.msra.mxu0 0
    %4500 = vmatprep.subr.bf16.mxu0 0
    %4501 = vmatpush1.bf16.msra.mxu0 0
    %4502 = vmatprep.subr.bf16.mxu0 0
    %4503 = vmatpush1.bf16.msra.mxu0 0
    %4504 = vmatprep.subr.bf16.mxu0 0
    %4505 = vmatpush1.bf16.msra.mxu0 0
    %4506 = vmatprep.subr.bf16.mxu0 0
    %4507 = vmatpush1.bf16.msra.mxu0 0
    %4508 = vmatprep.subr.bf16.mxu0 0
    %4509 = vmatpush1.bf16.msra.mxu0 0
    %4510 = vmatprep.mubr.bf16.mxu0 0
    %4511 = vmatmul.mubr.bf16.gmra.mrb[0].mxu0 %v4473
    %v4512 = vpop.f32.mrb[0].mxu0
    %v4513 = vadd.f32 0.0, %v4512
    %v4514 = vpop.f32.mrb[0].mxu0
    %v4515 = vpop.f32.mrb[0].mxu0
    %v4516 = vpop.f32.mrb[0].mxu0
    %4517 = vdwg.mxu0
    %v4518 = vpack.c.bf16 %v4513, %v4403
    %s4519 = scalar_lea.vmem %s7, 96
    %v4520 = vld [vmem:[%s4519] sm:$0xf]
    %v4521 = vld [vmem:[%s4519 + $0x4] sm:$0xf]
    %v4522 = vld [vmem:[%s4519 + $0x8] sm:$0xf]
    %v4523 = vld [vmem:[%s4519 + $0xc] sm:$0xf]
    %s4524 = scalar_lea.vmem %s1, 224
    %v4525 = vld [vmem:[%s4524] sm:$0xf]
    %v4526 = vld [vmem:[%s4524 + $0x4] sm:$0xf]
    %v4527 = vld [vmem:[%s4524 + $0x8] sm:$0xf]
    %v4528 = vld [vmem:[%s4524 + $0xc] sm:$0xf]
    %v4529 = vld [vmem:[%s4524 + $0x10] sm:$0xf]
    %v4530 = vld [vmem:[%s4524 + $0x14] sm:$0xf]
    %v4531 = vld [vmem:[%s4524 + $0x18] sm:$0xf]
    %v4532 = vld [vmem:[%s4524 + $0x1c] sm:$0xf]
    %s4533 = scalar_lea.vmem %s2, 7
    %v4534 = vld [vmem:[%s4533] sm:$0x1]
    %v4536 = vlaneseq
    %v4537 = vshrl.u32 %v4536, 7
    %v4538 = vsub.s32 0, %v4537
    %v4539 = vrot.slane %v4534, %v4538
    %v4549 = vunpack.c.l.b16 %v4525
    %v4550 = vunpack.c.l.b16 %v4526
    %v4551 = vunpack.c.l.b16 %v4527
    %v4552 = vunpack.c.l.b16 %v4528
    %v4553 = vunpack.c.l.b16 %v4529
    %v4554 = vunpack.c.l.b16 %v4530
    %v4555 = vunpack.c.l.b16 %v4531
    %v4556 = vunpack.c.l.b16 %v4532
    %v4557 = vpack.c.b16 %v4550, %v4549
    %v4558 = vpack.c.b16 %v4552, %v4551
    %v4559 = vpack.c.b16 %v4554, %v4553
    %v4560 = vpack.c.b16 %v4556, %v4555
    %4565 = vmatprep.subr.bf16.mxu0 0
    %4566 = vmatpush1.bf16.msra.mxu0 %v4557
    %4567 = vmatprep.subr.bf16.mxu0 0
    %4568 = vmatpush1.bf16.msra.mxu0 %v4558
    %4569 = vmatprep.subr.bf16.mxu0 0
    %4570 = vmatpush1.bf16.msra.mxu0 %v4559
    %4571 = vmatprep.subr.bf16.mxu0 0
    %4572 = vmatpush1.bf16.msra.mxu0 %v4560
    %4573 = vmatprep.subr.bf16.mxu0 0
    %4574 = vmatpush1.bf16.msra.mxu0 0
    %4575 = vmatprep.subr.bf16.mxu0 0
    %4576 = vmatpush1.bf16.msra.mxu0 0
    %4577 = vmatprep.subr.bf16.mxu0 0
    %4578 = vmatpush1.bf16.msra.mxu0 0
    %4579 = vmatprep.subr.bf16.mxu0 0
    %4580 = vmatpush1.bf16.msra.mxu0 0
    %4581 = vmatprep.subr.bf16.mxu0 0
    %4582 = vmatpush1.bf16.msra.mxu0 0
    %4583 = vmatprep.subr.bf16.mxu0 0
    %4584 = vmatpush1.bf16.msra.mxu0 0
    %4585 = vmatprep.subr.bf16.mxu0 0
    %4586 = vmatpush1.bf16.msra.mxu0 0
    %4587 = vmatprep.subr.bf16.mxu0 0
    %4588 = vmatpush1.bf16.msra.mxu0 0
    %4589 = vmatprep.subr.bf16.mxu0 0
    %4590 = vmatpush1.bf16.msra.mxu0 0
    %4591 = vmatprep.subr.bf16.mxu0 0
    %4592 = vmatpush1.bf16.msra.mxu0 0
    %4593 = vmatprep.subr.bf16.mxu0 0
    %4594 = vmatpush1.bf16.msra.mxu0 0
    %4595 = vmatprep.subr.bf16.mxu0 0
    %4596 = vmatpush1.bf16.msra.mxu0 0
    %4597 = vmatprep.mubr.bf16.mxu0 0
    %4598 = vmatmul.mubr.bf16.gmra.mrb[0].mxu0 %v4094
    %v4599 = vpop.f32.mrb[0].mxu0
    %v4600 = vadd.f32 %v4539, %v4599
    %v4601 = vpop.f32.mrb[0].mxu0
    %v4602 = vpop.f32.mrb[0].mxu0
    %v4603 = vadd.f32 %v4539, %v4602
    %v4604 = vpop.f32.mrb[0].mxu0
    %4605 = vdwg.mxu0
    %s4606 = scalar_lea.vmem %s3, 224
    %v4607 = vld [vmem:[%s4606] sm:$0xf]
    %v4608 = vld [vmem:[%s4606 + $0x4] sm:$0xf]
    %v4609 = vld [vmem:[%s4606 + $0x8] sm:$0xf]
    %v4610 = vld [vmem:[%s4606 + $0xc] sm:$0xf]
    %v4611 = vld [vmem:[%s4606 + $0x10] sm:$0xf]
    %v4612 = vld [vmem:[%s4606 + $0x14] sm:$0xf]
    %v4613 = vld [vmem:[%s4606 + $0x18] sm:$0xf]
    %v4614 = vld [vmem:[%s4606 + $0x1c] sm:$0xf]
    %s4615 = scalar_lea.vmem %s4, 7
    %v4616 = vld [vmem:[%s4615] sm:$0x1]
    %v4618 = vlaneseq
    %v4619 = vshrl.u32 %v4618, 7
    %v4620 = vsub.s32 0, %v4619
    %v4621 = vrot.slane %v4616, %v4620
    %v4631 = vunpack.c.l.b16 %v4607
    %v4632 = vunpack.c.l.b16 %v4608
    %v4633 = vunpack.c.l.b16 %v4609
    %v4634 = vunpack.c.l.b16 %v4610
    %v4635 = vunpack.c.l.b16 %v4611
    %v4636 = vunpack.c.l.b16 %v4612
    %v4637 = vunpack.c.l.b16 %v4613
    %v4638 = vunpack.c.l.b16 %v4614
    %v4639 = vpack.c.b16 %v4632, %v4631
    %v4640 = vpack.c.b16 %v4634, %v4633
    %v4641 = vpack.c.b16 %v4636, %v4635
    %v4642 = vpack.c.b16 %v4638, %v4637
    %4647 = vmatprep.subr.bf16.mxu0 0
    %4648 = vmatpush1.bf16.msra.mxu0 %v4639
    %4649 = vmatprep.subr.bf16.mxu0 0
    %4650 = vmatpush1.bf16.msra.mxu0 %v4640
    %4651 = vmatprep.subr.bf16.mxu0 0
    %4652 = vmatpush1.bf16.msra.mxu0 %v4641
    %4653 = vmatprep.subr.bf16.mxu0 0
    %4654 = vmatpush1.bf16.msra.mxu0 %v4642
    %4655 = vmatprep.subr.bf16.mxu0 0
    %4656 = vmatpush1.bf16.msra.mxu0 0
    %4657 = vmatprep.subr.bf16.mxu0 0
    %4658 = vmatpush1.bf16.msra.mxu0 0
    %4659 = vmatprep.subr.bf16.mxu0 0
    %4660 = vmatpush1.bf16.msra.mxu0 0
    %4661 = vmatprep.subr.bf16.mxu0 0
    %4662 = vmatpush1.bf16.msra.mxu0 0
    %4663 = vmatprep.subr.bf16.mxu0 0
    %4664 = vmatpush1.bf16.msra.mxu0 0
    %4665 = vmatprep.subr.bf16.mxu0 0
    %4666 = vmatpush1.bf16.msra.mxu0 0
    %4667 = vmatprep.subr.bf16.mxu0 0
    %4668 = vmatpush1.bf16.msra.mxu0 0
    %4669 = vmatprep.subr.bf16.mxu0 0
    %4670 = vmatpush1.bf16.msra.mxu0 0
    %4671 = vmatprep.subr.bf16.mxu0 0
    %4672 = vmatpush1.bf16.msra.mxu0 0
    %4673 = vmatprep.subr.bf16.mxu0 0
    %4674 = vmatpush1.bf16.msra.mxu0 0
    %4675 = vmatprep.subr.bf16.mxu0 0
    %4676 = vmatpush1.bf16.msra.mxu0 0
    %4677 = vmatprep.subr.bf16.mxu0 0
    %4678 = vmatpush1.bf16.msra.mxu0 0
    %4679 = vmatprep.mubr.bf16.mxu0 0
    %4680 = vmatmul.mubr.bf16.gmra.mrb[0].mxu0 %v4094
    %v4681 = vpop.f32.mrb[0].mxu0
    %v4682 = vadd.f32 %v4621, %v4681
    %v4683 = vpop.f32.mrb[0].mxu0
    %v4684 = vpop.f32.mrb[0].mxu0
    %v4685 = vadd.f32 %v4621, %v4684
    %v4686 = vpop.f32.mrb[0].mxu0
    %4687 = vdwg.mxu0
    %s4688 = scalar_lea.vmem %s5, 224
    %v4689 = vld [vmem:[%s4688] sm:$0xf]
    %v4690 = vld [vmem:[%s4688 + $0x4] sm:$0xf]
    %v4691 = vld [vmem:[%s4688 + $0x8] sm:$0xf]
    %v4692 = vld [vmem:[%s4688 + $0xc] sm:$0xf]
    %v4693 = vld [vmem:[%s4688 + $0x10] sm:$0xf]
    %v4694 = vld [vmem:[%s4688 + $0x14] sm:$0xf]
    %v4695 = vld [vmem:[%s4688 + $0x18] sm:$0xf]
    %v4696 = vld [vmem:[%s4688 + $0x1c] sm:$0xf]
    %s4697 = scalar_lea.vmem %s6, 7
    %v4698 = vld [vmem:[%s4697] sm:$0x1]
    %v4700 = vlaneseq
    %v4701 = vshrl.u32 %v4700, 7
    %v4702 = vsub.s32 0, %v4701
    %v4703 = vrot.slane %v4698, %v4702
    %v4713 = vunpack.c.l.b16 %v4689
    %v4714 = vunpack.c.l.b16 %v4690
    %v4715 = vunpack.c.l.b16 %v4691
    %v4716 = vunpack.c.l.b16 %v4692
    %v4717 = vunpack.c.l.b16 %v4693
    %v4718 = vunpack.c.l.b16 %v4694
    %v4719 = vunpack.c.l.b16 %v4695
    %v4720 = vunpack.c.l.b16 %v4696
    %v4721 = vpack.c.b16 %v4714, %v4713
    %v4722 = vpack.c.b16 %v4716, %v4715
    %v4723 = vpack.c.b16 %v4718, %v4717
    %v4724 = vpack.c.b16 %v4720, %v4719
    %4729 = vmatprep.subr.bf16.mxu0 0
    %4730 = vmatpush1.bf16.msra.mxu0 %v4721
    %4731 = vmatprep.subr.bf16.mxu0 0
    %4732 = vmatpush1.bf16.msra.mxu0 %v4722
    %4733 = vmatprep.subr.bf16.mxu0 0
    %4734 = vmatpush1.bf16.msra.mxu0 %v4723
    %4735 = vmatprep.subr.bf16.mxu0 0
    %4736 = vmatpush1.bf16.msra.mxu0 %v4724
    %4737 = vmatprep.subr.bf16.mxu0 0
    %4738 = vmatpush1.bf16.msra.mxu0 0
    %4739 = vmatprep.subr.bf16.mxu0 0
    %4740 = vmatpush1.bf16.msra.mxu0 0
    %4741 = vmatprep.subr.bf16.mxu0 0
    %4742 = vmatpush1.bf16.msra.mxu0 0
    %4743 = vmatprep.subr.bf16.mxu0 0
    %4744 = vmatpush1.bf16.msra.mxu0 0
    %4745 = vmatprep.subr.bf16.mxu0 0
    %4746 = vmatpush1.bf16.msra.mxu0 0
    %4747 = vmatprep.subr.bf16.mxu0 0
    %4748 = vmatpush1.bf16.msra.mxu0 0
    %4749 = vmatprep.subr.bf16.mxu0 0
    %4750 = vmatpush1.bf16.msra.mxu0 0
    %4751 = vmatprep.subr.bf16.mxu0 0
    %4752 = vmatpush1.bf16.msra.mxu0 0
    %4753 = vmatprep.subr.bf16.mxu0 0
    %4754 = vmatpush1.bf16.msra.mxu0 0
    %4755 = vmatprep.subr.bf16.mxu0 0
    %4756 = vmatpush1.bf16.msra.mxu0 0
    %4757 = vmatprep.subr.bf16.mxu0 0
    %4758 = vmatpush1.bf16.msra.mxu0 0
    %4759 = vmatprep.subr.bf16.mxu0 0
    %4760 = vmatpush1.bf16.msra.mxu0 0
    %4761 = vmatprep.mubr.bf16.mxu0 0
    %4762 = vmatmul.mubr.bf16.gmra.mrb[0].mxu0 %v4094
    %v4763 = vpop.f32.mrb[0].mxu0
    %v4764 = vadd.f32 %v4703, %v4763
    %v4765 = vpop.f32.mrb[0].mxu0
    %v4766 = vpop.f32.mrb[0].mxu0
    %v4767 = vadd.f32 %v4703, %v4766
    %v4768 = vpop.f32.mrb[0].mxu0
    %4769 = vdwg.mxu0
    %v4770 = vpack.c.bf16 %v4603, %v4600
    %v4771 = vpack.c.bf16 %v4685, %v4682
    %v4772 = vpack.c.bf16 %v4767, %v4764
    %v4774 = vsel %vm308, %v4770, 0
    %v4777 = vsel %vm308, %v4771, 0
    %4779 = vmatprep.subr.bf16.mxu0 0
    %4780 = vmatpush1.bf16.xpose.msra.mxu0 %v4777
    %4781 = vmatprep.subr.bf16.mxu0 0
    %4782 = vmatpush1.bf16.xpose.msra.mxu0 0
    %4783 = vmatprep.subr.bf16.mxu0 0
    %4784 = vmatpush1.bf16.xpose.msra.mxu0 0
    %4785 = vmatprep.subr.bf16.mxu0 0
    %4786 = vmatpush1.bf16.xpose.msra.mxu0 0
    %4787 = vmatprep.subr.bf16.mxu0 0
    %4788 = vmatpush1.bf16.xpose.msra.mxu0 0
    %4789 = vmatprep.subr.bf16.mxu0 0
    %4790 = vmatpush1.bf16.xpose.msra.mxu0 0
    %4791 = vmatprep.subr.bf16.mxu0 0
    %4792 = vmatpush1.bf16.xpose.msra.mxu0 0
    %4793 = vmatprep.subr.bf16.mxu0 0
    %4794 = vmatpush1.bf16.xpose.msra.mxu0 0
    %4795 = vmatprep.subr.bf16.mxu0 0
    %4796 = vmatpush1.bf16.xpose.msra.mxu0 0
    %4797 = vmatprep.subr.bf16.mxu0 0
    %4798 = vmatpush1.bf16.xpose.msra.mxu0 0
    %4799 = vmatprep.subr.bf16.mxu0 0
    %4800 = vmatpush1.bf16.xpose.msra.mxu0 0
    %4801 = vmatprep.subr.bf16.mxu0 0
    %4802 = vmatpush1.bf16.xpose.msra.mxu0 0
    %4803 = vmatprep.subr.bf16.mxu0 0
    %4804 = vmatpush1.bf16.xpose.msra.mxu0 0
    %4805 = vmatprep.subr.bf16.mxu0 0
    %4806 = vmatpush1.bf16.xpose.msra.mxu0 0
    %4807 = vmatprep.subr.bf16.mxu0 0
    %4808 = vmatpush1.bf16.xpose.msra.mxu0 0
    %4809 = vmatprep.subr.bf16.mxu0 0
    %4810 = vmatpush1.bf16.xpose.msra.mxu0 0
    %4811 = vmatprep.mubr.bf16.mxu0 0
    %4812 = vmatmul.mubr.bf16.gmra.mrb[0].mxu0 %v4774
    %v4813 = vpop.f32.mrb[0].mxu0
    %v4814 = vadd.f32 0.0, %v4813
    %v4815 = vpop.f32.mrb[0].mxu0
    %v4816 = vpop.f32.mrb[0].mxu0
    %v4817 = vpop.f32.mrb[0].mxu0
    %4818 = vdwg.mxu0
    %v4819 = vsel %vm355, %v4814, -inf
    %4820 = vmax.xlane.f32.xlu0 %v4819
    %v4821 = vpop.xlane.xlu0 %4820
    %v4822 = vsub.f32 %v4814, %v4821
    %v4823 = vmul.f32 %v4822, 1.442695
    %v4824 = vpow.pop %v4823
    %v4825 = vsel %vm355, %v4824, 0.0
    %4826 = vadd.xlane.f32.xlu0 %v4825
    %v4827 = vpop.xlane.xlu0 %4826
    %v4828 = vrcp.pop %v4827
    %v4829 = vmul.f32 %v4824, %v4828
    %v4830 = vpack.c.bf16 %v4829, %v4829
    %v4832 = vsel %vm355, %v4830, 0
    %v4835 = vsel %vm371, %v4772, 0
    %4837 = vmatprep.subr.bf16.mxu0 0
    %4838 = vmatpush1.bf16.msra.mxu0 %v4835
    %4839 = vmatprep.subr.bf16.mxu0 0
    %4840 = vmatpush1.bf16.msra.mxu0 0
    %4841 = vmatprep.subr.bf16.mxu0 0
    %4842 = vmatpush1.bf16.msra.mxu0 0
    %4843 = vmatprep.subr.bf16.mxu0 0
    %4844 = vmatpush1.bf16.msra.mxu0 0
    %4845 = vmatprep.subr.bf16.mxu0 0
    %4846 = vmatpush1.bf16.msra.mxu0 0
    %4847 = vmatprep.subr.bf16.mxu0 0
    %4848 = vmatpush1.bf16.msra.mxu0 0
    %4849 = vmatprep.subr.bf16.mxu0 0
    %4850 = vmatpush1.bf16.msra.mxu0 0
    %4851 = vmatprep.subr.bf16.mxu0 0
    %4852 = vmatpush1.bf16.msra.mxu0 0
    %4853 = vmatprep.subr.bf16.mxu0 0
    %4854 = vmatpush1.bf16.msra.mxu0 0
    %4855 = vmatprep.subr.bf16.mxu0 0
    %4856 = vmatpush1.bf16.msra.mxu0 0
    %4857 = vmatprep.subr.bf16.mxu0 0
    %4858 = vmatpush1.bf16.msra.mxu0 0
    %4859 = vmatprep.subr.bf16.mxu0 0
    %4860 = vmatpush1.bf16.msra.mxu0 0
    %4861 = vmatprep.subr.bf16.mxu0 0
    %4862 = vmatpush1.bf16.msra.mxu0 0
    %4863 = vmatprep.subr.bf16.mxu0 0
    %4864 = vmatpush1.bf16.msra.mxu0 0
    %4865 = vmatprep.subr.bf16.mxu0 0
    %4866 = vmatpush1.bf16.msra.mxu0 0
    %4867 = vmatprep.subr.bf16.mxu0 0
    %4868 = vmatpush1.bf16.msra.mxu0 0
    %4869 = vmatprep.mubr.bf16.mxu0 0
    %4870 = vmatmul.mubr.bf16.gmra.mrb[0].mxu0 %v4832
    %v4871 = vpop.f32.mrb[0].mxu0
    %v4872 = vadd.f32 0.0, %v4871
    %v4873 = vpop.f32.mrb[0].mxu0
    %v4874 = vpop.f32.mrb[0].mxu0
    %v4875 = vpop.f32.mrb[0].mxu0
    %4876 = vdwg.mxu0
    %v4878 = vrot.slane %v4770, 4
    %v4880 = vrot.slane %v4771, 4
    %v4882 = vsel %vm308, %v4878, 0
    %v4885 = vsel %vm308, %v4880, 0
    %4887 = vmatprep.subr.bf16.mxu0 0
    %4888 = vmatpush1.bf16.xpose.msra.mxu0 %v4885
    %4889 = vmatprep.subr.bf16.mxu0 0
    %4890 = vmatpush1.bf16.xpose.msra.mxu0 0
    %4891 = vmatprep.subr.bf16.mxu0 0
    %4892 = vmatpush1.bf16.xpose.msra.mxu0 0
    %4893 = vmatprep.subr.bf16.mxu0 0
    %4894 = vmatpush1.bf16.xpose.msra.mxu0 0
    %4895 = vmatprep.subr.bf16.mxu0 0
    %4896 = vmatpush1.bf16.xpose.msra.mxu0 0
    %4897 = vmatprep.subr.bf16.mxu0 0
    %4898 = vmatpush1.bf16.xpose.msra.mxu0 0
    %4899 = vmatprep.subr.bf16.mxu0 0
    %4900 = vmatpush1.bf16.xpose.msra.mxu0 0
    %4901 = vmatprep.subr.bf16.mxu0 0
    %4902 = vmatpush1.bf16.xpose.msra.mxu0 0
    %4903 = vmatprep.subr.bf16.mxu0 0
    %4904 = vmatpush1.bf16.xpose.msra.mxu0 0
    %4905 = vmatprep.subr.bf16.mxu0 0
    %4906 = vmatpush1.bf16.xpose.msra.mxu0 0
    %4907 = vmatprep.subr.bf16.mxu0 0
    %4908 = vmatpush1.bf16.xpose.msra.mxu0 0
    %4909 = vmatprep.subr.bf16.mxu0 0
    %4910 = vmatpush1.bf16.xpose.msra.mxu0 0
    %4911 = vmatprep.subr.bf16.mxu0 0
    %4912 = vmatpush1.bf16.xpose.msra.mxu0 0
    %4913 = vmatprep.subr.bf16.mxu0 0
    %4914 = vmatpush1.bf16.xpose.msra.mxu0 0
    %4915 = vmatprep.subr.bf16.mxu0 0
    %4916 = vmatpush1.bf16.xpose.msra.mxu0 0
    %4917 = vmatprep.subr.bf16.mxu0 0
    %4918 = vmatpush1.bf16.xpose.msra.mxu0 0
    %4919 = vmatprep.mubr.bf16.mxu0 0
    %4920 = vmatmul.mubr.bf16.gmra.mrb[0].mxu0 %v4882
    %v4921 = vpop.f32.mrb[0].mxu0
    %v4922 = vadd.f32 0.0, %v4921
    %v4923 = vpop.f32.mrb[0].mxu0
    %v4924 = vpop.f32.mrb[0].mxu0
    %v4925 = vpop.f32.mrb[0].mxu0
    %4926 = vdwg.mxu0
    %v4927 = vsel %vm355, %v4922, -inf
    %4928 = vmax.xlane.f32.xlu0 %v4927
    %v4929 = vpop.xlane.xlu0 %4928
    %v4930 = vsub.f32 %v4922, %v4929
    %v4931 = vmul.f32 %v4930, 1.442695
    %v4932 = vpow.pop %v4931
    %v4933 = vsel %vm355, %v4932, 0.0
    %4934 = vadd.xlane.f32.xlu0 %v4933
    %v4935 = vpop.xlane.xlu0 %4934
    %v4936 = vrcp.pop %v4935
    %v4937 = vmul.f32 %v4932, %v4936
    %v4938 = vpack.c.bf16 %v4937, %v4937
    %v4940 = vrot.slane %v4772, 4
    %v4942 = vsel %vm355, %v4938, 0
    %v4945 = vsel %vm371, %v4940, 0
    %4947 = vmatprep.subr.bf16.mxu0 0
    %4948 = vmatpush1.bf16.msra.mxu0 %v4945
    %4949 = vmatprep.subr.bf16.mxu0 0
    %4950 = vmatpush1.bf16.msra.mxu0 0
    %4951 = vmatprep.subr.bf16.mxu0 0
    %4952 = vmatpush1.bf16.msra.mxu0 0
    %4953 = vmatprep.subr.bf16.mxu0 0
    %4954 = vmatpush1.bf16.msra.mxu0 0
    %4955 = vmatprep.subr.bf16.mxu0 0
    %4956 = vmatpush1.bf16.msra.mxu0 0
    %4957 = vmatprep.subr.bf16.mxu0 0
    %4958 = vmatpush1.bf16.msra.mxu0 0
    %4959 = vmatprep.subr.bf16.mxu0 0
    %4960 = vmatpush1.bf16.msra.mxu0 0
    %4961 = vmatprep.subr.bf16.mxu0 0
    %4962 = vmatpush1.bf16.msra.mxu0 0
    %4963 = vmatprep.subr.bf16.mxu0 0
    %4964 = vmatpush1.bf16.msra.mxu0 0
    %4965 = vmatprep.subr.bf16.mxu0 0
    %4966 = vmatpush1.bf16.msra.mxu0 0
    %4967 = vmatprep.subr.bf16.mxu0 0
    %4968 = vmatpush1.bf16.msra.mxu0 0
    %4969 = vmatprep.subr.bf16.mxu0 0
    %4970 = vmatpush1.bf16.msra.mxu0 0
    %4971 = vmatprep.subr.bf16.mxu0 0
    %4972 = vmatpush1.bf16.msra.mxu0 0
    %4973 = vmatprep.subr.bf16.mxu0 0
    %4974 = vmatpush1.bf16.msra.mxu0 0
    %4975 = vmatprep.subr.bf16.mxu0 0
    %4976 = vmatpush1.bf16.msra.mxu0 0
    %4977 = vmatprep.subr.bf16.mxu0 0
    %4978 = vmatpush1.bf16.msra.mxu0 0
    %4979 = vmatprep.mubr.bf16.mxu0 0
    %4980 = vmatmul.mubr.bf16.gmra.mrb[0].mxu0 %v4942
    %v4981 = vpop.f32.mrb[0].mxu0
    %v4982 = vadd.f32 0.0, %v4981
    %v4983 = vpop.f32.mrb[0].mxu0
    %v4984 = vpop.f32.mrb[0].mxu0
    %v4985 = vpop.f32.mrb[0].mxu0
    %4986 = vdwg.mxu0
    %v4987 = vpack.c.bf16 %v4982, %v4872
    %s4988 = scalar_lea.vmem %s7, 112
    %v4989 = vld [vmem:[%s4988] sm:$0xf]
    %v4990 = vld [vmem:[%s4988 + $0x4] sm:$0xf]
    %v4991 = vld [vmem:[%s4988 + $0x8] sm:$0xf]
    %v4992 = vld [vmem:[%s4988 + $0xc] sm:$0xf]
    %v4997 = vunpack.c.l.b16 %v4989
    %v4998 = vunpack.c.l.b16 %v4990
    %v4999 = vunpack.c.l.b16 %v4991
    %v5000 = vunpack.c.l.b16 %v4992
    %v5001 = vpack.c.b16 %v4998, %v4997
    %v5002 = vpack.c.b16 %v5000, %v4999
    %v5006 = vsel %vm308, %v4987, 0
    %5008 = vmatprep.subr.bf16.mxu0 0
    %5009 = vmatpush1.bf16.msra.mxu0 %v5001
    %5010 = vmatprep.subr.bf16.mxu0 0
    %5011 = vmatpush1.bf16.msra.mxu0 %v5002
    %5012 = vmatprep.subr.bf16.mxu0 0
    %5013 = vmatpush1.bf16.msra.mxu0 0
    %5014 = vmatprep.subr.bf16.mxu0 0
    %5015 = vmatpush1.bf16.msra.mxu0 0
    %5016 = vmatprep.subr.bf16.mxu0 0
    %5017 = vmatpush1.bf16.msra.mxu0 0
    %5018 = vmatprep.subr.bf16.mxu0 0
    %5019 = vmatpush1.bf16.msra.mxu0 0
    %5020 = vmatprep.subr.bf16.mxu0 0
    %5021 = vmatpush1.bf16.msra.mxu0 0
    %5022 = vmatprep.subr.bf16.mxu0 0
    %5023 = vmatpush1.bf16.msra.mxu0 0
    %5024 = vmatprep.subr.bf16.mxu0 0
    %5025 = vmatpush1.bf16.msra.mxu0 0
    %5026 = vmatprep.subr.bf16.mxu0 0
    %5027 = vmatpush1.bf16.msra.mxu0 0
    %5028 = vmatprep.subr.bf16.mxu0 0
    %5029 = vmatpush1.bf16.msra.mxu0 0
    %5030 = vmatprep.subr.bf16.mxu0 0
    %5031 = vmatpush1.bf16.msra.mxu0 0
    %5032 = vmatprep.subr.bf16.mxu0 0
    %5033 = vmatpush1.bf16.msra.mxu0 0
    %5034 = vmatprep.subr.bf16.mxu0 0
    %5035 = vmatpush1.bf16.msra.mxu0 0
    %5036 = vmatprep.subr.bf16.mxu0 0
    %5037 = vmatpush1.bf16.msra.mxu0 0
    %5038 = vmatprep.subr.bf16.mxu0 0
    %5039 = vmatpush1.bf16.msra.mxu0 0
    %5040 = vmatprep.mubr.bf16.mxu0 0
    %5041 = vmatmul.mubr.bf16.gmra.mrb[0].mxu0 %v5006
    %v5042 = vpop.f32.mrb[0].mxu0
    %v5043 = vadd.f32 0.0, %v5042
    %v5044 = vpop.f32.mrb[0].mxu0
    %v5045 = vpop.f32.mrb[0].mxu0
    %v5046 = vadd.f32 0.0, %v5045
    %v5047 = vpop.f32.mrb[0].mxu0
    %5048 = vdwg.mxu0
    %v5053 = vunpack.c.l.b16 %v4520
    %v5054 = vunpack.c.l.b16 %v4521
    %v5055 = vunpack.c.l.b16 %v4522
    %v5056 = vunpack.c.l.b16 %v4523
    %v5057 = vpack.c.b16 %v5054, %v5053
    %v5058 = vpack.c.b16 %v5056, %v5055
    %v5062 = vsel %vm308, %v4518, 0
    %5064 = vmatprep.subr.bf16.mxu0 0
    %5065 = vmatpush1.bf16.msra.mxu0 %v5057
    %5066 = vmatprep.subr.bf16.mxu0 0
    %5067 = vmatpush1.bf16.msra.mxu0 %v5058
    %5068 = vmatprep.subr.bf16.mxu0 0
    %5069 = vmatpush1.bf16.msra.mxu0 0
    %5070 = vmatprep.subr.bf16.mxu0 0
    %5071 = vmatpush1.bf16.msra.mxu0 0
    %5072 = vmatprep.subr.bf16.mxu0 0
    %5073 = vmatpush1.bf16.msra.mxu0 0
    %5074 = vmatprep.subr.bf16.mxu0 0
    %5075 = vmatpush1.bf16.msra.mxu0 0
    %5076 = vmatprep.subr.bf16.mxu0 0
    %5077 = vmatpush1.bf16.msra.mxu0 0
    %5078 = vmatprep.subr.bf16.mxu0 0
    %5079 = vmatpush1.bf16.msra.mxu0 0
    %5080 = vmatprep.subr.bf16.mxu0 0
    %5081 = vmatpush1.bf16.msra.mxu0 0
    %5082 = vmatprep.subr.bf16.mxu0 0
    %5083 = vmatpush1.bf16.msra.mxu0 0
    %5084 = vmatprep.subr.bf16.mxu0 0
    %5085 = vmatpush1.bf16.msra.mxu0 0
    %5086 = vmatprep.subr.bf16.mxu0 0
    %5087 = vmatpush1.bf16.msra.mxu0 0
    %5088 = vmatprep.subr.bf16.mxu0 0
    %5089 = vmatpush1.bf16.msra.mxu0 0
    %5090 = vmatprep.subr.bf16.mxu0 0
    %5091 = vmatpush1.bf16.msra.mxu0 0
    %5092 = vmatprep.subr.bf16.mxu0 0
    %5093 = vmatpush1.bf16.msra.mxu0 0
    %5094 = vmatprep.subr.bf16.mxu0 0
    %5095 = vmatpush1.bf16.msra.mxu0 0
    %5096 = vmatprep.mubr.bf16.mxu0 0
    %5097 = vmatmul.mubr.bf16.gmra.mrb[0].mxu0 %v5062
    %v5098 = vpop.f32.mrb[0].mxu0
    %v5099 = vadd.f32 %v5043, %v5098
    %v5100 = vpop.f32.mrb[0].mxu0
    %v5101 = vpop.f32.mrb[0].mxu0
    %v5102 = vadd.f32 %v5046, %v5101
    %v5103 = vpop.f32.mrb[0].mxu0
    %5104 = vdwg.mxu0
    %s5105 = scalar_lea.vmem %s8, 3
    %v5106 = vld [vmem:[%s5105] sm:$0x1]
    %v5108 = vlaneseq
    %v5109 = vshrl.u32 %v5108, 7
    %v5110 = vsub.s32 0, %v5109
    %v5111 = vrot.slane %v5106, %v5110
    %v5113 = vadd.f32 %v5099, %v5111
    %v5114 = vadd.f32 %v5102, %v5111
    %v5115 = vadd.f32 %v4049, %v5113
    %v5116 = vadd.f32 %v4050, %v5114
    %s5117 = scalar_lea.vmem %s13, 3
    %v5118 = vld [vmem:[%s5117] sm:$0x1]
    %s5119 = scalar_lea.vmem %s14, 3
    %v5120 = vld [vmem:[%s5119] sm:$0x1]
    %v5121 = vsel %vm100, %v5115, 0.0
    %5122 = vadd.xlane.f32.xlu0 %v5121
    %v5123 = vpop.xlane.xlu0 %5122
    %v5124 = vsel %vm100, %v5116, 0.0
    %5125 = vadd.xlane.f32.xlu0 %v5124
    %v5126 = vpop.xlane.xlu0 %5125
    %v5127 = vmul.f32 %v5123, %v1130
    %v5128 = vmul.f32 %v5126, %v1130
    %v5129 = vsub.f32 %v5115, %v5127
    %v5130 = vsub.f32 %v5116, %v5128
    %v5131 = vmul.f32 %v5129, %v5129
    %v5132 = vmul.f32 %v5130, %v5130
    %v5133 = vsel %vm100, %v5131, 0.0
    %5134 = vadd.xlane.f32.xlu0 %v5133
    %v5135 = vpop.xlane.xlu0 %5134
    %v5136 = vsel %vm100, %v5132, 0.0
    %5137 = vadd.xlane.f32.xlu0 %v5136
    %v5138 = vpop.xlane.xlu0 %5137
    %v5139 = vmul.f32 %v5135, %v1130
    %v5140 = vmul.f32 %v5138, %v1130
    %v5141 = vadd.f32 %v5139, 1e-05
    %v5142 = vadd.f32 %v5140, 1e-05
    %v5143 = vrsqrt.pop %v5141
    %v5144 = vrsqrt.pop %v5142
    %v5145 = vmul.f32 %v5129, %v5143
    %v5146 = vmul.f32 %v5130, %v5144
    %v5148 = vlaneseq
    %v5149 = vshrl.u32 %v5148, 7
    %v5150 = vsub.s32 0, %v5149
    %v5151 = vrot.slane %v5118, %v5150
    %v5153 = vmul.f32 %v5145, %v5151
    %v5154 = vmul.f32 %v5146, %v5151
    %v5156 = vlaneseq
    %v5157 = vshrl.u32 %v5156, 7
    %v5158 = vsub.s32 0, %v5157
    %v5159 = vrot.slane %v5120, %v5158
    %v5161 = vadd.f32 %v5153, %v5159
    %v5162 = vadd.f32 %v5154, %v5159
    %v5163 = vpack.c.bf16 %v5162, %v5161
    %s5164 = scalar_lea.vmem %s9, 96
    %v5165 = vld [vmem:[%s5164] sm:$0xf]
    %v5166 = vld [vmem:[%s5164 + $0x4] sm:$0xf]
    %v5167 = vld [vmem:[%s5164 + $0x8] sm:$0xf]
    %v5168 = vld [vmem:[%s5164 + $0xc] sm:$0xf]
    %v5169 = vld [vmem:[%s5164 + $0x10] sm:$0xf]
    %v5170 = vld [vmem:[%s5164 + $0x14] sm:$0xf]
    %v5171 = vld [vmem:[%s5164 + $0x18] sm:$0xf]
    %v5172 = vld [vmem:[%s5164 + $0x1c] sm:$0xf]
    %s5173 = scalar_lea.vmem %s10, 3
    %v5174 = vld [vmem:[%s5173] sm:$0x1]
    %v5176 = vlaneseq
    %v5177 = vshrl.u32 %v5176, 7
    %v5178 = vsub.s32 0, %v5177
    %v5179 = vrot.slane %v5174, %v5178
    %v5189 = vunpack.c.l.b16 %v5165
    %v5190 = vunpack.c.l.b16 %v5166
    %v5191 = vunpack.c.l.b16 %v5167
    %v5192 = vunpack.c.l.b16 %v5168
    %v5193 = vunpack.c.l.b16 %v5169
    %v5194 = vunpack.c.l.b16 %v5170
    %v5195 = vunpack.c.l.b16 %v5171
    %v5196 = vunpack.c.l.b16 %v5172
    %v5197 = vpack.c.b16 %v5190, %v5189
    %v5198 = vpack.c.b16 %v5192, %v5191
    %v5199 = vpack.c.b16 %v5194, %v5193
    %v5200 = vpack.c.b16 %v5196, %v5195
    %v5206 = vsel %vm100, %v5163, 0
    %5208 = vmatprep.subr.bf16.mxu0 0
    %5209 = vmatpush1.bf16.msra.mxu0 %v5197
    %5210 = vmatprep.subr.bf16.mxu0 0
    %5211 = vmatpush1.bf16.msra.mxu0 %v5198
    %5212 = vmatprep.subr.bf16.mxu0 0
    %5213 = vmatpush1.bf16.msra.mxu0 %v5199
    %5214 = vmatprep.subr.bf16.mxu0 0
    %5215 = vmatpush1.bf16.msra.mxu0 %v5200
    %5216 = vmatprep.subr.bf16.mxu0 0
    %5217 = vmatpush1.bf16.msra.mxu0 0
    %5218 = vmatprep.subr.bf16.mxu0 0
    %5219 = vmatpush1.bf16.msra.mxu0 0
    %5220 = vmatprep.subr.bf16.mxu0 0
    %5221 = vmatpush1.bf16.msra.mxu0 0
    %5222 = vmatprep.subr.bf16.mxu0 0
    %5223 = vmatpush1.bf16.msra.mxu0 0
    %5224 = vmatprep.subr.bf16.mxu0 0
    %5225 = vmatpush1.bf16.msra.mxu0 0
    %5226 = vmatprep.subr.bf16.mxu0 0
    %5227 = vmatpush1.bf16.msra.mxu0 0
    %5228 = vmatprep.subr.bf16.mxu0 0
    %5229 = vmatpush1.bf16.msra.mxu0 0
    %5230 = vmatprep.subr.bf16.mxu0 0
    %5231 = vmatpush1.bf16.msra.mxu0 0
    %5232 = vmatprep.subr.bf16.mxu0 0
    %5233 = vmatpush1.bf16.msra.mxu0 0
    %5234 = vmatprep.subr.bf16.mxu0 0
    %5235 = vmatpush1.bf16.msra.mxu0 0
    %5236 = vmatprep.subr.bf16.mxu0 0
    %5237 = vmatpush1.bf16.msra.mxu0 0
    %5238 = vmatprep.subr.bf16.mxu0 0
    %5239 = vmatpush1.bf16.msra.mxu0 0
    %5240 = vmatprep.mubr.bf16.mxu0 0
    %5241 = vmatmul.mubr.bf16.gmra.mrb[0].mxu0 %v5206
    %v5242 = vpop.f32.mrb[0].mxu0
    %v5243 = vadd.f32 %v5179, %v5242
    %v5244 = vpop.f32.mrb[0].mxu0
    %v5245 = vpop.f32.mrb[0].mxu0
    %v5246 = vadd.f32 %v5179, %v5245
    %v5247 = vpop.f32.mrb[0].mxu0
    %5248 = vdwg.mxu0
    %v5249 = vmax.f32 %v5243, 0.0
    %v5250 = vmax.f32 %v5246, 0.0
    %v5251 = vpack.c.bf16 %v5250, %v5249
    %s5252 = scalar_lea.vmem %s11, 96
    %v5253 = vld [vmem:[%s5252] sm:$0xf]
    %v5254 = vld [vmem:[%s5252 + $0x4] sm:$0xf]
    %v5255 = vld [vmem:[%s5252 + $0x8] sm:$0xf]
    %v5256 = vld [vmem:[%s5252 + $0xc] sm:$0xf]
    %v5257 = vld [vmem:[%s5252 + $0x10] sm:$0xf]
    %v5258 = vld [vmem:[%s5252 + $0x14] sm:$0xf]
    %v5259 = vld [vmem:[%s5252 + $0x18] sm:$0xf]
    %v5260 = vld [vmem:[%s5252 + $0x1c] sm:$0xf]
    %s5261 = scalar_lea.vmem %s12, 3
    %v5262 = vld [vmem:[%s5261] sm:$0x1]
    %v5264 = vlaneseq
    %v5265 = vshrl.u32 %v5264, 7
    %v5266 = vsub.s32 0, %v5265
    %v5267 = vrot.slane %v5262, %v5266
    %v5277 = vunpack.c.l.b16 %v5253
    %v5278 = vunpack.c.l.b16 %v5254
    %v5279 = vunpack.c.l.b16 %v5255
    %v5280 = vunpack.c.l.b16 %v5256
    %v5281 = vunpack.c.l.b16 %v5257
    %v5282 = vunpack.c.l.b16 %v5258
    %v5283 = vunpack.c.l.b16 %v5259
    %v5284 = vunpack.c.l.b16 %v5260
    %v5285 = vpack.c.b16 %v5278, %v5277
    %v5286 = vpack.c.b16 %v5280, %v5279
    %v5287 = vpack.c.b16 %v5282, %v5281
    %v5288 = vpack.c.b16 %v5284, %v5283
    %v5294 = vsel %vm100, %v5251, 0
    %5296 = vmatprep.subr.bf16.mxu0 0
    %5297 = vmatpush1.bf16.msra.mxu0 %v5285
    %5298 = vmatprep.subr.bf16.mxu0 0
    %5299 = vmatpush1.bf16.msra.mxu0 %v5286
    %5300 = vmatprep.subr.bf16.mxu0 0
    %5301 = vmatpush1.bf16.msra.mxu0 %v5287
    %5302 = vmatprep.subr.bf16.mxu0 0
    %5303 = vmatpush1.bf16.msra.mxu0 %v5288
    %5304 = vmatprep.subr.bf16.mxu0 0
    %5305 = vmatpush1.bf16.msra.mxu0 0
    %5306 = vmatprep.subr.bf16.mxu0 0
    %5307 = vmatpush1.bf16.msra.mxu0 0
    %5308 = vmatprep.subr.bf16.mxu0 0
    %5309 = vmatpush1.bf16.msra.mxu0 0
    %5310 = vmatprep.subr.bf16.mxu0 0
    %5311 = vmatpush1.bf16.msra.mxu0 0
    %5312 = vmatprep.subr.bf16.mxu0 0
    %5313 = vmatpush1.bf16.msra.mxu0 0
    %5314 = vmatprep.subr.bf16.mxu0 0
    %5315 = vmatpush1.bf16.msra.mxu0 0
    %5316 = vmatprep.subr.bf16.mxu0 0
    %5317 = vmatpush1.bf16.msra.mxu0 0
    %5318 = vmatprep.subr.bf16.mxu0 0
    %5319 = vmatpush1.bf16.msra.mxu0 0
    %5320 = vmatprep.subr.bf16.mxu0 0
    %5321 = vmatpush1.bf16.msra.mxu0 0
    %5322 = vmatprep.subr.bf16.mxu0 0
    %5323 = vmatpush1.bf16.msra.mxu0 0
    %5324 = vmatprep.subr.bf16.mxu0 0
    %5325 = vmatpush1.bf16.msra.mxu0 0
    %5326 = vmatprep.subr.bf16.mxu0 0
    %5327 = vmatpush1.bf16.msra.mxu0 0
    %5328 = vmatprep.mubr.bf16.mxu0 0
    %5329 = vmatmul.mubr.bf16.gmra.mrb[0].mxu0 %v5294
    %v5330 = vpop.f32.mrb[0].mxu0
    %v5331 = vadd.f32 %v5267, %v5330
    %v5332 = vpop.f32.mrb[0].mxu0
    %v5333 = vpop.f32.mrb[0].mxu0
    %v5334 = vadd.f32 %v5267, %v5333
    %v5335 = vpop.f32.mrb[0].mxu0
    %5336 = vdwg.mxu0
    %v5337 = vadd.f32 %v5161, %v5331
    %v5338 = vadd.f32 %v5162, %v5334
    %s5339 = scalar_lea.vmem %s15, 3
    %v5340 = vld [vmem:[%s5339] sm:$0x1]
    %s5341 = scalar_lea.vmem %s16, 3
    %v5342 = vld [vmem:[%s5341] sm:$0x1]
    %v5343 = vsel %vm100, %v5337, 0.0
    %5344 = vadd.xlane.f32.xlu0 %v5343
    %v5345 = vpop.xlane.xlu0 %5344
    %v5346 = vsel %vm100, %v5338, 0.0
    %5347 = vadd.xlane.f32.xlu0 %v5346
    %v5348 = vpop.xlane.xlu0 %5347
    %v5349 = vmul.f32 %v5345, %v1130
    %v5350 = vmul.f32 %v5348, %v1130
    %v5351 = vsub.f32 %v5337, %v5349
    %v5352 = vsub.f32 %v5338, %v5350
    %v5353 = vmul.f32 %v5351, %v5351
    %v5354 = vmul.f32 %v5352, %v5352
    %v5355 = vsel %vm100, %v5353, 0.0
    %5356 = vadd.xlane.f32.xlu0 %v5355
    %v5357 = vpop.xlane.xlu0 %5356
    %v5358 = vsel %vm100, %v5354, 0.0
    %5359 = vadd.xlane.f32.xlu0 %v5358
    %v5360 = vpop.xlane.xlu0 %5359
    %v5361 = vmul.f32 %v5357, %v1130
    %v5362 = vmul.f32 %v5360, %v1130
    %v5363 = vadd.f32 %v5361, 1e-05
    %v5364 = vadd.f32 %v5362, 1e-05
    %v5365 = vrsqrt.pop %v5363
    %v5366 = vrsqrt.pop %v5364
    %v5367 = vmul.f32 %v5351, %v5365
    %v5368 = vmul.f32 %v5352, %v5366
    %v5370 = vlaneseq
    %v5371 = vshrl.u32 %v5370, 7
    %v5372 = vsub.s32 0, %v5371
    %v5373 = vrot.slane %v5340, %v5372
    %v5375 = vmul.f32 %v5367, %v5373
    %v5376 = vmul.f32 %v5368, %v5373
    %v5378 = vlaneseq
    %v5379 = vshrl.u32 %v5378, 7
    %v5380 = vsub.s32 0, %v5379
    %v5381 = vrot.slane %v5342, %v5380
    %v5383 = vadd.f32 %v5375, %v5381
    %v5384 = vadd.f32 %v5376, %v5381
    %5385 = vst.msk [vmem:[#allocation2] sm:$0xff] %vm100, %v5383
    %5386 = vst.msk [vmem:[#allocation2 + $0x8] sm:$0xff] %vm100, %v5384
    // Predicated region
    $region70: #{encoder_forward.1} parent=1 // pred_check
      _
    $region71: #{encoder_forward.1} parent=1 // pred_check_branch
      %5388 = sbr.rel (0) target = $region73
    $region72: #{encoder_forward.1} parent=1 // pred_region
      %s5390 = ssub.s32 256, 256
      %5391 = vsyncadd [#allocation3], %s5390
      %s5392 = sshll.u32 [#allocation2], 4
      %s5393 = int_to_ptr.vmem [resolvable:$true] %s5392
      %5398 = dma.vmem_to_hbm [thread:$0]  %s5393, 256, %s17, [#allocation3], 128, 128, 8
    $region73: #{encoder_forward.1} parent=1 // pred_fallthru
      _
    // Predicated region
    $region74: #{encoder_forward.1} parent=1 // pred_check
      _
    $region75: #{encoder_forward.1} parent=1 // pred_check_branch
      %5400 = sbr.rel (0) target = $region77
    $region76: #{encoder_forward.1} parent=1 // pred_region
      %5401 = dma.done [#allocation3], 256
    $region77: #{encoder_forward.1} parent=1 // pred_fallthru
      _
    %5402 = vsyncpa [#allocation3], 1

</llo_original>
